<compile_context>
chip_gen: v7x
topology: tpu7x:2x2x1
jax: 0.10.0
libtpu: 0.0.40
codegen_flags: <defaults>
</compile_context>

<pallas_src>
import jax
import jax.numpy as jnp
from jax.experimental import pallas as pl
from jax.experimental.pallas import tpu as pltpu

BN_EPS = 1e-5


# ----------------------------------------------------------------------------
# Host-side constants
# ----------------------------------------------------------------------------
def _bilinear_matrix(n_in, n_out):
    """(n_out, n_in) matrix matching F.interpolate(mode='bilinear', align_corners=True)."""
    if n_in == 1:
        return jnp.ones((n_out, 1), jnp.float32)
    src = jnp.arange(n_out, dtype=jnp.float32) * (n_in - 1) / (n_out - 1)
    i0 = jnp.clip(jnp.floor(src).astype(jnp.int32), 0, n_in - 2)
    frac = src - i0.astype(jnp.float32)
    rows = jnp.arange(n_out)
    m = jnp.zeros((n_out, n_in), jnp.float32)
    m = m.at[rows, i0].set(1.0 - frac)
    m = m.at[rows, i0 + 1].add(frac)
    return m


# ----------------------------------------------------------------------------
# Fused Pallas kernel: upsample(+pad) -> 3x3 conv -> folded BN bias -> ReLU
# ----------------------------------------------------------------------------
def _upconv_kernel(x_ref, ahp_ref, awpt_ref, w_ref, b_ref, o_ref):
    """One batch element per grid step.

    x_ref:    (1, Cin, H, W)       input image (NCHW)
    ahp_ref:  (Ho+2, H)            row-interp matrix with zero pad rows folded in
    awpt_ref: (W, Wo+2)            transposed col-interp matrix with zero pad cols folded in
    w_ref:    (9, Cout, Cin)       conv weights (tap-major, BN scale pre-folded)
    b_ref:    (Cout, 1)            folded BN bias
    o_ref:    (1, Cout, Ho*Wo)     output, flat spatial on lanes (lane-dense stores)
    """
    _, Cin, H, W = x_ref.shape
    Hp = ahp_ref.shape[0]                     # Ho + 2
    Wp = awpt_ref.shape[1]                    # Wo + 2
    Ho, Wo = Hp - 2, Wp - 2
    Cout = o_ref.shape[1]

    # ---- bilinear 2x upsample (align_corners=True) with conv zero-padding fused ----
    # W direction for all channels at once: rows are (ci, h) pairs.
    x2 = x_ref[0].reshape(Cin * H, W)                                        # free merge
    uw = jnp.dot(x2, awpt_ref[...], preferred_element_type=jnp.float32)      # (Cin*H, Wo+2)

    # H direction per channel (static unroll, one 2-D matmul each).
    ups = []
    for c in range(Cin):
        ups.append(jnp.dot(ahp_ref[...], uw[c * H:(c + 1) * H, :],
                           preferred_element_type=jnp.float32))              # (Ho+2, Wo+2)
    up = jnp.stack(ups, axis=0)                                              # (Cin, Ho+2, Wo+2)

    # ---- 3x3 conv (BN scale already folded into weights), spatial-on-lanes ----
    acc = jnp.zeros((Cout, Ho * Wo), jnp.float32)
    for kh in range(3):
        for kw in range(3):
            patch = up[:, kh:kh + Ho, kw:kw + Wo].reshape(Cin, Ho * Wo)      # (Cin, Ho*Wo)
            acc = acc + jnp.dot(w_ref[kh * 3 + kw], patch,
                                preferred_element_type=jnp.float32)          # (Cout, Ho*Wo)

    # ---- folded BN bias + ReLU, dense store ----
    o_ref[0] = jnp.maximum(acc + b_ref[...], 0.0)


# ----------------------------------------------------------------------------
# Wrapper
# ----------------------------------------------------------------------------
def upconvolution_forward(params, x):
    """x: (N, Cin, H, W) NCHW -> (N, Cout, 2H, 2W) NCHW. BatchNorm in eval mode."""
    N, Cin, H, W = x.shape
    w = params["conv_w"]                                   # (Cout, Cin, 3, 3) (OIHW)
    Cout = w.shape[0]
    Ho, Wo = 2 * H, 2 * W

    bn = params["bn"]
    scale = bn["gamma"] * jax.lax.rsqrt(bn["var"] + BN_EPS)          # (Cout,)
    bias = bn["beta"] - bn["mean"] * scale                           # (Cout,)

    # Weights: OIHW -> (9, Cout, Cin), tap-major (kh*3+kw), BN scale folded in.
    w9 = (jnp.transpose(w, (2, 3, 0, 1)).reshape(9, Cout, Cin)
          * scale[None, :, None]).astype(jnp.float32)
    bias2 = bias.reshape(Cout, 1).astype(jnp.float32)

    # Interpolation matrices with the conv's zero padding folded in.
    ahp = jnp.pad(_bilinear_matrix(H, Ho), ((1, 1), (0, 0)))         # (Ho+2, H)
    awpt = jnp.pad(_bilinear_matrix(W, Wo), ((1, 1), (0, 0))).T      # (W, Wo+2)

    out_flat = pl.pallas_call(
        _upconv_kernel,
        out_shape=jax.ShapeDtypeStruct((N, Cout, Ho * Wo), jnp.float32),
        grid=(N,),
        in_specs=[
            pl.BlockSpec((1, Cin, H, W), lambda n: (n, 0, 0, 0)),
            pl.BlockSpec((Ho + 2, H), lambda n: (0, 0)),
            pl.BlockSpec((W, Wo + 2), lambda n: (0, 0)),
            pl.BlockSpec((9, Cout, Cin), lambda n: (0, 0, 0)),
            pl.BlockSpec((Cout, 1), lambda n: (0, 0)),
        ],
        out_specs=pl.BlockSpec((1, Cout, Ho * Wo), lambda n: (n, 0, 0)),
        compiler_params=pltpu.CompilerParams(dimension_semantics=("parallel",)),
    )(x.astype(jnp.float32), ahp, awpt, w9, bias2)

    # Free, contiguous reshape back to NCHW.
    return out_flat.reshape(N, Cout, Ho, Wo)


# ----------------------------------------------------------------------------
# Pure-JAX reference (for a sanity check)
# ----------------------------------------------------------------------------
def upconvolution_reference(params, x):
    N, Cin, H, W = x.shape
    Ho, Wo = 2 * H, 2 * W
    ah = _bilinear_matrix(H, Ho)
    aw = _bilinear_matrix(W, Wo)
    up = jnp.einsum("oh,nchw,vw->ncov", ah, x.astype(jnp.float32), aw,
                    precision=jax.lax.Precision.HIGHEST)
    y = jax.lax.conv_general_dilated(
        up, params["conv_w"].astype(jnp.float32),
        window_strides=(1, 1), padding=((1, 1), (1, 1)),
        dimension_numbers=("NCHW", "OIHW", "NCHW"),
        precision=jax.lax.Precision.HIGHEST)
    bn = params["bn"]
    scale = bn["gamma"] * jax.lax.rsqrt(bn["var"] + BN_EPS)
    bias = bn["beta"] - bn["mean"] * scale
    y = y * scale[None, :, None, None] + bias[None, :, None, None]
    return jnp.maximum(y, 0.0)


def init_params(key, input_channels, output_channels):
    k_w, k_g, k_b, k_m, k_v = jax.random.split(key, 5)
    return {
        "conv_w": 0.1 * jax.random.normal(
            k_w, (output_channels, input_channels, 3, 3), jnp.float32),
        "bn": {
            "gamma": 1.0 + 0.1 * jax.random.normal(k_g, (output_channels,), jnp.float32),
            "beta": 0.1 * jax.random.normal(k_b, (output_channels,), jnp.float32),
            "mean": 0.1 * jax.random.normal(k_m, (output_channels,), jnp.float32),
            "var": 0.5 + jnp.abs(jax.random.normal(k_v, (output_channels,), jnp.float32)),
        },
    }


if __name__ == "__main__":
    # UpconvolutionLayer(input_channels=4, output_channels=8, kernel_size=3)
    N, C_IN, C_OUT, H, W = 2, 4, 8, 16, 16

    key = jax.random.PRNGKey(0)
    k_p, k_x = jax.random.split(key)
    params = init_params(k_p, C_IN, C_OUT)
    x = jax.random.normal(k_x, (N, C_IN, H, W), jnp.float32)

    out = jax.block_until_ready(upconvolution_forward(params, x))
    assert out.shape == (N, C_OUT, 2 * H, 2 * W), out.shape

    ref = jax.block_until_ready(upconvolution_reference(params, x))
    max_err = float(jnp.max(jnp.abs(out - ref)))
    assert max_err < 1e-1, f"max abs err {max_err}"

    print("KERNEL_OK")
</pallas_src>

<mosaic_0001>
module attributes {stable_mosaic.version = 11 : i64} {
  func.func @_upconv_kernel(%arg0: i32, %arg1: memref<1x4x16x16xf32, #tpu.memory_space<vmem>>, %arg2: memref<34x16xf32, #tpu.memory_space<vmem>>, %arg3: memref<16x34xf32, #tpu.memory_space<vmem>>, %arg4: memref<9x8x4xf32, #tpu.memory_space<vmem>>, %arg5: memref<8x1xf32, #tpu.memory_space<vmem>>, %arg6: memref<1x8x1024xf32, #tpu.memory_space<vmem>>) attributes {dimension_semantics = [#tpu.dimension_semantics<parallel>], iteration_bounds = array<i64: 2>, scalar_prefetch = 0 : i64, scratch_operands = 0 : i64, tpu.core_type = #tpu.core_type<tc>, window_params = [{transform_indices = @transform_0, window_bounds = array<i64: 1, 4, 16, 16>}, {pipeline_mode = #tpu.pipeline_mode<synchronous>, transform_indices = @transform_1, window_bounds = array<i64: 34, 16>}, {pipeline_mode = #tpu.pipeline_mode<synchronous>, transform_indices = @transform_2, window_bounds = array<i64: 16, 34>}, {pipeline_mode = #tpu.pipeline_mode<synchronous>, transform_indices = @transform_3, window_bounds = array<i64: 9, 8, 4>}, {pipeline_mode = #tpu.pipeline_mode<synchronous>, transform_indices = @transform_4, window_bounds = array<i64: 8, 1>}, {transform_indices = @transform_5, window_bounds = array<i64: 1, 8, 1024>}]} {
    %c0 = arith.constant 0 : index
    %c0_0 = arith.constant 0 : index
    %c0_1 = arith.constant 0 : index
    %c0_2 = arith.constant 0 : index
    %0 = vector.load %arg1[%c0, %c0_0, %c0_1, %c0_2] : memref<1x4x16x16xf32, #tpu.memory_space<vmem>>, vector<1x4x16x16xf32>
    %1 = vector.shape_cast %0 : vector<1x4x16x16xf32> to vector<4x16x16xf32>
    %2 = vector.shape_cast %1 : vector<4x16x16xf32> to vector<64x16xf32>
    %c0_3 = arith.constant 0 : index
    %c0_4 = arith.constant 0 : index
    %3 = vector.load %arg3[%c0_3, %c0_4] : memref<16x34xf32, #tpu.memory_space<vmem>>, vector<16x34xf32>
    %cst = arith.constant dense<0.000000e+00> : vector<64x34xf32>
    %4 = tpu.matmul %2, %3, %cst {dimension_numbers = #tpu.dot_dimension_numbers<[1], [0], [0], [1], [0, 0, 1, 1], [], []>} : vector<64x16xf32>, vector<16x34xf32>, vector<64x34xf32> -> vector<64x34xf32>
    %c0_5 = arith.constant 0 : index
    %c0_6 = arith.constant 0 : index
    %5 = vector.load %arg2[%c0_5, %c0_6] : memref<34x16xf32, #tpu.memory_space<vmem>>, vector<34x16xf32>
    %6 = vector.extract_strided_slice %4 {offsets = [0, 0], sizes = [16, 34], strides = [1, 1]} : vector<64x34xf32> to vector<16x34xf32>
    %cst_7 = arith.constant dense<0.000000e+00> : vector<34x34xf32>
    %7 = tpu.matmul %5, %6, %cst_7 {dimension_numbers = #tpu.dot_dimension_numbers<[1], [0], [0], [1], [0, 0, 1, 1], [], []>} : vector<34x16xf32>, vector<16x34xf32>, vector<34x34xf32> -> vector<34x34xf32>
    %c0_8 = arith.constant 0 : index
    %c0_9 = arith.constant 0 : index
    %8 = vector.load %arg2[%c0_8, %c0_9] : memref<34x16xf32, #tpu.memory_space<vmem>>, vector<34x16xf32>
    %9 = vector.extract_strided_slice %4 {offsets = [16, 0], sizes = [16, 34], strides = [1, 1]} : vector<64x34xf32> to vector<16x34xf32>
    %cst_10 = arith.constant dense<0.000000e+00> : vector<34x34xf32>
    %10 = tpu.matmul %8, %9, %cst_10 {dimension_numbers = #tpu.dot_dimension_numbers<[1], [0], [0], [1], [0, 0, 1, 1], [], []>} : vector<34x16xf32>, vector<16x34xf32>, vector<34x34xf32> -> vector<34x34xf32>
    %c0_11 = arith.constant 0 : index
    %c0_12 = arith.constant 0 : index
    %11 = vector.load %arg2[%c0_11, %c0_12] : memref<34x16xf32, #tpu.memory_space<vmem>>, vector<34x16xf32>
    %12 = vector.extract_strided_slice %4 {offsets = [32, 0], sizes = [16, 34], strides = [1, 1]} : vector<64x34xf32> to vector<16x34xf32>
    %cst_13 = arith.constant dense<0.000000e+00> : vector<34x34xf32>
    %13 = tpu.matmul %11, %12, %cst_13 {dimension_numbers = #tpu.dot_dimension_numbers<[1], [0], [0], [1], [0, 0, 1, 1], [], []>} : vector<34x16xf32>, vector<16x34xf32>, vector<34x34xf32> -> vector<34x34xf32>
    %c0_14 = arith.constant 0 : index
    %c0_15 = arith.constant 0 : index
    %14 = vector.load %arg2[%c0_14, %c0_15] : memref<34x16xf32, #tpu.memory_space<vmem>>, vector<34x16xf32>
    %15 = vector.extract_strided_slice %4 {offsets = [48, 0], sizes = [16, 34], strides = [1, 1]} : vector<64x34xf32> to vector<16x34xf32>
    %cst_16 = arith.constant dense<0.000000e+00> : vector<34x34xf32>
    %16 = tpu.matmul %14, %15, %cst_16 {dimension_numbers = #tpu.dot_dimension_numbers<[1], [0], [0], [1], [0, 0, 1, 1], [], []>} : vector<34x16xf32>, vector<16x34xf32>, vector<34x34xf32> -> vector<34x34xf32>
    %17 = vector.shape_cast %7 : vector<34x34xf32> to vector<1x34x34xf32>
    %18 = vector.shape_cast %10 : vector<34x34xf32> to vector<1x34x34xf32>
    %19 = vector.shape_cast %13 : vector<34x34xf32> to vector<1x34x34xf32>
    %20 = vector.shape_cast %16 : vector<34x34xf32> to vector<1x34x34xf32>
    %21 = tpu.concatenate %17, %18, %19, %20 in 0 : vector<1x34x34xf32>, vector<1x34x34xf32>, vector<1x34x34xf32>, vector<1x34x34xf32> -> vector<4x34x34xf32>
    %cst_17 = arith.constant 0.000000e+00 : f32
    %22 = vector.broadcast %cst_17 : f32 to vector<8x1024xf32>
    %23 = vector.extract_strided_slice %21 {offsets = [0, 0, 0], sizes = [4, 32, 32], strides = [1, 1, 1]} : vector<4x34x34xf32> to vector<4x32x32xf32>
    %24 = vector.shape_cast %23 : vector<4x32x32xf32> to vector<4x1024xf32>
    %c0_18 = arith.constant 0 : index
    %c0_19 = arith.constant 0 : index
    %c0_20 = arith.constant 0 : index
    %25 = vector.load %arg4[%c0_18, %c0_19, %c0_20] : memref<9x8x4xf32, #tpu.memory_space<vmem>>, vector<1x8x4xf32>
    %26 = vector.shape_cast %25 : vector<1x8x4xf32> to vector<8x4xf32>
    %cst_21 = arith.constant dense<0.000000e+00> : vector<8x1024xf32>
    %27 = tpu.matmul %26, %24, %cst_21 {dimension_numbers = #tpu.dot_dimension_numbers<[1], [0], [0], [1], [0, 0, 1, 1], [], []>} : vector<8x4xf32>, vector<4x1024xf32>, vector<8x1024xf32> -> vector<8x1024xf32>
    %28 = arith.addf %22, %27 : vector<8x1024xf32>
    %29 = vector.extract_strided_slice %21 {offsets = [0, 0, 1], sizes = [4, 32, 32], strides = [1, 1, 1]} : vector<4x34x34xf32> to vector<4x32x32xf32>
    %30 = vector.shape_cast %29 : vector<4x32x32xf32> to vector<4x1024xf32>
    %c1 = arith.constant 1 : index
    %c0_22 = arith.constant 0 : index
    %c0_23 = arith.constant 0 : index
    %31 = vector.load %arg4[%c1, %c0_22, %c0_23] : memref<9x8x4xf32, #tpu.memory_space<vmem>>, vector<1x8x4xf32>
    %32 = vector.shape_cast %31 : vector<1x8x4xf32> to vector<8x4xf32>
    %cst_24 = arith.constant dense<0.000000e+00> : vector<8x1024xf32>
    %33 = tpu.matmul %32, %30, %cst_24 {dimension_numbers = #tpu.dot_dimension_numbers<[1], [0], [0], [1], [0, 0, 1, 1], [], []>} : vector<8x4xf32>, vector<4x1024xf32>, vector<8x1024xf32> -> vector<8x1024xf32>
    %34 = arith.addf %28, %33 : vector<8x1024xf32>
    %35 = vector.extract_strided_slice %21 {offsets = [0, 0, 2], sizes = [4, 32, 32], strides = [1, 1, 1]} : vector<4x34x34xf32> to vector<4x32x32xf32>
    %36 = vector.shape_cast %35 : vector<4x32x32xf32> to vector<4x1024xf32>
    %c2 = arith.constant 2 : index
    %c0_25 = arith.constant 0 : index
    %c0_26 = arith.constant 0 : index
    %37 = vector.load %arg4[%c2, %c0_25, %c0_26] : memref<9x8x4xf32, #tpu.memory_space<vmem>>, vector<1x8x4xf32>
    %38 = vector.shape_cast %37 : vector<1x8x4xf32> to vector<8x4xf32>
    %cst_27 = arith.constant dense<0.000000e+00> : vector<8x1024xf32>
    %39 = tpu.matmul %38, %36, %cst_27 {dimension_numbers = #tpu.dot_dimension_numbers<[1], [0], [0], [1], [0, 0, 1, 1], [], []>} : vector<8x4xf32>, vector<4x1024xf32>, vector<8x1024xf32> -> vector<8x1024xf32>
    %40 = arith.addf %34, %39 : vector<8x1024xf32>
    %41 = vector.extract_strided_slice %21 {offsets = [0, 1, 0], sizes = [4, 32, 32], strides = [1, 1, 1]} : vector<4x34x34xf32> to vector<4x32x32xf32>
    %42 = vector.shape_cast %41 : vector<4x32x32xf32> to vector<4x1024xf32>
    %c3 = arith.constant 3 : index
    %c0_28 = arith.constant 0 : index
    %c0_29 = arith.constant 0 : index
    %43 = vector.load %arg4[%c3, %c0_28, %c0_29] : memref<9x8x4xf32, #tpu.memory_space<vmem>>, vector<1x8x4xf32>
    %44 = vector.shape_cast %43 : vector<1x8x4xf32> to vector<8x4xf32>
    %cst_30 = arith.constant dense<0.000000e+00> : vector<8x1024xf32>
    %45 = tpu.matmul %44, %42, %cst_30 {dimension_numbers = #tpu.dot_dimension_numbers<[1], [0], [0], [1], [0, 0, 1, 1], [], []>} : vector<8x4xf32>, vector<4x1024xf32>, vector<8x1024xf32> -> vector<8x1024xf32>
    %46 = arith.addf %40, %45 : vector<8x1024xf32>
    %47 = vector.extract_strided_slice %21 {offsets = [0, 1, 1], sizes = [4, 32, 32], strides = [1, 1, 1]} : vector<4x34x34xf32> to vector<4x32x32xf32>
    %48 = vector.shape_cast %47 : vector<4x32x32xf32> to vector<4x1024xf32>
    %c4 = arith.constant 4 : index
    %c0_31 = arith.constant 0 : index
    %c0_32 = arith.constant 0 : index
    %49 = vector.load %arg4[%c4, %c0_31, %c0_32] : memref<9x8x4xf32, #tpu.memory_space<vmem>>, vector<1x8x4xf32>
    %50 = vector.shape_cast %49 : vector<1x8x4xf32> to vector<8x4xf32>
    %cst_33 = arith.constant dense<0.000000e+00> : vector<8x1024xf32>
    %51 = tpu.matmul %50, %48, %cst_33 {dimension_numbers = #tpu.dot_dimension_numbers<[1], [0], [0], [1], [0, 0, 1, 1], [], []>} : vector<8x4xf32>, vector<4x1024xf32>, vector<8x1024xf32> -> vector<8x1024xf32>
    %52 = arith.addf %46, %51 : vector<8x1024xf32>
    %53 = vector.extract_strided_slice %21 {offsets = [0, 1, 2], sizes = [4, 32, 32], strides = [1, 1, 1]} : vector<4x34x34xf32> to vector<4x32x32xf32>
    %54 = vector.shape_cast %53 : vector<4x32x32xf32> to vector<4x1024xf32>
    %c5 = arith.constant 5 : index
    %c0_34 = arith.constant 0 : index
    %c0_35 = arith.constant 0 : index
    %55 = vector.load %arg4[%c5, %c0_34, %c0_35] : memref<9x8x4xf32, #tpu.memory_space<vmem>>, vector<1x8x4xf32>
    %56 = vector.shape_cast %55 : vector<1x8x4xf32> to vector<8x4xf32>
    %cst_36 = arith.constant dense<0.000000e+00> : vector<8x1024xf32>
    %57 = tpu.matmul %56, %54, %cst_36 {dimension_numbers = #tpu.dot_dimension_numbers<[1], [0], [0], [1], [0, 0, 1, 1], [], []>} : vector<8x4xf32>, vector<4x1024xf32>, vector<8x1024xf32> -> vector<8x1024xf32>
    %58 = arith.addf %52, %57 : vector<8x1024xf32>
    %59 = vector.extract_strided_slice %21 {offsets = [0, 2, 0], sizes = [4, 32, 32], strides = [1, 1, 1]} : vector<4x34x34xf32> to vector<4x32x32xf32>
    %60 = vector.shape_cast %59 : vector<4x32x32xf32> to vector<4x1024xf32>
    %c6 = arith.constant 6 : index
    %c0_37 = arith.constant 0 : index
    %c0_38 = arith.constant 0 : index
    %61 = vector.load %arg4[%c6, %c0_37, %c0_38] : memref<9x8x4xf32, #tpu.memory_space<vmem>>, vector<1x8x4xf32>
    %62 = vector.shape_cast %61 : vector<1x8x4xf32> to vector<8x4xf32>
    %cst_39 = arith.constant dense<0.000000e+00> : vector<8x1024xf32>
    %63 = tpu.matmul %62, %60, %cst_39 {dimension_numbers = #tpu.dot_dimension_numbers<[1], [0], [0], [1], [0, 0, 1, 1], [], []>} : vector<8x4xf32>, vector<4x1024xf32>, vector<8x1024xf32> -> vector<8x1024xf32>
    %64 = arith.addf %58, %63 : vector<8x1024xf32>
    %65 = vector.extract_strided_slice %21 {offsets = [0, 2, 1], sizes = [4, 32, 32], strides = [1, 1, 1]} : vector<4x34x34xf32> to vector<4x32x32xf32>
    %66 = vector.shape_cast %65 : vector<4x32x32xf32> to vector<4x1024xf32>
    %c7 = arith.constant 7 : index
    %c0_40 = arith.constant 0 : index
    %c0_41 = arith.constant 0 : index
    %67 = vector.load %arg4[%c7, %c0_40, %c0_41] : memref<9x8x4xf32, #tpu.memory_space<vmem>>, vector<1x8x4xf32>
    %68 = vector.shape_cast %67 : vector<1x8x4xf32> to vector<8x4xf32>
    %cst_42 = arith.constant dense<0.000000e+00> : vector<8x1024xf32>
    %69 = tpu.matmul %68, %66, %cst_42 {dimension_numbers = #tpu.dot_dimension_numbers<[1], [0], [0], [1], [0, 0, 1, 1], [], []>} : vector<8x4xf32>, vector<4x1024xf32>, vector<8x1024xf32> -> vector<8x1024xf32>
    %70 = arith.addf %64, %69 : vector<8x1024xf32>
    %71 = vector.extract_strided_slice %21 {offsets = [0, 2, 2], sizes = [4, 32, 32], strides = [1, 1, 1]} : vector<4x34x34xf32> to vector<4x32x32xf32>
    %72 = vector.shape_cast %71 : vector<4x32x32xf32> to vector<4x1024xf32>
    %c8 = arith.constant 8 : index
    %c0_43 = arith.constant 0 : index
    %c0_44 = arith.constant 0 : index
    %73 = vector.load %arg4[%c8, %c0_43, %c0_44] : memref<9x8x4xf32, #tpu.memory_space<vmem>>, vector<1x8x4xf32>
    %74 = vector.shape_cast %73 : vector<1x8x4xf32> to vector<8x4xf32>
    %cst_45 = arith.constant dense<0.000000e+00> : vector<8x1024xf32>
    %75 = tpu.matmul %74, %72, %cst_45 {dimension_numbers = #tpu.dot_dimension_numbers<[1], [0], [0], [1], [0, 0, 1, 1], [], []>} : vector<8x4xf32>, vector<4x1024xf32>, vector<8x1024xf32> -> vector<8x1024xf32>
    %76 = arith.addf %70, %75 : vector<8x1024xf32>
    %c0_46 = arith.constant 0 : index
    %c0_47 = arith.constant 0 : index
    %77 = vector.load %arg5[%c0_46, %c0_47] : memref<8x1xf32, #tpu.memory_space<vmem>>, vector<8x1xf32>
    %78 = vector.broadcast %77 : vector<8x1xf32> to vector<8x1024xf32>
    %79 = arith.addf %76, %78 : vector<8x1024xf32>
    %cst_48 = arith.constant 0.000000e+00 : f32
    %80 = vector.broadcast %cst_48 : f32 to vector<8x1024xf32>
    %81 = arith.maximumf %79, %80 : vector<8x1024xf32>
    %c0_49 = arith.constant 0 : index
    %c0_50 = arith.constant 0 : index
    %c0_51 = arith.constant 0 : index
    %82 = vector.load %arg6[%c0_49, %c0_50, %c0_51] : memref<1x8x1024xf32, #tpu.memory_space<vmem>>, vector<1x8x1024xf32>
    %83 = vector.shape_cast %82 : vector<1x8x1024xf32> to vector<8x1024xf32>
    %84 = vector.shape_cast %81 : vector<8x1024xf32> to vector<1x8x1024xf32>
    tpu.vector_store %arg6[%c0_49, %c0_50, %c0_51], %84 {strides = array<i32>} : memref<1x8x1024xf32, #tpu.memory_space<vmem>>, vector<1x8x1024xf32>,
    return
  }
  func.func @transform_0(%arg0: i32) -> (i32, i32, i32, i32) {
    %c0_i32 = arith.constant 0 : i32
    %c0_i32_0 = arith.constant 0 : i32
    %c0_i32_1 = arith.constant 0 : i32
    %c0_i32_2 = arith.constant 0 : i32
    return %arg0, %c0_i32, %c0_i32_0, %c0_i32_1 : i32, i32, i32, i32
  }
  func.func @transform_1(%arg0: i32) -> (i32, i32) {
    %c0_i32 = arith.constant 0 : i32
    %c0_i32_0 = arith.constant 0 : i32
    %c0_i32_1 = arith.constant 0 : i32
    return %c0_i32, %c0_i32_0 : i32, i32
  }
  func.func @transform_2(%arg0: i32) -> (i32, i32) {
    %c0_i32 = arith.constant 0 : i32
    %c0_i32_0 = arith.constant 0 : i32
    %c0_i32_1 = arith.constant 0 : i32
    return %c0_i32, %c0_i32_0 : i32, i32
  }
  func.func @transform_3(%arg0: i32) -> (i32, i32, i32) {
    %c0_i32 = arith.constant 0 : i32
    %c0_i32_0 = arith.constant 0 : i32
    %c0_i32_1 = arith.constant 0 : i32
    %c0_i32_2 = arith.constant 0 : i32
    return %c0_i32, %c0_i32_0, %c0_i32_1 : i32, i32, i32
  }
  func.func @transform_4(%arg0: i32) -> (i32, i32) {
    %c0_i32 = arith.constant 0 : i32
    %c0_i32_0 = arith.constant 0 : i32
    %c0_i32_1 = arith.constant 0 : i32
    return %c0_i32, %c0_i32_0 : i32, i32
  }
  func.func @transform_5(%arg0: i32) -> (i32, i32, i32) {
    %c0_i32 = arith.constant 0 : i32
    %c0_i32_0 = arith.constant 0 : i32
    %c0_i32_1 = arith.constant 0 : i32
    return %arg0, %c0_i32, %c0_i32_0 : i32, i32, i32
  }
}

</mosaic_0001>

<llo_original>
// kernel: tpu_custom_call.1
$region0: #{tpu_custom_call.1}
  #allocation0 [shape = 'u32[]', space=smem, size = 0x4, offset = 0x4, fixed_abs, tag = 'smem constant byte address 0x4 - core index']
  #allocation1 [shape = 'u32[144,128]{1,0:T(1,128)}', space=vmem, size = 0x12000, scoped, tag = 'internal scratch']
  %s0 = inlined_call_operand.vmem [shape: f32[2,4,16,16], index: 0, kind: input, shape index: {}]
  %s1 = inlined_call_operand.vmem [shape: f32[34,16], index: 1, kind: input, shape index: {}]
  %s2 = inlined_call_operand.vmem [shape: f32[16,34], index: 2, kind: input, shape index: {}]
  %s3 = inlined_call_operand.vmem [shape: f32[9,8,4], index: 3, kind: input, shape index: {}]
  %s4 = inlined_call_operand.vmem [shape: f32[8,1], index: 4, kind: input, shape index: {}]
  %s5 = inlined_call_operand.hbm [shape: f32[2,8,1024], index: 5, kind: output, shape index: {}]
  %s6 = sld [smem:[#allocation0]]
  $region53: #{tpu_custom_call.1} parent=0
    _
  %s8 = ssub.s32 1, %s6
  %s9 = scalar_select 0, %s8, %s6
  $region1: #{tpu_custom_call.1} parent=0
    #allocation2 [shape = 'u8[65536]{0}', space=vmem, size = 0x10000, scoped, tag = 'output window, operand 0']
    #allocation3 [shape = 's32[2]{0}', space=sflag, size = 0x8, scoped, tag = 'scoped memory for tpu_custom_call.1']
    %10 = vsyncpa [#allocation3], 0
    %s11 = scalar_lea.sflag [#allocation3], 1
    %12 = vsyncpa %s11, 0
    loop: start=0, step=1, limit=4
    $region2: #{tpu_custom_call.1} parent=1 // loop_pre_header
      _
    $region3: #{tpu_custom_call.1} parent=1 // loop_header
      %s14 = sphi 0, %s18
      %p15 = scmp.ge.s32.totalorder %s14, 4
      %s24 = sphi 0, %s26
      %s27 = sphi 0, %s24
      %s28 = sphi 0, %s27
      %s44 = sphi 0, %s28
      %s48 = sphi 0, %s48
      %s50 = sphi 0, %s48
      %s51 = sphi 0, %s50
      %s65 = sphi 0, %s51
      %s69 = sphi 0, %s69
      %s71 = sphi 0, %s69
      %s72 = sphi 0, %s71
      %s86 = sphi 0, %s72
      %s90 = sphi 0, %s90
      %s92 = sphi 0, %s90
      %s93 = sphi 0, %s92
      %s107 = sphi 0, %s93
      %s111 = sphi 0, %s111
      %s113 = sphi 0, %s111
      %s114 = sphi 0, %s113
      %s128 = sphi 0, %s114
      %s134 = sphi 0, %s136
      %s137 = sphi 0, %s134
      %s138 = sphi 0, %s137
      %s154 = sphi 0, %s138
    $region4: #{tpu_custom_call.1} parent=1 // loop_header_branch
      %17 = sbr.rel (%p15) target = $region8
    $region5: #{tpu_custom_call.1} parent=1 // loop_body
      %s19 = ssub.s32 %s14, 1
      %s20 = ssub.s32 %s14, 2
      %s21 = sadd.s32 %s14, 1
      %s22 = ssub.s32 %s14, %s21
      %p23 = scmp.eq.s32.totalorder %s22, 0
      %s25 = sadd.s32 %s24, 1
      %s26 = scalar_select %p23, %s24, %s25
      %p29 = pneg %p23
      %p30 = scmp.eq.s32.totalorder %s14, 1
      %p31 = por %p29, %p30
      %p32 = scmp.ne.s32.totalorder %s24, %s27
      %p33 = scmp.eq.s32.totalorder %s14, 0
      %p34 = por %p32, %p33
      %p35 = scmp.ne.s32.totalorder %s24, %s27
      %p36 = scmp.eq.s32.totalorder %s19, 1
      %p37 = por %p35, %p36
      %p38 = scmp.ne.s32.totalorder %s27, %s28
      %p39 = scmp.eq.s32.totalorder %s19, 0
      %p40 = por %p38, %p39
      %p41 = scmp.ne.s32.totalorder %s27, %s28
      %p42 = scmp.eq.s32.totalorder %s20, 1
      %p43 = por %p41, %p42
      %p45 = scmp.ne.s32.totalorder %s28, %s44
      %p46 = scmp.eq.s32.totalorder %s20, 0
      %p47 = por %p45, %p46
      %s49 = sadd.s32 %s48, 1
      %p52 = scmp.eq.s32.totalorder %s14, 1
      %p53 = scmp.ne.s32.totalorder %s48, %s50
      %p54 = scmp.eq.s32.totalorder %s14, 0
      %p55 = por %p53, %p54
      %p56 = scmp.ne.s32.totalorder %s48, %s50
      %p57 = scmp.eq.s32.totalorder %s19, 1
      %p58 = por %p56, %p57
      %p59 = scmp.ne.s32.totalorder %s50, %s51
      %p60 = scmp.eq.s32.totalorder %s19, 0
      %p61 = por %p59, %p60
      %p62 = scmp.ne.s32.totalorder %s50, %s51
      %p63 = scmp.eq.s32.totalorder %s20, 1
      %p64 = por %p62, %p63
      %p66 = scmp.ne.s32.totalorder %s51, %s65
      %p67 = scmp.eq.s32.totalorder %s20, 0
      %p68 = por %p66, %p67
      %s70 = sadd.s32 %s69, 1
      %p73 = scmp.eq.s32.totalorder %s14, 1
      %p74 = scmp.ne.s32.totalorder %s69, %s71
      %p75 = scmp.eq.s32.totalorder %s14, 0
      %p76 = por %p74, %p75
      %p77 = scmp.ne.s32.totalorder %s69, %s71
      %p78 = scmp.eq.s32.totalorder %s19, 1
      %p79 = por %p77, %p78
      %p80 = scmp.ne.s32.totalorder %s71, %s72
      %p81 = scmp.eq.s32.totalorder %s19, 0
      %p82 = por %p80, %p81
      %p83 = scmp.ne.s32.totalorder %s71, %s72
      %p84 = scmp.eq.s32.totalorder %s20, 1
      %p85 = por %p83, %p84
      %p87 = scmp.ne.s32.totalorder %s72, %s86
      %p88 = scmp.eq.s32.totalorder %s20, 0
      %p89 = por %p87, %p88
      %s91 = sadd.s32 %s90, 1
      %p94 = scmp.eq.s32.totalorder %s14, 1
      %p95 = scmp.ne.s32.totalorder %s90, %s92
      %p96 = scmp.eq.s32.totalorder %s14, 0
      %p97 = por %p95, %p96
      %p98 = scmp.ne.s32.totalorder %s90, %s92
      %p99 = scmp.eq.s32.totalorder %s19, 1
      %p100 = por %p98, %p99
      %p101 = scmp.ne.s32.totalorder %s92, %s93
      %p102 = scmp.eq.s32.totalorder %s19, 0
      %p103 = por %p101, %p102
      %p104 = scmp.ne.s32.totalorder %s92, %s93
      %p105 = scmp.eq.s32.totalorder %s20, 1
      %p106 = por %p104, %p105
      %p108 = scmp.ne.s32.totalorder %s93, %s107
      %p109 = scmp.eq.s32.totalorder %s20, 0
      %p110 = por %p108, %p109
      %s112 = sadd.s32 %s111, 1
      %p115 = scmp.eq.s32.totalorder %s14, 1
      %p116 = scmp.ne.s32.totalorder %s111, %s113
      %p117 = scmp.eq.s32.totalorder %s14, 0
      %p118 = por %p116, %p117
      %p119 = scmp.ne.s32.totalorder %s111, %s113
      %p120 = scmp.eq.s32.totalorder %s19, 1
      %p121 = por %p119, %p120
      %p122 = scmp.ne.s32.totalorder %s113, %s114
      %p123 = scmp.eq.s32.totalorder %s19, 0
      %p124 = por %p122, %p123
      %p125 = scmp.ne.s32.totalorder %s113, %s114
      %p126 = scmp.eq.s32.totalorder %s20, 1
      %p127 = por %p125, %p126
      %p129 = scmp.ne.s32.totalorder %s114, %s128
      %p130 = scmp.eq.s32.totalorder %s20, 0
      %p131 = por %p129, %p130
      %s132 = ssub.s32 %s14, %s21
      %p133 = scmp.eq.s32.totalorder %s132, 0
      %s135 = sadd.s32 %s134, 1
      %s136 = scalar_select %p133, %s134, %s135
      %p139 = pneg %p133
      %p140 = scmp.eq.s32.totalorder %s14, 1
      %p141 = por %p139, %p140
      %p142 = scmp.ne.s32.totalorder %s134, %s137
      %p143 = scmp.eq.s32.totalorder %s14, 0
      %p144 = por %p142, %p143
      %p145 = scmp.ne.s32.totalorder %s134, %s137
      %p146 = scmp.eq.s32.totalorder %s19, 1
      %p147 = por %p145, %p146
      %p148 = scmp.ne.s32.totalorder %s137, %s138
      %p149 = scmp.eq.s32.totalorder %s19, 0
      %p150 = por %p148, %p149
      %p151 = scmp.ne.s32.totalorder %s137, %s138
      %p152 = scmp.eq.s32.totalorder %s20, 1
      %p153 = por %p151, %p152
      %p155 = scmp.ne.s32.totalorder %s138, %s154
      %p156 = scmp.eq.s32.totalorder %s20, 0
      %p157 = por %p155, %p156
      %p158 = scmp.le.s32.totalorder 1, %s14
      %p159 = scmp.lt.s32.totalorder %s14, 3
      %p160 = pnand %p158, %p159
      %p161 = pneg %p160
      // Predicated region
      $region9: #{tpu_custom_call.1} parent=5 // pred_check
        _
      $region10: #{tpu_custom_call.1} parent=5 // pred_check_branch
        %163 = sbr.rel (%p160) target = $region12
      $region11: #{tpu_custom_call.1} parent=5 // pred_region
        %s164 = ssub.s32 %s14, 1
        // Predicated region
        $region13: #{tpu_custom_call.1} parent=11 // pred_check
          %p165 = pneg %p61
        $region14: #{tpu_custom_call.1} parent=11 // pred_check_branch
          %167 = sbr.rel (%p165) target = $region16
        $region15: #{tpu_custom_call.1} parent=11 // pred_region
          _
        $region16: #{tpu_custom_call.1} parent=11 // pred_fallthru
          _
        // Predicated region
        $region17: #{tpu_custom_call.1} parent=11 // pred_check
          %p168 = pneg %p82
        $region18: #{tpu_custom_call.1} parent=11 // pred_check_branch
          %170 = sbr.rel (%p168) target = $region20
        $region19: #{tpu_custom_call.1} parent=11 // pred_region
          _
        $region20: #{tpu_custom_call.1} parent=11 // pred_fallthru
          _
        // Predicated region
        $region21: #{tpu_custom_call.1} parent=11 // pred_check
          %p171 = pneg %p103
        $region22: #{tpu_custom_call.1} parent=11 // pred_check_branch
          %173 = sbr.rel (%p171) target = $region24
        $region23: #{tpu_custom_call.1} parent=11 // pred_region
          _
        $region24: #{tpu_custom_call.1} parent=11 // pred_fallthru
          _
        // Predicated region
        $region25: #{tpu_custom_call.1} parent=11 // pred_check
          %p174 = pneg %p124
        $region26: #{tpu_custom_call.1} parent=11 // pred_check_branch
          %176 = sbr.rel (%p174) target = $region28
        $region27: #{tpu_custom_call.1} parent=11 // pred_region
          _
        $region28: #{tpu_custom_call.1} parent=11 // pred_fallthru
          _
      $region12: #{tpu_custom_call.1} parent=5 // pred_fallthru
        _
      %p177 = scmp.lt.s32.totalorder %s14, 2
      // Predicated region
      $region29: #{tpu_custom_call.1} parent=5 // pred_check
        %p178 = pneg %p177
      $region30: #{tpu_custom_call.1} parent=5 // pred_check_branch
        %180 = sbr.rel (%p178) target = $region32
      $region31: #{tpu_custom_call.1} parent=5 // pred_region
        // Predicated region
        $region33: #{tpu_custom_call.1} parent=31 // pred_check
          %p181 = pneg %p34
        $region34: #{tpu_custom_call.1} parent=31 // pred_check_branch
          %183 = sbr.rel (%p181) target = $region36
        $region35: #{tpu_custom_call.1} parent=31 // pred_region
          %p184 = scmp.lt.s32.totalorder %s14, 1
          %s185 = scalar_select %p184, %s14, 1
          %s186 = smul.addr %s185, 8
          %s187 = smul.addr %s186, 8
          %s188 = scalar_lea.vmem %s0, %s187
        $region36: #{tpu_custom_call.1} parent=31 // pred_fallthru
          _
      $region32: #{tpu_custom_call.1} parent=5 // pred_fallthru
        _
      %p189 = scmp.le.s32.totalorder 1, %s14
      %p190 = scmp.lt.s32.totalorder %s14, 3
      %p191 = pnand %p189, %p190
      %p192 = pneg %p191
      // Predicated region
      $region37: #{tpu_custom_call.1} parent=5 // pred_check
        _
      $region38: #{tpu_custom_call.1} parent=5 // pred_check_branch
        %194 = sbr.rel (%p191) target = $region40
      $region39: #{tpu_custom_call.1} parent=5 // pred_region
        %s195 = ssub.s32 %s14, 1
        %p196 = scmp.lt.s32.totalorder %s19, 1
        %s197 = scalar_select %p196, %s19, 1
        %s198 = smul.addr %s197, 8
        %s199 = smul.addr %s198, 8
        %s200 = scalar_lea.vmem %s0, %s199
        %p201 = pneg %p40
        %p202 = pneg %p37
        %p203 = pneg %p61
        %p204 = pneg %p58
        %p205 = pneg %p82
        %p206 = pneg %p79
        %p207 = pneg %p103
        %p208 = pneg %p100
        %p209 = pneg %p124
        %p210 = pneg %p121
        %p211 = pneg %p150
        %p212 = pneg %p147
        %s213 = sand.u32 %s137, 1
        %s214 = scalar_lea.sflag [#allocation3], %s213
        %s215 = sand.u32 %s137, 1
        %s216 = smul.addr %s215, 64
        %s217 = scalar_lea.vmem [#allocation2], %s216
        %p218 = scmp.lt.s32.totalorder %s19, 1
        %s219 = scalar_select %p218, %s19, 1
        %s220 = smul.addr %s219, 8
        %s221 = smul.addr %s220, 8
        %s222 = scalar_lea.vmem %s0, %s221
        %v223 = vld [vmem:[%s222] sm:$0xff]
        %v224 = vld [vmem:[%s222 + $0x8] sm:$0xff]
        %v225 = vld [vmem:[%s222 + $0x10] sm:$0xff]
        %v226 = vld [vmem:[%s222 + $0x18] sm:$0xff]
        %v227 = vld [vmem:[%s222 + $0x20] sm:$0xff]
        %v228 = vld [vmem:[%s222 + $0x28] sm:$0xff]
        %v229 = vld [vmem:[%s222 + $0x30] sm:$0xff]
        %v230 = vld [vmem:[%s222 + $0x38] sm:$0xff]
        %v231 = vld [vmem:[%s2] sm:$0xff]
        %v232 = vld [vmem:[%s2 + $0x8] sm:$0xff]
        %vm233 = vcmask 130048
        %v235 = vsel %vm233, %v223, 0
        %v238 = vsel %vm233, %v224, 0
        %v241 = vsel %vm233, %v225, 0
        %v244 = vsel %vm233, %v226, 0
        %v247 = vsel %vm233, %v227, 0
        %v250 = vsel %vm233, %v228, 0
        %v253 = vsel %vm233, %v229, 0
        %v256 = vsel %vm233, %v230, 0
        %258 = vmatprep.subr.mxu0 0.0
        %259 = vmatpush1.msra.mxu0 %v231
        %260 = vmatprep.subr.mxu0 0.0
        %261 = vmatpush1.msra.mxu0 %v232
        %262 = vmatprep.subr.mxu0 0.0
        %263 = vmatpush1.msra.mxu0 0.0
        %264 = vmatprep.subr.mxu0 0.0
        %265 = vmatpush1.msra.mxu0 0.0
        %266 = vmatprep.subr.mxu0 0.0
        %267 = vmatpush1.msra.mxu0 0.0
        %268 = vmatprep.subr.mxu0 0.0
        %269 = vmatpush1.msra.mxu0 0.0
        %270 = vmatprep.subr.mxu0 0.0
        %271 = vmatpush1.msra.mxu0 0.0
        %272 = vmatprep.subr.mxu0 0.0
        %273 = vmatpush1.msra.mxu0 0.0
        %274 = vmatprep.subr.mxu0 0.0
        %275 = vmatpush1.msra.mxu0 0.0
        %276 = vmatprep.subr.mxu0 0.0
        %277 = vmatpush1.msra.mxu0 0.0
        %278 = vmatprep.subr.mxu0 0.0
        %279 = vmatpush1.msra.mxu0 0.0
        %280 = vmatprep.subr.mxu0 0.0
        %281 = vmatpush1.msra.mxu0 0.0
        %282 = vmatprep.subr.mxu0 0.0
        %283 = vmatpush1.msra.mxu0 0.0
        %284 = vmatprep.subr.mxu0 0.0
        %285 = vmatpush1.msra.mxu0 0.0
        %286 = vmatprep.subr.mxu0 0.0
        %287 = vmatpush1.msra.mxu0 0.0
        %288 = vmatprep.subr.mxu0 0.0
        %289 = vmatpush1.msra.mxu0 0.0
        %290 = vmatprep.subr.mxu0 0.0
        %291 = vmatpush1.msra.mxu0 0.0
        %292 = vmatprep.subr.mxu0 0.0
        %293 = vmatpush1.msra.mxu0 0.0
        %294 = vmatprep.subr.mxu0 0.0
        %295 = vmatpush1.msra.mxu0 0.0
        %296 = vmatprep.subr.mxu0 0.0
        %297 = vmatpush1.msra.mxu0 0.0
        %298 = vmatprep.subr.mxu0 0.0
        %299 = vmatpush1.msra.mxu0 0.0
        %300 = vmatprep.subr.mxu0 0.0
        %301 = vmatpush1.msra.mxu0 0.0
        %302 = vmatprep.subr.mxu0 0.0
        %303 = vmatpush1.msra.mxu0 0.0
        %304 = vmatprep.subr.mxu0 0.0
        %305 = vmatpush1.msra.mxu0 0.0
        %306 = vmatprep.subr.mxu0 0.0
        %307 = vmatpush1.msra.mxu0 0.0
        %308 = vmatprep.subr.mxu0 0.0
        %309 = vmatpush1.msra.mxu0 0.0
        %310 = vmatprep.subr.mxu0 0.0
        %311 = vmatpush1.msra.mxu0 0.0
        %312 = vmatprep.subr.mxu0 0.0
        %313 = vmatpush1.msra.mxu0 0.0
        %314 = vmatprep.subr.mxu0 0.0
        %315 = vmatpush1.msra.mxu0 0.0
        %316 = vmatprep.subr.mxu0 0.0
        %317 = vmatpush1.msra.mxu0 0.0
        %318 = vmatprep.subr.mxu0 0.0
        %319 = vmatpush1.msra.mxu0 0.0
        %320 = vmatprep.subr.mxu0 0.0
        %321 = vmatpush1.msra.mxu0 0.0
        %322 = vmatprep.mubr.f32.mxu0 0.0
        %323 = vmatmul.mubr.f32.gmra.mrb[0].mxu0 %v235
        %v324 = vpop.f32.mrb[0].mxu0
        %v325 = vadd.f32 0.0, %v324
        %v326 = vpop.f32.mrb[0].mxu0
        %327 = vmatprep.mubr.f32.mxu0 0.0
        %328 = vmatmul.mubr.f32.gmra.mrb[0].mxu0 %v238
        %v329 = vpop.f32.mrb[0].mxu0
        %v330 = vadd.f32 0.0, %v329
        %v331 = vpop.f32.mrb[0].mxu0
        %332 = vmatprep.mubr.f32.mxu0 0.0
        %333 = vmatmul.mubr.f32.gmra.mrb[0].mxu0 %v241
        %v334 = vpop.f32.mrb[0].mxu0
        %v335 = vadd.f32 0.0, %v334
        %v336 = vpop.f32.mrb[0].mxu0
        %337 = vmatprep.mubr.f32.mxu0 0.0
        %338 = vmatmul.mubr.f32.gmra.mrb[0].mxu0 %v244
        %v339 = vpop.f32.mrb[0].mxu0
        %v340 = vadd.f32 0.0, %v339
        %v341 = vpop.f32.mrb[0].mxu0
        %342 = vmatprep.mubr.f32.mxu0 0.0
        %343 = vmatmul.mubr.f32.gmra.mrb[0].mxu0 %v247
        %v344 = vpop.f32.mrb[0].mxu0
        %v345 = vadd.f32 0.0, %v344
        %v346 = vpop.f32.mrb[0].mxu0
        %347 = vmatprep.mubr.f32.mxu0 0.0
        %348 = vmatmul.mubr.f32.gmra.mrb[0].mxu0 %v250
        %v349 = vpop.f32.mrb[0].mxu0
        %v350 = vadd.f32 0.0, %v349
        %v351 = vpop.f32.mrb[0].mxu0
        %352 = vmatprep.mubr.f32.mxu0 0.0
        %353 = vmatmul.mubr.f32.gmra.mrb[0].mxu0 %v253
        %v354 = vpop.f32.mrb[0].mxu0
        %v355 = vadd.f32 0.0, %v354
        %v356 = vpop.f32.mrb[0].mxu0
        %357 = vmatprep.mubr.f32.mxu0 0.0
        %358 = vmatmul.mubr.f32.gmra.mrb[0].mxu0 %v256
        %v359 = vpop.f32.mrb[0].mxu0
        %v360 = vadd.f32 0.0, %v359
        %v361 = vpop.f32.mrb[0].mxu0
        %362 = vdwg.mxu0
        %v363 = vld [vmem:[%s1] sm:$0xff]
        %v364 = vld [vmem:[%s1 + $0x8] sm:$0xff]
        %v365 = vld [vmem:[%s1 + $0x10] sm:$0xff]
        %v366 = vld [vmem:[%s1 + $0x18] sm:$0xff]
        %v367 = vld [vmem:[%s1 + $0x20] sm:$0x3]
        %v369 = vsel %vm233, %v363, 0
        %v372 = vsel %vm233, %v364, 0
        %v375 = vsel %vm233, %v365, 0
        %v378 = vsel %vm233, %v366, 0
        %v381 = vsel %vm233, %v367, 0
        %383 = vmatprep.subr.mxu0 0.0
        %384 = vmatpush1.msra.mxu0 %v325
        %385 = vmatprep.subr.mxu0 0.0
        %386 = vmatpush1.msra.mxu0 %v330
        %387 = vmatprep.subr.mxu0 0.0
        %388 = vmatpush1.msra.mxu0 0.0
        %389 = vmatprep.subr.mxu0 0.0
        %390 = vmatpush1.msra.mxu0 0.0
        %391 = vmatprep.subr.mxu0 0.0
        %392 = vmatpush1.msra.mxu0 0.0
        %393 = vmatprep.subr.mxu0 0.0
        %394 = vmatpush1.msra.mxu0 0.0
        %395 = vmatprep.subr.mxu0 0.0
        %396 = vmatpush1.msra.mxu0 0.0
        %397 = vmatprep.subr.mxu0 0.0
        %398 = vmatpush1.msra.mxu0 0.0
        %399 = vmatprep.subr.mxu0 0.0
        %400 = vmatpush1.msra.mxu0 0.0
        %401 = vmatprep.subr.mxu0 0.0
        %402 = vmatpush1.msra.mxu0 0.0
        %403 = vmatprep.subr.mxu0 0.0
        %404 = vmatpush1.msra.mxu0 0.0
        %405 = vmatprep.subr.mxu0 0.0
        %406 = vmatpush1.msra.mxu0 0.0
        %407 = vmatprep.subr.mxu0 0.0
        %408 = vmatpush1.msra.mxu0 0.0
        %409 = vmatprep.subr.mxu0 0.0
        %410 = vmatpush1.msra.mxu0 0.0
        %411 = vmatprep.subr.mxu0 0.0
        %412 = vmatpush1.msra.mxu0 0.0
        %413 = vmatprep.subr.mxu0 0.0
        %414 = vmatpush1.msra.mxu0 0.0
        %415 = vmatprep.subr.mxu0 0.0
        %416 = vmatpush1.msra.mxu0 0.0
        %417 = vmatprep.subr.mxu0 0.0
        %418 = vmatpush1.msra.mxu0 0.0
        %419 = vmatprep.subr.mxu0 0.0
        %420 = vmatpush1.msra.mxu0 0.0
        %421 = vmatprep.subr.mxu0 0.0
        %422 = vmatpush1.msra.mxu0 0.0
        %423 = vmatprep.subr.mxu0 0.0
        %424 = vmatpush1.msra.mxu0 0.0
        %425 = vmatprep.subr.mxu0 0.0
        %426 = vmatpush1.msra.mxu0 0.0
        %427 = vmatprep.subr.mxu0 0.0
        %428 = vmatpush1.msra.mxu0 0.0
        %429 = vmatprep.subr.mxu0 0.0
        %430 = vmatpush1.msra.mxu0 0.0
        %431 = vmatprep.subr.mxu0 0.0
        %432 = vmatpush1.msra.mxu0 0.0
        %433 = vmatprep.subr.mxu0 0.0
        %434 = vmatpush1.msra.mxu0 0.0
        %435 = vmatprep.subr.mxu0 0.0
        %436 = vmatpush1.msra.mxu0 0.0
        %437 = vmatprep.subr.mxu0 0.0
        %438 = vmatpush1.msra.mxu0 0.0
        %439 = vmatprep.subr.mxu0 0.0
        %440 = vmatpush1.msra.mxu0 0.0
        %441 = vmatprep.subr.mxu0 0.0
        %442 = vmatpush1.msra.mxu0 0.0
        %443 = vmatprep.subr.mxu0 0.0
        %444 = vmatpush1.msra.mxu0 0.0
        %445 = vmatprep.subr.mxu0 0.0
        %446 = vmatpush1.msra.mxu0 0.0
        %447 = vmatprep.mubr.f32.mxu0 0.0
        %448 = vmatmul.mubr.f32.gmra.mrb[0].mxu0 %v369
        %v449 = vpop.f32.mrb[0].mxu0
        %v450 = vadd.f32 0.0, %v449
        %v451 = vpop.f32.mrb[0].mxu0
        %452 = vmatprep.mubr.f32.mxu0 0.0
        %453 = vmatmul.mubr.f32.gmra.mrb[0].mxu0 %v372
        %v454 = vpop.f32.mrb[0].mxu0
        %v455 = vadd.f32 0.0, %v454
        %v456 = vpop.f32.mrb[0].mxu0
        %457 = vmatprep.mubr.f32.mxu0 0.0
        %458 = vmatmul.mubr.f32.gmra.mrb[0].mxu0 %v375
        %v459 = vpop.f32.mrb[0].mxu0
        %v460 = vadd.f32 0.0, %v459
        %v461 = vpop.f32.mrb[0].mxu0
        %462 = vmatprep.mubr.f32.mxu0 0.0
        %463 = vmatmul.mubr.f32.gmra.mrb[0].mxu0 %v378
        %v464 = vpop.f32.mrb[0].mxu0
        %v465 = vadd.f32 0.0, %v464
        %v466 = vpop.f32.mrb[0].mxu0
        %467 = vmatprep.mubr.f32.mxu0 0.0
        %468 = vmatmul.mubr.f32.gmra.mrb[0].mxu0 %v381
        %v469 = vpop.f32.mrb[0].mxu0
        %v470 = vadd.f32 0.0, %v469
        %v471 = vpop.f32.mrb[0].mxu0
        %472 = vdwg.mxu0
        %473 = vmatprep.subr.mxu0 0.0
        %474 = vmatpush1.msra.mxu0 %v335
        %475 = vmatprep.subr.mxu0 0.0
        %476 = vmatpush1.msra.mxu0 %v340
        %477 = vmatprep.subr.mxu0 0.0
        %478 = vmatpush1.msra.mxu0 0.0
        %479 = vmatprep.subr.mxu0 0.0
        %480 = vmatpush1.msra.mxu0 0.0
        %481 = vmatprep.subr.mxu0 0.0
        %482 = vmatpush1.msra.mxu0 0.0
        %483 = vmatprep.subr.mxu0 0.0
        %484 = vmatpush1.msra.mxu0 0.0
        %485 = vmatprep.subr.mxu0 0.0
        %486 = vmatpush1.msra.mxu0 0.0
        %487 = vmatprep.subr.mxu0 0.0
        %488 = vmatpush1.msra.mxu0 0.0
        %489 = vmatprep.subr.mxu0 0.0
        %490 = vmatpush1.msra.mxu0 0.0
        %491 = vmatprep.subr.mxu0 0.0
        %492 = vmatpush1.msra.mxu0 0.0
        %493 = vmatprep.subr.mxu0 0.0
        %494 = vmatpush1.msra.mxu0 0.0
        %495 = vmatprep.subr.mxu0 0.0
        %496 = vmatpush1.msra.mxu0 0.0
        %497 = vmatprep.subr.mxu0 0.0
        %498 = vmatpush1.msra.mxu0 0.0
        %499 = vmatprep.subr.mxu0 0.0
        %500 = vmatpush1.msra.mxu0 0.0
        %501 = vmatprep.subr.mxu0 0.0
        %502 = vmatpush1.msra.mxu0 0.0
        %503 = vmatprep.subr.mxu0 0.0
        %504 = vmatpush1.msra.mxu0 0.0
        %505 = vmatprep.subr.mxu0 0.0
        %506 = vmatpush1.msra.mxu0 0.0
        %507 = vmatprep.subr.mxu0 0.0
        %508 = vmatpush1.msra.mxu0 0.0
        %509 = vmatprep.subr.mxu0 0.0
        %510 = vmatpush1.msra.mxu0 0.0
        %511 = vmatprep.subr.mxu0 0.0
        %512 = vmatpush1.msra.mxu0 0.0
        %513 = vmatprep.subr.mxu0 0.0
        %514 = vmatpush1.msra.mxu0 0.0
        %515 = vmatprep.subr.mxu0 0.0
        %516 = vmatpush1.msra.mxu0 0.0
        %517 = vmatprep.subr.mxu0 0.0
        %518 = vmatpush1.msra.mxu0 0.0
        %519 = vmatprep.subr.mxu0 0.0
        %520 = vmatpush1.msra.mxu0 0.0
        %521 = vmatprep.subr.mxu0 0.0
        %522 = vmatpush1.msra.mxu0 0.0
        %523 = vmatprep.subr.mxu0 0.0
        %524 = vmatpush1.msra.mxu0 0.0
        %525 = vmatprep.subr.mxu0 0.0
        %526 = vmatpush1.msra.mxu0 0.0
        %527 = vmatprep.subr.mxu0 0.0
        %528 = vmatpush1.msra.mxu0 0.0
        %529 = vmatprep.subr.mxu0 0.0
        %530 = vmatpush1.msra.mxu0 0.0
        %531 = vmatprep.subr.mxu0 0.0
        %532 = vmatpush1.msra.mxu0 0.0
        %533 = vmatprep.subr.mxu0 0.0
        %534 = vmatpush1.msra.mxu0 0.0
        %535 = vmatprep.subr.mxu0 0.0
        %536 = vmatpush1.msra.mxu0 0.0
        %537 = vmatprep.mubr.f32.mxu0 0.0
        %538 = vmatmul.mubr.f32.gmra.mrb[0].mxu0 %v369
        %v539 = vpop.f32.mrb[0].mxu0
        %v540 = vadd.f32 0.0, %v539
        %v541 = vpop.f32.mrb[0].mxu0
        %542 = vmatprep.mubr.f32.mxu0 0.0
        %543 = vmatmul.mubr.f32.gmra.mrb[0].mxu0 %v372
        %v544 = vpop.f32.mrb[0].mxu0
        %v545 = vadd.f32 0.0, %v544
        %v546 = vpop.f32.mrb[0].mxu0
        %547 = vmatprep.mubr.f32.mxu0 0.0
        %548 = vmatmul.mubr.f32.gmra.mrb[0].mxu0 %v375
        %v549 = vpop.f32.mrb[0].mxu0
        %v550 = vadd.f32 0.0, %v549
        %v551 = vpop.f32.mrb[0].mxu0
        %552 = vmatprep.mubr.f32.mxu0 0.0
        %553 = vmatmul.mubr.f32.gmra.mrb[0].mxu0 %v378
        %v554 = vpop.f32.mrb[0].mxu0
        %v555 = vadd.f32 0.0, %v554
        %v556 = vpop.f32.mrb[0].mxu0
        %557 = vmatprep.mubr.f32.mxu0 0.0
        %558 = vmatmul.mubr.f32.gmra.mrb[0].mxu0 %v381
        %v559 = vpop.f32.mrb[0].mxu0
        %v560 = vadd.f32 0.0, %v559
        %v561 = vpop.f32.mrb[0].mxu0
        %562 = vdwg.mxu0
        %563 = vmatprep.subr.mxu0 0.0
        %564 = vmatpush1.msra.mxu0 %v345
        %565 = vmatprep.subr.mxu0 0.0
        %566 = vmatpush1.msra.mxu0 %v350
        %567 = vmatprep.subr.mxu0 0.0
        %568 = vmatpush1.msra.mxu0 0.0
        %569 = vmatprep.subr.mxu0 0.0
        %570 = vmatpush1.msra.mxu0 0.0
        %571 = vmatprep.subr.mxu0 0.0
        %572 = vmatpush1.msra.mxu0 0.0
        %573 = vmatprep.subr.mxu0 0.0
        %574 = vmatpush1.msra.mxu0 0.0
        %575 = vmatprep.subr.mxu0 0.0
        %576 = vmatpush1.msra.mxu0 0.0
        %577 = vmatprep.subr.mxu0 0.0
        %578 = vmatpush1.msra.mxu0 0.0
        %579 = vmatprep.subr.mxu0 0.0
        %580 = vmatpush1.msra.mxu0 0.0
        %581 = vmatprep.subr.mxu0 0.0
        %582 = vmatpush1.msra.mxu0 0.0
        %583 = vmatprep.subr.mxu0 0.0
        %584 = vmatpush1.msra.mxu0 0.0
        %585 = vmatprep.subr.mxu0 0.0
        %586 = vmatpush1.msra.mxu0 0.0
        %587 = vmatprep.subr.mxu0 0.0
        %588 = vmatpush1.msra.mxu0 0.0
        %589 = vmatprep.subr.mxu0 0.0
        %590 = vmatpush1.msra.mxu0 0.0
        %591 = vmatprep.subr.mxu0 0.0
        %592 = vmatpush1.msra.mxu0 0.0
        %593 = vmatprep.subr.mxu0 0.0
        %594 = vmatpush1.msra.mxu0 0.0
        %595 = vmatprep.subr.mxu0 0.0
        %596 = vmatpush1.msra.mxu0 0.0
        %597 = vmatprep.subr.mxu0 0.0
        %598 = vmatpush1.msra.mxu0 0.0
        %599 = vmatprep.subr.mxu0 0.0
        %600 = vmatpush1.msra.mxu0 0.0
        %601 = vmatprep.subr.mxu0 0.0
        %602 = vmatpush1.msra.mxu0 0.0
        %603 = vmatprep.subr.mxu0 0.0
        %604 = vmatpush1.msra.mxu0 0.0
        %605 = vmatprep.subr.mxu0 0.0
        %606 = vmatpush1.msra.mxu0 0.0
        %607 = vmatprep.subr.mxu0 0.0
        %608 = vmatpush1.msra.mxu0 0.0
        %609 = vmatprep.subr.mxu0 0.0
        %610 = vmatpush1.msra.mxu0 0.0
        %611 = vmatprep.subr.mxu0 0.0
        %612 = vmatpush1.msra.mxu0 0.0
        %613 = vmatprep.subr.mxu0 0.0
        %614 = vmatpush1.msra.mxu0 0.0
        %615 = vmatprep.subr.mxu0 0.0
        %616 = vmatpush1.msra.mxu0 0.0
        %617 = vmatprep.subr.mxu0 0.0
        %618 = vmatpush1.msra.mxu0 0.0
        %619 = vmatprep.subr.mxu0 0.0
        %620 = vmatpush1.msra.mxu0 0.0
        %621 = vmatprep.subr.mxu0 0.0
        %622 = vmatpush1.msra.mxu0 0.0
        %623 = vmatprep.subr.mxu0 0.0
        %624 = vmatpush1.msra.mxu0 0.0
        %625 = vmatprep.subr.mxu0 0.0
        %626 = vmatpush1.msra.mxu0 0.0
        %627 = vmatprep.mubr.f32.mxu0 0.0
        %628 = vmatmul.mubr.f32.gmra.mrb[0].mxu0 %v369
        %v629 = vpop.f32.mrb[0].mxu0
        %v630 = vadd.f32 0.0, %v629
        %v631 = vpop.f32.mrb[0].mxu0
        %632 = vmatprep.mubr.f32.mxu0 0.0
        %633 = vmatmul.mubr.f32.gmra.mrb[0].mxu0 %v372
        %v634 = vpop.f32.mrb[0].mxu0
        %v635 = vadd.f32 0.0, %v634
        %v636 = vpop.f32.mrb[0].mxu0
        %637 = vmatprep.mubr.f32.mxu0 0.0
        %638 = vmatmul.mubr.f32.gmra.mrb[0].mxu0 %v375
        %v639 = vpop.f32.mrb[0].mxu0
        %v640 = vadd.f32 0.0, %v639
        %v641 = vpop.f32.mrb[0].mxu0
        %642 = vmatprep.mubr.f32.mxu0 0.0
        %643 = vmatmul.mubr.f32.gmra.mrb[0].mxu0 %v378
        %v644 = vpop.f32.mrb[0].mxu0
        %v645 = vadd.f32 0.0, %v644
        %v646 = vpop.f32.mrb[0].mxu0
        %647 = vmatprep.mubr.f32.mxu0 0.0
        %648 = vmatmul.mubr.f32.gmra.mrb[0].mxu0 %v381
        %v649 = vpop.f32.mrb[0].mxu0
        %v650 = vadd.f32 0.0, %v649
        %v651 = vpop.f32.mrb[0].mxu0
        %652 = vdwg.mxu0
        %653 = vmatprep.subr.mxu0 0.0
        %654 = vmatpush1.msra.mxu0 %v355
        %655 = vmatprep.subr.mxu0 0.0
        %656 = vmatpush1.msra.mxu0 %v360
        %657 = vmatprep.subr.mxu0 0.0
        %658 = vmatpush1.msra.mxu0 0.0
        %659 = vmatprep.subr.mxu0 0.0
        %660 = vmatpush1.msra.mxu0 0.0
        %661 = vmatprep.subr.mxu0 0.0
        %662 = vmatpush1.msra.mxu0 0.0
        %663 = vmatprep.subr.mxu0 0.0
        %664 = vmatpush1.msra.mxu0 0.0
        %665 = vmatprep.subr.mxu0 0.0
        %666 = vmatpush1.msra.mxu0 0.0
        %667 = vmatprep.subr.mxu0 0.0
        %668 = vmatpush1.msra.mxu0 0.0
        %669 = vmatprep.subr.mxu0 0.0
        %670 = vmatpush1.msra.mxu0 0.0
        %671 = vmatprep.subr.mxu0 0.0
        %672 = vmatpush1.msra.mxu0 0.0
        %673 = vmatprep.subr.mxu0 0.0
        %674 = vmatpush1.msra.mxu0 0.0
        %675 = vmatprep.subr.mxu0 0.0
        %676 = vmatpush1.msra.mxu0 0.0
        %677 = vmatprep.subr.mxu0 0.0
        %678 = vmatpush1.msra.mxu0 0.0
        %679 = vmatprep.subr.mxu0 0.0
        %680 = vmatpush1.msra.mxu0 0.0
        %681 = vmatprep.subr.mxu0 0.0
        %682 = vmatpush1.msra.mxu0 0.0
        %683 = vmatprep.subr.mxu0 0.0
        %684 = vmatpush1.msra.mxu0 0.0
        %685 = vmatprep.subr.mxu0 0.0
        %686 = vmatpush1.msra.mxu0 0.0
        %687 = vmatprep.subr.mxu0 0.0
        %688 = vmatpush1.msra.mxu0 0.0
        %689 = vmatprep.subr.mxu0 0.0
        %690 = vmatpush1.msra.mxu0 0.0
        %691 = vmatprep.subr.mxu0 0.0
        %692 = vmatpush1.msra.mxu0 0.0
        %693 = vmatprep.subr.mxu0 0.0
        %694 = vmatpush1.msra.mxu0 0.0
        %695 = vmatprep.subr.mxu0 0.0
        %696 = vmatpush1.msra.mxu0 0.0
        %697 = vmatprep.subr.mxu0 0.0
        %698 = vmatpush1.msra.mxu0 0.0
        %699 = vmatprep.subr.mxu0 0.0
        %700 = vmatpush1.msra.mxu0 0.0
        %701 = vmatprep.subr.mxu0 0.0
        %702 = vmatpush1.msra.mxu0 0.0
        %703 = vmatprep.subr.mxu0 0.0
        %704 = vmatpush1.msra.mxu0 0.0
        %705 = vmatprep.subr.mxu0 0.0
        %706 = vmatpush1.msra.mxu0 0.0
        %707 = vmatprep.subr.mxu0 0.0
        %708 = vmatpush1.msra.mxu0 0.0
        %709 = vmatprep.subr.mxu0 0.0
        %710 = vmatpush1.msra.mxu0 0.0
        %711 = vmatprep.subr.mxu0 0.0
        %712 = vmatpush1.msra.mxu0 0.0
        %713 = vmatprep.subr.mxu0 0.0
        %714 = vmatpush1.msra.mxu0 0.0
        %715 = vmatprep.subr.mxu0 0.0
        %716 = vmatpush1.msra.mxu0 0.0
        %717 = vmatprep.mubr.f32.mxu0 0.0
        %718 = vmatmul.mubr.f32.gmra.mrb[0].mxu0 %v369
        %v719 = vpop.f32.mrb[0].mxu0
        %v720 = vadd.f32 0.0, %v719
        %v721 = vpop.f32.mrb[0].mxu0
        %722 = vmatprep.mubr.f32.mxu0 0.0
        %723 = vmatmul.mubr.f32.gmra.mrb[0].mxu0 %v372
        %v724 = vpop.f32.mrb[0].mxu0
        %v725 = vadd.f32 0.0, %v724
        %v726 = vpop.f32.mrb[0].mxu0
        %727 = vmatprep.mubr.f32.mxu0 0.0
        %728 = vmatmul.mubr.f32.gmra.mrb[0].mxu0 %v375
        %v729 = vpop.f32.mrb[0].mxu0
        %v730 = vadd.f32 0.0, %v729
        %v731 = vpop.f32.mrb[0].mxu0
        %732 = vmatprep.mubr.f32.mxu0 0.0
        %733 = vmatmul.mubr.f32.gmra.mrb[0].mxu0 %v378
        %v734 = vpop.f32.mrb[0].mxu0
        %v735 = vadd.f32 0.0, %v734
        %v736 = vpop.f32.mrb[0].mxu0
        %737 = vmatprep.mubr.f32.mxu0 0.0
        %738 = vmatmul.mubr.f32.gmra.mrb[0].mxu0 %v381
        %v739 = vpop.f32.mrb[0].mxu0
        %v740 = vadd.f32 0.0, %v739
        %v741 = vpop.f32.mrb[0].mxu0
        %742 = vdwg.mxu0
        %v743 = vcombine.low %v450, %v630
        %v744 = vcombine.high %v450, %v630
        %v746 = vunpack.c.l.s4 1983009808
        %v747 = vunpack.c.0.s8 %v746
        %v748 = vlaneseq
        %v749 = vshrl.u32 %v748, 7
        %v750 = vsub.s32 %v747, %v749
        %v751 = vrot.slane %v743, %v750
        %v753 = vunpack.c.l.s4 1983009808
        %v754 = vunpack.c.0.s8 %v753
        %v755 = vlaneseq
        %v756 = vshrl.u32 %v755, 7
        %v757 = vsub.s32 %v754, %v756
        %v758 = vrot.slane %v744, %v757
        %v759 = vcombine.low %v540, %v720
        %v760 = vcombine.high %v540, %v720
        %v762 = vunpack.c.l.s4 1983009808
        %v763 = vunpack.c.0.s8 %v762
        %v764 = vlaneseq
        %v765 = vshrl.u32 %v764, 7
        %v766 = vsub.s32 %v763, %v765
        %v767 = vrot.slane %v759, %v766
        %v769 = vunpack.c.l.s4 1983009808
        %v770 = vunpack.c.0.s8 %v769
        %v771 = vlaneseq
        %v772 = vshrl.u32 %v771, 7
        %v773 = vsub.s32 %v770, %v772
        %v774 = vrot.slane %v760, %v773
        %v775 = vcombine.low %v751, %v767
        %v776 = vcombine.high %v751, %v767
        %v778 = vunpack.c.l.s4 1934713408
        %v779 = vunpack.c.0.s8 %v778
        %v780 = vlaneseq
        %v781 = vshrl.u32 %v780, 7
        %v782 = vsub.s32 %v779, %v781
        %v783 = vrot.slane %v775, %v782
        %v785 = vunpack.c.l.s4 1934713408
        %v786 = vunpack.c.0.s8 %v785
        %v787 = vlaneseq
        %v788 = vshrl.u32 %v787, 7
        %v789 = vsub.s32 %v786, %v788
        %v790 = vrot.slane %v776, %v789
        %v791 = vcombine.low %v758, %v774
        %v792 = vcombine.high %v758, %v774
        %v794 = vunpack.c.l.s4 1934713408
        %v795 = vunpack.c.0.s8 %v794
        %v796 = vlaneseq
        %v797 = vshrl.u32 %v796, 7
        %v798 = vsub.s32 %v795, %v797
        %v799 = vrot.slane %v791, %v798
        %v801 = vunpack.c.l.s4 1934713408
        %v802 = vunpack.c.0.s8 %v801
        %v803 = vlaneseq
        %v804 = vshrl.u32 %v803, 7
        %v805 = vsub.s32 %v802, %v804
        %v806 = vrot.slane %v792, %v805
        %v807 = vcombine.high %v783, 0.0
        %v808 = vcombine.high %v790, 0.0
        %v809 = vcombine.high %v799, 0.0
        %v810 = vcombine.high %v806, 0.0
        %v811 = vcombine.low %v455, %v635
        %v812 = vcombine.high %v455, %v635
        %v814 = vunpack.c.l.s4 1983009808
        %v815 = vunpack.c.0.s8 %v814
        %v816 = vlaneseq
        %v817 = vshrl.u32 %v816, 7
        %v818 = vsub.s32 %v815, %v817
        %v819 = vrot.slane %v811, %v818
        %v821 = vunpack.c.l.s4 1983009808
        %v822 = vunpack.c.0.s8 %v821
        %v823 = vlaneseq
        %v824 = vshrl.u32 %v823, 7
        %v825 = vsub.s32 %v822, %v824
        %v826 = vrot.slane %v812, %v825
        %v827 = vcombine.low %v545, %v725
        %v828 = vcombine.high %v545, %v725
        %v830 = vunpack.c.l.s4 1983009808
        %v831 = vunpack.c.0.s8 %v830
        %v832 = vlaneseq
        %v833 = vshrl.u32 %v832, 7
        %v834 = vsub.s32 %v831, %v833
        %v835 = vrot.slane %v827, %v834
        %v837 = vunpack.c.l.s4 1983009808
        %v838 = vunpack.c.0.s8 %v837
        %v839 = vlaneseq
        %v840 = vshrl.u32 %v839, 7
        %v841 = vsub.s32 %v838, %v840
        %v842 = vrot.slane %v828, %v841
        %v843 = vcombine.low %v819, %v835
        %v844 = vcombine.high %v819, %v835
        %v846 = vunpack.c.l.s4 1934713408
        %v847 = vunpack.c.0.s8 %v846
        %v848 = vlaneseq
        %v849 = vshrl.u32 %v848, 7
        %v850 = vsub.s32 %v847, %v849
        %v851 = vrot.slane %v843, %v850
        %v853 = vunpack.c.l.s4 1934713408
        %v854 = vunpack.c.0.s8 %v853
        %v855 = vlaneseq
        %v856 = vshrl.u32 %v855, 7
        %v857 = vsub.s32 %v854, %v856
        %v858 = vrot.slane %v844, %v857
        %v859 = vcombine.low %v826, %v842
        %v860 = vcombine.high %v826, %v842
        %v862 = vunpack.c.l.s4 1934713408
        %v863 = vunpack.c.0.s8 %v862
        %v864 = vlaneseq
        %v865 = vshrl.u32 %v864, 7
        %v866 = vsub.s32 %v863, %v865
        %v867 = vrot.slane %v859, %v866
        %v869 = vunpack.c.l.s4 1934713408
        %v870 = vunpack.c.0.s8 %v869
        %v871 = vlaneseq
        %v872 = vshrl.u32 %v871, 7
        %v873 = vsub.s32 %v870, %v872
        %v874 = vrot.slane %v860, %v873
        %v875 = vcombine.high %v851, 0.0
        %v876 = vcombine.high %v858, 0.0
        %v877 = vcombine.high %v867, 0.0
        %v878 = vcombine.high %v874, 0.0
        %v879 = vcombine.low %v460, %v640
        %v880 = vcombine.high %v460, %v640
        %v882 = vunpack.c.l.s4 1983009808
        %v883 = vunpack.c.0.s8 %v882
        %v884 = vlaneseq
        %v885 = vshrl.u32 %v884, 7
        %v886 = vsub.s32 %v883, %v885
        %v887 = vrot.slane %v879, %v886
        %v889 = vunpack.c.l.s4 1983009808
        %v890 = vunpack.c.0.s8 %v889
        %v891 = vlaneseq
        %v892 = vshrl.u32 %v891, 7
        %v893 = vsub.s32 %v890, %v892
        %v894 = vrot.slane %v880, %v893
        %v895 = vcombine.low %v550, %v730
        %v896 = vcombine.high %v550, %v730
        %v898 = vunpack.c.l.s4 1983009808
        %v899 = vunpack.c.0.s8 %v898
        %v900 = vlaneseq
        %v901 = vshrl.u32 %v900, 7
        %v902 = vsub.s32 %v899, %v901
        %v903 = vrot.slane %v895, %v902
        %v905 = vunpack.c.l.s4 1983009808
        %v906 = vunpack.c.0.s8 %v905
        %v907 = vlaneseq
        %v908 = vshrl.u32 %v907, 7
        %v909 = vsub.s32 %v906, %v908
        %v910 = vrot.slane %v896, %v909
        %v911 = vcombine.low %v887, %v903
        %v912 = vcombine.high %v887, %v903
        %v914 = vunpack.c.l.s4 1934713408
        %v915 = vunpack.c.0.s8 %v914
        %v916 = vlaneseq
        %v917 = vshrl.u32 %v916, 7
        %v918 = vsub.s32 %v915, %v917
        %v919 = vrot.slane %v911, %v918
        %v921 = vunpack.c.l.s4 1934713408
        %v922 = vunpack.c.0.s8 %v921
        %v923 = vlaneseq
        %v924 = vshrl.u32 %v923, 7
        %v925 = vsub.s32 %v922, %v924
        %v926 = vrot.slane %v912, %v925
        %v927 = vcombine.low %v894, %v910
        %v928 = vcombine.high %v894, %v910
        %v930 = vunpack.c.l.s4 1934713408
        %v931 = vunpack.c.0.s8 %v930
        %v932 = vlaneseq
        %v933 = vshrl.u32 %v932, 7
        %v934 = vsub.s32 %v931, %v933
        %v935 = vrot.slane %v927, %v934
        %v937 = vunpack.c.l.s4 1934713408
        %v938 = vunpack.c.0.s8 %v937
        %v939 = vlaneseq
        %v940 = vshrl.u32 %v939, 7
        %v941 = vsub.s32 %v938, %v940
        %v942 = vrot.slane %v928, %v941
        %v943 = vcombine.high %v919, 0.0
        %v944 = vcombine.high %v926, 0.0
        %v945 = vcombine.high %v935, 0.0
        %v946 = vcombine.high %v942, 0.0
        %v947 = vcombine.low %v465, %v645
        %v948 = vcombine.high %v465, %v645
        %v950 = vunpack.c.l.s4 1983009808
        %v951 = vunpack.c.0.s8 %v950
        %v952 = vlaneseq
        %v953 = vshrl.u32 %v952, 7
        %v954 = vsub.s32 %v951, %v953
        %v955 = vrot.slane %v947, %v954
        %v957 = vunpack.c.l.s4 1983009808
        %v958 = vunpack.c.0.s8 %v957
        %v959 = vlaneseq
        %v960 = vshrl.u32 %v959, 7
        %v961 = vsub.s32 %v958, %v960
        %v962 = vrot.slane %v948, %v961
        %v963 = vcombine.low %v555, %v735
        %v964 = vcombine.high %v555, %v735
        %v966 = vunpack.c.l.s4 1983009808
        %v967 = vunpack.c.0.s8 %v966
        %v968 = vlaneseq
        %v969 = vshrl.u32 %v968, 7
        %v970 = vsub.s32 %v967, %v969
        %v971 = vrot.slane %v963, %v970
        %v973 = vunpack.c.l.s4 1983009808
        %v974 = vunpack.c.0.s8 %v973
        %v975 = vlaneseq
        %v976 = vshrl.u32 %v975, 7
        %v977 = vsub.s32 %v974, %v976
        %v978 = vrot.slane %v964, %v977
        %v979 = vcombine.low %v955, %v971
        %v980 = vcombine.high %v955, %v971
        %v982 = vunpack.c.l.s4 1934713408
        %v983 = vunpack.c.0.s8 %v982
        %v984 = vlaneseq
        %v985 = vshrl.u32 %v984, 7
        %v986 = vsub.s32 %v983, %v985
        %v987 = vrot.slane %v979, %v986
        %v989 = vunpack.c.l.s4 1934713408
        %v990 = vunpack.c.0.s8 %v989
        %v991 = vlaneseq
        %v992 = vshrl.u32 %v991, 7
        %v993 = vsub.s32 %v990, %v992
        %v994 = vrot.slane %v980, %v993
        %v995 = vcombine.low %v962, %v978
        %v996 = vcombine.high %v962, %v978
        %v998 = vunpack.c.l.s4 1934713408
        %v999 = vunpack.c.0.s8 %v998
        %v1000 = vlaneseq
        %v1001 = vshrl.u32 %v1000, 7
        %v1002 = vsub.s32 %v999, %v1001
        %v1003 = vrot.slane %v995, %v1002
        %v1005 = vunpack.c.l.s4 1934713408
        %v1006 = vunpack.c.0.s8 %v1005
        %v1007 = vlaneseq
        %v1008 = vshrl.u32 %v1007, 7
        %v1009 = vsub.s32 %v1006, %v1008
        %v1010 = vrot.slane %v996, %v1009
        %v1011 = vcombine.high %v987, 0.0
        %v1012 = vcombine.high %v994, 0.0
        %v1013 = vcombine.high %v1003, 0.0
        %v1014 = vcombine.high %v1010, 0.0
        %1016 = vrot.lane.b32.xlu0 %v807, 32
        %v1017 = vpop.permute.xlu0 %1016
        %1020 = vrot.lane.b32.xlu0 %v790, 64
        %v1021 = vpop.permute.xlu0 %1020
        %1024 = vrot.lane.b32.xlu0 %v808, 96
        %v1025 = vpop.permute.xlu0 %1024
        %1028 = vrot.lane.b32.xlu0 %v809, 32
        %v1029 = vpop.permute.xlu0 %1028
        %1032 = vrot.lane.b32.xlu0 %v806, 64
        %v1033 = vpop.permute.xlu0 %1032
        %1036 = vrot.lane.b32.xlu0 %v810, 96
        %v1037 = vpop.permute.xlu0 %1036
        %1040 = vrot.lane.b32.xlu0 %v875, 32
        %v1041 = vpop.permute.xlu0 %1040
        %1044 = vrot.lane.b32.xlu0 %v858, 64
        %v1045 = vpop.permute.xlu0 %1044
        %1048 = vrot.lane.b32.xlu0 %v876, 96
        %v1049 = vpop.permute.xlu0 %1048
        %1052 = vrot.lane.b32.xlu0 %v877, 32
        %v1053 = vpop.permute.xlu0 %1052
        %1056 = vrot.lane.b32.xlu0 %v874, 64
        %v1057 = vpop.permute.xlu0 %1056
        %1060 = vrot.lane.b32.xlu0 %v878, 96
        %v1061 = vpop.permute.xlu0 %1060
        %1064 = vrot.lane.b32.xlu0 %v943, 32
        %v1065 = vpop.permute.xlu0 %1064
        %1068 = vrot.lane.b32.xlu0 %v926, 64
        %v1069 = vpop.permute.xlu0 %1068
        %1072 = vrot.lane.b32.xlu0 %v944, 96
        %v1073 = vpop.permute.xlu0 %1072
        %1076 = vrot.lane.b32.xlu0 %v945, 32
        %v1077 = vpop.permute.xlu0 %1076
        %1080 = vrot.lane.b32.xlu0 %v942, 64
        %v1081 = vpop.permute.xlu0 %1080
        %1084 = vrot.lane.b32.xlu0 %v946, 96
        %v1085 = vpop.permute.xlu0 %1084
        %1088 = vrot.lane.b32.xlu0 %v1011, 32
        %v1089 = vpop.permute.xlu0 %1088
        %1092 = vrot.lane.b32.xlu0 %v994, 64
        %v1093 = vpop.permute.xlu0 %1092
        %1096 = vrot.lane.b32.xlu0 %v1012, 96
        %v1097 = vpop.permute.xlu0 %1096
        %1100 = vrot.lane.b32.xlu0 %v1013, 32
        %v1101 = vpop.permute.xlu0 %1100
        %1104 = vrot.lane.b32.xlu0 %v1010, 64
        %v1105 = vpop.permute.xlu0 %1104
        %1108 = vrot.lane.b32.xlu0 %v1014, 96
        %v1109 = vpop.permute.xlu0 %1108
        %vm1111 = vcmask 261120
        %v1112 = vsel %vm1111, %v783, %v1017
        %vm1113 = vcmask 523264
        %v1114 = vsel %vm1113, %v1112, %v1021
        %vm1115 = vcmask 785408
        %v1116 = vsel %vm1115, %v1114, %v1025
        %v1117 = vsel %vm1111, %v799, %v1029
        %v1118 = vsel %vm1113, %v1117, %v1033
        %v1119 = vsel %vm1115, %v1118, %v1037
        %v1120 = vsel %vm1111, %v851, %v1041
        %v1121 = vsel %vm1113, %v1120, %v1045
        %v1122 = vsel %vm1115, %v1121, %v1049
        %v1123 = vsel %vm1111, %v867, %v1053
        %v1124 = vsel %vm1113, %v1123, %v1057
        %v1125 = vsel %vm1115, %v1124, %v1061
        %v1126 = vsel %vm1111, %v919, %v1065
        %v1127 = vsel %vm1113, %v1126, %v1069
        %v1128 = vsel %vm1115, %v1127, %v1073
        %v1129 = vsel %vm1111, %v935, %v1077
        %v1130 = vsel %vm1113, %v1129, %v1081
        %v1131 = vsel %vm1115, %v1130, %v1085
        %v1132 = vsel %vm1111, %v987, %v1089
        %v1133 = vsel %vm1113, %v1132, %v1093
        %v1134 = vsel %vm1115, %v1133, %v1097
        %v1135 = vsel %vm1111, %v1003, %v1101
        %v1136 = vsel %vm1113, %v1135, %v1105
        %v1137 = vsel %vm1115, %v1136, %v1109
        %v1138 = vld [vmem:[%s3] sm:$0xff]
        %1155 = vrot.lane.b32.xlu0 %v450, 127
        %v1156 = vpop.permute.xlu0 %1155
        %1157 = vrot.lane.b32.xlu0 %v455, 127
        %v1158 = vpop.permute.xlu0 %1157
        %1159 = vrot.lane.b32.xlu0 %v460, 127
        %v1160 = vpop.permute.xlu0 %1159
        %1161 = vrot.lane.b32.xlu0 %v465, 127
        %v1162 = vpop.permute.xlu0 %1161
        %1163 = vrot.lane.b32.xlu0 %v540, 127
        %v1164 = vpop.permute.xlu0 %1163
        %1165 = vrot.lane.b32.xlu0 %v545, 127
        %v1166 = vpop.permute.xlu0 %1165
        %1167 = vrot.lane.b32.xlu0 %v550, 127
        %v1168 = vpop.permute.xlu0 %1167
        %1169 = vrot.lane.b32.xlu0 %v555, 127
        %v1170 = vpop.permute.xlu0 %1169
        %1171 = vrot.lane.b32.xlu0 %v630, 127
        %v1172 = vpop.permute.xlu0 %1171
        %1173 = vrot.lane.b32.xlu0 %v635, 127
        %v1174 = vpop.permute.xlu0 %1173
        %1175 = vrot.lane.b32.xlu0 %v640, 127
        %v1176 = vpop.permute.xlu0 %1175
        %1177 = vrot.lane.b32.xlu0 %v645, 127
        %v1178 = vpop.permute.xlu0 %1177
        %1179 = vrot.lane.b32.xlu0 %v720, 127
        %v1180 = vpop.permute.xlu0 %1179
        %1181 = vrot.lane.b32.xlu0 %v725, 127
        %v1182 = vpop.permute.xlu0 %1181
        %1183 = vrot.lane.b32.xlu0 %v730, 127
        %v1184 = vpop.permute.xlu0 %1183
        %1185 = vrot.lane.b32.xlu0 %v735, 127
        %v1186 = vpop.permute.xlu0 %1185
        %v1203 = vcombine.low %v1156, %v1172
        %v1204 = vcombine.high %v1156, %v1172
        %v1206 = vunpack.c.l.s4 1983009808
        %v1207 = vunpack.c.0.s8 %v1206
        %v1208 = vlaneseq
        %v1209 = vshrl.u32 %v1208, 7
        %v1210 = vsub.s32 %v1207, %v1209
        %v1211 = vrot.slane %v1203, %v1210
        %v1213 = vunpack.c.l.s4 1983009808
        %v1214 = vunpack.c.0.s8 %v1213
        %v1215 = vlaneseq
        %v1216 = vshrl.u32 %v1215, 7
        %v1217 = vsub.s32 %v1214, %v1216
        %v1218 = vrot.slane %v1204, %v1217
        %v1219 = vcombine.low %v1164, %v1180
        %v1220 = vcombine.high %v1164, %v1180
        %v1222 = vunpack.c.l.s4 1983009808
        %v1223 = vunpack.c.0.s8 %v1222
        %v1224 = vlaneseq
        %v1225 = vshrl.u32 %v1224, 7
        %v1226 = vsub.s32 %v1223, %v1225
        %v1227 = vrot.slane %v1219, %v1226
        %v1229 = vunpack.c.l.s4 1983009808
        %v1230 = vunpack.c.0.s8 %v1229
        %v1231 = vlaneseq
        %v1232 = vshrl.u32 %v1231, 7
        %v1233 = vsub.s32 %v1230, %v1232
        %v1234 = vrot.slane %v1220, %v1233
        %v1235 = vcombine.low %v1211, %v1227
        %v1236 = vcombine.high %v1211, %v1227
        %v1238 = vunpack.c.l.s4 1934713408
        %v1239 = vunpack.c.0.s8 %v1238
        %v1240 = vlaneseq
        %v1241 = vshrl.u32 %v1240, 7
        %v1242 = vsub.s32 %v1239, %v1241
        %v1243 = vrot.slane %v1235, %v1242
        %v1245 = vunpack.c.l.s4 1934713408
        %v1246 = vunpack.c.0.s8 %v1245
        %v1247 = vlaneseq
        %v1248 = vshrl.u32 %v1247, 7
        %v1249 = vsub.s32 %v1246, %v1248
        %v1250 = vrot.slane %v1236, %v1249
        %v1251 = vcombine.low %v1218, %v1234
        %v1252 = vcombine.high %v1218, %v1234
        %v1254 = vunpack.c.l.s4 1934713408
        %v1255 = vunpack.c.0.s8 %v1254
        %v1256 = vlaneseq
        %v1257 = vshrl.u32 %v1256, 7
        %v1258 = vsub.s32 %v1255, %v1257
        %v1259 = vrot.slane %v1251, %v1258
        %v1261 = vunpack.c.l.s4 1934713408
        %v1262 = vunpack.c.0.s8 %v1261
        %v1263 = vlaneseq
        %v1264 = vshrl.u32 %v1263, 7
        %v1265 = vsub.s32 %v1262, %v1264
        %v1266 = vrot.slane %v1252, %v1265
        %v1267 = vcombine.high %v1243, 0.0
        %v1268 = vcombine.high %v1250, 0.0
        %v1269 = vcombine.high %v1259, 0.0
        %v1270 = vcombine.high %v1266, 0.0
        %v1271 = vcombine.low %v1158, %v1174
        %v1272 = vcombine.high %v1158, %v1174
        %v1274 = vunpack.c.l.s4 1983009808
        %v1275 = vunpack.c.0.s8 %v1274
        %v1276 = vlaneseq
        %v1277 = vshrl.u32 %v1276, 7
        %v1278 = vsub.s32 %v1275, %v1277
        %v1279 = vrot.slane %v1271, %v1278
        %v1281 = vunpack.c.l.s4 1983009808
        %v1282 = vunpack.c.0.s8 %v1281
        %v1283 = vlaneseq
        %v1284 = vshrl.u32 %v1283, 7
        %v1285 = vsub.s32 %v1282, %v1284
        %v1286 = vrot.slane %v1272, %v1285
        %v1287 = vcombine.low %v1166, %v1182
        %v1288 = vcombine.high %v1166, %v1182
        %v1290 = vunpack.c.l.s4 1983009808
        %v1291 = vunpack.c.0.s8 %v1290
        %v1292 = vlaneseq
        %v1293 = vshrl.u32 %v1292, 7
        %v1294 = vsub.s32 %v1291, %v1293
        %v1295 = vrot.slane %v1287, %v1294
        %v1297 = vunpack.c.l.s4 1983009808
        %v1298 = vunpack.c.0.s8 %v1297
        %v1299 = vlaneseq
        %v1300 = vshrl.u32 %v1299, 7
        %v1301 = vsub.s32 %v1298, %v1300
        %v1302 = vrot.slane %v1288, %v1301
        %v1303 = vcombine.low %v1279, %v1295
        %v1304 = vcombine.high %v1279, %v1295
        %v1306 = vunpack.c.l.s4 1934713408
        %v1307 = vunpack.c.0.s8 %v1306
        %v1308 = vlaneseq
        %v1309 = vshrl.u32 %v1308, 7
        %v1310 = vsub.s32 %v1307, %v1309
        %v1311 = vrot.slane %v1303, %v1310
        %v1313 = vunpack.c.l.s4 1934713408
        %v1314 = vunpack.c.0.s8 %v1313
        %v1315 = vlaneseq
        %v1316 = vshrl.u32 %v1315, 7
        %v1317 = vsub.s32 %v1314, %v1316
        %v1318 = vrot.slane %v1304, %v1317
        %v1319 = vcombine.low %v1286, %v1302
        %v1320 = vcombine.high %v1286, %v1302
        %v1322 = vunpack.c.l.s4 1934713408
        %v1323 = vunpack.c.0.s8 %v1322
        %v1324 = vlaneseq
        %v1325 = vshrl.u32 %v1324, 7
        %v1326 = vsub.s32 %v1323, %v1325
        %v1327 = vrot.slane %v1319, %v1326
        %v1329 = vunpack.c.l.s4 1934713408
        %v1330 = vunpack.c.0.s8 %v1329
        %v1331 = vlaneseq
        %v1332 = vshrl.u32 %v1331, 7
        %v1333 = vsub.s32 %v1330, %v1332
        %v1334 = vrot.slane %v1320, %v1333
        %v1335 = vcombine.high %v1311, 0.0
        %v1336 = vcombine.high %v1318, 0.0
        %v1337 = vcombine.high %v1327, 0.0
        %v1338 = vcombine.high %v1334, 0.0
        %v1339 = vcombine.low %v1160, %v1176
        %v1340 = vcombine.high %v1160, %v1176
        %v1342 = vunpack.c.l.s4 1983009808
        %v1343 = vunpack.c.0.s8 %v1342
        %v1344 = vlaneseq
        %v1345 = vshrl.u32 %v1344, 7
        %v1346 = vsub.s32 %v1343, %v1345
        %v1347 = vrot.slane %v1339, %v1346
        %v1349 = vunpack.c.l.s4 1983009808
        %v1350 = vunpack.c.0.s8 %v1349
        %v1351 = vlaneseq
        %v1352 = vshrl.u32 %v1351, 7
        %v1353 = vsub.s32 %v1350, %v1352
        %v1354 = vrot.slane %v1340, %v1353
        %v1355 = vcombine.low %v1168, %v1184
        %v1356 = vcombine.high %v1168, %v1184
        %v1358 = vunpack.c.l.s4 1983009808
        %v1359 = vunpack.c.0.s8 %v1358
        %v1360 = vlaneseq
        %v1361 = vshrl.u32 %v1360, 7
        %v1362 = vsub.s32 %v1359, %v1361
        %v1363 = vrot.slane %v1355, %v1362
        %v1365 = vunpack.c.l.s4 1983009808
        %v1366 = vunpack.c.0.s8 %v1365
        %v1367 = vlaneseq
        %v1368 = vshrl.u32 %v1367, 7
        %v1369 = vsub.s32 %v1366, %v1368
        %v1370 = vrot.slane %v1356, %v1369
        %v1371 = vcombine.low %v1347, %v1363
        %v1372 = vcombine.high %v1347, %v1363
        %v1374 = vunpack.c.l.s4 1934713408
        %v1375 = vunpack.c.0.s8 %v1374
        %v1376 = vlaneseq
        %v1377 = vshrl.u32 %v1376, 7
        %v1378 = vsub.s32 %v1375, %v1377
        %v1379 = vrot.slane %v1371, %v1378
        %v1381 = vunpack.c.l.s4 1934713408
        %v1382 = vunpack.c.0.s8 %v1381
        %v1383 = vlaneseq
        %v1384 = vshrl.u32 %v1383, 7
        %v1385 = vsub.s32 %v1382, %v1384
        %v1386 = vrot.slane %v1372, %v1385
        %v1387 = vcombine.low %v1354, %v1370
        %v1388 = vcombine.high %v1354, %v1370
        %v1390 = vunpack.c.l.s4 1934713408
        %v1391 = vunpack.c.0.s8 %v1390
        %v1392 = vlaneseq
        %v1393 = vshrl.u32 %v1392, 7
        %v1394 = vsub.s32 %v1391, %v1393
        %v1395 = vrot.slane %v1387, %v1394
        %v1397 = vunpack.c.l.s4 1934713408
        %v1398 = vunpack.c.0.s8 %v1397
        %v1399 = vlaneseq
        %v1400 = vshrl.u32 %v1399, 7
        %v1401 = vsub.s32 %v1398, %v1400
        %v1402 = vrot.slane %v1388, %v1401
        %v1403 = vcombine.high %v1379, 0.0
        %v1404 = vcombine.high %v1386, 0.0
        %v1405 = vcombine.high %v1395, 0.0
        %v1406 = vcombine.high %v1402, 0.0
        %v1407 = vcombine.low %v1162, %v1178
        %v1408 = vcombine.high %v1162, %v1178
        %v1410 = vunpack.c.l.s4 1983009808
        %v1411 = vunpack.c.0.s8 %v1410
        %v1412 = vlaneseq
        %v1413 = vshrl.u32 %v1412, 7
        %v1414 = vsub.s32 %v1411, %v1413
        %v1415 = vrot.slane %v1407, %v1414
        %v1417 = vunpack.c.l.s4 1983009808
        %v1418 = vunpack.c.0.s8 %v1417
        %v1419 = vlaneseq
        %v1420 = vshrl.u32 %v1419, 7
        %v1421 = vsub.s32 %v1418, %v1420
        %v1422 = vrot.slane %v1408, %v1421
        %v1423 = vcombine.low %v1170, %v1186
        %v1424 = vcombine.high %v1170, %v1186
        %v1426 = vunpack.c.l.s4 1983009808
        %v1427 = vunpack.c.0.s8 %v1426
        %v1428 = vlaneseq
        %v1429 = vshrl.u32 %v1428, 7
        %v1430 = vsub.s32 %v1427, %v1429
        %v1431 = vrot.slane %v1423, %v1430
        %v1433 = vunpack.c.l.s4 1983009808
        %v1434 = vunpack.c.0.s8 %v1433
        %v1435 = vlaneseq
        %v1436 = vshrl.u32 %v1435, 7
        %v1437 = vsub.s32 %v1434, %v1436
        %v1438 = vrot.slane %v1424, %v1437
        %v1439 = vcombine.low %v1415, %v1431
        %v1440 = vcombine.high %v1415, %v1431
        %v1442 = vunpack.c.l.s4 1934713408
        %v1443 = vunpack.c.0.s8 %v1442
        %v1444 = vlaneseq
        %v1445 = vshrl.u32 %v1444, 7
        %v1446 = vsub.s32 %v1443, %v1445
        %v1447 = vrot.slane %v1439, %v1446
        %v1449 = vunpack.c.l.s4 1934713408
        %v1450 = vunpack.c.0.s8 %v1449
        %v1451 = vlaneseq
        %v1452 = vshrl.u32 %v1451, 7
        %v1453 = vsub.s32 %v1450, %v1452
        %v1454 = vrot.slane %v1440, %v1453
        %v1455 = vcombine.low %v1422, %v1438
        %v1456 = vcombine.high %v1422, %v1438
        %v1458 = vunpack.c.l.s4 1934713408
        %v1459 = vunpack.c.0.s8 %v1458
        %v1460 = vlaneseq
        %v1461 = vshrl.u32 %v1460, 7
        %v1462 = vsub.s32 %v1459, %v1461
        %v1463 = vrot.slane %v1455, %v1462
        %v1465 = vunpack.c.l.s4 1934713408
        %v1466 = vunpack.c.0.s8 %v1465
        %v1467 = vlaneseq
        %v1468 = vshrl.u32 %v1467, 7
        %v1469 = vsub.s32 %v1466, %v1468
        %v1470 = vrot.slane %v1456, %v1469
        %v1471 = vcombine.high %v1447, 0.0
        %v1472 = vcombine.high %v1454, 0.0
        %v1473 = vcombine.high %v1463, 0.0
        %v1474 = vcombine.high %v1470, 0.0
        %1476 = vrot.lane.b32.xlu0 %v1267, 32
        %v1477 = vpop.permute.xlu0 %1476
        %1480 = vrot.lane.b32.xlu0 %v1250, 64
        %v1481 = vpop.permute.xlu0 %1480
        %1484 = vrot.lane.b32.xlu0 %v1268, 96
        %v1485 = vpop.permute.xlu0 %1484
        %1488 = vrot.lane.b32.xlu0 %v1269, 32
        %v1489 = vpop.permute.xlu0 %1488
        %1492 = vrot.lane.b32.xlu0 %v1266, 64
        %v1493 = vpop.permute.xlu0 %1492
        %1496 = vrot.lane.b32.xlu0 %v1270, 96
        %v1497 = vpop.permute.xlu0 %1496
        %1500 = vrot.lane.b32.xlu0 %v1335, 32
        %v1501 = vpop.permute.xlu0 %1500
        %1504 = vrot.lane.b32.xlu0 %v1318, 64
        %v1505 = vpop.permute.xlu0 %1504
        %1508 = vrot.lane.b32.xlu0 %v1336, 96
        %v1509 = vpop.permute.xlu0 %1508
        %1512 = vrot.lane.b32.xlu0 %v1337, 32
        %v1513 = vpop.permute.xlu0 %1512
        %1516 = vrot.lane.b32.xlu0 %v1334, 64
        %v1517 = vpop.permute.xlu0 %1516
        %1520 = vrot.lane.b32.xlu0 %v1338, 96
        %v1521 = vpop.permute.xlu0 %1520
        %1524 = vrot.lane.b32.xlu0 %v1403, 32
        %v1525 = vpop.permute.xlu0 %1524
        %1528 = vrot.lane.b32.xlu0 %v1386, 64
        %v1529 = vpop.permute.xlu0 %1528
        %1532 = vrot.lane.b32.xlu0 %v1404, 96
        %v1533 = vpop.permute.xlu0 %1532
        %1536 = vrot.lane.b32.xlu0 %v1405, 32
        %v1537 = vpop.permute.xlu0 %1536
        %1540 = vrot.lane.b32.xlu0 %v1402, 64
        %v1541 = vpop.permute.xlu0 %1540
        %1544 = vrot.lane.b32.xlu0 %v1406, 96
        %v1545 = vpop.permute.xlu0 %1544
        %1548 = vrot.lane.b32.xlu0 %v1471, 32
        %v1549 = vpop.permute.xlu0 %1548
        %1552 = vrot.lane.b32.xlu0 %v1454, 64
        %v1553 = vpop.permute.xlu0 %1552
        %1556 = vrot.lane.b32.xlu0 %v1472, 96
        %v1557 = vpop.permute.xlu0 %1556
        %1560 = vrot.lane.b32.xlu0 %v1473, 32
        %v1561 = vpop.permute.xlu0 %1560
        %1564 = vrot.lane.b32.xlu0 %v1470, 64
        %v1565 = vpop.permute.xlu0 %1564
        %1568 = vrot.lane.b32.xlu0 %v1474, 96
        %v1569 = vpop.permute.xlu0 %1568
        %v1571 = vsel %vm1111, %v1243, %v1477
        %v1572 = vsel %vm1113, %v1571, %v1481
        %v1573 = vsel %vm1115, %v1572, %v1485
        %v1574 = vsel %vm1111, %v1259, %v1489
        %v1575 = vsel %vm1113, %v1574, %v1493
        %v1576 = vsel %vm1115, %v1575, %v1497
        %v1577 = vsel %vm1111, %v1311, %v1501
        %v1578 = vsel %vm1113, %v1577, %v1505
        %v1579 = vsel %vm1115, %v1578, %v1509
        %v1580 = vsel %vm1111, %v1327, %v1513
        %v1581 = vsel %vm1113, %v1580, %v1517
        %v1582 = vsel %vm1115, %v1581, %v1521
        %v1583 = vsel %vm1111, %v1379, %v1525
        %v1584 = vsel %vm1113, %v1583, %v1529
        %v1585 = vsel %vm1115, %v1584, %v1533
        %v1586 = vsel %vm1111, %v1395, %v1537
        %v1587 = vsel %vm1113, %v1586, %v1541
        %v1588 = vsel %vm1115, %v1587, %v1545
        %v1589 = vsel %vm1111, %v1447, %v1549
        %v1590 = vsel %vm1113, %v1589, %v1553
        %v1591 = vsel %vm1115, %v1590, %v1557
        %v1592 = vsel %vm1111, %v1463, %v1561
        %v1593 = vsel %vm1113, %v1592, %v1565
        %v1594 = vsel %vm1115, %v1593, %v1569
        %s1595 = scalar_lea.vmem %s3, 8
        %v1596 = vld [vmem:[%s1595] sm:$0xff]
        %vm1597 = vcmask 31744
        %v1599 = vsel %vm1597, %v1596, 0
        %vm1601 = vcmask 1043456
        %v1603 = vsel %vm1601, %v1573, 0
        %v1606 = vsel %vm1601, %v1576, 0
        %v1609 = vsel %vm1601, %v1579, 0
        %v1612 = vsel %vm1601, %v1582, 0
        %v1615 = vsel %vm1601, %v1585, 0
        %v1618 = vsel %vm1601, %v1588, 0
        %v1621 = vsel %vm1601, %v1591, 0
        %v1624 = vsel %vm1601, %v1594, 0
        %1626 = vmatprep.subr.mxu0 %v1606
        %1627 = vmatpush1.msra.mxu0 %v1603
        %1628 = vmatprep.subr.mxu0 0.0
        %1629 = vmatpush1.msra.mxu0 0.0
        %1630 = vmatprep.subr.mxu0 0.0
        %1631 = vmatpush1.msra.mxu0 0.0
        %1632 = vmatprep.subr.mxu0 0.0
        %1633 = vmatpush1.msra.mxu0 0.0
        %1634 = vmatprep.subr.mxu0 0.0
        %1635 = vmatpush1.msra.mxu0 0.0
        %1636 = vmatprep.subr.mxu0 0.0
        %1637 = vmatpush1.msra.mxu0 0.0
        %1638 = vmatprep.subr.mxu0 0.0
        %1639 = vmatpush1.msra.mxu0 0.0
        %1640 = vmatprep.subr.mxu0 0.0
        %1641 = vmatpush1.msra.mxu0 0.0
        %1642 = vmatprep.subr.mxu0 0.0
        %1643 = vmatpush1.msra.mxu0 0.0
        %1644 = vmatprep.subr.mxu0 0.0
        %1645 = vmatpush1.msra.mxu0 0.0
        %1646 = vmatprep.subr.mxu0 0.0
        %1647 = vmatpush1.msra.mxu0 0.0
        %1648 = vmatprep.subr.mxu0 0.0
        %1649 = vmatpush1.msra.mxu0 0.0
        %1650 = vmatprep.subr.mxu0 0.0
        %1651 = vmatpush1.msra.mxu0 0.0
        %1652 = vmatprep.subr.mxu0 0.0
        %1653 = vmatpush1.msra.mxu0 0.0
        %1654 = vmatprep.subr.mxu0 0.0
        %1655 = vmatpush1.msra.mxu0 0.0
        %1656 = vmatprep.subr.mxu0 0.0
        %1657 = vmatpush1.msra.mxu0 0.0
        %1658 = vmatprep.subr.mxu0 0.0
        %1659 = vmatpush1.msra.mxu0 0.0
        %1660 = vmatprep.subr.mxu0 0.0
        %1661 = vmatpush1.msra.mxu0 0.0
        %1662 = vmatprep.subr.mxu0 0.0
        %1663 = vmatpush1.msra.mxu0 0.0
        %1664 = vmatprep.subr.mxu0 0.0
        %1665 = vmatpush1.msra.mxu0 0.0
        %1666 = vmatprep.subr.mxu0 0.0
        %1667 = vmatpush1.msra.mxu0 0.0
        %1668 = vmatprep.subr.mxu0 0.0
        %1669 = vmatpush1.msra.mxu0 0.0
        %1670 = vmatprep.subr.mxu0 0.0
        %1671 = vmatpush1.msra.mxu0 0.0
        %1672 = vmatprep.subr.mxu0 0.0
        %1673 = vmatpush1.msra.mxu0 0.0
        %1674 = vmatprep.subr.mxu0 0.0
        %1675 = vmatpush1.msra.mxu0 0.0
        %1676 = vmatprep.subr.mxu0 0.0
        %1677 = vmatpush1.msra.mxu0 0.0
        %1678 = vmatprep.subr.mxu0 0.0
        %1679 = vmatpush1.msra.mxu0 0.0
        %1680 = vmatprep.subr.mxu0 0.0
        %1681 = vmatpush1.msra.mxu0 0.0
        %1682 = vmatprep.subr.mxu0 0.0
        %1683 = vmatpush1.msra.mxu0 0.0
        %1684 = vmatprep.subr.mxu0 0.0
        %1685 = vmatpush1.msra.mxu0 0.0
        %1686 = vmatprep.subr.mxu0 0.0
        %1687 = vmatpush1.msra.mxu0 0.0
        %1688 = vmatprep.subr.mxu0 0.0
        %1689 = vmatpush1.msra.mxu0 0.0
        %1690 = vmatprep.mubr.f32.mxu0 0.0
        %1691 = vmatmul.mubr.f32.gmra.mrb[0].mxu0 %v1599
        %v1692 = vpop.f32.mrb[0].mxu0
        %v1693 = vadd.f32 0.0, %v1692
        %v1694 = vpop.f32.mrb[0].mxu0
        %v1695 = vadd.f32 0.0, %v1694
        %1696 = vdwg.mxu0
        %1697 = vmatprep.subr.mxu0 %v1612
        %1698 = vmatpush1.msra.mxu0 %v1609
        %1699 = vmatprep.subr.mxu0 0.0
        %1700 = vmatpush1.msra.mxu0 0.0
        %1701 = vmatprep.subr.mxu0 0.0
        %1702 = vmatpush1.msra.mxu0 0.0
        %1703 = vmatprep.subr.mxu0 0.0
        %1704 = vmatpush1.msra.mxu0 0.0
        %1705 = vmatprep.subr.mxu0 0.0
        %1706 = vmatpush1.msra.mxu0 0.0
        %1707 = vmatprep.subr.mxu0 0.0
        %1708 = vmatpush1.msra.mxu0 0.0
        %1709 = vmatprep.subr.mxu0 0.0
        %1710 = vmatpush1.msra.mxu0 0.0
        %1711 = vmatprep.subr.mxu0 0.0
        %1712 = vmatpush1.msra.mxu0 0.0
        %1713 = vmatprep.subr.mxu0 0.0
        %1714 = vmatpush1.msra.mxu0 0.0
        %1715 = vmatprep.subr.mxu0 0.0
        %1716 = vmatpush1.msra.mxu0 0.0
        %1717 = vmatprep.subr.mxu0 0.0
        %1718 = vmatpush1.msra.mxu0 0.0
        %1719 = vmatprep.subr.mxu0 0.0
        %1720 = vmatpush1.msra.mxu0 0.0
        %1721 = vmatprep.subr.mxu0 0.0
        %1722 = vmatpush1.msra.mxu0 0.0
        %1723 = vmatprep.subr.mxu0 0.0
        %1724 = vmatpush1.msra.mxu0 0.0
        %1725 = vmatprep.subr.mxu0 0.0
        %1726 = vmatpush1.msra.mxu0 0.0
        %1727 = vmatprep.subr.mxu0 0.0
        %1728 = vmatpush1.msra.mxu0 0.0
        %1729 = vmatprep.subr.mxu0 0.0
        %1730 = vmatpush1.msra.mxu0 0.0
        %1731 = vmatprep.subr.mxu0 0.0
        %1732 = vmatpush1.msra.mxu0 0.0
        %1733 = vmatprep.subr.mxu0 0.0
        %1734 = vmatpush1.msra.mxu0 0.0
        %1735 = vmatprep.subr.mxu0 0.0
        %1736 = vmatpush1.msra.mxu0 0.0
        %1737 = vmatprep.subr.mxu0 0.0
        %1738 = vmatpush1.msra.mxu0 0.0
        %1739 = vmatprep.subr.mxu0 0.0
        %1740 = vmatpush1.msra.mxu0 0.0
        %1741 = vmatprep.subr.mxu0 0.0
        %1742 = vmatpush1.msra.mxu0 0.0
        %1743 = vmatprep.subr.mxu0 0.0
        %1744 = vmatpush1.msra.mxu0 0.0
        %1745 = vmatprep.subr.mxu0 0.0
        %1746 = vmatpush1.msra.mxu0 0.0
        %1747 = vmatprep.subr.mxu0 0.0
        %1748 = vmatpush1.msra.mxu0 0.0
        %1749 = vmatprep.subr.mxu0 0.0
        %1750 = vmatpush1.msra.mxu0 0.0
        %1751 = vmatprep.subr.mxu0 0.0
        %1752 = vmatpush1.msra.mxu0 0.0
        %1753 = vmatprep.subr.mxu0 0.0
        %1754 = vmatpush1.msra.mxu0 0.0
        %1755 = vmatprep.subr.mxu0 0.0
        %1756 = vmatpush1.msra.mxu0 0.0
        %1757 = vmatprep.subr.mxu0 0.0
        %1758 = vmatpush1.msra.mxu0 0.0
        %1759 = vmatprep.subr.mxu0 0.0
        %1760 = vmatpush1.msra.mxu0 0.0
        %1761 = vmatprep.mubr.f32.mxu0 0.0
        %1762 = vmatmul.mubr.f32.gmra.mrb[0].mxu0 %v1599
        %v1763 = vpop.f32.mrb[0].mxu0
        %v1764 = vadd.f32 0.0, %v1763
        %v1765 = vpop.f32.mrb[0].mxu0
        %v1766 = vadd.f32 0.0, %v1765
        %1767 = vdwg.mxu0
        %1768 = vmatprep.subr.mxu0 %v1618
        %1769 = vmatpush1.msra.mxu0 %v1615
        %1770 = vmatprep.subr.mxu0 0.0
        %1771 = vmatpush1.msra.mxu0 0.0
        %1772 = vmatprep.subr.mxu0 0.0
        %1773 = vmatpush1.msra.mxu0 0.0
        %1774 = vmatprep.subr.mxu0 0.0
        %1775 = vmatpush1.msra.mxu0 0.0
        %1776 = vmatprep.subr.mxu0 0.0
        %1777 = vmatpush1.msra.mxu0 0.0
        %1778 = vmatprep.subr.mxu0 0.0
        %1779 = vmatpush1.msra.mxu0 0.0
        %1780 = vmatprep.subr.mxu0 0.0
        %1781 = vmatpush1.msra.mxu0 0.0
        %1782 = vmatprep.subr.mxu0 0.0
        %1783 = vmatpush1.msra.mxu0 0.0
        %1784 = vmatprep.subr.mxu0 0.0
        %1785 = vmatpush1.msra.mxu0 0.0
        %1786 = vmatprep.subr.mxu0 0.0
        %1787 = vmatpush1.msra.mxu0 0.0
        %1788 = vmatprep.subr.mxu0 0.0
        %1789 = vmatpush1.msra.mxu0 0.0
        %1790 = vmatprep.subr.mxu0 0.0
        %1791 = vmatpush1.msra.mxu0 0.0
        %1792 = vmatprep.subr.mxu0 0.0
        %1793 = vmatpush1.msra.mxu0 0.0
        %1794 = vmatprep.subr.mxu0 0.0
        %1795 = vmatpush1.msra.mxu0 0.0
        %1796 = vmatprep.subr.mxu0 0.0
        %1797 = vmatpush1.msra.mxu0 0.0
        %1798 = vmatprep.subr.mxu0 0.0
        %1799 = vmatpush1.msra.mxu0 0.0
        %1800 = vmatprep.subr.mxu0 0.0
        %1801 = vmatpush1.msra.mxu0 0.0
        %1802 = vmatprep.subr.mxu0 0.0
        %1803 = vmatpush1.msra.mxu0 0.0
        %1804 = vmatprep.subr.mxu0 0.0
        %1805 = vmatpush1.msra.mxu0 0.0
        %1806 = vmatprep.subr.mxu0 0.0
        %1807 = vmatpush1.msra.mxu0 0.0
        %1808 = vmatprep.subr.mxu0 0.0
        %1809 = vmatpush1.msra.mxu0 0.0
        %1810 = vmatprep.subr.mxu0 0.0
        %1811 = vmatpush1.msra.mxu0 0.0
        %1812 = vmatprep.subr.mxu0 0.0
        %1813 = vmatpush1.msra.mxu0 0.0
        %1814 = vmatprep.subr.mxu0 0.0
        %1815 = vmatpush1.msra.mxu0 0.0
        %1816 = vmatprep.subr.mxu0 0.0
        %1817 = vmatpush1.msra.mxu0 0.0
        %1818 = vmatprep.subr.mxu0 0.0
        %1819 = vmatpush1.msra.mxu0 0.0
        %1820 = vmatprep.subr.mxu0 0.0
        %1821 = vmatpush1.msra.mxu0 0.0
        %1822 = vmatprep.subr.mxu0 0.0
        %1823 = vmatpush1.msra.mxu0 0.0
        %1824 = vmatprep.subr.mxu0 0.0
        %1825 = vmatpush1.msra.mxu0 0.0
        %1826 = vmatprep.subr.mxu0 0.0
        %1827 = vmatpush1.msra.mxu0 0.0
        %1828 = vmatprep.subr.mxu0 0.0
        %1829 = vmatpush1.msra.mxu0 0.0
        %1830 = vmatprep.subr.mxu0 0.0
        %1831 = vmatpush1.msra.mxu0 0.0
        %1832 = vmatprep.mubr.f32.mxu0 0.0
        %1833 = vmatmul.mubr.f32.gmra.mrb[0].mxu0 %v1599
        %v1834 = vpop.f32.mrb[0].mxu0
        %v1835 = vadd.f32 0.0, %v1834
        %v1836 = vpop.f32.mrb[0].mxu0
        %v1837 = vadd.f32 0.0, %v1836
        %1838 = vdwg.mxu0
        %1839 = vmatprep.subr.mxu0 %v1624
        %1840 = vmatpush1.msra.mxu0 %v1621
        %1841 = vmatprep.subr.mxu0 0.0
        %1842 = vmatpush1.msra.mxu0 0.0
        %1843 = vmatprep.subr.mxu0 0.0
        %1844 = vmatpush1.msra.mxu0 0.0
        %1845 = vmatprep.subr.mxu0 0.0
        %1846 = vmatpush1.msra.mxu0 0.0
        %1847 = vmatprep.subr.mxu0 0.0
        %1848 = vmatpush1.msra.mxu0 0.0
        %1849 = vmatprep.subr.mxu0 0.0
        %1850 = vmatpush1.msra.mxu0 0.0
        %1851 = vmatprep.subr.mxu0 0.0
        %1852 = vmatpush1.msra.mxu0 0.0
        %1853 = vmatprep.subr.mxu0 0.0
        %1854 = vmatpush1.msra.mxu0 0.0
        %1855 = vmatprep.subr.mxu0 0.0
        %1856 = vmatpush1.msra.mxu0 0.0
        %1857 = vmatprep.subr.mxu0 0.0
        %1858 = vmatpush1.msra.mxu0 0.0
        %1859 = vmatprep.subr.mxu0 0.0
        %1860 = vmatpush1.msra.mxu0 0.0
        %1861 = vmatprep.subr.mxu0 0.0
        %1862 = vmatpush1.msra.mxu0 0.0
        %1863 = vmatprep.subr.mxu0 0.0
        %1864 = vmatpush1.msra.mxu0 0.0
        %1865 = vmatprep.subr.mxu0 0.0
        %1866 = vmatpush1.msra.mxu0 0.0
        %1867 = vmatprep.subr.mxu0 0.0
        %1868 = vmatpush1.msra.mxu0 0.0
        %1869 = vmatprep.subr.mxu0 0.0
        %1870 = vmatpush1.msra.mxu0 0.0
        %1871 = vmatprep.subr.mxu0 0.0
        %1872 = vmatpush1.msra.mxu0 0.0
        %1873 = vmatprep.subr.mxu0 0.0
        %1874 = vmatpush1.msra.mxu0 0.0
        %1875 = vmatprep.subr.mxu0 0.0
        %1876 = vmatpush1.msra.mxu0 0.0
        %1877 = vmatprep.subr.mxu0 0.0
        %1878 = vmatpush1.msra.mxu0 0.0
        %1879 = vmatprep.subr.mxu0 0.0
        %1880 = vmatpush1.msra.mxu0 0.0
        %1881 = vmatprep.subr.mxu0 0.0
        %1882 = vmatpush1.msra.mxu0 0.0
        %1883 = vmatprep.subr.mxu0 0.0
        %1884 = vmatpush1.msra.mxu0 0.0
        %1885 = vmatprep.subr.mxu0 0.0
        %1886 = vmatpush1.msra.mxu0 0.0
        %1887 = vmatprep.subr.mxu0 0.0
        %1888 = vmatpush1.msra.mxu0 0.0
        %1889 = vmatprep.subr.mxu0 0.0
        %1890 = vmatpush1.msra.mxu0 0.0
        %1891 = vmatprep.subr.mxu0 0.0
        %1892 = vmatpush1.msra.mxu0 0.0
        %1893 = vmatprep.subr.mxu0 0.0
        %1894 = vmatpush1.msra.mxu0 0.0
        %1895 = vmatprep.subr.mxu0 0.0
        %1896 = vmatpush1.msra.mxu0 0.0
        %1897 = vmatprep.subr.mxu0 0.0
        %1898 = vmatpush1.msra.mxu0 0.0
        %1899 = vmatprep.subr.mxu0 0.0
        %1900 = vmatpush1.msra.mxu0 0.0
        %1901 = vmatprep.subr.mxu0 0.0
        %1902 = vmatpush1.msra.mxu0 0.0
        %1903 = vmatprep.mubr.f32.mxu0 0.0
        %1904 = vmatmul.mubr.f32.gmra.mrb[0].mxu0 %v1599
        %v1905 = vpop.f32.mrb[0].mxu0
        %v1906 = vadd.f32 0.0, %v1905
        %v1907 = vpop.f32.mrb[0].mxu0
        %v1908 = vadd.f32 0.0, %v1907
        %1909 = vdwg.mxu0
        %v1911 = vsel %vm1597, %v1138, 0
        %v1914 = vsel %vm1601, %v1116, 0
        %v1917 = vsel %vm1601, %v1119, 0
        %v1920 = vsel %vm1601, %v1122, 0
        %v1923 = vsel %vm1601, %v1125, 0
        %v1926 = vsel %vm1601, %v1128, 0
        %v1929 = vsel %vm1601, %v1131, 0
        %v1932 = vsel %vm1601, %v1134, 0
        %v1935 = vsel %vm1601, %v1137, 0
        %1937 = vmatprep.subr.mxu0 %v1917
        %1938 = vmatpush1.msra.mxu0 %v1914
        %1939 = vmatprep.subr.mxu0 0.0
        %1940 = vmatpush1.msra.mxu0 0.0
        %1941 = vmatprep.subr.mxu0 0.0
        %1942 = vmatpush1.msra.mxu0 0.0
        %1943 = vmatprep.subr.mxu0 0.0
        %1944 = vmatpush1.msra.mxu0 0.0
        %1945 = vmatprep.subr.mxu0 0.0
        %1946 = vmatpush1.msra.mxu0 0.0
        %1947 = vmatprep.subr.mxu0 0.0
        %1948 = vmatpush1.msra.mxu0 0.0
        %1949 = vmatprep.subr.mxu0 0.0
        %1950 = vmatpush1.msra.mxu0 0.0
        %1951 = vmatprep.subr.mxu0 0.0
        %1952 = vmatpush1.msra.mxu0 0.0
        %1953 = vmatprep.subr.mxu0 0.0
        %1954 = vmatpush1.msra.mxu0 0.0
        %1955 = vmatprep.subr.mxu0 0.0
        %1956 = vmatpush1.msra.mxu0 0.0
        %1957 = vmatprep.subr.mxu0 0.0
        %1958 = vmatpush1.msra.mxu0 0.0
        %1959 = vmatprep.subr.mxu0 0.0
        %1960 = vmatpush1.msra.mxu0 0.0
        %1961 = vmatprep.subr.mxu0 0.0
        %1962 = vmatpush1.msra.mxu0 0.0
        %1963 = vmatprep.subr.mxu0 0.0
        %1964 = vmatpush1.msra.mxu0 0.0
        %1965 = vmatprep.subr.mxu0 0.0
        %1966 = vmatpush1.msra.mxu0 0.0
        %1967 = vmatprep.subr.mxu0 0.0
        %1968 = vmatpush1.msra.mxu0 0.0
        %1969 = vmatprep.subr.mxu0 0.0
        %1970 = vmatpush1.msra.mxu0 0.0
        %1971 = vmatprep.subr.mxu0 0.0
        %1972 = vmatpush1.msra.mxu0 0.0
        %1973 = vmatprep.subr.mxu0 0.0
        %1974 = vmatpush1.msra.mxu0 0.0
        %1975 = vmatprep.subr.mxu0 0.0
        %1976 = vmatpush1.msra.mxu0 0.0
        %1977 = vmatprep.subr.mxu0 0.0
        %1978 = vmatpush1.msra.mxu0 0.0
        %1979 = vmatprep.subr.mxu0 0.0
        %1980 = vmatpush1.msra.mxu0 0.0
        %1981 = vmatprep.subr.mxu0 0.0
        %1982 = vmatpush1.msra.mxu0 0.0
        %1983 = vmatprep.subr.mxu0 0.0
        %1984 = vmatpush1.msra.mxu0 0.0
        %1985 = vmatprep.subr.mxu0 0.0
        %1986 = vmatpush1.msra.mxu0 0.0
        %1987 = vmatprep.subr.mxu0 0.0
        %1988 = vmatpush1.msra.mxu0 0.0
        %1989 = vmatprep.subr.mxu0 0.0
        %1990 = vmatpush1.msra.mxu0 0.0
        %1991 = vmatprep.subr.mxu0 0.0
        %1992 = vmatpush1.msra.mxu0 0.0
        %1993 = vmatprep.subr.mxu0 0.0
        %1994 = vmatpush1.msra.mxu0 0.0
        %1995 = vmatprep.subr.mxu0 0.0
        %1996 = vmatpush1.msra.mxu0 0.0
        %1997 = vmatprep.subr.mxu0 0.0
        %1998 = vmatpush1.msra.mxu0 0.0
        %1999 = vmatprep.subr.mxu0 0.0
        %2000 = vmatpush1.msra.mxu0 0.0
        %2001 = vmatprep.mubr.f32.mxu0 0.0
        %2002 = vmatmul.mubr.f32.gmra.mrb[0].mxu0 %v1911
        %v2003 = vpop.f32.mrb[0].mxu0
        %v2004 = vadd.f32 %v1693, %v2003
        %v2005 = vpop.f32.mrb[0].mxu0
        %v2006 = vadd.f32 %v1695, %v2005
        %2007 = vdwg.mxu0
        %2008 = vmatprep.subr.mxu0 %v1923
        %2009 = vmatpush1.msra.mxu0 %v1920
        %2010 = vmatprep.subr.mxu0 0.0
        %2011 = vmatpush1.msra.mxu0 0.0
        %2012 = vmatprep.subr.mxu0 0.0
        %2013 = vmatpush1.msra.mxu0 0.0
        %2014 = vmatprep.subr.mxu0 0.0
        %2015 = vmatpush1.msra.mxu0 0.0
        %2016 = vmatprep.subr.mxu0 0.0
        %2017 = vmatpush1.msra.mxu0 0.0
        %2018 = vmatprep.subr.mxu0 0.0
        %2019 = vmatpush1.msra.mxu0 0.0
        %2020 = vmatprep.subr.mxu0 0.0
        %2021 = vmatpush1.msra.mxu0 0.0
        %2022 = vmatprep.subr.mxu0 0.0
        %2023 = vmatpush1.msra.mxu0 0.0
        %2024 = vmatprep.subr.mxu0 0.0
        %2025 = vmatpush1.msra.mxu0 0.0
        %2026 = vmatprep.subr.mxu0 0.0
        %2027 = vmatpush1.msra.mxu0 0.0
        %2028 = vmatprep.subr.mxu0 0.0
        %2029 = vmatpush1.msra.mxu0 0.0
        %2030 = vmatprep.subr.mxu0 0.0
        %2031 = vmatpush1.msra.mxu0 0.0
        %2032 = vmatprep.subr.mxu0 0.0
        %2033 = vmatpush1.msra.mxu0 0.0
        %2034 = vmatprep.subr.mxu0 0.0
        %2035 = vmatpush1.msra.mxu0 0.0
        %2036 = vmatprep.subr.mxu0 0.0
        %2037 = vmatpush1.msra.mxu0 0.0
        %2038 = vmatprep.subr.mxu0 0.0
        %2039 = vmatpush1.msra.mxu0 0.0
        %2040 = vmatprep.subr.mxu0 0.0
        %2041 = vmatpush1.msra.mxu0 0.0
        %2042 = vmatprep.subr.mxu0 0.0
        %2043 = vmatpush1.msra.mxu0 0.0
        %2044 = vmatprep.subr.mxu0 0.0
        %2045 = vmatpush1.msra.mxu0 0.0
        %2046 = vmatprep.subr.mxu0 0.0
        %2047 = vmatpush1.msra.mxu0 0.0
        %2048 = vmatprep.subr.mxu0 0.0
        %2049 = vmatpush1.msra.mxu0 0.0
        %2050 = vmatprep.subr.mxu0 0.0
        %2051 = vmatpush1.msra.mxu0 0.0
        %2052 = vmatprep.subr.mxu0 0.0
        %2053 = vmatpush1.msra.mxu0 0.0
        %2054 = vmatprep.subr.mxu0 0.0
        %2055 = vmatpush1.msra.mxu0 0.0
        %2056 = vmatprep.subr.mxu0 0.0
        %2057 = vmatpush1.msra.mxu0 0.0
        %2058 = vmatprep.subr.mxu0 0.0
        %2059 = vmatpush1.msra.mxu0 0.0
        %2060 = vmatprep.subr.mxu0 0.0
        %2061 = vmatpush1.msra.mxu0 0.0
        %2062 = vmatprep.subr.mxu0 0.0
        %2063 = vmatpush1.msra.mxu0 0.0
        %2064 = vmatprep.subr.mxu0 0.0
        %2065 = vmatpush1.msra.mxu0 0.0
        %2066 = vmatprep.subr.mxu0 0.0
        %2067 = vmatpush1.msra.mxu0 0.0
        %2068 = vmatprep.subr.mxu0 0.0
        %2069 = vmatpush1.msra.mxu0 0.0
        %2070 = vmatprep.subr.mxu0 0.0
        %2071 = vmatpush1.msra.mxu0 0.0
        %2072 = vmatprep.mubr.f32.mxu0 0.0
        %2073 = vmatmul.mubr.f32.gmra.mrb[0].mxu0 %v1911
        %v2074 = vpop.f32.mrb[0].mxu0
        %v2075 = vadd.f32 %v1764, %v2074
        %v2076 = vpop.f32.mrb[0].mxu0
        %v2077 = vadd.f32 %v1766, %v2076
        %2078 = vdwg.mxu0
        %2079 = vmatprep.subr.mxu0 %v1929
        %2080 = vmatpush1.msra.mxu0 %v1926
        %2081 = vmatprep.subr.mxu0 0.0
        %2082 = vmatpush1.msra.mxu0 0.0
        %2083 = vmatprep.subr.mxu0 0.0
        %2084 = vmatpush1.msra.mxu0 0.0
        %2085 = vmatprep.subr.mxu0 0.0
        %2086 = vmatpush1.msra.mxu0 0.0
        %2087 = vmatprep.subr.mxu0 0.0
        %2088 = vmatpush1.msra.mxu0 0.0
        %2089 = vmatprep.subr.mxu0 0.0
        %2090 = vmatpush1.msra.mxu0 0.0
        %2091 = vmatprep.subr.mxu0 0.0
        %2092 = vmatpush1.msra.mxu0 0.0
        %2093 = vmatprep.subr.mxu0 0.0
        %2094 = vmatpush1.msra.mxu0 0.0
        %2095 = vmatprep.subr.mxu0 0.0
        %2096 = vmatpush1.msra.mxu0 0.0
        %2097 = vmatprep.subr.mxu0 0.0
        %2098 = vmatpush1.msra.mxu0 0.0
        %2099 = vmatprep.subr.mxu0 0.0
        %2100 = vmatpush1.msra.mxu0 0.0
        %2101 = vmatprep.subr.mxu0 0.0
        %2102 = vmatpush1.msra.mxu0 0.0
        %2103 = vmatprep.subr.mxu0 0.0
        %2104 = vmatpush1.msra.mxu0 0.0
        %2105 = vmatprep.subr.mxu0 0.0
        %2106 = vmatpush1.msra.mxu0 0.0
        %2107 = vmatprep.subr.mxu0 0.0
        %2108 = vmatpush1.msra.mxu0 0.0
        %2109 = vmatprep.subr.mxu0 0.0
        %2110 = vmatpush1.msra.mxu0 0.0
        %2111 = vmatprep.subr.mxu0 0.0
        %2112 = vmatpush1.msra.mxu0 0.0
        %2113 = vmatprep.subr.mxu0 0.0
        %2114 = vmatpush1.msra.mxu0 0.0
        %2115 = vmatprep.subr.mxu0 0.0
        %2116 = vmatpush1.msra.mxu0 0.0
        %2117 = vmatprep.subr.mxu0 0.0
        %2118 = vmatpush1.msra.mxu0 0.0
        %2119 = vmatprep.subr.mxu0 0.0
        %2120 = vmatpush1.msra.mxu0 0.0
        %2121 = vmatprep.subr.mxu0 0.0
        %2122 = vmatpush1.msra.mxu0 0.0
        %2123 = vmatprep.subr.mxu0 0.0
        %2124 = vmatpush1.msra.mxu0 0.0
        %2125 = vmatprep.subr.mxu0 0.0
        %2126 = vmatpush1.msra.mxu0 0.0
        %2127 = vmatprep.subr.mxu0 0.0
        %2128 = vmatpush1.msra.mxu0 0.0
        %2129 = vmatprep.subr.mxu0 0.0
        %2130 = vmatpush1.msra.mxu0 0.0
        %2131 = vmatprep.subr.mxu0 0.0
        %2132 = vmatpush1.msra.mxu0 0.0
        %2133 = vmatprep.subr.mxu0 0.0
        %2134 = vmatpush1.msra.mxu0 0.0
        %2135 = vmatprep.subr.mxu0 0.0
        %2136 = vmatpush1.msra.mxu0 0.0
        %2137 = vmatprep.subr.mxu0 0.0
        %2138 = vmatpush1.msra.mxu0 0.0
        %2139 = vmatprep.subr.mxu0 0.0
        %2140 = vmatpush1.msra.mxu0 0.0
        %2141 = vmatprep.subr.mxu0 0.0
        %2142 = vmatpush1.msra.mxu0 0.0
        %2143 = vmatprep.mubr.f32.mxu0 0.0
        %2144 = vmatmul.mubr.f32.gmra.mrb[0].mxu0 %v1911
        %v2145 = vpop.f32.mrb[0].mxu0
        %v2146 = vadd.f32 %v1835, %v2145
        %v2147 = vpop.f32.mrb[0].mxu0
        %v2148 = vadd.f32 %v1837, %v2147
        %2149 = vdwg.mxu0
        %2150 = vmatprep.subr.mxu0 %v1935
        %2151 = vmatpush1.msra.mxu0 %v1932
        %2152 = vmatprep.subr.mxu0 0.0
        %2153 = vmatpush1.msra.mxu0 0.0
        %2154 = vmatprep.subr.mxu0 0.0
        %2155 = vmatpush1.msra.mxu0 0.0
        %2156 = vmatprep.subr.mxu0 0.0
        %2157 = vmatpush1.msra.mxu0 0.0
        %2158 = vmatprep.subr.mxu0 0.0
        %2159 = vmatpush1.msra.mxu0 0.0
        %2160 = vmatprep.subr.mxu0 0.0
        %2161 = vmatpush1.msra.mxu0 0.0
        %2162 = vmatprep.subr.mxu0 0.0
        %2163 = vmatpush1.msra.mxu0 0.0
        %2164 = vmatprep.subr.mxu0 0.0
        %2165 = vmatpush1.msra.mxu0 0.0
        %2166 = vmatprep.subr.mxu0 0.0
        %2167 = vmatpush1.msra.mxu0 0.0
        %2168 = vmatprep.subr.mxu0 0.0
        %2169 = vmatpush1.msra.mxu0 0.0
        %2170 = vmatprep.subr.mxu0 0.0
        %2171 = vmatpush1.msra.mxu0 0.0
        %2172 = vmatprep.subr.mxu0 0.0
        %2173 = vmatpush1.msra.mxu0 0.0
        %2174 = vmatprep.subr.mxu0 0.0
        %2175 = vmatpush1.msra.mxu0 0.0
        %2176 = vmatprep.subr.mxu0 0.0
        %2177 = vmatpush1.msra.mxu0 0.0
        %2178 = vmatprep.subr.mxu0 0.0
        %2179 = vmatpush1.msra.mxu0 0.0
        %2180 = vmatprep.subr.mxu0 0.0
        %2181 = vmatpush1.msra.mxu0 0.0
        %2182 = vmatprep.subr.mxu0 0.0
        %2183 = vmatpush1.msra.mxu0 0.0
        %2184 = vmatprep.subr.mxu0 0.0
        %2185 = vmatpush1.msra.mxu0 0.0
        %2186 = vmatprep.subr.mxu0 0.0
        %2187 = vmatpush1.msra.mxu0 0.0
        %2188 = vmatprep.subr.mxu0 0.0
        %2189 = vmatpush1.msra.mxu0 0.0
        %2190 = vmatprep.subr.mxu0 0.0
        %2191 = vmatpush1.msra.mxu0 0.0
        %2192 = vmatprep.subr.mxu0 0.0
        %2193 = vmatpush1.msra.mxu0 0.0
        %2194 = vmatprep.subr.mxu0 0.0
        %2195 = vmatpush1.msra.mxu0 0.0
        %2196 = vmatprep.subr.mxu0 0.0
        %2197 = vmatpush1.msra.mxu0 0.0
        %2198 = vmatprep.subr.mxu0 0.0
        %2199 = vmatpush1.msra.mxu0 0.0
        %2200 = vmatprep.subr.mxu0 0.0
        %2201 = vmatpush1.msra.mxu0 0.0
        %2202 = vmatprep.subr.mxu0 0.0
        %2203 = vmatpush1.msra.mxu0 0.0
        %2204 = vmatprep.subr.mxu0 0.0
        %2205 = vmatpush1.msra.mxu0 0.0
        %2206 = vmatprep.subr.mxu0 0.0
        %2207 = vmatpush1.msra.mxu0 0.0
        %2208 = vmatprep.subr.mxu0 0.0
        %2209 = vmatpush1.msra.mxu0 0.0
        %2210 = vmatprep.subr.mxu0 0.0
        %2211 = vmatpush1.msra.mxu0 0.0
        %2212 = vmatprep.subr.mxu0 0.0
        %2213 = vmatpush1.msra.mxu0 0.0
        %2214 = vmatprep.mubr.f32.mxu0 0.0
        %2215 = vmatmul.mubr.f32.gmra.mrb[0].mxu0 %v1911
        %v2216 = vpop.f32.mrb[0].mxu0
        %v2217 = vadd.f32 %v1906, %v2216
        %v2218 = vpop.f32.mrb[0].mxu0
        %v2219 = vadd.f32 %v1908, %v2218
        %2220 = vdwg.mxu0
        %2221 = vrot.lane.b32.xlu0 %v450, 126
        %v2222 = vpop.permute.xlu0 %2221
        %2223 = vrot.lane.b32.xlu0 %v455, 126
        %v2224 = vpop.permute.xlu0 %2223
        %2225 = vrot.lane.b32.xlu0 %v460, 126
        %v2226 = vpop.permute.xlu0 %2225
        %2227 = vrot.lane.b32.xlu0 %v465, 126
        %v2228 = vpop.permute.xlu0 %2227
        %2229 = vrot.lane.b32.xlu0 %v540, 126
        %v2230 = vpop.permute.xlu0 %2229
        %2231 = vrot.lane.b32.xlu0 %v545, 126
        %v2232 = vpop.permute.xlu0 %2231
        %2233 = vrot.lane.b32.xlu0 %v550, 126
        %v2234 = vpop.permute.xlu0 %2233
        %2235 = vrot.lane.b32.xlu0 %v555, 126
        %v2236 = vpop.permute.xlu0 %2235
        %2237 = vrot.lane.b32.xlu0 %v630, 126
        %v2238 = vpop.permute.xlu0 %2237
        %2239 = vrot.lane.b32.xlu0 %v635, 126
        %v2240 = vpop.permute.xlu0 %2239
        %2241 = vrot.lane.b32.xlu0 %v640, 126
        %v2242 = vpop.permute.xlu0 %2241
        %2243 = vrot.lane.b32.xlu0 %v645, 126
        %v2244 = vpop.permute.xlu0 %2243
        %2245 = vrot.lane.b32.xlu0 %v720, 126
        %v2246 = vpop.permute.xlu0 %2245
        %2247 = vrot.lane.b32.xlu0 %v725, 126
        %v2248 = vpop.permute.xlu0 %2247
        %2249 = vrot.lane.b32.xlu0 %v730, 126
        %v2250 = vpop.permute.xlu0 %2249
        %2251 = vrot.lane.b32.xlu0 %v735, 126
        %v2252 = vpop.permute.xlu0 %2251
        %v2269 = vcombine.low %v2222, %v2238
        %v2270 = vcombine.high %v2222, %v2238
        %v2272 = vunpack.c.l.s4 1983009808
        %v2273 = vunpack.c.0.s8 %v2272
        %v2274 = vlaneseq
        %v2275 = vshrl.u32 %v2274, 7
        %v2276 = vsub.s32 %v2273, %v2275
        %v2277 = vrot.slane %v2269, %v2276
        %v2279 = vunpack.c.l.s4 1983009808
        %v2280 = vunpack.c.0.s8 %v2279
        %v2281 = vlaneseq
        %v2282 = vshrl.u32 %v2281, 7
        %v2283 = vsub.s32 %v2280, %v2282
        %v2284 = vrot.slane %v2270, %v2283
        %v2285 = vcombine.low %v2230, %v2246
        %v2286 = vcombine.high %v2230, %v2246
        %v2288 = vunpack.c.l.s4 1983009808
        %v2289 = vunpack.c.0.s8 %v2288
        %v2290 = vlaneseq
        %v2291 = vshrl.u32 %v2290, 7
        %v2292 = vsub.s32 %v2289, %v2291
        %v2293 = vrot.slane %v2285, %v2292
        %v2295 = vunpack.c.l.s4 1983009808
        %v2296 = vunpack.c.0.s8 %v2295
        %v2297 = vlaneseq
        %v2298 = vshrl.u32 %v2297, 7
        %v2299 = vsub.s32 %v2296, %v2298
        %v2300 = vrot.slane %v2286, %v2299
        %v2301 = vcombine.low %v2277, %v2293
        %v2302 = vcombine.high %v2277, %v2293
        %v2304 = vunpack.c.l.s4 1934713408
        %v2305 = vunpack.c.0.s8 %v2304
        %v2306 = vlaneseq
        %v2307 = vshrl.u32 %v2306, 7
        %v2308 = vsub.s32 %v2305, %v2307
        %v2309 = vrot.slane %v2301, %v2308
        %v2311 = vunpack.c.l.s4 1934713408
        %v2312 = vunpack.c.0.s8 %v2311
        %v2313 = vlaneseq
        %v2314 = vshrl.u32 %v2313, 7
        %v2315 = vsub.s32 %v2312, %v2314
        %v2316 = vrot.slane %v2302, %v2315
        %v2317 = vcombine.low %v2284, %v2300
        %v2318 = vcombine.high %v2284, %v2300
        %v2320 = vunpack.c.l.s4 1934713408
        %v2321 = vunpack.c.0.s8 %v2320
        %v2322 = vlaneseq
        %v2323 = vshrl.u32 %v2322, 7
        %v2324 = vsub.s32 %v2321, %v2323
        %v2325 = vrot.slane %v2317, %v2324
        %v2327 = vunpack.c.l.s4 1934713408
        %v2328 = vunpack.c.0.s8 %v2327
        %v2329 = vlaneseq
        %v2330 = vshrl.u32 %v2329, 7
        %v2331 = vsub.s32 %v2328, %v2330
        %v2332 = vrot.slane %v2318, %v2331
        %v2333 = vcombine.high %v2309, 0.0
        %v2334 = vcombine.high %v2316, 0.0
        %v2335 = vcombine.high %v2325, 0.0
        %v2336 = vcombine.high %v2332, 0.0
        %v2337 = vcombine.low %v2224, %v2240
        %v2338 = vcombine.high %v2224, %v2240
        %v2340 = vunpack.c.l.s4 1983009808
        %v2341 = vunpack.c.0.s8 %v2340
        %v2342 = vlaneseq
        %v2343 = vshrl.u32 %v2342, 7
        %v2344 = vsub.s32 %v2341, %v2343
        %v2345 = vrot.slane %v2337, %v2344
        %v2347 = vunpack.c.l.s4 1983009808
        %v2348 = vunpack.c.0.s8 %v2347
        %v2349 = vlaneseq
        %v2350 = vshrl.u32 %v2349, 7
        %v2351 = vsub.s32 %v2348, %v2350
        %v2352 = vrot.slane %v2338, %v2351
        %v2353 = vcombine.low %v2232, %v2248
        %v2354 = vcombine.high %v2232, %v2248
        %v2356 = vunpack.c.l.s4 1983009808
        %v2357 = vunpack.c.0.s8 %v2356
        %v2358 = vlaneseq
        %v2359 = vshrl.u32 %v2358, 7
        %v2360 = vsub.s32 %v2357, %v2359
        %v2361 = vrot.slane %v2353, %v2360
        %v2363 = vunpack.c.l.s4 1983009808
        %v2364 = vunpack.c.0.s8 %v2363
        %v2365 = vlaneseq
        %v2366 = vshrl.u32 %v2365, 7
        %v2367 = vsub.s32 %v2364, %v2366
        %v2368 = vrot.slane %v2354, %v2367
        %v2369 = vcombine.low %v2345, %v2361
        %v2370 = vcombine.high %v2345, %v2361
        %v2372 = vunpack.c.l.s4 1934713408
        %v2373 = vunpack.c.0.s8 %v2372
        %v2374 = vlaneseq
        %v2375 = vshrl.u32 %v2374, 7
        %v2376 = vsub.s32 %v2373, %v2375
        %v2377 = vrot.slane %v2369, %v2376
        %v2379 = vunpack.c.l.s4 1934713408
        %v2380 = vunpack.c.0.s8 %v2379
        %v2381 = vlaneseq
        %v2382 = vshrl.u32 %v2381, 7
        %v2383 = vsub.s32 %v2380, %v2382
        %v2384 = vrot.slane %v2370, %v2383
        %v2385 = vcombine.low %v2352, %v2368
        %v2386 = vcombine.high %v2352, %v2368
        %v2388 = vunpack.c.l.s4 1934713408
        %v2389 = vunpack.c.0.s8 %v2388
        %v2390 = vlaneseq
        %v2391 = vshrl.u32 %v2390, 7
        %v2392 = vsub.s32 %v2389, %v2391
        %v2393 = vrot.slane %v2385, %v2392
        %v2395 = vunpack.c.l.s4 1934713408
        %v2396 = vunpack.c.0.s8 %v2395
        %v2397 = vlaneseq
        %v2398 = vshrl.u32 %v2397, 7
        %v2399 = vsub.s32 %v2396, %v2398
        %v2400 = vrot.slane %v2386, %v2399
        %v2401 = vcombine.high %v2377, 0.0
        %v2402 = vcombine.high %v2384, 0.0
        %v2403 = vcombine.high %v2393, 0.0
        %v2404 = vcombine.high %v2400, 0.0
        %v2405 = vcombine.low %v2226, %v2242
        %v2406 = vcombine.high %v2226, %v2242
        %v2408 = vunpack.c.l.s4 1983009808
        %v2409 = vunpack.c.0.s8 %v2408
        %v2410 = vlaneseq
        %v2411 = vshrl.u32 %v2410, 7
        %v2412 = vsub.s32 %v2409, %v2411
        %v2413 = vrot.slane %v2405, %v2412
        %v2415 = vunpack.c.l.s4 1983009808
        %v2416 = vunpack.c.0.s8 %v2415
        %v2417 = vlaneseq
        %v2418 = vshrl.u32 %v2417, 7
        %v2419 = vsub.s32 %v2416, %v2418
        %v2420 = vrot.slane %v2406, %v2419
        %v2421 = vcombine.low %v2234, %v2250
        %v2422 = vcombine.high %v2234, %v2250
        %v2424 = vunpack.c.l.s4 1983009808
        %v2425 = vunpack.c.0.s8 %v2424
        %v2426 = vlaneseq
        %v2427 = vshrl.u32 %v2426, 7
        %v2428 = vsub.s32 %v2425, %v2427
        %v2429 = vrot.slane %v2421, %v2428
        %v2431 = vunpack.c.l.s4 1983009808
        %v2432 = vunpack.c.0.s8 %v2431
        %v2433 = vlaneseq
        %v2434 = vshrl.u32 %v2433, 7
        %v2435 = vsub.s32 %v2432, %v2434
        %v2436 = vrot.slane %v2422, %v2435
        %v2437 = vcombine.low %v2413, %v2429
        %v2438 = vcombine.high %v2413, %v2429
        %v2440 = vunpack.c.l.s4 1934713408
        %v2441 = vunpack.c.0.s8 %v2440
        %v2442 = vlaneseq
        %v2443 = vshrl.u32 %v2442, 7
        %v2444 = vsub.s32 %v2441, %v2443
        %v2445 = vrot.slane %v2437, %v2444
        %v2447 = vunpack.c.l.s4 1934713408
        %v2448 = vunpack.c.0.s8 %v2447
        %v2449 = vlaneseq
        %v2450 = vshrl.u32 %v2449, 7
        %v2451 = vsub.s32 %v2448, %v2450
        %v2452 = vrot.slane %v2438, %v2451
        %v2453 = vcombine.low %v2420, %v2436
        %v2454 = vcombine.high %v2420, %v2436
        %v2456 = vunpack.c.l.s4 1934713408
        %v2457 = vunpack.c.0.s8 %v2456
        %v2458 = vlaneseq
        %v2459 = vshrl.u32 %v2458, 7
        %v2460 = vsub.s32 %v2457, %v2459
        %v2461 = vrot.slane %v2453, %v2460
        %v2463 = vunpack.c.l.s4 1934713408
        %v2464 = vunpack.c.0.s8 %v2463
        %v2465 = vlaneseq
        %v2466 = vshrl.u32 %v2465, 7
        %v2467 = vsub.s32 %v2464, %v2466
        %v2468 = vrot.slane %v2454, %v2467
        %v2469 = vcombine.high %v2445, 0.0
        %v2470 = vcombine.high %v2452, 0.0
        %v2471 = vcombine.high %v2461, 0.0
        %v2472 = vcombine.high %v2468, 0.0
        %v2473 = vcombine.low %v2228, %v2244
        %v2474 = vcombine.high %v2228, %v2244
        %v2476 = vunpack.c.l.s4 1983009808
        %v2477 = vunpack.c.0.s8 %v2476
        %v2478 = vlaneseq
        %v2479 = vshrl.u32 %v2478, 7
        %v2480 = vsub.s32 %v2477, %v2479
        %v2481 = vrot.slane %v2473, %v2480
        %v2483 = vunpack.c.l.s4 1983009808
        %v2484 = vunpack.c.0.s8 %v2483
        %v2485 = vlaneseq
        %v2486 = vshrl.u32 %v2485, 7
        %v2487 = vsub.s32 %v2484, %v2486
        %v2488 = vrot.slane %v2474, %v2487
        %v2489 = vcombine.low %v2236, %v2252
        %v2490 = vcombine.high %v2236, %v2252
        %v2492 = vunpack.c.l.s4 1983009808
        %v2493 = vunpack.c.0.s8 %v2492
        %v2494 = vlaneseq
        %v2495 = vshrl.u32 %v2494, 7
        %v2496 = vsub.s32 %v2493, %v2495
        %v2497 = vrot.slane %v2489, %v2496
        %v2499 = vunpack.c.l.s4 1983009808
        %v2500 = vunpack.c.0.s8 %v2499
        %v2501 = vlaneseq
        %v2502 = vshrl.u32 %v2501, 7
        %v2503 = vsub.s32 %v2500, %v2502
        %v2504 = vrot.slane %v2490, %v2503
        %v2505 = vcombine.low %v2481, %v2497
        %v2506 = vcombine.high %v2481, %v2497
        %v2508 = vunpack.c.l.s4 1934713408
        %v2509 = vunpack.c.0.s8 %v2508
        %v2510 = vlaneseq
        %v2511 = vshrl.u32 %v2510, 7
        %v2512 = vsub.s32 %v2509, %v2511
        %v2513 = vrot.slane %v2505, %v2512
        %v2515 = vunpack.c.l.s4 1934713408
        %v2516 = vunpack.c.0.s8 %v2515
        %v2517 = vlaneseq
        %v2518 = vshrl.u32 %v2517, 7
        %v2519 = vsub.s32 %v2516, %v2518
        %v2520 = vrot.slane %v2506, %v2519
        %v2521 = vcombine.low %v2488, %v2504
        %v2522 = vcombine.high %v2488, %v2504
        %v2524 = vunpack.c.l.s4 1934713408
        %v2525 = vunpack.c.0.s8 %v2524
        %v2526 = vlaneseq
        %v2527 = vshrl.u32 %v2526, 7
        %v2528 = vsub.s32 %v2525, %v2527
        %v2529 = vrot.slane %v2521, %v2528
        %v2531 = vunpack.c.l.s4 1934713408
        %v2532 = vunpack.c.0.s8 %v2531
        %v2533 = vlaneseq
        %v2534 = vshrl.u32 %v2533, 7
        %v2535 = vsub.s32 %v2532, %v2534
        %v2536 = vrot.slane %v2522, %v2535
        %v2537 = vcombine.high %v2513, 0.0
        %v2538 = vcombine.high %v2520, 0.0
        %v2539 = vcombine.high %v2529, 0.0
        %v2540 = vcombine.high %v2536, 0.0
        %2542 = vrot.lane.b32.xlu0 %v2333, 32
        %v2543 = vpop.permute.xlu0 %2542
        %2546 = vrot.lane.b32.xlu0 %v2316, 64
        %v2547 = vpop.permute.xlu0 %2546
        %2550 = vrot.lane.b32.xlu0 %v2334, 96
        %v2551 = vpop.permute.xlu0 %2550
        %2554 = vrot.lane.b32.xlu0 %v2335, 32
        %v2555 = vpop.permute.xlu0 %2554
        %2558 = vrot.lane.b32.xlu0 %v2332, 64
        %v2559 = vpop.permute.xlu0 %2558
        %2562 = vrot.lane.b32.xlu0 %v2336, 96
        %v2563 = vpop.permute.xlu0 %2562
        %2566 = vrot.lane.b32.xlu0 %v2401, 32
        %v2567 = vpop.permute.xlu0 %2566
        %2570 = vrot.lane.b32.xlu0 %v2384, 64
        %v2571 = vpop.permute.xlu0 %2570
        %2574 = vrot.lane.b32.xlu0 %v2402, 96
        %v2575 = vpop.permute.xlu0 %2574
        %2578 = vrot.lane.b32.xlu0 %v2403, 32
        %v2579 = vpop.permute.xlu0 %2578
        %2582 = vrot.lane.b32.xlu0 %v2400, 64
        %v2583 = vpop.permute.xlu0 %2582
        %2586 = vrot.lane.b32.xlu0 %v2404, 96
        %v2587 = vpop.permute.xlu0 %2586
        %2590 = vrot.lane.b32.xlu0 %v2469, 32
        %v2591 = vpop.permute.xlu0 %2590
        %2594 = vrot.lane.b32.xlu0 %v2452, 64
        %v2595 = vpop.permute.xlu0 %2594
        %2598 = vrot.lane.b32.xlu0 %v2470, 96
        %v2599 = vpop.permute.xlu0 %2598
        %2602 = vrot.lane.b32.xlu0 %v2471, 32
        %v2603 = vpop.permute.xlu0 %2602
        %2606 = vrot.lane.b32.xlu0 %v2468, 64
        %v2607 = vpop.permute.xlu0 %2606
        %2610 = vrot.lane.b32.xlu0 %v2472, 96
        %v2611 = vpop.permute.xlu0 %2610
        %2614 = vrot.lane.b32.xlu0 %v2537, 32
        %v2615 = vpop.permute.xlu0 %2614
        %2618 = vrot.lane.b32.xlu0 %v2520, 64
        %v2619 = vpop.permute.xlu0 %2618
        %2622 = vrot.lane.b32.xlu0 %v2538, 96
        %v2623 = vpop.permute.xlu0 %2622
        %2626 = vrot.lane.b32.xlu0 %v2539, 32
        %v2627 = vpop.permute.xlu0 %2626
        %2630 = vrot.lane.b32.xlu0 %v2536, 64
        %v2631 = vpop.permute.xlu0 %2630
        %2634 = vrot.lane.b32.xlu0 %v2540, 96
        %v2635 = vpop.permute.xlu0 %2634
        %v2637 = vsel %vm1111, %v2309, %v2543
        %v2638 = vsel %vm1113, %v2637, %v2547
        %v2639 = vsel %vm1115, %v2638, %v2551
        %v2640 = vsel %vm1111, %v2325, %v2555
        %v2641 = vsel %vm1113, %v2640, %v2559
        %v2642 = vsel %vm1115, %v2641, %v2563
        %v2643 = vsel %vm1111, %v2377, %v2567
        %v2644 = vsel %vm1113, %v2643, %v2571
        %v2645 = vsel %vm1115, %v2644, %v2575
        %v2646 = vsel %vm1111, %v2393, %v2579
        %v2647 = vsel %vm1113, %v2646, %v2583
        %v2648 = vsel %vm1115, %v2647, %v2587
        %v2649 = vsel %vm1111, %v2445, %v2591
        %v2650 = vsel %vm1113, %v2649, %v2595
        %v2651 = vsel %vm1115, %v2650, %v2599
        %v2652 = vsel %vm1111, %v2461, %v2603
        %v2653 = vsel %vm1113, %v2652, %v2607
        %v2654 = vsel %vm1115, %v2653, %v2611
        %v2655 = vsel %vm1111, %v2513, %v2615
        %v2656 = vsel %vm1113, %v2655, %v2619
        %v2657 = vsel %vm1115, %v2656, %v2623
        %v2658 = vsel %vm1111, %v2529, %v2627
        %v2659 = vsel %vm1113, %v2658, %v2631
        %v2660 = vsel %vm1115, %v2659, %v2635
        %s2661 = scalar_lea.vmem %s3, 16
        %v2662 = vld [vmem:[%s2661] sm:$0xff]
        %v2664 = vsel %vm1597, %v2662, 0
        %v2667 = vsel %vm1601, %v2639, 0
        %v2670 = vsel %vm1601, %v2642, 0
        %v2673 = vsel %vm1601, %v2645, 0
        %v2676 = vsel %vm1601, %v2648, 0
        %v2679 = vsel %vm1601, %v2651, 0
        %v2682 = vsel %vm1601, %v2654, 0
        %v2685 = vsel %vm1601, %v2657, 0
        %v2688 = vsel %vm1601, %v2660, 0
        %2690 = vmatprep.subr.mxu0 %v2670
        %2691 = vmatpush1.msra.mxu0 %v2667
        %2692 = vmatprep.subr.mxu0 0.0
        %2693 = vmatpush1.msra.mxu0 0.0
        %2694 = vmatprep.subr.mxu0 0.0
        %2695 = vmatpush1.msra.mxu0 0.0
        %2696 = vmatprep.subr.mxu0 0.0
        %2697 = vmatpush1.msra.mxu0 0.0
        %2698 = vmatprep.subr.mxu0 0.0
        %2699 = vmatpush1.msra.mxu0 0.0
        %2700 = vmatprep.subr.mxu0 0.0
        %2701 = vmatpush1.msra.mxu0 0.0
        %2702 = vmatprep.subr.mxu0 0.0
        %2703 = vmatpush1.msra.mxu0 0.0
        %2704 = vmatprep.subr.mxu0 0.0
        %2705 = vmatpush1.msra.mxu0 0.0
        %2706 = vmatprep.subr.mxu0 0.0
        %2707 = vmatpush1.msra.mxu0 0.0
        %2708 = vmatprep.subr.mxu0 0.0
        %2709 = vmatpush1.msra.mxu0 0.0
        %2710 = vmatprep.subr.mxu0 0.0
        %2711 = vmatpush1.msra.mxu0 0.0
        %2712 = vmatprep.subr.mxu0 0.0
        %2713 = vmatpush1.msra.mxu0 0.0
        %2714 = vmatprep.subr.mxu0 0.0
        %2715 = vmatpush1.msra.mxu0 0.0
        %2716 = vmatprep.subr.mxu0 0.0
        %2717 = vmatpush1.msra.mxu0 0.0
        %2718 = vmatprep.subr.mxu0 0.0
        %2719 = vmatpush1.msra.mxu0 0.0
        %2720 = vmatprep.subr.mxu0 0.0
        %2721 = vmatpush1.msra.mxu0 0.0
        %2722 = vmatprep.subr.mxu0 0.0
        %2723 = vmatpush1.msra.mxu0 0.0
        %2724 = vmatprep.subr.mxu0 0.0
        %2725 = vmatpush1.msra.mxu0 0.0
        %2726 = vmatprep.subr.mxu0 0.0
        %2727 = vmatpush1.msra.mxu0 0.0
        %2728 = vmatprep.subr.mxu0 0.0
        %2729 = vmatpush1.msra.mxu0 0.0
        %2730 = vmatprep.subr.mxu0 0.0
        %2731 = vmatpush1.msra.mxu0 0.0
        %2732 = vmatprep.subr.mxu0 0.0
        %2733 = vmatpush1.msra.mxu0 0.0
        %2734 = vmatprep.subr.mxu0 0.0
        %2735 = vmatpush1.msra.mxu0 0.0
        %2736 = vmatprep.subr.mxu0 0.0
        %2737 = vmatpush1.msra.mxu0 0.0
        %2738 = vmatprep.subr.mxu0 0.0
        %2739 = vmatpush1.msra.mxu0 0.0
        %2740 = vmatprep.subr.mxu0 0.0
        %2741 = vmatpush1.msra.mxu0 0.0
        %2742 = vmatprep.subr.mxu0 0.0
        %2743 = vmatpush1.msra.mxu0 0.0
        %2744 = vmatprep.subr.mxu0 0.0
        %2745 = vmatpush1.msra.mxu0 0.0
        %2746 = vmatprep.subr.mxu0 0.0
        %2747 = vmatpush1.msra.mxu0 0.0
        %2748 = vmatprep.subr.mxu0 0.0
        %2749 = vmatpush1.msra.mxu0 0.0
        %2750 = vmatprep.subr.mxu0 0.0
        %2751 = vmatpush1.msra.mxu0 0.0
        %2752 = vmatprep.subr.mxu0 0.0
        %2753 = vmatpush1.msra.mxu0 0.0
        %2754 = vmatprep.mubr.f32.mxu0 0.0
        %2755 = vmatmul.mubr.f32.gmra.mrb[0].mxu0 %v2664
        %v2756 = vpop.f32.mrb[0].mxu0
        %v2757 = vadd.f32 0.0, %v2756
        %v2758 = vpop.f32.mrb[0].mxu0
        %v2759 = vadd.f32 0.0, %v2758
        %2760 = vdwg.mxu0
        %2761 = vmatprep.subr.mxu0 %v2676
        %2762 = vmatpush1.msra.mxu0 %v2673
        %2763 = vmatprep.subr.mxu0 0.0
        %2764 = vmatpush1.msra.mxu0 0.0
        %2765 = vmatprep.subr.mxu0 0.0
        %2766 = vmatpush1.msra.mxu0 0.0
        %2767 = vmatprep.subr.mxu0 0.0
        %2768 = vmatpush1.msra.mxu0 0.0
        %2769 = vmatprep.subr.mxu0 0.0
        %2770 = vmatpush1.msra.mxu0 0.0
        %2771 = vmatprep.subr.mxu0 0.0
        %2772 = vmatpush1.msra.mxu0 0.0
        %2773 = vmatprep.subr.mxu0 0.0
        %2774 = vmatpush1.msra.mxu0 0.0
        %2775 = vmatprep.subr.mxu0 0.0
        %2776 = vmatpush1.msra.mxu0 0.0
        %2777 = vmatprep.subr.mxu0 0.0
        %2778 = vmatpush1.msra.mxu0 0.0
        %2779 = vmatprep.subr.mxu0 0.0
        %2780 = vmatpush1.msra.mxu0 0.0
        %2781 = vmatprep.subr.mxu0 0.0
        %2782 = vmatpush1.msra.mxu0 0.0
        %2783 = vmatprep.subr.mxu0 0.0
        %2784 = vmatpush1.msra.mxu0 0.0
        %2785 = vmatprep.subr.mxu0 0.0
        %2786 = vmatpush1.msra.mxu0 0.0
        %2787 = vmatprep.subr.mxu0 0.0
        %2788 = vmatpush1.msra.mxu0 0.0
        %2789 = vmatprep.subr.mxu0 0.0
        %2790 = vmatpush1.msra.mxu0 0.0
        %2791 = vmatprep.subr.mxu0 0.0
        %2792 = vmatpush1.msra.mxu0 0.0
        %2793 = vmatprep.subr.mxu0 0.0
        %2794 = vmatpush1.msra.mxu0 0.0
        %2795 = vmatprep.subr.mxu0 0.0
        %2796 = vmatpush1.msra.mxu0 0.0
        %2797 = vmatprep.subr.mxu0 0.0
        %2798 = vmatpush1.msra.mxu0 0.0
        %2799 = vmatprep.subr.mxu0 0.0
        %2800 = vmatpush1.msra.mxu0 0.0
        %2801 = vmatprep.subr.mxu0 0.0
        %2802 = vmatpush1.msra.mxu0 0.0
        %2803 = vmatprep.subr.mxu0 0.0
        %2804 = vmatpush1.msra.mxu0 0.0
        %2805 = vmatprep.subr.mxu0 0.0
        %2806 = vmatpush1.msra.mxu0 0.0
        %2807 = vmatprep.subr.mxu0 0.0
        %2808 = vmatpush1.msra.mxu0 0.0
        %2809 = vmatprep.subr.mxu0 0.0
        %2810 = vmatpush1.msra.mxu0 0.0
        %2811 = vmatprep.subr.mxu0 0.0
        %2812 = vmatpush1.msra.mxu0 0.0
        %2813 = vmatprep.subr.mxu0 0.0
        %2814 = vmatpush1.msra.mxu0 0.0
        %2815 = vmatprep.subr.mxu0 0.0
        %2816 = vmatpush1.msra.mxu0 0.0
        %2817 = vmatprep.subr.mxu0 0.0
        %2818 = vmatpush1.msra.mxu0 0.0
        %2819 = vmatprep.subr.mxu0 0.0
        %2820 = vmatpush1.msra.mxu0 0.0
        %2821 = vmatprep.subr.mxu0 0.0
        %2822 = vmatpush1.msra.mxu0 0.0
        %2823 = vmatprep.subr.mxu0 0.0
        %2824 = vmatpush1.msra.mxu0 0.0
        %2825 = vmatprep.mubr.f32.mxu0 0.0
        %2826 = vmatmul.mubr.f32.gmra.mrb[0].mxu0 %v2664
        %v2827 = vpop.f32.mrb[0].mxu0
        %v2828 = vadd.f32 0.0, %v2827
        %v2829 = vpop.f32.mrb[0].mxu0
        %v2830 = vadd.f32 0.0, %v2829
        %2831 = vdwg.mxu0
        %2832 = vmatprep.subr.mxu0 %v2682
        %2833 = vmatpush1.msra.mxu0 %v2679
        %2834 = vmatprep.subr.mxu0 0.0
        %2835 = vmatpush1.msra.mxu0 0.0
        %2836 = vmatprep.subr.mxu0 0.0
        %2837 = vmatpush1.msra.mxu0 0.0
        %2838 = vmatprep.subr.mxu0 0.0
        %2839 = vmatpush1.msra.mxu0 0.0
        %2840 = vmatprep.subr.mxu0 0.0
        %2841 = vmatpush1.msra.mxu0 0.0
        %2842 = vmatprep.subr.mxu0 0.0
        %2843 = vmatpush1.msra.mxu0 0.0
        %2844 = vmatprep.subr.mxu0 0.0
        %2845 = vmatpush1.msra.mxu0 0.0
        %2846 = vmatprep.subr.mxu0 0.0
        %2847 = vmatpush1.msra.mxu0 0.0
        %2848 = vmatprep.subr.mxu0 0.0
        %2849 = vmatpush1.msra.mxu0 0.0
        %2850 = vmatprep.subr.mxu0 0.0
        %2851 = vmatpush1.msra.mxu0 0.0
        %2852 = vmatprep.subr.mxu0 0.0
        %2853 = vmatpush1.msra.mxu0 0.0
        %2854 = vmatprep.subr.mxu0 0.0
        %2855 = vmatpush1.msra.mxu0 0.0
        %2856 = vmatprep.subr.mxu0 0.0
        %2857 = vmatpush1.msra.mxu0 0.0
        %2858 = vmatprep.subr.mxu0 0.0
        %2859 = vmatpush1.msra.mxu0 0.0
        %2860 = vmatprep.subr.mxu0 0.0
        %2861 = vmatpush1.msra.mxu0 0.0
        %2862 = vmatprep.subr.mxu0 0.0
        %2863 = vmatpush1.msra.mxu0 0.0
        %2864 = vmatprep.subr.mxu0 0.0
        %2865 = vmatpush1.msra.mxu0 0.0
        %2866 = vmatprep.subr.mxu0 0.0
        %2867 = vmatpush1.msra.mxu0 0.0
        %2868 = vmatprep.subr.mxu0 0.0
        %2869 = vmatpush1.msra.mxu0 0.0
        %2870 = vmatprep.subr.mxu0 0.0
        %2871 = vmatpush1.msra.mxu0 0.0
        %2872 = vmatprep.subr.mxu0 0.0
        %2873 = vmatpush1.msra.mxu0 0.0
        %2874 = vmatprep.subr.mxu0 0.0
        %2875 = vmatpush1.msra.mxu0 0.0
        %2876 = vmatprep.subr.mxu0 0.0
        %2877 = vmatpush1.msra.mxu0 0.0
        %2878 = vmatprep.subr.mxu0 0.0
        %2879 = vmatpush1.msra.mxu0 0.0
        %2880 = vmatprep.subr.mxu0 0.0
        %2881 = vmatpush1.msra.mxu0 0.0
        %2882 = vmatprep.subr.mxu0 0.0
        %2883 = vmatpush1.msra.mxu0 0.0
        %2884 = vmatprep.subr.mxu0 0.0
        %2885 = vmatpush1.msra.mxu0 0.0
        %2886 = vmatprep.subr.mxu0 0.0
        %2887 = vmatpush1.msra.mxu0 0.0
        %2888 = vmatprep.subr.mxu0 0.0
        %2889 = vmatpush1.msra.mxu0 0.0
        %2890 = vmatprep.subr.mxu0 0.0
        %2891 = vmatpush1.msra.mxu0 0.0
        %2892 = vmatprep.subr.mxu0 0.0
        %2893 = vmatpush1.msra.mxu0 0.0
        %2894 = vmatprep.subr.mxu0 0.0
        %2895 = vmatpush1.msra.mxu0 0.0
        %2896 = vmatprep.mubr.f32.mxu0 0.0
        %2897 = vmatmul.mubr.f32.gmra.mrb[0].mxu0 %v2664
        %v2898 = vpop.f32.mrb[0].mxu0
        %v2899 = vadd.f32 0.0, %v2898
        %v2900 = vpop.f32.mrb[0].mxu0
        %v2901 = vadd.f32 0.0, %v2900
        %2902 = vdwg.mxu0
        %2903 = vmatprep.subr.mxu0 %v2688
        %2904 = vmatpush1.msra.mxu0 %v2685
        %2905 = vmatprep.subr.mxu0 0.0
        %2906 = vmatpush1.msra.mxu0 0.0
        %2907 = vmatprep.subr.mxu0 0.0
        %2908 = vmatpush1.msra.mxu0 0.0
        %2909 = vmatprep.subr.mxu0 0.0
        %2910 = vmatpush1.msra.mxu0 0.0
        %2911 = vmatprep.subr.mxu0 0.0
        %2912 = vmatpush1.msra.mxu0 0.0
        %2913 = vmatprep.subr.mxu0 0.0
        %2914 = vmatpush1.msra.mxu0 0.0
        %2915 = vmatprep.subr.mxu0 0.0
        %2916 = vmatpush1.msra.mxu0 0.0
        %2917 = vmatprep.subr.mxu0 0.0
        %2918 = vmatpush1.msra.mxu0 0.0
        %2919 = vmatprep.subr.mxu0 0.0
        %2920 = vmatpush1.msra.mxu0 0.0
        %2921 = vmatprep.subr.mxu0 0.0
        %2922 = vmatpush1.msra.mxu0 0.0
        %2923 = vmatprep.subr.mxu0 0.0
        %2924 = vmatpush1.msra.mxu0 0.0
        %2925 = vmatprep.subr.mxu0 0.0
        %2926 = vmatpush1.msra.mxu0 0.0
        %2927 = vmatprep.subr.mxu0 0.0
        %2928 = vmatpush1.msra.mxu0 0.0
        %2929 = vmatprep.subr.mxu0 0.0
        %2930 = vmatpush1.msra.mxu0 0.0
        %2931 = vmatprep.subr.mxu0 0.0
        %2932 = vmatpush1.msra.mxu0 0.0
        %2933 = vmatprep.subr.mxu0 0.0
        %2934 = vmatpush1.msra.mxu0 0.0
        %2935 = vmatprep.subr.mxu0 0.0
        %2936 = vmatpush1.msra.mxu0 0.0
        %2937 = vmatprep.subr.mxu0 0.0
        %2938 = vmatpush1.msra.mxu0 0.0
        %2939 = vmatprep.subr.mxu0 0.0
        %2940 = vmatpush1.msra.mxu0 0.0
        %2941 = vmatprep.subr.mxu0 0.0
        %2942 = vmatpush1.msra.mxu0 0.0
        %2943 = vmatprep.subr.mxu0 0.0
        %2944 = vmatpush1.msra.mxu0 0.0
        %2945 = vmatprep.subr.mxu0 0.0
        %2946 = vmatpush1.msra.mxu0 0.0
        %2947 = vmatprep.subr.mxu0 0.0
        %2948 = vmatpush1.msra.mxu0 0.0
        %2949 = vmatprep.subr.mxu0 0.0
        %2950 = vmatpush1.msra.mxu0 0.0
        %2951 = vmatprep.subr.mxu0 0.0
        %2952 = vmatpush1.msra.mxu0 0.0
        %2953 = vmatprep.subr.mxu0 0.0
        %2954 = vmatpush1.msra.mxu0 0.0
        %2955 = vmatprep.subr.mxu0 0.0
        %2956 = vmatpush1.msra.mxu0 0.0
        %2957 = vmatprep.subr.mxu0 0.0
        %2958 = vmatpush1.msra.mxu0 0.0
        %2959 = vmatprep.subr.mxu0 0.0
        %2960 = vmatpush1.msra.mxu0 0.0
        %2961 = vmatprep.subr.mxu0 0.0
        %2962 = vmatpush1.msra.mxu0 0.0
        %2963 = vmatprep.subr.mxu0 0.0
        %2964 = vmatpush1.msra.mxu0 0.0
        %2965 = vmatprep.subr.mxu0 0.0
        %2966 = vmatpush1.msra.mxu0 0.0
        %2967 = vmatprep.mubr.f32.mxu0 0.0
        %2968 = vmatmul.mubr.f32.gmra.mrb[0].mxu0 %v2664
        %v2969 = vpop.f32.mrb[0].mxu0
        %v2970 = vadd.f32 0.0, %v2969
        %v2971 = vpop.f32.mrb[0].mxu0
        %v2972 = vadd.f32 0.0, %v2971
        %2973 = vdwg.mxu0
        %v2974 = vadd.f32 %v2004, %v2757
        %v2975 = vadd.f32 %v2006, %v2759
        %v2976 = vadd.f32 %v2075, %v2828
        %v2977 = vadd.f32 %v2077, %v2830
        %v2978 = vadd.f32 %v2146, %v2899
        %v2979 = vadd.f32 %v2148, %v2901
        %v2980 = vadd.f32 %v2217, %v2970
        %v2981 = vadd.f32 %v2219, %v2972
        %vm2986 = vcmask 1046528
        %v2987 = vrot.slane %v450, 1
        %v2988 = vrot.slane %v455, 1
        %v2989 = vsel %vm2986, %v2987, %v2988
        %v2990 = vrot.slane %v460, 1
        %v2991 = vsel %vm2986, %v2988, %v2990
        %v2992 = vrot.slane %v465, 1
        %v2993 = vsel %vm2986, %v2990, %v2992
        %v2994 = vrot.slane %v470, 1
        %v2995 = vsel %vm2986, %v2992, %v2994
        %v2996 = vrot.slane %v540, 1
        %v2997 = vrot.slane %v545, 1
        %v2998 = vsel %vm2986, %v2996, %v2997
        %v2999 = vrot.slane %v550, 1
        %v3000 = vsel %vm2986, %v2997, %v2999
        %v3001 = vrot.slane %v555, 1
        %v3002 = vsel %vm2986, %v2999, %v3001
        %v3003 = vrot.slane %v560, 1
        %v3004 = vsel %vm2986, %v3001, %v3003
        %v3005 = vrot.slane %v630, 1
        %v3006 = vrot.slane %v635, 1
        %v3007 = vsel %vm2986, %v3005, %v3006
        %v3008 = vrot.slane %v640, 1
        %v3009 = vsel %vm2986, %v3006, %v3008
        %v3010 = vrot.slane %v645, 1
        %v3011 = vsel %vm2986, %v3008, %v3010
        %v3012 = vrot.slane %v650, 1
        %v3013 = vsel %vm2986, %v3010, %v3012
        %v3014 = vrot.slane %v720, 1
        %v3015 = vrot.slane %v725, 1
        %v3016 = vsel %vm2986, %v3014, %v3015
        %v3017 = vrot.slane %v730, 1
        %v3018 = vsel %vm2986, %v3015, %v3017
        %v3019 = vrot.slane %v735, 1
        %v3020 = vsel %vm2986, %v3017, %v3019
        %v3021 = vrot.slane %v740, 1
        %v3022 = vsel %vm2986, %v3019, %v3021
        %v3039 = vcombine.low %v2989, %v3007
        %v3040 = vcombine.high %v2989, %v3007
        %v3042 = vunpack.c.l.s4 1983009808
        %v3043 = vunpack.c.0.s8 %v3042
        %v3044 = vlaneseq
        %v3045 = vshrl.u32 %v3044, 7
        %v3046 = vsub.s32 %v3043, %v3045
        %v3047 = vrot.slane %v3039, %v3046
        %v3049 = vunpack.c.l.s4 1983009808
        %v3050 = vunpack.c.0.s8 %v3049
        %v3051 = vlaneseq
        %v3052 = vshrl.u32 %v3051, 7
        %v3053 = vsub.s32 %v3050, %v3052
        %v3054 = vrot.slane %v3040, %v3053
        %v3055 = vcombine.low %v2998, %v3016
        %v3056 = vcombine.high %v2998, %v3016
        %v3058 = vunpack.c.l.s4 1983009808
        %v3059 = vunpack.c.0.s8 %v3058
        %v3060 = vlaneseq
        %v3061 = vshrl.u32 %v3060, 7
        %v3062 = vsub.s32 %v3059, %v3061
        %v3063 = vrot.slane %v3055, %v3062
        %v3065 = vunpack.c.l.s4 1983009808
        %v3066 = vunpack.c.0.s8 %v3065
        %v3067 = vlaneseq
        %v3068 = vshrl.u32 %v3067, 7
        %v3069 = vsub.s32 %v3066, %v3068
        %v3070 = vrot.slane %v3056, %v3069
        %v3071 = vcombine.low %v3047, %v3063
        %v3072 = vcombine.high %v3047, %v3063
        %v3074 = vunpack.c.l.s4 1934713408
        %v3075 = vunpack.c.0.s8 %v3074
        %v3076 = vlaneseq
        %v3077 = vshrl.u32 %v3076, 7
        %v3078 = vsub.s32 %v3075, %v3077
        %v3079 = vrot.slane %v3071, %v3078
        %v3081 = vunpack.c.l.s4 1934713408
        %v3082 = vunpack.c.0.s8 %v3081
        %v3083 = vlaneseq
        %v3084 = vshrl.u32 %v3083, 7
        %v3085 = vsub.s32 %v3082, %v3084
        %v3086 = vrot.slane %v3072, %v3085
        %v3087 = vcombine.low %v3054, %v3070
        %v3088 = vcombine.high %v3054, %v3070
        %v3090 = vunpack.c.l.s4 1934713408
        %v3091 = vunpack.c.0.s8 %v3090
        %v3092 = vlaneseq
        %v3093 = vshrl.u32 %v3092, 7
        %v3094 = vsub.s32 %v3091, %v3093
        %v3095 = vrot.slane %v3087, %v3094
        %v3097 = vunpack.c.l.s4 1934713408
        %v3098 = vunpack.c.0.s8 %v3097
        %v3099 = vlaneseq
        %v3100 = vshrl.u32 %v3099, 7
        %v3101 = vsub.s32 %v3098, %v3100
        %v3102 = vrot.slane %v3088, %v3101
        %v3103 = vcombine.high %v3079, 0.0
        %v3104 = vcombine.high %v3086, 0.0
        %v3105 = vcombine.high %v3095, 0.0
        %v3106 = vcombine.high %v3102, 0.0
        %v3107 = vcombine.low %v2991, %v3009
        %v3108 = vcombine.high %v2991, %v3009
        %v3110 = vunpack.c.l.s4 1983009808
        %v3111 = vunpack.c.0.s8 %v3110
        %v3112 = vlaneseq
        %v3113 = vshrl.u32 %v3112, 7
        %v3114 = vsub.s32 %v3111, %v3113
        %v3115 = vrot.slane %v3107, %v3114
        %v3117 = vunpack.c.l.s4 1983009808
        %v3118 = vunpack.c.0.s8 %v3117
        %v3119 = vlaneseq
        %v3120 = vshrl.u32 %v3119, 7
        %v3121 = vsub.s32 %v3118, %v3120
        %v3122 = vrot.slane %v3108, %v3121
        %v3123 = vcombine.low %v3000, %v3018
        %v3124 = vcombine.high %v3000, %v3018
        %v3126 = vunpack.c.l.s4 1983009808
        %v3127 = vunpack.c.0.s8 %v3126
        %v3128 = vlaneseq
        %v3129 = vshrl.u32 %v3128, 7
        %v3130 = vsub.s32 %v3127, %v3129
        %v3131 = vrot.slane %v3123, %v3130
        %v3133 = vunpack.c.l.s4 1983009808
        %v3134 = vunpack.c.0.s8 %v3133
        %v3135 = vlaneseq
        %v3136 = vshrl.u32 %v3135, 7
        %v3137 = vsub.s32 %v3134, %v3136
        %v3138 = vrot.slane %v3124, %v3137
        %v3139 = vcombine.low %v3115, %v3131
        %v3140 = vcombine.high %v3115, %v3131
        %v3142 = vunpack.c.l.s4 1934713408
        %v3143 = vunpack.c.0.s8 %v3142
        %v3144 = vlaneseq
        %v3145 = vshrl.u32 %v3144, 7
        %v3146 = vsub.s32 %v3143, %v3145
        %v3147 = vrot.slane %v3139, %v3146
        %v3149 = vunpack.c.l.s4 1934713408
        %v3150 = vunpack.c.0.s8 %v3149
        %v3151 = vlaneseq
        %v3152 = vshrl.u32 %v3151, 7
        %v3153 = vsub.s32 %v3150, %v3152
        %v3154 = vrot.slane %v3140, %v3153
        %v3155 = vcombine.low %v3122, %v3138
        %v3156 = vcombine.high %v3122, %v3138
        %v3158 = vunpack.c.l.s4 1934713408
        %v3159 = vunpack.c.0.s8 %v3158
        %v3160 = vlaneseq
        %v3161 = vshrl.u32 %v3160, 7
        %v3162 = vsub.s32 %v3159, %v3161
        %v3163 = vrot.slane %v3155, %v3162
        %v3165 = vunpack.c.l.s4 1934713408
        %v3166 = vunpack.c.0.s8 %v3165
        %v3167 = vlaneseq
        %v3168 = vshrl.u32 %v3167, 7
        %v3169 = vsub.s32 %v3166, %v3168
        %v3170 = vrot.slane %v3156, %v3169
        %v3171 = vcombine.high %v3147, 0.0
        %v3172 = vcombine.high %v3154, 0.0
        %v3173 = vcombine.high %v3163, 0.0
        %v3174 = vcombine.high %v3170, 0.0
        %v3175 = vcombine.low %v2993, %v3011
        %v3176 = vcombine.high %v2993, %v3011
        %v3178 = vunpack.c.l.s4 1983009808
        %v3179 = vunpack.c.0.s8 %v3178
        %v3180 = vlaneseq
        %v3181 = vshrl.u32 %v3180, 7
        %v3182 = vsub.s32 %v3179, %v3181
        %v3183 = vrot.slane %v3175, %v3182
        %v3185 = vunpack.c.l.s4 1983009808
        %v3186 = vunpack.c.0.s8 %v3185
        %v3187 = vlaneseq
        %v3188 = vshrl.u32 %v3187, 7
        %v3189 = vsub.s32 %v3186, %v3188
        %v3190 = vrot.slane %v3176, %v3189
        %v3191 = vcombine.low %v3002, %v3020
        %v3192 = vcombine.high %v3002, %v3020
        %v3194 = vunpack.c.l.s4 1983009808
        %v3195 = vunpack.c.0.s8 %v3194
        %v3196 = vlaneseq
        %v3197 = vshrl.u32 %v3196, 7
        %v3198 = vsub.s32 %v3195, %v3197
        %v3199 = vrot.slane %v3191, %v3198
        %v3201 = vunpack.c.l.s4 1983009808
        %v3202 = vunpack.c.0.s8 %v3201
        %v3203 = vlaneseq
        %v3204 = vshrl.u32 %v3203, 7
        %v3205 = vsub.s32 %v3202, %v3204
        %v3206 = vrot.slane %v3192, %v3205
        %v3207 = vcombine.low %v3183, %v3199
        %v3208 = vcombine.high %v3183, %v3199
        %v3210 = vunpack.c.l.s4 1934713408
        %v3211 = vunpack.c.0.s8 %v3210
        %v3212 = vlaneseq
        %v3213 = vshrl.u32 %v3212, 7
        %v3214 = vsub.s32 %v3211, %v3213
        %v3215 = vrot.slane %v3207, %v3214
        %v3217 = vunpack.c.l.s4 1934713408
        %v3218 = vunpack.c.0.s8 %v3217
        %v3219 = vlaneseq
        %v3220 = vshrl.u32 %v3219, 7
        %v3221 = vsub.s32 %v3218, %v3220
        %v3222 = vrot.slane %v3208, %v3221
        %v3223 = vcombine.low %v3190, %v3206
        %v3224 = vcombine.high %v3190, %v3206
        %v3226 = vunpack.c.l.s4 1934713408
        %v3227 = vunpack.c.0.s8 %v3226
        %v3228 = vlaneseq
        %v3229 = vshrl.u32 %v3228, 7
        %v3230 = vsub.s32 %v3227, %v3229
        %v3231 = vrot.slane %v3223, %v3230
        %v3233 = vunpack.c.l.s4 1934713408
        %v3234 = vunpack.c.0.s8 %v3233
        %v3235 = vlaneseq
        %v3236 = vshrl.u32 %v3235, 7
        %v3237 = vsub.s32 %v3234, %v3236
        %v3238 = vrot.slane %v3224, %v3237
        %v3239 = vcombine.high %v3215, 0.0
        %v3240 = vcombine.high %v3222, 0.0
        %v3241 = vcombine.high %v3231, 0.0
        %v3242 = vcombine.high %v3238, 0.0
        %v3243 = vcombine.low %v2995, %v3013
        %v3244 = vcombine.high %v2995, %v3013
        %v3246 = vunpack.c.l.s4 1983009808
        %v3247 = vunpack.c.0.s8 %v3246
        %v3248 = vlaneseq
        %v3249 = vshrl.u32 %v3248, 7
        %v3250 = vsub.s32 %v3247, %v3249
        %v3251 = vrot.slane %v3243, %v3250
        %v3253 = vunpack.c.l.s4 1983009808
        %v3254 = vunpack.c.0.s8 %v3253
        %v3255 = vlaneseq
        %v3256 = vshrl.u32 %v3255, 7
        %v3257 = vsub.s32 %v3254, %v3256
        %v3258 = vrot.slane %v3244, %v3257
        %v3259 = vcombine.low %v3004, %v3022
        %v3260 = vcombine.high %v3004, %v3022
        %v3262 = vunpack.c.l.s4 1983009808
        %v3263 = vunpack.c.0.s8 %v3262
        %v3264 = vlaneseq
        %v3265 = vshrl.u32 %v3264, 7
        %v3266 = vsub.s32 %v3263, %v3265
        %v3267 = vrot.slane %v3259, %v3266
        %v3269 = vunpack.c.l.s4 1983009808
        %v3270 = vunpack.c.0.s8 %v3269
        %v3271 = vlaneseq
        %v3272 = vshrl.u32 %v3271, 7
        %v3273 = vsub.s32 %v3270, %v3272
        %v3274 = vrot.slane %v3260, %v3273
        %v3275 = vcombine.low %v3251, %v3267
        %v3276 = vcombine.high %v3251, %v3267
        %v3278 = vunpack.c.l.s4 1934713408
        %v3279 = vunpack.c.0.s8 %v3278
        %v3280 = vlaneseq
        %v3281 = vshrl.u32 %v3280, 7
        %v3282 = vsub.s32 %v3279, %v3281
        %v3283 = vrot.slane %v3275, %v3282
        %v3285 = vunpack.c.l.s4 1934713408
        %v3286 = vunpack.c.0.s8 %v3285
        %v3287 = vlaneseq
        %v3288 = vshrl.u32 %v3287, 7
        %v3289 = vsub.s32 %v3286, %v3288
        %v3290 = vrot.slane %v3276, %v3289
        %v3291 = vcombine.low %v3258, %v3274
        %v3292 = vcombine.high %v3258, %v3274
        %v3294 = vunpack.c.l.s4 1934713408
        %v3295 = vunpack.c.0.s8 %v3294
        %v3296 = vlaneseq
        %v3297 = vshrl.u32 %v3296, 7
        %v3298 = vsub.s32 %v3295, %v3297
        %v3299 = vrot.slane %v3291, %v3298
        %v3301 = vunpack.c.l.s4 1934713408
        %v3302 = vunpack.c.0.s8 %v3301
        %v3303 = vlaneseq
        %v3304 = vshrl.u32 %v3303, 7
        %v3305 = vsub.s32 %v3302, %v3304
        %v3306 = vrot.slane %v3292, %v3305
        %v3307 = vcombine.high %v3283, 0.0
        %v3308 = vcombine.high %v3290, 0.0
        %v3309 = vcombine.high %v3299, 0.0
        %v3310 = vcombine.high %v3306, 0.0
        %3312 = vrot.lane.b32.xlu0 %v3103, 32
        %v3313 = vpop.permute.xlu0 %3312
        %3316 = vrot.lane.b32.xlu0 %v3086, 64
        %v3317 = vpop.permute.xlu0 %3316
        %3320 = vrot.lane.b32.xlu0 %v3104, 96
        %v3321 = vpop.permute.xlu0 %3320
        %3324 = vrot.lane.b32.xlu0 %v3105, 32
        %v3325 = vpop.permute.xlu0 %3324
        %3328 = vrot.lane.b32.xlu0 %v3102, 64
        %v3329 = vpop.permute.xlu0 %3328
        %3332 = vrot.lane.b32.xlu0 %v3106, 96
        %v3333 = vpop.permute.xlu0 %3332
        %3336 = vrot.lane.b32.xlu0 %v3171, 32
        %v3337 = vpop.permute.xlu0 %3336
        %3340 = vrot.lane.b32.xlu0 %v3154, 64
        %v3341 = vpop.permute.xlu0 %3340
        %3344 = vrot.lane.b32.xlu0 %v3172, 96
        %v3345 = vpop.permute.xlu0 %3344
        %3348 = vrot.lane.b32.xlu0 %v3173, 32
        %v3349 = vpop.permute.xlu0 %3348
        %3352 = vrot.lane.b32.xlu0 %v3170, 64
        %v3353 = vpop.permute.xlu0 %3352
        %3356 = vrot.lane.b32.xlu0 %v3174, 96
        %v3357 = vpop.permute.xlu0 %3356
        %3360 = vrot.lane.b32.xlu0 %v3239, 32
        %v3361 = vpop.permute.xlu0 %3360
        %3364 = vrot.lane.b32.xlu0 %v3222, 64
        %v3365 = vpop.permute.xlu0 %3364
        %3368 = vrot.lane.b32.xlu0 %v3240, 96
        %v3369 = vpop.permute.xlu0 %3368
        %3372 = vrot.lane.b32.xlu0 %v3241, 32
        %v3373 = vpop.permute.xlu0 %3372
        %3376 = vrot.lane.b32.xlu0 %v3238, 64
        %v3377 = vpop.permute.xlu0 %3376
        %3380 = vrot.lane.b32.xlu0 %v3242, 96
        %v3381 = vpop.permute.xlu0 %3380
        %3384 = vrot.lane.b32.xlu0 %v3307, 32
        %v3385 = vpop.permute.xlu0 %3384
        %3388 = vrot.lane.b32.xlu0 %v3290, 64
        %v3389 = vpop.permute.xlu0 %3388
        %3392 = vrot.lane.b32.xlu0 %v3308, 96
        %v3393 = vpop.permute.xlu0 %3392
        %3396 = vrot.lane.b32.xlu0 %v3309, 32
        %v3397 = vpop.permute.xlu0 %3396
        %3400 = vrot.lane.b32.xlu0 %v3306, 64
        %v3401 = vpop.permute.xlu0 %3400
        %3404 = vrot.lane.b32.xlu0 %v3310, 96
        %v3405 = vpop.permute.xlu0 %3404
        %v3407 = vsel %vm1111, %v3079, %v3313
        %v3408 = vsel %vm1113, %v3407, %v3317
        %v3409 = vsel %vm1115, %v3408, %v3321
        %v3410 = vsel %vm1111, %v3095, %v3325
        %v3411 = vsel %vm1113, %v3410, %v3329
        %v3412 = vsel %vm1115, %v3411, %v3333
        %v3413 = vsel %vm1111, %v3147, %v3337
        %v3414 = vsel %vm1113, %v3413, %v3341
        %v3415 = vsel %vm1115, %v3414, %v3345
        %v3416 = vsel %vm1111, %v3163, %v3349
        %v3417 = vsel %vm1113, %v3416, %v3353
        %v3418 = vsel %vm1115, %v3417, %v3357
        %v3419 = vsel %vm1111, %v3215, %v3361
        %v3420 = vsel %vm1113, %v3419, %v3365
        %v3421 = vsel %vm1115, %v3420, %v3369
        %v3422 = vsel %vm1111, %v3231, %v3373
        %v3423 = vsel %vm1113, %v3422, %v3377
        %v3424 = vsel %vm1115, %v3423, %v3381
        %v3425 = vsel %vm1111, %v3283, %v3385
        %v3426 = vsel %vm1113, %v3425, %v3389
        %v3427 = vsel %vm1115, %v3426, %v3393
        %v3428 = vsel %vm1111, %v3299, %v3397
        %v3429 = vsel %vm1113, %v3428, %v3401
        %v3430 = vsel %vm1115, %v3429, %v3405
        %s3431 = scalar_lea.vmem %s3, 24
        %v3432 = vld [vmem:[%s3431] sm:$0xff]
        %v3434 = vsel %vm1597, %v3432, 0
        %v3437 = vsel %vm1601, %v3409, 0
        %v3440 = vsel %vm1601, %v3412, 0
        %v3443 = vsel %vm1601, %v3415, 0
        %v3446 = vsel %vm1601, %v3418, 0
        %v3449 = vsel %vm1601, %v3421, 0
        %v3452 = vsel %vm1601, %v3424, 0
        %v3455 = vsel %vm1601, %v3427, 0
        %v3458 = vsel %vm1601, %v3430, 0
        %3460 = vmatprep.subr.mxu0 %v3440
        %3461 = vmatpush1.msra.mxu0 %v3437
        %3462 = vmatprep.subr.mxu0 0.0
        %3463 = vmatpush1.msra.mxu0 0.0
        %3464 = vmatprep.subr.mxu0 0.0
        %3465 = vmatpush1.msra.mxu0 0.0
        %3466 = vmatprep.subr.mxu0 0.0
        %3467 = vmatpush1.msra.mxu0 0.0
        %3468 = vmatprep.subr.mxu0 0.0
        %3469 = vmatpush1.msra.mxu0 0.0
        %3470 = vmatprep.subr.mxu0 0.0
        %3471 = vmatpush1.msra.mxu0 0.0
        %3472 = vmatprep.subr.mxu0 0.0
        %3473 = vmatpush1.msra.mxu0 0.0
        %3474 = vmatprep.subr.mxu0 0.0
        %3475 = vmatpush1.msra.mxu0 0.0
        %3476 = vmatprep.subr.mxu0 0.0
        %3477 = vmatpush1.msra.mxu0 0.0
        %3478 = vmatprep.subr.mxu0 0.0
        %3479 = vmatpush1.msra.mxu0 0.0
        %3480 = vmatprep.subr.mxu0 0.0
        %3481 = vmatpush1.msra.mxu0 0.0
        %3482 = vmatprep.subr.mxu0 0.0
        %3483 = vmatpush1.msra.mxu0 0.0
        %3484 = vmatprep.subr.mxu0 0.0
        %3485 = vmatpush1.msra.mxu0 0.0
        %3486 = vmatprep.subr.mxu0 0.0
        %3487 = vmatpush1.msra.mxu0 0.0
        %3488 = vmatprep.subr.mxu0 0.0
        %3489 = vmatpush1.msra.mxu0 0.0
        %3490 = vmatprep.subr.mxu0 0.0
        %3491 = vmatpush1.msra.mxu0 0.0
        %3492 = vmatprep.subr.mxu0 0.0
        %3493 = vmatpush1.msra.mxu0 0.0
        %3494 = vmatprep.subr.mxu0 0.0
        %3495 = vmatpush1.msra.mxu0 0.0
        %3496 = vmatprep.subr.mxu0 0.0
        %3497 = vmatpush1.msra.mxu0 0.0
        %3498 = vmatprep.subr.mxu0 0.0
        %3499 = vmatpush1.msra.mxu0 0.0
        %3500 = vmatprep.subr.mxu0 0.0
        %3501 = vmatpush1.msra.mxu0 0.0
        %3502 = vmatprep.subr.mxu0 0.0
        %3503 = vmatpush1.msra.mxu0 0.0
        %3504 = vmatprep.subr.mxu0 0.0
        %3505 = vmatpush1.msra.mxu0 0.0
        %3506 = vmatprep.subr.mxu0 0.0
        %3507 = vmatpush1.msra.mxu0 0.0
        %3508 = vmatprep.subr.mxu0 0.0
        %3509 = vmatpush1.msra.mxu0 0.0
        %3510 = vmatprep.subr.mxu0 0.0
        %3511 = vmatpush1.msra.mxu0 0.0
        %3512 = vmatprep.subr.mxu0 0.0
        %3513 = vmatpush1.msra.mxu0 0.0
        %3514 = vmatprep.subr.mxu0 0.0
        %3515 = vmatpush1.msra.mxu0 0.0
        %3516 = vmatprep.subr.mxu0 0.0
        %3517 = vmatpush1.msra.mxu0 0.0
        %3518 = vmatprep.subr.mxu0 0.0
        %3519 = vmatpush1.msra.mxu0 0.0
        %3520 = vmatprep.subr.mxu0 0.0
        %3521 = vmatpush1.msra.mxu0 0.0
        %3522 = vmatprep.subr.mxu0 0.0
        %3523 = vmatpush1.msra.mxu0 0.0
        %3524 = vmatprep.mubr.f32.mxu0 0.0
        %3525 = vmatmul.mubr.f32.gmra.mrb[0].mxu0 %v3434
        %v3526 = vpop.f32.mrb[0].mxu0
        %v3527 = vadd.f32 0.0, %v3526
        %v3528 = vpop.f32.mrb[0].mxu0
        %v3529 = vadd.f32 0.0, %v3528
        %3530 = vdwg.mxu0
        %3531 = vmatprep.subr.mxu0 %v3446
        %3532 = vmatpush1.msra.mxu0 %v3443
        %3533 = vmatprep.subr.mxu0 0.0
        %3534 = vmatpush1.msra.mxu0 0.0
        %3535 = vmatprep.subr.mxu0 0.0
        %3536 = vmatpush1.msra.mxu0 0.0
        %3537 = vmatprep.subr.mxu0 0.0
        %3538 = vmatpush1.msra.mxu0 0.0
        %3539 = vmatprep.subr.mxu0 0.0
        %3540 = vmatpush1.msra.mxu0 0.0
        %3541 = vmatprep.subr.mxu0 0.0
        %3542 = vmatpush1.msra.mxu0 0.0
        %3543 = vmatprep.subr.mxu0 0.0
        %3544 = vmatpush1.msra.mxu0 0.0
        %3545 = vmatprep.subr.mxu0 0.0
        %3546 = vmatpush1.msra.mxu0 0.0
        %3547 = vmatprep.subr.mxu0 0.0
        %3548 = vmatpush1.msra.mxu0 0.0
        %3549 = vmatprep.subr.mxu0 0.0
        %3550 = vmatpush1.msra.mxu0 0.0
        %3551 = vmatprep.subr.mxu0 0.0
        %3552 = vmatpush1.msra.mxu0 0.0
        %3553 = vmatprep.subr.mxu0 0.0
        %3554 = vmatpush1.msra.mxu0 0.0
        %3555 = vmatprep.subr.mxu0 0.0
        %3556 = vmatpush1.msra.mxu0 0.0
        %3557 = vmatprep.subr.mxu0 0.0
        %3558 = vmatpush1.msra.mxu0 0.0
        %3559 = vmatprep.subr.mxu0 0.0
        %3560 = vmatpush1.msra.mxu0 0.0
        %3561 = vmatprep.subr.mxu0 0.0
        %3562 = vmatpush1.msra.mxu0 0.0
        %3563 = vmatprep.subr.mxu0 0.0
        %3564 = vmatpush1.msra.mxu0 0.0
        %3565 = vmatprep.subr.mxu0 0.0
        %3566 = vmatpush1.msra.mxu0 0.0
        %3567 = vmatprep.subr.mxu0 0.0
        %3568 = vmatpush1.msra.mxu0 0.0
        %3569 = vmatprep.subr.mxu0 0.0
        %3570 = vmatpush1.msra.mxu0 0.0
        %3571 = vmatprep.subr.mxu0 0.0
        %3572 = vmatpush1.msra.mxu0 0.0
        %3573 = vmatprep.subr.mxu0 0.0
        %3574 = vmatpush1.msra.mxu0 0.0
        %3575 = vmatprep.subr.mxu0 0.0
        %3576 = vmatpush1.msra.mxu0 0.0
        %3577 = vmatprep.subr.mxu0 0.0
        %3578 = vmatpush1.msra.mxu0 0.0
        %3579 = vmatprep.subr.mxu0 0.0
        %3580 = vmatpush1.msra.mxu0 0.0
        %3581 = vmatprep.subr.mxu0 0.0
        %3582 = vmatpush1.msra.mxu0 0.0
        %3583 = vmatprep.subr.mxu0 0.0
        %3584 = vmatpush1.msra.mxu0 0.0
        %3585 = vmatprep.subr.mxu0 0.0
        %3586 = vmatpush1.msra.mxu0 0.0
        %3587 = vmatprep.subr.mxu0 0.0
        %3588 = vmatpush1.msra.mxu0 0.0
        %3589 = vmatprep.subr.mxu0 0.0
        %3590 = vmatpush1.msra.mxu0 0.0
        %3591 = vmatprep.subr.mxu0 0.0
        %3592 = vmatpush1.msra.mxu0 0.0
        %3593 = vmatprep.subr.mxu0 0.0
        %3594 = vmatpush1.msra.mxu0 0.0
        %3595 = vmatprep.mubr.f32.mxu0 0.0
        %3596 = vmatmul.mubr.f32.gmra.mrb[0].mxu0 %v3434
        %v3597 = vpop.f32.mrb[0].mxu0
        %v3598 = vadd.f32 0.0, %v3597
        %v3599 = vpop.f32.mrb[0].mxu0
        %v3600 = vadd.f32 0.0, %v3599
        %3601 = vdwg.mxu0
        %3602 = vmatprep.subr.mxu0 %v3452
        %3603 = vmatpush1.msra.mxu0 %v3449
        %3604 = vmatprep.subr.mxu0 0.0
        %3605 = vmatpush1.msra.mxu0 0.0
        %3606 = vmatprep.subr.mxu0 0.0
        %3607 = vmatpush1.msra.mxu0 0.0
        %3608 = vmatprep.subr.mxu0 0.0
        %3609 = vmatpush1.msra.mxu0 0.0
        %3610 = vmatprep.subr.mxu0 0.0
        %3611 = vmatpush1.msra.mxu0 0.0
        %3612 = vmatprep.subr.mxu0 0.0
        %3613 = vmatpush1.msra.mxu0 0.0
        %3614 = vmatprep.subr.mxu0 0.0
        %3615 = vmatpush1.msra.mxu0 0.0
        %3616 = vmatprep.subr.mxu0 0.0
        %3617 = vmatpush1.msra.mxu0 0.0
        %3618 = vmatprep.subr.mxu0 0.0
        %3619 = vmatpush1.msra.mxu0 0.0
        %3620 = vmatprep.subr.mxu0 0.0
        %3621 = vmatpush1.msra.mxu0 0.0
        %3622 = vmatprep.subr.mxu0 0.0
        %3623 = vmatpush1.msra.mxu0 0.0
        %3624 = vmatprep.subr.mxu0 0.0
        %3625 = vmatpush1.msra.mxu0 0.0
        %3626 = vmatprep.subr.mxu0 0.0
        %3627 = vmatpush1.msra.mxu0 0.0
        %3628 = vmatprep.subr.mxu0 0.0
        %3629 = vmatpush1.msra.mxu0 0.0
        %3630 = vmatprep.subr.mxu0 0.0
        %3631 = vmatpush1.msra.mxu0 0.0
        %3632 = vmatprep.subr.mxu0 0.0
        %3633 = vmatpush1.msra.mxu0 0.0
        %3634 = vmatprep.subr.mxu0 0.0
        %3635 = vmatpush1.msra.mxu0 0.0
        %3636 = vmatprep.subr.mxu0 0.0
        %3637 = vmatpush1.msra.mxu0 0.0
        %3638 = vmatprep.subr.mxu0 0.0
        %3639 = vmatpush1.msra.mxu0 0.0
        %3640 = vmatprep.subr.mxu0 0.0
        %3641 = vmatpush1.msra.mxu0 0.0
        %3642 = vmatprep.subr.mxu0 0.0
        %3643 = vmatpush1.msra.mxu0 0.0
        %3644 = vmatprep.subr.mxu0 0.0
        %3645 = vmatpush1.msra.mxu0 0.0
        %3646 = vmatprep.subr.mxu0 0.0
        %3647 = vmatpush1.msra.mxu0 0.0
        %3648 = vmatprep.subr.mxu0 0.0
        %3649 = vmatpush1.msra.mxu0 0.0
        %3650 = vmatprep.subr.mxu0 0.0
        %3651 = vmatpush1.msra.mxu0 0.0
        %3652 = vmatprep.subr.mxu0 0.0
        %3653 = vmatpush1.msra.mxu0 0.0
        %3654 = vmatprep.subr.mxu0 0.0
        %3655 = vmatpush1.msra.mxu0 0.0
        %3656 = vmatprep.subr.mxu0 0.0
        %3657 = vmatpush1.msra.mxu0 0.0
        %3658 = vmatprep.subr.mxu0 0.0
        %3659 = vmatpush1.msra.mxu0 0.0
        %3660 = vmatprep.subr.mxu0 0.0
        %3661 = vmatpush1.msra.mxu0 0.0
        %3662 = vmatprep.subr.mxu0 0.0
        %3663 = vmatpush1.msra.mxu0 0.0
        %3664 = vmatprep.subr.mxu0 0.0
        %3665 = vmatpush1.msra.mxu0 0.0
        %3666 = vmatprep.mubr.f32.mxu0 0.0
        %3667 = vmatmul.mubr.f32.gmra.mrb[0].mxu0 %v3434
        %v3668 = vpop.f32.mrb[0].mxu0
        %v3669 = vadd.f32 0.0, %v3668
        %v3670 = vpop.f32.mrb[0].mxu0
        %v3671 = vadd.f32 0.0, %v3670
        %3672 = vdwg.mxu0
        %3673 = vmatprep.subr.mxu0 %v3458
        %3674 = vmatpush1.msra.mxu0 %v3455
        %3675 = vmatprep.subr.mxu0 0.0
        %3676 = vmatpush1.msra.mxu0 0.0
        %3677 = vmatprep.subr.mxu0 0.0
        %3678 = vmatpush1.msra.mxu0 0.0
        %3679 = vmatprep.subr.mxu0 0.0
        %3680 = vmatpush1.msra.mxu0 0.0
        %3681 = vmatprep.subr.mxu0 0.0
        %3682 = vmatpush1.msra.mxu0 0.0
        %3683 = vmatprep.subr.mxu0 0.0
        %3684 = vmatpush1.msra.mxu0 0.0
        %3685 = vmatprep.subr.mxu0 0.0
        %3686 = vmatpush1.msra.mxu0 0.0
        %3687 = vmatprep.subr.mxu0 0.0
        %3688 = vmatpush1.msra.mxu0 0.0
        %3689 = vmatprep.subr.mxu0 0.0
        %3690 = vmatpush1.msra.mxu0 0.0
        %3691 = vmatprep.subr.mxu0 0.0
        %3692 = vmatpush1.msra.mxu0 0.0
        %3693 = vmatprep.subr.mxu0 0.0
        %3694 = vmatpush1.msra.mxu0 0.0
        %3695 = vmatprep.subr.mxu0 0.0
        %3696 = vmatpush1.msra.mxu0 0.0
        %3697 = vmatprep.subr.mxu0 0.0
        %3698 = vmatpush1.msra.mxu0 0.0
        %3699 = vmatprep.subr.mxu0 0.0
        %3700 = vmatpush1.msra.mxu0 0.0
        %3701 = vmatprep.subr.mxu0 0.0
        %3702 = vmatpush1.msra.mxu0 0.0
        %3703 = vmatprep.subr.mxu0 0.0
        %3704 = vmatpush1.msra.mxu0 0.0
        %3705 = vmatprep.subr.mxu0 0.0
        %3706 = vmatpush1.msra.mxu0 0.0
        %3707 = vmatprep.subr.mxu0 0.0
        %3708 = vmatpush1.msra.mxu0 0.0
        %3709 = vmatprep.subr.mxu0 0.0
        %3710 = vmatpush1.msra.mxu0 0.0
        %3711 = vmatprep.subr.mxu0 0.0
        %3712 = vmatpush1.msra.mxu0 0.0
        %3713 = vmatprep.subr.mxu0 0.0
        %3714 = vmatpush1.msra.mxu0 0.0
        %3715 = vmatprep.subr.mxu0 0.0
        %3716 = vmatpush1.msra.mxu0 0.0
        %3717 = vmatprep.subr.mxu0 0.0
        %3718 = vmatpush1.msra.mxu0 0.0
        %3719 = vmatprep.subr.mxu0 0.0
        %3720 = vmatpush1.msra.mxu0 0.0
        %3721 = vmatprep.subr.mxu0 0.0
        %3722 = vmatpush1.msra.mxu0 0.0
        %3723 = vmatprep.subr.mxu0 0.0
        %3724 = vmatpush1.msra.mxu0 0.0
        %3725 = vmatprep.subr.mxu0 0.0
        %3726 = vmatpush1.msra.mxu0 0.0
        %3727 = vmatprep.subr.mxu0 0.0
        %3728 = vmatpush1.msra.mxu0 0.0
        %3729 = vmatprep.subr.mxu0 0.0
        %3730 = vmatpush1.msra.mxu0 0.0
        %3731 = vmatprep.subr.mxu0 0.0
        %3732 = vmatpush1.msra.mxu0 0.0
        %3733 = vmatprep.subr.mxu0 0.0
        %3734 = vmatpush1.msra.mxu0 0.0
        %3735 = vmatprep.subr.mxu0 0.0
        %3736 = vmatpush1.msra.mxu0 0.0
        %3737 = vmatprep.mubr.f32.mxu0 0.0
        %3738 = vmatmul.mubr.f32.gmra.mrb[0].mxu0 %v3434
        %v3739 = vpop.f32.mrb[0].mxu0
        %v3740 = vadd.f32 0.0, %v3739
        %v3741 = vpop.f32.mrb[0].mxu0
        %v3742 = vadd.f32 0.0, %v3741
        %3743 = vdwg.mxu0
        %v3744 = vadd.f32 %v2974, %v3527
        %v3745 = vadd.f32 %v2975, %v3529
        %v3746 = vadd.f32 %v2976, %v3598
        %v3747 = vadd.f32 %v2977, %v3600
        %v3748 = vadd.f32 %v2978, %v3669
        %v3749 = vadd.f32 %v2979, %v3671
        %v3750 = vadd.f32 %v2980, %v3740
        %v3751 = vadd.f32 %v2981, %v3742
        %3752 = vrot.lane.b32.xlu0 %v2989, 127
        %v3753 = vpop.permute.xlu0 %3752
        %3754 = vrot.lane.b32.xlu0 %v2991, 127
        %v3755 = vpop.permute.xlu0 %3754
        %3756 = vrot.lane.b32.xlu0 %v2993, 127
        %v3757 = vpop.permute.xlu0 %3756
        %3758 = vrot.lane.b32.xlu0 %v2995, 127
        %v3759 = vpop.permute.xlu0 %3758
        %3760 = vrot.lane.b32.xlu0 %v2998, 127
        %v3761 = vpop.permute.xlu0 %3760
        %3762 = vrot.lane.b32.xlu0 %v3000, 127
        %v3763 = vpop.permute.xlu0 %3762
        %3764 = vrot.lane.b32.xlu0 %v3002, 127
        %v3765 = vpop.permute.xlu0 %3764
        %3766 = vrot.lane.b32.xlu0 %v3004, 127
        %v3767 = vpop.permute.xlu0 %3766
        %3768 = vrot.lane.b32.xlu0 %v3007, 127
        %v3769 = vpop.permute.xlu0 %3768
        %3770 = vrot.lane.b32.xlu0 %v3009, 127
        %v3771 = vpop.permute.xlu0 %3770
        %3772 = vrot.lane.b32.xlu0 %v3011, 127
        %v3773 = vpop.permute.xlu0 %3772
        %3774 = vrot.lane.b32.xlu0 %v3013, 127
        %v3775 = vpop.permute.xlu0 %3774
        %3776 = vrot.lane.b32.xlu0 %v3016, 127
        %v3777 = vpop.permute.xlu0 %3776
        %3778 = vrot.lane.b32.xlu0 %v3018, 127
        %v3779 = vpop.permute.xlu0 %3778
        %3780 = vrot.lane.b32.xlu0 %v3020, 127
        %v3781 = vpop.permute.xlu0 %3780
        %3782 = vrot.lane.b32.xlu0 %v3022, 127
        %v3783 = vpop.permute.xlu0 %3782
        %v3800 = vcombine.low %v3753, %v3769
        %v3801 = vcombine.high %v3753, %v3769
        %v3803 = vunpack.c.l.s4 1983009808
        %v3804 = vunpack.c.0.s8 %v3803
        %v3805 = vlaneseq
        %v3806 = vshrl.u32 %v3805, 7
        %v3807 = vsub.s32 %v3804, %v3806
        %v3808 = vrot.slane %v3800, %v3807
        %v3810 = vunpack.c.l.s4 1983009808
        %v3811 = vunpack.c.0.s8 %v3810
        %v3812 = vlaneseq
        %v3813 = vshrl.u32 %v3812, 7
        %v3814 = vsub.s32 %v3811, %v3813
        %v3815 = vrot.slane %v3801, %v3814
        %v3816 = vcombine.low %v3761, %v3777
        %v3817 = vcombine.high %v3761, %v3777
        %v3819 = vunpack.c.l.s4 1983009808
        %v3820 = vunpack.c.0.s8 %v3819
        %v3821 = vlaneseq
        %v3822 = vshrl.u32 %v3821, 7
        %v3823 = vsub.s32 %v3820, %v3822
        %v3824 = vrot.slane %v3816, %v3823
        %v3826 = vunpack.c.l.s4 1983009808
        %v3827 = vunpack.c.0.s8 %v3826
        %v3828 = vlaneseq
        %v3829 = vshrl.u32 %v3828, 7
        %v3830 = vsub.s32 %v3827, %v3829
        %v3831 = vrot.slane %v3817, %v3830
        %v3832 = vcombine.low %v3808, %v3824
        %v3833 = vcombine.high %v3808, %v3824
        %v3835 = vunpack.c.l.s4 1934713408
        %v3836 = vunpack.c.0.s8 %v3835
        %v3837 = vlaneseq
        %v3838 = vshrl.u32 %v3837, 7
        %v3839 = vsub.s32 %v3836, %v3838
        %v3840 = vrot.slane %v3832, %v3839
        %v3842 = vunpack.c.l.s4 1934713408
        %v3843 = vunpack.c.0.s8 %v3842
        %v3844 = vlaneseq
        %v3845 = vshrl.u32 %v3844, 7
        %v3846 = vsub.s32 %v3843, %v3845
        %v3847 = vrot.slane %v3833, %v3846
        %v3848 = vcombine.low %v3815, %v3831
        %v3849 = vcombine.high %v3815, %v3831
        %v3851 = vunpack.c.l.s4 1934713408
        %v3852 = vunpack.c.0.s8 %v3851
        %v3853 = vlaneseq
        %v3854 = vshrl.u32 %v3853, 7
        %v3855 = vsub.s32 %v3852, %v3854
        %v3856 = vrot.slane %v3848, %v3855
        %v3858 = vunpack.c.l.s4 1934713408
        %v3859 = vunpack.c.0.s8 %v3858
        %v3860 = vlaneseq
        %v3861 = vshrl.u32 %v3860, 7
        %v3862 = vsub.s32 %v3859, %v3861
        %v3863 = vrot.slane %v3849, %v3862
        %v3864 = vcombine.high %v3840, 0.0
        %v3865 = vcombine.high %v3847, 0.0
        %v3866 = vcombine.high %v3856, 0.0
        %v3867 = vcombine.high %v3863, 0.0
        %v3868 = vcombine.low %v3755, %v3771
        %v3869 = vcombine.high %v3755, %v3771
        %v3871 = vunpack.c.l.s4 1983009808
        %v3872 = vunpack.c.0.s8 %v3871
        %v3873 = vlaneseq
        %v3874 = vshrl.u32 %v3873, 7
        %v3875 = vsub.s32 %v3872, %v3874
        %v3876 = vrot.slane %v3868, %v3875
        %v3878 = vunpack.c.l.s4 1983009808
        %v3879 = vunpack.c.0.s8 %v3878
        %v3880 = vlaneseq
        %v3881 = vshrl.u32 %v3880, 7
        %v3882 = vsub.s32 %v3879, %v3881
        %v3883 = vrot.slane %v3869, %v3882
        %v3884 = vcombine.low %v3763, %v3779
        %v3885 = vcombine.high %v3763, %v3779
        %v3887 = vunpack.c.l.s4 1983009808
        %v3888 = vunpack.c.0.s8 %v3887
        %v3889 = vlaneseq
        %v3890 = vshrl.u32 %v3889, 7
        %v3891 = vsub.s32 %v3888, %v3890
        %v3892 = vrot.slane %v3884, %v3891
        %v3894 = vunpack.c.l.s4 1983009808
        %v3895 = vunpack.c.0.s8 %v3894
        %v3896 = vlaneseq
        %v3897 = vshrl.u32 %v3896, 7
        %v3898 = vsub.s32 %v3895, %v3897
        %v3899 = vrot.slane %v3885, %v3898
        %v3900 = vcombine.low %v3876, %v3892
        %v3901 = vcombine.high %v3876, %v3892
        %v3903 = vunpack.c.l.s4 1934713408
        %v3904 = vunpack.c.0.s8 %v3903
        %v3905 = vlaneseq
        %v3906 = vshrl.u32 %v3905, 7
        %v3907 = vsub.s32 %v3904, %v3906
        %v3908 = vrot.slane %v3900, %v3907
        %v3910 = vunpack.c.l.s4 1934713408
        %v3911 = vunpack.c.0.s8 %v3910
        %v3912 = vlaneseq
        %v3913 = vshrl.u32 %v3912, 7
        %v3914 = vsub.s32 %v3911, %v3913
        %v3915 = vrot.slane %v3901, %v3914
        %v3916 = vcombine.low %v3883, %v3899
        %v3917 = vcombine.high %v3883, %v3899
        %v3919 = vunpack.c.l.s4 1934713408
        %v3920 = vunpack.c.0.s8 %v3919
        %v3921 = vlaneseq
        %v3922 = vshrl.u32 %v3921, 7
        %v3923 = vsub.s32 %v3920, %v3922
        %v3924 = vrot.slane %v3916, %v3923
        %v3926 = vunpack.c.l.s4 1934713408
        %v3927 = vunpack.c.0.s8 %v3926
        %v3928 = vlaneseq
        %v3929 = vshrl.u32 %v3928, 7
        %v3930 = vsub.s32 %v3927, %v3929
        %v3931 = vrot.slane %v3917, %v3930
        %v3932 = vcombine.high %v3908, 0.0
        %v3933 = vcombine.high %v3915, 0.0
        %v3934 = vcombine.high %v3924, 0.0
        %v3935 = vcombine.high %v3931, 0.0
        %v3936 = vcombine.low %v3757, %v3773
        %v3937 = vcombine.high %v3757, %v3773
        %v3939 = vunpack.c.l.s4 1983009808
        %v3940 = vunpack.c.0.s8 %v3939
        %v3941 = vlaneseq
        %v3942 = vshrl.u32 %v3941, 7
        %v3943 = vsub.s32 %v3940, %v3942
        %v3944 = vrot.slane %v3936, %v3943
        %v3946 = vunpack.c.l.s4 1983009808
        %v3947 = vunpack.c.0.s8 %v3946
        %v3948 = vlaneseq
        %v3949 = vshrl.u32 %v3948, 7
        %v3950 = vsub.s32 %v3947, %v3949
        %v3951 = vrot.slane %v3937, %v3950
        %v3952 = vcombine.low %v3765, %v3781
        %v3953 = vcombine.high %v3765, %v3781
        %v3955 = vunpack.c.l.s4 1983009808
        %v3956 = vunpack.c.0.s8 %v3955
        %v3957 = vlaneseq
        %v3958 = vshrl.u32 %v3957, 7
        %v3959 = vsub.s32 %v3956, %v3958
        %v3960 = vrot.slane %v3952, %v3959
        %v3962 = vunpack.c.l.s4 1983009808
        %v3963 = vunpack.c.0.s8 %v3962
        %v3964 = vlaneseq
        %v3965 = vshrl.u32 %v3964, 7
        %v3966 = vsub.s32 %v3963, %v3965
        %v3967 = vrot.slane %v3953, %v3966
        %v3968 = vcombine.low %v3944, %v3960
        %v3969 = vcombine.high %v3944, %v3960
        %v3971 = vunpack.c.l.s4 1934713408
        %v3972 = vunpack.c.0.s8 %v3971
        %v3973 = vlaneseq
        %v3974 = vshrl.u32 %v3973, 7
        %v3975 = vsub.s32 %v3972, %v3974
        %v3976 = vrot.slane %v3968, %v3975
        %v3978 = vunpack.c.l.s4 1934713408
        %v3979 = vunpack.c.0.s8 %v3978
        %v3980 = vlaneseq
        %v3981 = vshrl.u32 %v3980, 7
        %v3982 = vsub.s32 %v3979, %v3981
        %v3983 = vrot.slane %v3969, %v3982
        %v3984 = vcombine.low %v3951, %v3967
        %v3985 = vcombine.high %v3951, %v3967
        %v3987 = vunpack.c.l.s4 1934713408
        %v3988 = vunpack.c.0.s8 %v3987
        %v3989 = vlaneseq
        %v3990 = vshrl.u32 %v3989, 7
        %v3991 = vsub.s32 %v3988, %v3990
        %v3992 = vrot.slane %v3984, %v3991
        %v3994 = vunpack.c.l.s4 1934713408
        %v3995 = vunpack.c.0.s8 %v3994
        %v3996 = vlaneseq
        %v3997 = vshrl.u32 %v3996, 7
        %v3998 = vsub.s32 %v3995, %v3997
        %v3999 = vrot.slane %v3985, %v3998
        %v4000 = vcombine.high %v3976, 0.0
        %v4001 = vcombine.high %v3983, 0.0
        %v4002 = vcombine.high %v3992, 0.0
        %v4003 = vcombine.high %v3999, 0.0
        %v4004 = vcombine.low %v3759, %v3775
        %v4005 = vcombine.high %v3759, %v3775
        %v4007 = vunpack.c.l.s4 1983009808
        %v4008 = vunpack.c.0.s8 %v4007
        %v4009 = vlaneseq
        %v4010 = vshrl.u32 %v4009, 7
        %v4011 = vsub.s32 %v4008, %v4010
        %v4012 = vrot.slane %v4004, %v4011
        %v4014 = vunpack.c.l.s4 1983009808
        %v4015 = vunpack.c.0.s8 %v4014
        %v4016 = vlaneseq
        %v4017 = vshrl.u32 %v4016, 7
        %v4018 = vsub.s32 %v4015, %v4017
        %v4019 = vrot.slane %v4005, %v4018
        %v4020 = vcombine.low %v3767, %v3783
        %v4021 = vcombine.high %v3767, %v3783
        %v4023 = vunpack.c.l.s4 1983009808
        %v4024 = vunpack.c.0.s8 %v4023
        %v4025 = vlaneseq
        %v4026 = vshrl.u32 %v4025, 7
        %v4027 = vsub.s32 %v4024, %v4026
        %v4028 = vrot.slane %v4020, %v4027
        %v4030 = vunpack.c.l.s4 1983009808
        %v4031 = vunpack.c.0.s8 %v4030
        %v4032 = vlaneseq
        %v4033 = vshrl.u32 %v4032, 7
        %v4034 = vsub.s32 %v4031, %v4033
        %v4035 = vrot.slane %v4021, %v4034
        %v4036 = vcombine.low %v4012, %v4028
        %v4037 = vcombine.high %v4012, %v4028
        %v4039 = vunpack.c.l.s4 1934713408
        %v4040 = vunpack.c.0.s8 %v4039
        %v4041 = vlaneseq
        %v4042 = vshrl.u32 %v4041, 7
        %v4043 = vsub.s32 %v4040, %v4042
        %v4044 = vrot.slane %v4036, %v4043
        %v4046 = vunpack.c.l.s4 1934713408
        %v4047 = vunpack.c.0.s8 %v4046
        %v4048 = vlaneseq
        %v4049 = vshrl.u32 %v4048, 7
        %v4050 = vsub.s32 %v4047, %v4049
        %v4051 = vrot.slane %v4037, %v4050
        %v4052 = vcombine.low %v4019, %v4035
        %v4053 = vcombine.high %v4019, %v4035
        %v4055 = vunpack.c.l.s4 1934713408
        %v4056 = vunpack.c.0.s8 %v4055
        %v4057 = vlaneseq
        %v4058 = vshrl.u32 %v4057, 7
        %v4059 = vsub.s32 %v4056, %v4058
        %v4060 = vrot.slane %v4052, %v4059
        %v4062 = vunpack.c.l.s4 1934713408
        %v4063 = vunpack.c.0.s8 %v4062
        %v4064 = vlaneseq
        %v4065 = vshrl.u32 %v4064, 7
        %v4066 = vsub.s32 %v4063, %v4065
        %v4067 = vrot.slane %v4053, %v4066
        %v4068 = vcombine.high %v4044, 0.0
        %v4069 = vcombine.high %v4051, 0.0
        %v4070 = vcombine.high %v4060, 0.0
        %v4071 = vcombine.high %v4067, 0.0
        %4073 = vrot.lane.b32.xlu0 %v3864, 32
        %v4074 = vpop.permute.xlu0 %4073
        %4077 = vrot.lane.b32.xlu0 %v3847, 64
        %v4078 = vpop.permute.xlu0 %4077
        %4081 = vrot.lane.b32.xlu0 %v3865, 96
        %v4082 = vpop.permute.xlu0 %4081
        %4085 = vrot.lane.b32.xlu0 %v3866, 32
        %v4086 = vpop.permute.xlu0 %4085
        %4089 = vrot.lane.b32.xlu0 %v3863, 64
        %v4090 = vpop.permute.xlu0 %4089
        %4093 = vrot.lane.b32.xlu0 %v3867, 96
        %v4094 = vpop.permute.xlu0 %4093
        %4097 = vrot.lane.b32.xlu0 %v3932, 32
        %v4098 = vpop.permute.xlu0 %4097
        %4101 = vrot.lane.b32.xlu0 %v3915, 64
        %v4102 = vpop.permute.xlu0 %4101
        %4105 = vrot.lane.b32.xlu0 %v3933, 96
        %v4106 = vpop.permute.xlu0 %4105
        %4109 = vrot.lane.b32.xlu0 %v3934, 32
        %v4110 = vpop.permute.xlu0 %4109
        %4113 = vrot.lane.b32.xlu0 %v3931, 64
        %v4114 = vpop.permute.xlu0 %4113
        %4117 = vrot.lane.b32.xlu0 %v3935, 96
        %v4118 = vpop.permute.xlu0 %4117
        %4121 = vrot.lane.b32.xlu0 %v4000, 32
        %v4122 = vpop.permute.xlu0 %4121
        %4125 = vrot.lane.b32.xlu0 %v3983, 64
        %v4126 = vpop.permute.xlu0 %4125
        %4129 = vrot.lane.b32.xlu0 %v4001, 96
        %v4130 = vpop.permute.xlu0 %4129
        %4133 = vrot.lane.b32.xlu0 %v4002, 32
        %v4134 = vpop.permute.xlu0 %4133
        %4137 = vrot.lane.b32.xlu0 %v3999, 64
        %v4138 = vpop.permute.xlu0 %4137
        %4141 = vrot.lane.b32.xlu0 %v4003, 96
        %v4142 = vpop.permute.xlu0 %4141
        %4145 = vrot.lane.b32.xlu0 %v4068, 32
        %v4146 = vpop.permute.xlu0 %4145
        %4149 = vrot.lane.b32.xlu0 %v4051, 64
        %v4150 = vpop.permute.xlu0 %4149
        %4153 = vrot.lane.b32.xlu0 %v4069, 96
        %v4154 = vpop.permute.xlu0 %4153
        %4157 = vrot.lane.b32.xlu0 %v4070, 32
        %v4158 = vpop.permute.xlu0 %4157
        %4161 = vrot.lane.b32.xlu0 %v4067, 64
        %v4162 = vpop.permute.xlu0 %4161
        %4165 = vrot.lane.b32.xlu0 %v4071, 96
        %v4166 = vpop.permute.xlu0 %4165
        %v4168 = vsel %vm1111, %v3840, %v4074
        %v4169 = vsel %vm1113, %v4168, %v4078
        %v4170 = vsel %vm1115, %v4169, %v4082
        %v4171 = vsel %vm1111, %v3856, %v4086
        %v4172 = vsel %vm1113, %v4171, %v4090
        %v4173 = vsel %vm1115, %v4172, %v4094
        %v4174 = vsel %vm1111, %v3908, %v4098
        %v4175 = vsel %vm1113, %v4174, %v4102
        %v4176 = vsel %vm1115, %v4175, %v4106
        %v4177 = vsel %vm1111, %v3924, %v4110
        %v4178 = vsel %vm1113, %v4177, %v4114
        %v4179 = vsel %vm1115, %v4178, %v4118
        %v4180 = vsel %vm1111, %v3976, %v4122
        %v4181 = vsel %vm1113, %v4180, %v4126
        %v4182 = vsel %vm1115, %v4181, %v4130
        %v4183 = vsel %vm1111, %v3992, %v4134
        %v4184 = vsel %vm1113, %v4183, %v4138
        %v4185 = vsel %vm1115, %v4184, %v4142
        %v4186 = vsel %vm1111, %v4044, %v4146
        %v4187 = vsel %vm1113, %v4186, %v4150
        %v4188 = vsel %vm1115, %v4187, %v4154
        %v4189 = vsel %vm1111, %v4060, %v4158
        %v4190 = vsel %vm1113, %v4189, %v4162
        %v4191 = vsel %vm1115, %v4190, %v4166
        %s4192 = scalar_lea.vmem %s3, 32
        %v4193 = vld [vmem:[%s4192] sm:$0xff]
        %v4195 = vsel %vm1597, %v4193, 0
        %v4198 = vsel %vm1601, %v4170, 0
        %v4201 = vsel %vm1601, %v4173, 0
        %v4204 = vsel %vm1601, %v4176, 0
        %v4207 = vsel %vm1601, %v4179, 0
        %v4210 = vsel %vm1601, %v4182, 0
        %v4213 = vsel %vm1601, %v4185, 0
        %v4216 = vsel %vm1601, %v4188, 0
        %v4219 = vsel %vm1601, %v4191, 0
        %4221 = vmatprep.subr.mxu0 %v4201
        %4222 = vmatpush1.msra.mxu0 %v4198
        %4223 = vmatprep.subr.mxu0 0.0
        %4224 = vmatpush1.msra.mxu0 0.0
        %4225 = vmatprep.subr.mxu0 0.0
        %4226 = vmatpush1.msra.mxu0 0.0
        %4227 = vmatprep.subr.mxu0 0.0
        %4228 = vmatpush1.msra.mxu0 0.0
        %4229 = vmatprep.subr.mxu0 0.0
        %4230 = vmatpush1.msra.mxu0 0.0
        %4231 = vmatprep.subr.mxu0 0.0
        %4232 = vmatpush1.msra.mxu0 0.0
        %4233 = vmatprep.subr.mxu0 0.0
        %4234 = vmatpush1.msra.mxu0 0.0
        %4235 = vmatprep.subr.mxu0 0.0
        %4236 = vmatpush1.msra.mxu0 0.0
        %4237 = vmatprep.subr.mxu0 0.0
        %4238 = vmatpush1.msra.mxu0 0.0
        %4239 = vmatprep.subr.mxu0 0.0
        %4240 = vmatpush1.msra.mxu0 0.0
        %4241 = vmatprep.subr.mxu0 0.0
        %4242 = vmatpush1.msra.mxu0 0.0
        %4243 = vmatprep.subr.mxu0 0.0
        %4244 = vmatpush1.msra.mxu0 0.0
        %4245 = vmatprep.subr.mxu0 0.0
        %4246 = vmatpush1.msra.mxu0 0.0
        %4247 = vmatprep.subr.mxu0 0.0
        %4248 = vmatpush1.msra.mxu0 0.0
        %4249 = vmatprep.subr.mxu0 0.0
        %4250 = vmatpush1.msra.mxu0 0.0
        %4251 = vmatprep.subr.mxu0 0.0
        %4252 = vmatpush1.msra.mxu0 0.0
        %4253 = vmatprep.subr.mxu0 0.0
        %4254 = vmatpush1.msra.mxu0 0.0
        %4255 = vmatprep.subr.mxu0 0.0
        %4256 = vmatpush1.msra.mxu0 0.0
        %4257 = vmatprep.subr.mxu0 0.0
        %4258 = vmatpush1.msra.mxu0 0.0
        %4259 = vmatprep.subr.mxu0 0.0
        %4260 = vmatpush1.msra.mxu0 0.0
        %4261 = vmatprep.subr.mxu0 0.0
        %4262 = vmatpush1.msra.mxu0 0.0
        %4263 = vmatprep.subr.mxu0 0.0
        %4264 = vmatpush1.msra.mxu0 0.0
        %4265 = vmatprep.subr.mxu0 0.0
        %4266 = vmatpush1.msra.mxu0 0.0
        %4267 = vmatprep.subr.mxu0 0.0
        %4268 = vmatpush1.msra.mxu0 0.0
        %4269 = vmatprep.subr.mxu0 0.0
        %4270 = vmatpush1.msra.mxu0 0.0
        %4271 = vmatprep.subr.mxu0 0.0
        %4272 = vmatpush1.msra.mxu0 0.0
        %4273 = vmatprep.subr.mxu0 0.0
        %4274 = vmatpush1.msra.mxu0 0.0
        %4275 = vmatprep.subr.mxu0 0.0
        %4276 = vmatpush1.msra.mxu0 0.0
        %4277 = vmatprep.subr.mxu0 0.0
        %4278 = vmatpush1.msra.mxu0 0.0
        %4279 = vmatprep.subr.mxu0 0.0
        %4280 = vmatpush1.msra.mxu0 0.0
        %4281 = vmatprep.subr.mxu0 0.0
        %4282 = vmatpush1.msra.mxu0 0.0
        %4283 = vmatprep.subr.mxu0 0.0
        %4284 = vmatpush1.msra.mxu0 0.0
        %4285 = vmatprep.mubr.f32.mxu0 0.0
        %4286 = vmatmul.mubr.f32.gmra.mrb[0].mxu0 %v4195
        %v4287 = vpop.f32.mrb[0].mxu0
        %v4288 = vadd.f32 0.0, %v4287
        %v4289 = vpop.f32.mrb[0].mxu0
        %v4290 = vadd.f32 0.0, %v4289
        %4291 = vdwg.mxu0
        %4292 = vmatprep.subr.mxu0 %v4207
        %4293 = vmatpush1.msra.mxu0 %v4204
        %4294 = vmatprep.subr.mxu0 0.0
        %4295 = vmatpush1.msra.mxu0 0.0
        %4296 = vmatprep.subr.mxu0 0.0
        %4297 = vmatpush1.msra.mxu0 0.0
        %4298 = vmatprep.subr.mxu0 0.0
        %4299 = vmatpush1.msra.mxu0 0.0
        %4300 = vmatprep.subr.mxu0 0.0
        %4301 = vmatpush1.msra.mxu0 0.0
        %4302 = vmatprep.subr.mxu0 0.0
        %4303 = vmatpush1.msra.mxu0 0.0
        %4304 = vmatprep.subr.mxu0 0.0
        %4305 = vmatpush1.msra.mxu0 0.0
        %4306 = vmatprep.subr.mxu0 0.0
        %4307 = vmatpush1.msra.mxu0 0.0
        %4308 = vmatprep.subr.mxu0 0.0
        %4309 = vmatpush1.msra.mxu0 0.0
        %4310 = vmatprep.subr.mxu0 0.0
        %4311 = vmatpush1.msra.mxu0 0.0
        %4312 = vmatprep.subr.mxu0 0.0
        %4313 = vmatpush1.msra.mxu0 0.0
        %4314 = vmatprep.subr.mxu0 0.0
        %4315 = vmatpush1.msra.mxu0 0.0
        %4316 = vmatprep.subr.mxu0 0.0
        %4317 = vmatpush1.msra.mxu0 0.0
        %4318 = vmatprep.subr.mxu0 0.0
        %4319 = vmatpush1.msra.mxu0 0.0
        %4320 = vmatprep.subr.mxu0 0.0
        %4321 = vmatpush1.msra.mxu0 0.0
        %4322 = vmatprep.subr.mxu0 0.0
        %4323 = vmatpush1.msra.mxu0 0.0
        %4324 = vmatprep.subr.mxu0 0.0
        %4325 = vmatpush1.msra.mxu0 0.0
        %4326 = vmatprep.subr.mxu0 0.0
        %4327 = vmatpush1.msra.mxu0 0.0
        %4328 = vmatprep.subr.mxu0 0.0
        %4329 = vmatpush1.msra.mxu0 0.0
        %4330 = vmatprep.subr.mxu0 0.0
        %4331 = vmatpush1.msra.mxu0 0.0
        %4332 = vmatprep.subr.mxu0 0.0
        %4333 = vmatpush1.msra.mxu0 0.0
        %4334 = vmatprep.subr.mxu0 0.0
        %4335 = vmatpush1.msra.mxu0 0.0
        %4336 = vmatprep.subr.mxu0 0.0
        %4337 = vmatpush1.msra.mxu0 0.0
        %4338 = vmatprep.subr.mxu0 0.0
        %4339 = vmatpush1.msra.mxu0 0.0
        %4340 = vmatprep.subr.mxu0 0.0
        %4341 = vmatpush1.msra.mxu0 0.0
        %4342 = vmatprep.subr.mxu0 0.0
        %4343 = vmatpush1.msra.mxu0 0.0
        %4344 = vmatprep.subr.mxu0 0.0
        %4345 = vmatpush1.msra.mxu0 0.0
        %4346 = vmatprep.subr.mxu0 0.0
        %4347 = vmatpush1.msra.mxu0 0.0
        %4348 = vmatprep.subr.mxu0 0.0
        %4349 = vmatpush1.msra.mxu0 0.0
        %4350 = vmatprep.subr.mxu0 0.0
        %4351 = vmatpush1.msra.mxu0 0.0
        %4352 = vmatprep.subr.mxu0 0.0
        %4353 = vmatpush1.msra.mxu0 0.0
        %4354 = vmatprep.subr.mxu0 0.0
        %4355 = vmatpush1.msra.mxu0 0.0
        %4356 = vmatprep.mubr.f32.mxu0 0.0
        %4357 = vmatmul.mubr.f32.gmra.mrb[0].mxu0 %v4195
        %v4358 = vpop.f32.mrb[0].mxu0
        %v4359 = vadd.f32 0.0, %v4358
        %v4360 = vpop.f32.mrb[0].mxu0
        %v4361 = vadd.f32 0.0, %v4360
        %4362 = vdwg.mxu0
        %4363 = vmatprep.subr.mxu0 %v4213
        %4364 = vmatpush1.msra.mxu0 %v4210
        %4365 = vmatprep.subr.mxu0 0.0
        %4366 = vmatpush1.msra.mxu0 0.0
        %4367 = vmatprep.subr.mxu0 0.0
        %4368 = vmatpush1.msra.mxu0 0.0
        %4369 = vmatprep.subr.mxu0 0.0
        %4370 = vmatpush1.msra.mxu0 0.0
        %4371 = vmatprep.subr.mxu0 0.0
        %4372 = vmatpush1.msra.mxu0 0.0
        %4373 = vmatprep.subr.mxu0 0.0
        %4374 = vmatpush1.msra.mxu0 0.0
        %4375 = vmatprep.subr.mxu0 0.0
        %4376 = vmatpush1.msra.mxu0 0.0
        %4377 = vmatprep.subr.mxu0 0.0
        %4378 = vmatpush1.msra.mxu0 0.0
        %4379 = vmatprep.subr.mxu0 0.0
        %4380 = vmatpush1.msra.mxu0 0.0
        %4381 = vmatprep.subr.mxu0 0.0
        %4382 = vmatpush1.msra.mxu0 0.0
        %4383 = vmatprep.subr.mxu0 0.0
        %4384 = vmatpush1.msra.mxu0 0.0
        %4385 = vmatprep.subr.mxu0 0.0
        %4386 = vmatpush1.msra.mxu0 0.0
        %4387 = vmatprep.subr.mxu0 0.0
        %4388 = vmatpush1.msra.mxu0 0.0
        %4389 = vmatprep.subr.mxu0 0.0
        %4390 = vmatpush1.msra.mxu0 0.0
        %4391 = vmatprep.subr.mxu0 0.0
        %4392 = vmatpush1.msra.mxu0 0.0
        %4393 = vmatprep.subr.mxu0 0.0
        %4394 = vmatpush1.msra.mxu0 0.0
        %4395 = vmatprep.subr.mxu0 0.0
        %4396 = vmatpush1.msra.mxu0 0.0
        %4397 = vmatprep.subr.mxu0 0.0
        %4398 = vmatpush1.msra.mxu0 0.0
        %4399 = vmatprep.subr.mxu0 0.0
        %4400 = vmatpush1.msra.mxu0 0.0
        %4401 = vmatprep.subr.mxu0 0.0
        %4402 = vmatpush1.msra.mxu0 0.0
        %4403 = vmatprep.subr.mxu0 0.0
        %4404 = vmatpush1.msra.mxu0 0.0
        %4405 = vmatprep.subr.mxu0 0.0
        %4406 = vmatpush1.msra.mxu0 0.0
        %4407 = vmatprep.subr.mxu0 0.0
        %4408 = vmatpush1.msra.mxu0 0.0
        %4409 = vmatprep.subr.mxu0 0.0
        %4410 = vmatpush1.msra.mxu0 0.0
        %4411 = vmatprep.subr.mxu0 0.0
        %4412 = vmatpush1.msra.mxu0 0.0
        %4413 = vmatprep.subr.mxu0 0.0
        %4414 = vmatpush1.msra.mxu0 0.0
        %4415 = vmatprep.subr.mxu0 0.0
        %4416 = vmatpush1.msra.mxu0 0.0
        %4417 = vmatprep.subr.mxu0 0.0
        %4418 = vmatpush1.msra.mxu0 0.0
        %4419 = vmatprep.subr.mxu0 0.0
        %4420 = vmatpush1.msra.mxu0 0.0
        %4421 = vmatprep.subr.mxu0 0.0
        %4422 = vmatpush1.msra.mxu0 0.0
        %4423 = vmatprep.subr.mxu0 0.0
        %4424 = vmatpush1.msra.mxu0 0.0
        %4425 = vmatprep.subr.mxu0 0.0
        %4426 = vmatpush1.msra.mxu0 0.0
        %4427 = vmatprep.mubr.f32.mxu0 0.0
        %4428 = vmatmul.mubr.f32.gmra.mrb[0].mxu0 %v4195
        %v4429 = vpop.f32.mrb[0].mxu0
        %v4430 = vadd.f32 0.0, %v4429
        %v4431 = vpop.f32.mrb[0].mxu0
        %v4432 = vadd.f32 0.0, %v4431
        %4433 = vdwg.mxu0
        %4434 = vmatprep.subr.mxu0 %v4219
        %4435 = vmatpush1.msra.mxu0 %v4216
        %4436 = vmatprep.subr.mxu0 0.0
        %4437 = vmatpush1.msra.mxu0 0.0
        %4438 = vmatprep.subr.mxu0 0.0
        %4439 = vmatpush1.msra.mxu0 0.0
        %4440 = vmatprep.subr.mxu0 0.0
        %4441 = vmatpush1.msra.mxu0 0.0
        %4442 = vmatprep.subr.mxu0 0.0
        %4443 = vmatpush1.msra.mxu0 0.0
        %4444 = vmatprep.subr.mxu0 0.0
        %4445 = vmatpush1.msra.mxu0 0.0
        %4446 = vmatprep.subr.mxu0 0.0
        %4447 = vmatpush1.msra.mxu0 0.0
        %4448 = vmatprep.subr.mxu0 0.0
        %4449 = vmatpush1.msra.mxu0 0.0
        %4450 = vmatprep.subr.mxu0 0.0
        %4451 = vmatpush1.msra.mxu0 0.0
        %4452 = vmatprep.subr.mxu0 0.0
        %4453 = vmatpush1.msra.mxu0 0.0
        %4454 = vmatprep.subr.mxu0 0.0
        %4455 = vmatpush1.msra.mxu0 0.0
        %4456 = vmatprep.subr.mxu0 0.0
        %4457 = vmatpush1.msra.mxu0 0.0
        %4458 = vmatprep.subr.mxu0 0.0
        %4459 = vmatpush1.msra.mxu0 0.0
        %4460 = vmatprep.subr.mxu0 0.0
        %4461 = vmatpush1.msra.mxu0 0.0
        %4462 = vmatprep.subr.mxu0 0.0
        %4463 = vmatpush1.msra.mxu0 0.0
        %4464 = vmatprep.subr.mxu0 0.0
        %4465 = vmatpush1.msra.mxu0 0.0
        %4466 = vmatprep.subr.mxu0 0.0
        %4467 = vmatpush1.msra.mxu0 0.0
        %4468 = vmatprep.subr.mxu0 0.0
        %4469 = vmatpush1.msra.mxu0 0.0
        %4470 = vmatprep.subr.mxu0 0.0
        %4471 = vmatpush1.msra.mxu0 0.0
        %4472 = vmatprep.subr.mxu0 0.0
        %4473 = vmatpush1.msra.mxu0 0.0
        %4474 = vmatprep.subr.mxu0 0.0
        %4475 = vmatpush1.msra.mxu0 0.0
        %4476 = vmatprep.subr.mxu0 0.0
        %4477 = vmatpush1.msra.mxu0 0.0
        %4478 = vmatprep.subr.mxu0 0.0
        %4479 = vmatpush1.msra.mxu0 0.0
        %4480 = vmatprep.subr.mxu0 0.0
        %4481 = vmatpush1.msra.mxu0 0.0
        %4482 = vmatprep.subr.mxu0 0.0
        %4483 = vmatpush1.msra.mxu0 0.0
        %4484 = vmatprep.subr.mxu0 0.0
        %4485 = vmatpush1.msra.mxu0 0.0
        %4486 = vmatprep.subr.mxu0 0.0
        %4487 = vmatpush1.msra.mxu0 0.0
        %4488 = vmatprep.subr.mxu0 0.0
        %4489 = vmatpush1.msra.mxu0 0.0
        %4490 = vmatprep.subr.mxu0 0.0
        %4491 = vmatpush1.msra.mxu0 0.0
        %4492 = vmatprep.subr.mxu0 0.0
        %4493 = vmatpush1.msra.mxu0 0.0
        %4494 = vmatprep.subr.mxu0 0.0
        %4495 = vmatpush1.msra.mxu0 0.0
        %4496 = vmatprep.subr.mxu0 0.0
        %4497 = vmatpush1.msra.mxu0 0.0
        %4498 = vmatprep.mubr.f32.mxu0 0.0
        %4499 = vmatmul.mubr.f32.gmra.mrb[0].mxu0 %v4195
        %v4500 = vpop.f32.mrb[0].mxu0
        %v4501 = vadd.f32 0.0, %v4500
        %v4502 = vpop.f32.mrb[0].mxu0
        %v4503 = vadd.f32 0.0, %v4502
        %4504 = vdwg.mxu0
        %v4505 = vadd.f32 %v3744, %v4288
        %v4506 = vadd.f32 %v3745, %v4290
        %v4507 = vadd.f32 %v3746, %v4359
        %v4508 = vadd.f32 %v3747, %v4361
        %v4509 = vadd.f32 %v3748, %v4430
        %v4510 = vadd.f32 %v3749, %v4432
        %v4511 = vadd.f32 %v3750, %v4501
        %v4512 = vadd.f32 %v3751, %v4503
        %4513 = vrot.lane.b32.xlu0 %v2989, 126
        %v4514 = vpop.permute.xlu0 %4513
        %4515 = vrot.lane.b32.xlu0 %v2991, 126
        %v4516 = vpop.permute.xlu0 %4515
        %4517 = vrot.lane.b32.xlu0 %v2993, 126
        %v4518 = vpop.permute.xlu0 %4517
        %4519 = vrot.lane.b32.xlu0 %v2995, 126
        %v4520 = vpop.permute.xlu0 %4519
        %4521 = vrot.lane.b32.xlu0 %v2998, 126
        %v4522 = vpop.permute.xlu0 %4521
        %4523 = vrot.lane.b32.xlu0 %v3000, 126
        %v4524 = vpop.permute.xlu0 %4523
        %4525 = vrot.lane.b32.xlu0 %v3002, 126
        %v4526 = vpop.permute.xlu0 %4525
        %4527 = vrot.lane.b32.xlu0 %v3004, 126
        %v4528 = vpop.permute.xlu0 %4527
        %4529 = vrot.lane.b32.xlu0 %v3007, 126
        %v4530 = vpop.permute.xlu0 %4529
        %4531 = vrot.lane.b32.xlu0 %v3009, 126
        %v4532 = vpop.permute.xlu0 %4531
        %4533 = vrot.lane.b32.xlu0 %v3011, 126
        %v4534 = vpop.permute.xlu0 %4533
        %4535 = vrot.lane.b32.xlu0 %v3013, 126
        %v4536 = vpop.permute.xlu0 %4535
        %4537 = vrot.lane.b32.xlu0 %v3016, 126
        %v4538 = vpop.permute.xlu0 %4537
        %4539 = vrot.lane.b32.xlu0 %v3018, 126
        %v4540 = vpop.permute.xlu0 %4539
        %4541 = vrot.lane.b32.xlu0 %v3020, 126
        %v4542 = vpop.permute.xlu0 %4541
        %4543 = vrot.lane.b32.xlu0 %v3022, 126
        %v4544 = vpop.permute.xlu0 %4543
        %v4561 = vcombine.low %v4514, %v4530
        %v4562 = vcombine.high %v4514, %v4530
        %v4564 = vunpack.c.l.s4 1983009808
        %v4565 = vunpack.c.0.s8 %v4564
        %v4566 = vlaneseq
        %v4567 = vshrl.u32 %v4566, 7
        %v4568 = vsub.s32 %v4565, %v4567
        %v4569 = vrot.slane %v4561, %v4568
        %v4571 = vunpack.c.l.s4 1983009808
        %v4572 = vunpack.c.0.s8 %v4571
        %v4573 = vlaneseq
        %v4574 = vshrl.u32 %v4573, 7
        %v4575 = vsub.s32 %v4572, %v4574
        %v4576 = vrot.slane %v4562, %v4575
        %v4577 = vcombine.low %v4522, %v4538
        %v4578 = vcombine.high %v4522, %v4538
        %v4580 = vunpack.c.l.s4 1983009808
        %v4581 = vunpack.c.0.s8 %v4580
        %v4582 = vlaneseq
        %v4583 = vshrl.u32 %v4582, 7
        %v4584 = vsub.s32 %v4581, %v4583
        %v4585 = vrot.slane %v4577, %v4584
        %v4587 = vunpack.c.l.s4 1983009808
        %v4588 = vunpack.c.0.s8 %v4587
        %v4589 = vlaneseq
        %v4590 = vshrl.u32 %v4589, 7
        %v4591 = vsub.s32 %v4588, %v4590
        %v4592 = vrot.slane %v4578, %v4591
        %v4593 = vcombine.low %v4569, %v4585
        %v4594 = vcombine.high %v4569, %v4585
        %v4596 = vunpack.c.l.s4 1934713408
        %v4597 = vunpack.c.0.s8 %v4596
        %v4598 = vlaneseq
        %v4599 = vshrl.u32 %v4598, 7
        %v4600 = vsub.s32 %v4597, %v4599
        %v4601 = vrot.slane %v4593, %v4600
        %v4603 = vunpack.c.l.s4 1934713408
        %v4604 = vunpack.c.0.s8 %v4603
        %v4605 = vlaneseq
        %v4606 = vshrl.u32 %v4605, 7
        %v4607 = vsub.s32 %v4604, %v4606
        %v4608 = vrot.slane %v4594, %v4607
        %v4609 = vcombine.low %v4576, %v4592
        %v4610 = vcombine.high %v4576, %v4592
        %v4612 = vunpack.c.l.s4 1934713408
        %v4613 = vunpack.c.0.s8 %v4612
        %v4614 = vlaneseq
        %v4615 = vshrl.u32 %v4614, 7
        %v4616 = vsub.s32 %v4613, %v4615
        %v4617 = vrot.slane %v4609, %v4616
        %v4619 = vunpack.c.l.s4 1934713408
        %v4620 = vunpack.c.0.s8 %v4619
        %v4621 = vlaneseq
        %v4622 = vshrl.u32 %v4621, 7
        %v4623 = vsub.s32 %v4620, %v4622
        %v4624 = vrot.slane %v4610, %v4623
        %v4625 = vcombine.high %v4601, 0.0
        %v4626 = vcombine.high %v4608, 0.0
        %v4627 = vcombine.high %v4617, 0.0
        %v4628 = vcombine.high %v4624, 0.0
        %v4629 = vcombine.low %v4516, %v4532
        %v4630 = vcombine.high %v4516, %v4532
        %v4632 = vunpack.c.l.s4 1983009808
        %v4633 = vunpack.c.0.s8 %v4632
        %v4634 = vlaneseq
        %v4635 = vshrl.u32 %v4634, 7
        %v4636 = vsub.s32 %v4633, %v4635
        %v4637 = vrot.slane %v4629, %v4636
        %v4639 = vunpack.c.l.s4 1983009808
        %v4640 = vunpack.c.0.s8 %v4639
        %v4641 = vlaneseq
        %v4642 = vshrl.u32 %v4641, 7
        %v4643 = vsub.s32 %v4640, %v4642
        %v4644 = vrot.slane %v4630, %v4643
        %v4645 = vcombine.low %v4524, %v4540
        %v4646 = vcombine.high %v4524, %v4540
        %v4648 = vunpack.c.l.s4 1983009808
        %v4649 = vunpack.c.0.s8 %v4648
        %v4650 = vlaneseq
        %v4651 = vshrl.u32 %v4650, 7
        %v4652 = vsub.s32 %v4649, %v4651
        %v4653 = vrot.slane %v4645, %v4652
        %v4655 = vunpack.c.l.s4 1983009808
        %v4656 = vunpack.c.0.s8 %v4655
        %v4657 = vlaneseq
        %v4658 = vshrl.u32 %v4657, 7
        %v4659 = vsub.s32 %v4656, %v4658
        %v4660 = vrot.slane %v4646, %v4659
        %v4661 = vcombine.low %v4637, %v4653
        %v4662 = vcombine.high %v4637, %v4653
        %v4664 = vunpack.c.l.s4 1934713408
        %v4665 = vunpack.c.0.s8 %v4664
        %v4666 = vlaneseq
        %v4667 = vshrl.u32 %v4666, 7
        %v4668 = vsub.s32 %v4665, %v4667
        %v4669 = vrot.slane %v4661, %v4668
        %v4671 = vunpack.c.l.s4 1934713408
        %v4672 = vunpack.c.0.s8 %v4671
        %v4673 = vlaneseq
        %v4674 = vshrl.u32 %v4673, 7
        %v4675 = vsub.s32 %v4672, %v4674
        %v4676 = vrot.slane %v4662, %v4675
        %v4677 = vcombine.low %v4644, %v4660
        %v4678 = vcombine.high %v4644, %v4660
        %v4680 = vunpack.c.l.s4 1934713408
        %v4681 = vunpack.c.0.s8 %v4680
        %v4682 = vlaneseq
        %v4683 = vshrl.u32 %v4682, 7
        %v4684 = vsub.s32 %v4681, %v4683
        %v4685 = vrot.slane %v4677, %v4684
        %v4687 = vunpack.c.l.s4 1934713408
        %v4688 = vunpack.c.0.s8 %v4687
        %v4689 = vlaneseq
        %v4690 = vshrl.u32 %v4689, 7
        %v4691 = vsub.s32 %v4688, %v4690
        %v4692 = vrot.slane %v4678, %v4691
        %v4693 = vcombine.high %v4669, 0.0
        %v4694 = vcombine.high %v4676, 0.0
        %v4695 = vcombine.high %v4685, 0.0
        %v4696 = vcombine.high %v4692, 0.0
        %v4697 = vcombine.low %v4518, %v4534
        %v4698 = vcombine.high %v4518, %v4534
        %v4700 = vunpack.c.l.s4 1983009808
        %v4701 = vunpack.c.0.s8 %v4700
        %v4702 = vlaneseq
        %v4703 = vshrl.u32 %v4702, 7
        %v4704 = vsub.s32 %v4701, %v4703
        %v4705 = vrot.slane %v4697, %v4704
        %v4707 = vunpack.c.l.s4 1983009808
        %v4708 = vunpack.c.0.s8 %v4707
        %v4709 = vlaneseq
        %v4710 = vshrl.u32 %v4709, 7
        %v4711 = vsub.s32 %v4708, %v4710
        %v4712 = vrot.slane %v4698, %v4711
        %v4713 = vcombine.low %v4526, %v4542
        %v4714 = vcombine.high %v4526, %v4542
        %v4716 = vunpack.c.l.s4 1983009808
        %v4717 = vunpack.c.0.s8 %v4716
        %v4718 = vlaneseq
        %v4719 = vshrl.u32 %v4718, 7
        %v4720 = vsub.s32 %v4717, %v4719
        %v4721 = vrot.slane %v4713, %v4720
        %v4723 = vunpack.c.l.s4 1983009808
        %v4724 = vunpack.c.0.s8 %v4723
        %v4725 = vlaneseq
        %v4726 = vshrl.u32 %v4725, 7
        %v4727 = vsub.s32 %v4724, %v4726
        %v4728 = vrot.slane %v4714, %v4727
        %v4729 = vcombine.low %v4705, %v4721
        %v4730 = vcombine.high %v4705, %v4721
        %v4732 = vunpack.c.l.s4 1934713408
        %v4733 = vunpack.c.0.s8 %v4732
        %v4734 = vlaneseq
        %v4735 = vshrl.u32 %v4734, 7
        %v4736 = vsub.s32 %v4733, %v4735
        %v4737 = vrot.slane %v4729, %v4736
        %v4739 = vunpack.c.l.s4 1934713408
        %v4740 = vunpack.c.0.s8 %v4739
        %v4741 = vlaneseq
        %v4742 = vshrl.u32 %v4741, 7
        %v4743 = vsub.s32 %v4740, %v4742
        %v4744 = vrot.slane %v4730, %v4743
        %v4745 = vcombine.low %v4712, %v4728
        %v4746 = vcombine.high %v4712, %v4728
        %v4748 = vunpack.c.l.s4 1934713408
        %v4749 = vunpack.c.0.s8 %v4748
        %v4750 = vlaneseq
        %v4751 = vshrl.u32 %v4750, 7
        %v4752 = vsub.s32 %v4749, %v4751
        %v4753 = vrot.slane %v4745, %v4752
        %v4755 = vunpack.c.l.s4 1934713408
        %v4756 = vunpack.c.0.s8 %v4755
        %v4757 = vlaneseq
        %v4758 = vshrl.u32 %v4757, 7
        %v4759 = vsub.s32 %v4756, %v4758
        %v4760 = vrot.slane %v4746, %v4759
        %v4761 = vcombine.high %v4737, 0.0
        %v4762 = vcombine.high %v4744, 0.0
        %v4763 = vcombine.high %v4753, 0.0
        %v4764 = vcombine.high %v4760, 0.0
        %v4765 = vcombine.low %v4520, %v4536
        %v4766 = vcombine.high %v4520, %v4536
        %v4768 = vunpack.c.l.s4 1983009808
        %v4769 = vunpack.c.0.s8 %v4768
        %v4770 = vlaneseq
        %v4771 = vshrl.u32 %v4770, 7
        %v4772 = vsub.s32 %v4769, %v4771
        %v4773 = vrot.slane %v4765, %v4772
        %v4775 = vunpack.c.l.s4 1983009808
        %v4776 = vunpack.c.0.s8 %v4775
        %v4777 = vlaneseq
        %v4778 = vshrl.u32 %v4777, 7
        %v4779 = vsub.s32 %v4776, %v4778
        %v4780 = vrot.slane %v4766, %v4779
        %v4781 = vcombine.low %v4528, %v4544
        %v4782 = vcombine.high %v4528, %v4544
        %v4784 = vunpack.c.l.s4 1983009808
        %v4785 = vunpack.c.0.s8 %v4784
        %v4786 = vlaneseq
        %v4787 = vshrl.u32 %v4786, 7
        %v4788 = vsub.s32 %v4785, %v4787
        %v4789 = vrot.slane %v4781, %v4788
        %v4791 = vunpack.c.l.s4 1983009808
        %v4792 = vunpack.c.0.s8 %v4791
        %v4793 = vlaneseq
        %v4794 = vshrl.u32 %v4793, 7
        %v4795 = vsub.s32 %v4792, %v4794
        %v4796 = vrot.slane %v4782, %v4795
        %v4797 = vcombine.low %v4773, %v4789
        %v4798 = vcombine.high %v4773, %v4789
        %v4800 = vunpack.c.l.s4 1934713408
        %v4801 = vunpack.c.0.s8 %v4800
        %v4802 = vlaneseq
        %v4803 = vshrl.u32 %v4802, 7
        %v4804 = vsub.s32 %v4801, %v4803
        %v4805 = vrot.slane %v4797, %v4804
        %v4807 = vunpack.c.l.s4 1934713408
        %v4808 = vunpack.c.0.s8 %v4807
        %v4809 = vlaneseq
        %v4810 = vshrl.u32 %v4809, 7
        %v4811 = vsub.s32 %v4808, %v4810
        %v4812 = vrot.slane %v4798, %v4811
        %v4813 = vcombine.low %v4780, %v4796
        %v4814 = vcombine.high %v4780, %v4796
        %v4816 = vunpack.c.l.s4 1934713408
        %v4817 = vunpack.c.0.s8 %v4816
        %v4818 = vlaneseq
        %v4819 = vshrl.u32 %v4818, 7
        %v4820 = vsub.s32 %v4817, %v4819
        %v4821 = vrot.slane %v4813, %v4820
        %v4823 = vunpack.c.l.s4 1934713408
        %v4824 = vunpack.c.0.s8 %v4823
        %v4825 = vlaneseq
        %v4826 = vshrl.u32 %v4825, 7
        %v4827 = vsub.s32 %v4824, %v4826
        %v4828 = vrot.slane %v4814, %v4827
        %v4829 = vcombine.high %v4805, 0.0
        %v4830 = vcombine.high %v4812, 0.0
        %v4831 = vcombine.high %v4821, 0.0
        %v4832 = vcombine.high %v4828, 0.0
        %4834 = vrot.lane.b32.xlu0 %v4625, 32
        %v4835 = vpop.permute.xlu0 %4834
        %4838 = vrot.lane.b32.xlu0 %v4608, 64
        %v4839 = vpop.permute.xlu0 %4838
        %4842 = vrot.lane.b32.xlu0 %v4626, 96
        %v4843 = vpop.permute.xlu0 %4842
        %4846 = vrot.lane.b32.xlu0 %v4627, 32
        %v4847 = vpop.permute.xlu0 %4846
        %4850 = vrot.lane.b32.xlu0 %v4624, 64
        %v4851 = vpop.permute.xlu0 %4850
        %4854 = vrot.lane.b32.xlu0 %v4628, 96
        %v4855 = vpop.permute.xlu0 %4854
        %4858 = vrot.lane.b32.xlu0 %v4693, 32
        %v4859 = vpop.permute.xlu0 %4858
        %4862 = vrot.lane.b32.xlu0 %v4676, 64
        %v4863 = vpop.permute.xlu0 %4862
        %4866 = vrot.lane.b32.xlu0 %v4694, 96
        %v4867 = vpop.permute.xlu0 %4866
        %4870 = vrot.lane.b32.xlu0 %v4695, 32
        %v4871 = vpop.permute.xlu0 %4870
        %4874 = vrot.lane.b32.xlu0 %v4692, 64
        %v4875 = vpop.permute.xlu0 %4874
        %4878 = vrot.lane.b32.xlu0 %v4696, 96
        %v4879 = vpop.permute.xlu0 %4878
        %4882 = vrot.lane.b32.xlu0 %v4761, 32
        %v4883 = vpop.permute.xlu0 %4882
        %4886 = vrot.lane.b32.xlu0 %v4744, 64
        %v4887 = vpop.permute.xlu0 %4886
        %4890 = vrot.lane.b32.xlu0 %v4762, 96
        %v4891 = vpop.permute.xlu0 %4890
        %4894 = vrot.lane.b32.xlu0 %v4763, 32
        %v4895 = vpop.permute.xlu0 %4894
        %4898 = vrot.lane.b32.xlu0 %v4760, 64
        %v4899 = vpop.permute.xlu0 %4898
        %4902 = vrot.lane.b32.xlu0 %v4764, 96
        %v4903 = vpop.permute.xlu0 %4902
        %4906 = vrot.lane.b32.xlu0 %v4829, 32
        %v4907 = vpop.permute.xlu0 %4906
        %4910 = vrot.lane.b32.xlu0 %v4812, 64
        %v4911 = vpop.permute.xlu0 %4910
        %4914 = vrot.lane.b32.xlu0 %v4830, 96
        %v4915 = vpop.permute.xlu0 %4914
        %4918 = vrot.lane.b32.xlu0 %v4831, 32
        %v4919 = vpop.permute.xlu0 %4918
        %4922 = vrot.lane.b32.xlu0 %v4828, 64
        %v4923 = vpop.permute.xlu0 %4922
        %4926 = vrot.lane.b32.xlu0 %v4832, 96
        %v4927 = vpop.permute.xlu0 %4926
        %v4929 = vsel %vm1111, %v4601, %v4835
        %v4930 = vsel %vm1113, %v4929, %v4839
        %v4931 = vsel %vm1115, %v4930, %v4843
        %v4932 = vsel %vm1111, %v4617, %v4847
        %v4933 = vsel %vm1113, %v4932, %v4851
        %v4934 = vsel %vm1115, %v4933, %v4855
        %v4935 = vsel %vm1111, %v4669, %v4859
        %v4936 = vsel %vm1113, %v4935, %v4863
        %v4937 = vsel %vm1115, %v4936, %v4867
        %v4938 = vsel %vm1111, %v4685, %v4871
        %v4939 = vsel %vm1113, %v4938, %v4875
        %v4940 = vsel %vm1115, %v4939, %v4879
        %v4941 = vsel %vm1111, %v4737, %v4883
        %v4942 = vsel %vm1113, %v4941, %v4887
        %v4943 = vsel %vm1115, %v4942, %v4891
        %v4944 = vsel %vm1111, %v4753, %v4895
        %v4945 = vsel %vm1113, %v4944, %v4899
        %v4946 = vsel %vm1115, %v4945, %v4903
        %v4947 = vsel %vm1111, %v4805, %v4907
        %v4948 = vsel %vm1113, %v4947, %v4911
        %v4949 = vsel %vm1115, %v4948, %v4915
        %v4950 = vsel %vm1111, %v4821, %v4919
        %v4951 = vsel %vm1113, %v4950, %v4923
        %v4952 = vsel %vm1115, %v4951, %v4927
        %s4953 = scalar_lea.vmem %s3, 40
        %v4954 = vld [vmem:[%s4953] sm:$0xff]
        %v4956 = vsel %vm1597, %v4954, 0
        %v4959 = vsel %vm1601, %v4931, 0
        %v4962 = vsel %vm1601, %v4934, 0
        %v4965 = vsel %vm1601, %v4937, 0
        %v4968 = vsel %vm1601, %v4940, 0
        %v4971 = vsel %vm1601, %v4943, 0
        %v4974 = vsel %vm1601, %v4946, 0
        %v4977 = vsel %vm1601, %v4949, 0
        %v4980 = vsel %vm1601, %v4952, 0
        %4982 = vmatprep.subr.mxu0 %v4962
        %4983 = vmatpush1.msra.mxu0 %v4959
        %4984 = vmatprep.subr.mxu0 0.0
        %4985 = vmatpush1.msra.mxu0 0.0
        %4986 = vmatprep.subr.mxu0 0.0
        %4987 = vmatpush1.msra.mxu0 0.0
        %4988 = vmatprep.subr.mxu0 0.0
        %4989 = vmatpush1.msra.mxu0 0.0
        %4990 = vmatprep.subr.mxu0 0.0
        %4991 = vmatpush1.msra.mxu0 0.0
        %4992 = vmatprep.subr.mxu0 0.0
        %4993 = vmatpush1.msra.mxu0 0.0
        %4994 = vmatprep.subr.mxu0 0.0
        %4995 = vmatpush1.msra.mxu0 0.0
        %4996 = vmatprep.subr.mxu0 0.0
        %4997 = vmatpush1.msra.mxu0 0.0
        %4998 = vmatprep.subr.mxu0 0.0
        %4999 = vmatpush1.msra.mxu0 0.0
        %5000 = vmatprep.subr.mxu0 0.0
        %5001 = vmatpush1.msra.mxu0 0.0
        %5002 = vmatprep.subr.mxu0 0.0
        %5003 = vmatpush1.msra.mxu0 0.0
        %5004 = vmatprep.subr.mxu0 0.0
        %5005 = vmatpush1.msra.mxu0 0.0
        %5006 = vmatprep.subr.mxu0 0.0
        %5007 = vmatpush1.msra.mxu0 0.0
        %5008 = vmatprep.subr.mxu0 0.0
        %5009 = vmatpush1.msra.mxu0 0.0
        %5010 = vmatprep.subr.mxu0 0.0
        %5011 = vmatpush1.msra.mxu0 0.0
        %5012 = vmatprep.subr.mxu0 0.0
        %5013 = vmatpush1.msra.mxu0 0.0
        %5014 = vmatprep.subr.mxu0 0.0
        %5015 = vmatpush1.msra.mxu0 0.0
        %5016 = vmatprep.subr.mxu0 0.0
        %5017 = vmatpush1.msra.mxu0 0.0
        %5018 = vmatprep.subr.mxu0 0.0
        %5019 = vmatpush1.msra.mxu0 0.0
        %5020 = vmatprep.subr.mxu0 0.0
        %5021 = vmatpush1.msra.mxu0 0.0
        %5022 = vmatprep.subr.mxu0 0.0
        %5023 = vmatpush1.msra.mxu0 0.0
        %5024 = vmatprep.subr.mxu0 0.0
        %5025 = vmatpush1.msra.mxu0 0.0
        %5026 = vmatprep.subr.mxu0 0.0
        %5027 = vmatpush1.msra.mxu0 0.0
        %5028 = vmatprep.subr.mxu0 0.0
        %5029 = vmatpush1.msra.mxu0 0.0
        %5030 = vmatprep.subr.mxu0 0.0
        %5031 = vmatpush1.msra.mxu0 0.0
        %5032 = vmatprep.subr.mxu0 0.0
        %5033 = vmatpush1.msra.mxu0 0.0
        %5034 = vmatprep.subr.mxu0 0.0
        %5035 = vmatpush1.msra.mxu0 0.0
        %5036 = vmatprep.subr.mxu0 0.0
        %5037 = vmatpush1.msra.mxu0 0.0
        %5038 = vmatprep.subr.mxu0 0.0
        %5039 = vmatpush1.msra.mxu0 0.0
        %5040 = vmatprep.subr.mxu0 0.0
        %5041 = vmatpush1.msra.mxu0 0.0
        %5042 = vmatprep.subr.mxu0 0.0
        %5043 = vmatpush1.msra.mxu0 0.0
        %5044 = vmatprep.subr.mxu0 0.0
        %5045 = vmatpush1.msra.mxu0 0.0
        %5046 = vmatprep.mubr.f32.mxu0 0.0
        %5047 = vmatmul.mubr.f32.gmra.mrb[0].mxu0 %v4956
        %v5048 = vpop.f32.mrb[0].mxu0
        %v5049 = vadd.f32 0.0, %v5048
        %v5050 = vpop.f32.mrb[0].mxu0
        %v5051 = vadd.f32 0.0, %v5050
        %5052 = vdwg.mxu0
        %5053 = vmatprep.subr.mxu0 %v4968
        %5054 = vmatpush1.msra.mxu0 %v4965
        %5055 = vmatprep.subr.mxu0 0.0
        %5056 = vmatpush1.msra.mxu0 0.0
        %5057 = vmatprep.subr.mxu0 0.0
        %5058 = vmatpush1.msra.mxu0 0.0
        %5059 = vmatprep.subr.mxu0 0.0
        %5060 = vmatpush1.msra.mxu0 0.0
        %5061 = vmatprep.subr.mxu0 0.0
        %5062 = vmatpush1.msra.mxu0 0.0
        %5063 = vmatprep.subr.mxu0 0.0
        %5064 = vmatpush1.msra.mxu0 0.0
        %5065 = vmatprep.subr.mxu0 0.0
        %5066 = vmatpush1.msra.mxu0 0.0
        %5067 = vmatprep.subr.mxu0 0.0
        %5068 = vmatpush1.msra.mxu0 0.0
        %5069 = vmatprep.subr.mxu0 0.0
        %5070 = vmatpush1.msra.mxu0 0.0
        %5071 = vmatprep.subr.mxu0 0.0
        %5072 = vmatpush1.msra.mxu0 0.0
        %5073 = vmatprep.subr.mxu0 0.0
        %5074 = vmatpush1.msra.mxu0 0.0
        %5075 = vmatprep.subr.mxu0 0.0
        %5076 = vmatpush1.msra.mxu0 0.0
        %5077 = vmatprep.subr.mxu0 0.0
        %5078 = vmatpush1.msra.mxu0 0.0
        %5079 = vmatprep.subr.mxu0 0.0
        %5080 = vmatpush1.msra.mxu0 0.0
        %5081 = vmatprep.subr.mxu0 0.0
        %5082 = vmatpush1.msra.mxu0 0.0
        %5083 = vmatprep.subr.mxu0 0.0
        %5084 = vmatpush1.msra.mxu0 0.0
        %5085 = vmatprep.subr.mxu0 0.0
        %5086 = vmatpush1.msra.mxu0 0.0
        %5087 = vmatprep.subr.mxu0 0.0
        %5088 = vmatpush1.msra.mxu0 0.0
        %5089 = vmatprep.subr.mxu0 0.0
        %5090 = vmatpush1.msra.mxu0 0.0
        %5091 = vmatprep.subr.mxu0 0.0
        %5092 = vmatpush1.msra.mxu0 0.0
        %5093 = vmatprep.subr.mxu0 0.0
        %5094 = vmatpush1.msra.mxu0 0.0
        %5095 = vmatprep.subr.mxu0 0.0
        %5096 = vmatpush1.msra.mxu0 0.0
        %5097 = vmatprep.subr.mxu0 0.0
        %5098 = vmatpush1.msra.mxu0 0.0
        %5099 = vmatprep.subr.mxu0 0.0
        %5100 = vmatpush1.msra.mxu0 0.0
        %5101 = vmatprep.subr.mxu0 0.0
        %5102 = vmatpush1.msra.mxu0 0.0
        %5103 = vmatprep.subr.mxu0 0.0
        %5104 = vmatpush1.msra.mxu0 0.0
        %5105 = vmatprep.subr.mxu0 0.0
        %5106 = vmatpush1.msra.mxu0 0.0
        %5107 = vmatprep.subr.mxu0 0.0
        %5108 = vmatpush1.msra.mxu0 0.0
        %5109 = vmatprep.subr.mxu0 0.0
        %5110 = vmatpush1.msra.mxu0 0.0
        %5111 = vmatprep.subr.mxu0 0.0
        %5112 = vmatpush1.msra.mxu0 0.0
        %5113 = vmatprep.subr.mxu0 0.0
        %5114 = vmatpush1.msra.mxu0 0.0
        %5115 = vmatprep.subr.mxu0 0.0
        %5116 = vmatpush1.msra.mxu0 0.0
        %5117 = vmatprep.mubr.f32.mxu0 0.0
        %5118 = vmatmul.mubr.f32.gmra.mrb[0].mxu0 %v4956
        %v5119 = vpop.f32.mrb[0].mxu0
        %v5120 = vadd.f32 0.0, %v5119
        %v5121 = vpop.f32.mrb[0].mxu0
        %v5122 = vadd.f32 0.0, %v5121
        %5123 = vdwg.mxu0
        %5124 = vmatprep.subr.mxu0 %v4974
        %5125 = vmatpush1.msra.mxu0 %v4971
        %5126 = vmatprep.subr.mxu0 0.0
        %5127 = vmatpush1.msra.mxu0 0.0
        %5128 = vmatprep.subr.mxu0 0.0
        %5129 = vmatpush1.msra.mxu0 0.0
        %5130 = vmatprep.subr.mxu0 0.0
        %5131 = vmatpush1.msra.mxu0 0.0
        %5132 = vmatprep.subr.mxu0 0.0
        %5133 = vmatpush1.msra.mxu0 0.0
        %5134 = vmatprep.subr.mxu0 0.0
        %5135 = vmatpush1.msra.mxu0 0.0
        %5136 = vmatprep.subr.mxu0 0.0
        %5137 = vmatpush1.msra.mxu0 0.0
        %5138 = vmatprep.subr.mxu0 0.0
        %5139 = vmatpush1.msra.mxu0 0.0
        %5140 = vmatprep.subr.mxu0 0.0
        %5141 = vmatpush1.msra.mxu0 0.0
        %5142 = vmatprep.subr.mxu0 0.0
        %5143 = vmatpush1.msra.mxu0 0.0
        %5144 = vmatprep.subr.mxu0 0.0
        %5145 = vmatpush1.msra.mxu0 0.0
        %5146 = vmatprep.subr.mxu0 0.0
        %5147 = vmatpush1.msra.mxu0 0.0
        %5148 = vmatprep.subr.mxu0 0.0
        %5149 = vmatpush1.msra.mxu0 0.0
        %5150 = vmatprep.subr.mxu0 0.0
        %5151 = vmatpush1.msra.mxu0 0.0
        %5152 = vmatprep.subr.mxu0 0.0
        %5153 = vmatpush1.msra.mxu0 0.0
        %5154 = vmatprep.subr.mxu0 0.0
        %5155 = vmatpush1.msra.mxu0 0.0
        %5156 = vmatprep.subr.mxu0 0.0
        %5157 = vmatpush1.msra.mxu0 0.0
        %5158 = vmatprep.subr.mxu0 0.0
        %5159 = vmatpush1.msra.mxu0 0.0
        %5160 = vmatprep.subr.mxu0 0.0
        %5161 = vmatpush1.msra.mxu0 0.0
        %5162 = vmatprep.subr.mxu0 0.0
        %5163 = vmatpush1.msra.mxu0 0.0
        %5164 = vmatprep.subr.mxu0 0.0
        %5165 = vmatpush1.msra.mxu0 0.0
        %5166 = vmatprep.subr.mxu0 0.0
        %5167 = vmatpush1.msra.mxu0 0.0
        %5168 = vmatprep.subr.mxu0 0.0
        %5169 = vmatpush1.msra.mxu0 0.0
        %5170 = vmatprep.subr.mxu0 0.0
        %5171 = vmatpush1.msra.mxu0 0.0
        %5172 = vmatprep.subr.mxu0 0.0
        %5173 = vmatpush1.msra.mxu0 0.0
        %5174 = vmatprep.subr.mxu0 0.0
        %5175 = vmatpush1.msra.mxu0 0.0
        %5176 = vmatprep.subr.mxu0 0.0
        %5177 = vmatpush1.msra.mxu0 0.0
        %5178 = vmatprep.subr.mxu0 0.0
        %5179 = vmatpush1.msra.mxu0 0.0
        %5180 = vmatprep.subr.mxu0 0.0
        %5181 = vmatpush1.msra.mxu0 0.0
        %5182 = vmatprep.subr.mxu0 0.0
        %5183 = vmatpush1.msra.mxu0 0.0
        %5184 = vmatprep.subr.mxu0 0.0
        %5185 = vmatpush1.msra.mxu0 0.0
        %5186 = vmatprep.subr.mxu0 0.0
        %5187 = vmatpush1.msra.mxu0 0.0
        %5188 = vmatprep.mubr.f32.mxu0 0.0
        %5189 = vmatmul.mubr.f32.gmra.mrb[0].mxu0 %v4956
        %v5190 = vpop.f32.mrb[0].mxu0
        %v5191 = vadd.f32 0.0, %v5190
        %v5192 = vpop.f32.mrb[0].mxu0
        %v5193 = vadd.f32 0.0, %v5192
        %5194 = vdwg.mxu0
        %5195 = vmatprep.subr.mxu0 %v4980
        %5196 = vmatpush1.msra.mxu0 %v4977
        %5197 = vmatprep.subr.mxu0 0.0
        %5198 = vmatpush1.msra.mxu0 0.0
        %5199 = vmatprep.subr.mxu0 0.0
        %5200 = vmatpush1.msra.mxu0 0.0
        %5201 = vmatprep.subr.mxu0 0.0
        %5202 = vmatpush1.msra.mxu0 0.0
        %5203 = vmatprep.subr.mxu0 0.0
        %5204 = vmatpush1.msra.mxu0 0.0
        %5205 = vmatprep.subr.mxu0 0.0
        %5206 = vmatpush1.msra.mxu0 0.0
        %5207 = vmatprep.subr.mxu0 0.0
        %5208 = vmatpush1.msra.mxu0 0.0
        %5209 = vmatprep.subr.mxu0 0.0
        %5210 = vmatpush1.msra.mxu0 0.0
        %5211 = vmatprep.subr.mxu0 0.0
        %5212 = vmatpush1.msra.mxu0 0.0
        %5213 = vmatprep.subr.mxu0 0.0
        %5214 = vmatpush1.msra.mxu0 0.0
        %5215 = vmatprep.subr.mxu0 0.0
        %5216 = vmatpush1.msra.mxu0 0.0
        %5217 = vmatprep.subr.mxu0 0.0
        %5218 = vmatpush1.msra.mxu0 0.0
        %5219 = vmatprep.subr.mxu0 0.0
        %5220 = vmatpush1.msra.mxu0 0.0
        %5221 = vmatprep.subr.mxu0 0.0
        %5222 = vmatpush1.msra.mxu0 0.0
        %5223 = vmatprep.subr.mxu0 0.0
        %5224 = vmatpush1.msra.mxu0 0.0
        %5225 = vmatprep.subr.mxu0 0.0
        %5226 = vmatpush1.msra.mxu0 0.0
        %5227 = vmatprep.subr.mxu0 0.0
        %5228 = vmatpush1.msra.mxu0 0.0
        %5229 = vmatprep.subr.mxu0 0.0
        %5230 = vmatpush1.msra.mxu0 0.0
        %5231 = vmatprep.subr.mxu0 0.0
        %5232 = vmatpush1.msra.mxu0 0.0
        %5233 = vmatprep.subr.mxu0 0.0
        %5234 = vmatpush1.msra.mxu0 0.0
        %5235 = vmatprep.subr.mxu0 0.0
        %5236 = vmatpush1.msra.mxu0 0.0
        %5237 = vmatprep.subr.mxu0 0.0
        %5238 = vmatpush1.msra.mxu0 0.0
        %5239 = vmatprep.subr.mxu0 0.0
        %5240 = vmatpush1.msra.mxu0 0.0
        %5241 = vmatprep.subr.mxu0 0.0
        %5242 = vmatpush1.msra.mxu0 0.0
        %5243 = vmatprep.subr.mxu0 0.0
        %5244 = vmatpush1.msra.mxu0 0.0
        %5245 = vmatprep.subr.mxu0 0.0
        %5246 = vmatpush1.msra.mxu0 0.0
        %5247 = vmatprep.subr.mxu0 0.0
        %5248 = vmatpush1.msra.mxu0 0.0
        %5249 = vmatprep.subr.mxu0 0.0
        %5250 = vmatpush1.msra.mxu0 0.0
        %5251 = vmatprep.subr.mxu0 0.0
        %5252 = vmatpush1.msra.mxu0 0.0
        %5253 = vmatprep.subr.mxu0 0.0
        %5254 = vmatpush1.msra.mxu0 0.0
        %5255 = vmatprep.subr.mxu0 0.0
        %5256 = vmatpush1.msra.mxu0 0.0
        %5257 = vmatprep.subr.mxu0 0.0
        %5258 = vmatpush1.msra.mxu0 0.0
        %5259 = vmatprep.mubr.f32.mxu0 0.0
        %5260 = vmatmul.mubr.f32.gmra.mrb[0].mxu0 %v4956
        %v5261 = vpop.f32.mrb[0].mxu0
        %v5262 = vadd.f32 0.0, %v5261
        %v5263 = vpop.f32.mrb[0].mxu0
        %v5264 = vadd.f32 0.0, %v5263
        %5265 = vdwg.mxu0
        %v5266 = vadd.f32 %v4505, %v5049
        %v5267 = vadd.f32 %v4506, %v5051
        %v5268 = vadd.f32 %v4507, %v5120
        %v5269 = vadd.f32 %v4508, %v5122
        %v5270 = vadd.f32 %v4509, %v5191
        %v5271 = vadd.f32 %v4510, %v5193
        %v5272 = vadd.f32 %v4511, %v5262
        %v5273 = vadd.f32 %v4512, %v5264
        %vm5274 = vcmask 1045504
        %v5275 = vrot.slane %v450, 2
        %v5276 = vrot.slane %v455, 2
        %v5277 = vsel %vm5274, %v5275, %v5276
        %v5278 = vrot.slane %v460, 2
        %v5279 = vsel %vm5274, %v5276, %v5278
        %v5280 = vrot.slane %v465, 2
        %v5281 = vsel %vm5274, %v5278, %v5280
        %v5282 = vrot.slane %v470, 2
        %v5283 = vsel %vm5274, %v5280, %v5282
        %v5284 = vrot.slane %v540, 2
        %v5285 = vrot.slane %v545, 2
        %v5286 = vsel %vm5274, %v5284, %v5285
        %v5287 = vrot.slane %v550, 2
        %v5288 = vsel %vm5274, %v5285, %v5287
        %v5289 = vrot.slane %v555, 2
        %v5290 = vsel %vm5274, %v5287, %v5289
        %v5291 = vrot.slane %v560, 2
        %v5292 = vsel %vm5274, %v5289, %v5291
        %v5293 = vrot.slane %v630, 2
        %v5294 = vrot.slane %v635, 2
        %v5295 = vsel %vm5274, %v5293, %v5294
        %v5296 = vrot.slane %v640, 2
        %v5297 = vsel %vm5274, %v5294, %v5296
        %v5298 = vrot.slane %v645, 2
        %v5299 = vsel %vm5274, %v5296, %v5298
        %v5300 = vrot.slane %v650, 2
        %v5301 = vsel %vm5274, %v5298, %v5300
        %v5302 = vrot.slane %v720, 2
        %v5303 = vrot.slane %v725, 2
        %v5304 = vsel %vm5274, %v5302, %v5303
        %v5305 = vrot.slane %v730, 2
        %v5306 = vsel %vm5274, %v5303, %v5305
        %v5307 = vrot.slane %v735, 2
        %v5308 = vsel %vm5274, %v5305, %v5307
        %v5309 = vrot.slane %v740, 2
        %v5310 = vsel %vm5274, %v5307, %v5309
        %v5327 = vcombine.low %v5277, %v5295
        %v5328 = vcombine.high %v5277, %v5295
        %v5330 = vunpack.c.l.s4 1983009808
        %v5331 = vunpack.c.0.s8 %v5330
        %v5332 = vlaneseq
        %v5333 = vshrl.u32 %v5332, 7
        %v5334 = vsub.s32 %v5331, %v5333
        %v5335 = vrot.slane %v5327, %v5334
        %v5337 = vunpack.c.l.s4 1983009808
        %v5338 = vunpack.c.0.s8 %v5337
        %v5339 = vlaneseq
        %v5340 = vshrl.u32 %v5339, 7
        %v5341 = vsub.s32 %v5338, %v5340
        %v5342 = vrot.slane %v5328, %v5341
        %v5343 = vcombine.low %v5286, %v5304
        %v5344 = vcombine.high %v5286, %v5304
        %v5346 = vunpack.c.l.s4 1983009808
        %v5347 = vunpack.c.0.s8 %v5346
        %v5348 = vlaneseq
        %v5349 = vshrl.u32 %v5348, 7
        %v5350 = vsub.s32 %v5347, %v5349
        %v5351 = vrot.slane %v5343, %v5350
        %v5353 = vunpack.c.l.s4 1983009808
        %v5354 = vunpack.c.0.s8 %v5353
        %v5355 = vlaneseq
        %v5356 = vshrl.u32 %v5355, 7
        %v5357 = vsub.s32 %v5354, %v5356
        %v5358 = vrot.slane %v5344, %v5357
        %v5359 = vcombine.low %v5335, %v5351
        %v5360 = vcombine.high %v5335, %v5351
        %v5362 = vunpack.c.l.s4 1934713408
        %v5363 = vunpack.c.0.s8 %v5362
        %v5364 = vlaneseq
        %v5365 = vshrl.u32 %v5364, 7
        %v5366 = vsub.s32 %v5363, %v5365
        %v5367 = vrot.slane %v5359, %v5366
        %v5369 = vunpack.c.l.s4 1934713408
        %v5370 = vunpack.c.0.s8 %v5369
        %v5371 = vlaneseq
        %v5372 = vshrl.u32 %v5371, 7
        %v5373 = vsub.s32 %v5370, %v5372
        %v5374 = vrot.slane %v5360, %v5373
        %v5375 = vcombine.low %v5342, %v5358
        %v5376 = vcombine.high %v5342, %v5358
        %v5378 = vunpack.c.l.s4 1934713408
        %v5379 = vunpack.c.0.s8 %v5378
        %v5380 = vlaneseq
        %v5381 = vshrl.u32 %v5380, 7
        %v5382 = vsub.s32 %v5379, %v5381
        %v5383 = vrot.slane %v5375, %v5382
        %v5385 = vunpack.c.l.s4 1934713408
        %v5386 = vunpack.c.0.s8 %v5385
        %v5387 = vlaneseq
        %v5388 = vshrl.u32 %v5387, 7
        %v5389 = vsub.s32 %v5386, %v5388
        %v5390 = vrot.slane %v5376, %v5389
        %v5391 = vcombine.high %v5367, 0.0
        %v5392 = vcombine.high %v5374, 0.0
        %v5393 = vcombine.high %v5383, 0.0
        %v5394 = vcombine.high %v5390, 0.0
        %v5395 = vcombine.low %v5279, %v5297
        %v5396 = vcombine.high %v5279, %v5297
        %v5398 = vunpack.c.l.s4 1983009808
        %v5399 = vunpack.c.0.s8 %v5398
        %v5400 = vlaneseq
        %v5401 = vshrl.u32 %v5400, 7
        %v5402 = vsub.s32 %v5399, %v5401
        %v5403 = vrot.slane %v5395, %v5402
        %v5405 = vunpack.c.l.s4 1983009808
        %v5406 = vunpack.c.0.s8 %v5405
        %v5407 = vlaneseq
        %v5408 = vshrl.u32 %v5407, 7
        %v5409 = vsub.s32 %v5406, %v5408
        %v5410 = vrot.slane %v5396, %v5409
        %v5411 = vcombine.low %v5288, %v5306
        %v5412 = vcombine.high %v5288, %v5306
        %v5414 = vunpack.c.l.s4 1983009808
        %v5415 = vunpack.c.0.s8 %v5414
        %v5416 = vlaneseq
        %v5417 = vshrl.u32 %v5416, 7
        %v5418 = vsub.s32 %v5415, %v5417
        %v5419 = vrot.slane %v5411, %v5418
        %v5421 = vunpack.c.l.s4 1983009808
        %v5422 = vunpack.c.0.s8 %v5421
        %v5423 = vlaneseq
        %v5424 = vshrl.u32 %v5423, 7
        %v5425 = vsub.s32 %v5422, %v5424
        %v5426 = vrot.slane %v5412, %v5425
        %v5427 = vcombine.low %v5403, %v5419
        %v5428 = vcombine.high %v5403, %v5419
        %v5430 = vunpack.c.l.s4 1934713408
        %v5431 = vunpack.c.0.s8 %v5430
        %v5432 = vlaneseq
        %v5433 = vshrl.u32 %v5432, 7
        %v5434 = vsub.s32 %v5431, %v5433
        %v5435 = vrot.slane %v5427, %v5434
        %v5437 = vunpack.c.l.s4 1934713408
        %v5438 = vunpack.c.0.s8 %v5437
        %v5439 = vlaneseq
        %v5440 = vshrl.u32 %v5439, 7
        %v5441 = vsub.s32 %v5438, %v5440
        %v5442 = vrot.slane %v5428, %v5441
        %v5443 = vcombine.low %v5410, %v5426
        %v5444 = vcombine.high %v5410, %v5426
        %v5446 = vunpack.c.l.s4 1934713408
        %v5447 = vunpack.c.0.s8 %v5446
        %v5448 = vlaneseq
        %v5449 = vshrl.u32 %v5448, 7
        %v5450 = vsub.s32 %v5447, %v5449
        %v5451 = vrot.slane %v5443, %v5450
        %v5453 = vunpack.c.l.s4 1934713408
        %v5454 = vunpack.c.0.s8 %v5453
        %v5455 = vlaneseq
        %v5456 = vshrl.u32 %v5455, 7
        %v5457 = vsub.s32 %v5454, %v5456
        %v5458 = vrot.slane %v5444, %v5457
        %v5459 = vcombine.high %v5435, 0.0
        %v5460 = vcombine.high %v5442, 0.0
        %v5461 = vcombine.high %v5451, 0.0
        %v5462 = vcombine.high %v5458, 0.0
        %v5463 = vcombine.low %v5281, %v5299
        %v5464 = vcombine.high %v5281, %v5299
        %v5466 = vunpack.c.l.s4 1983009808
        %v5467 = vunpack.c.0.s8 %v5466
        %v5468 = vlaneseq
        %v5469 = vshrl.u32 %v5468, 7
        %v5470 = vsub.s32 %v5467, %v5469
        %v5471 = vrot.slane %v5463, %v5470
        %v5473 = vunpack.c.l.s4 1983009808
        %v5474 = vunpack.c.0.s8 %v5473
        %v5475 = vlaneseq
        %v5476 = vshrl.u32 %v5475, 7
        %v5477 = vsub.s32 %v5474, %v5476
        %v5478 = vrot.slane %v5464, %v5477
        %v5479 = vcombine.low %v5290, %v5308
        %v5480 = vcombine.high %v5290, %v5308
        %v5482 = vunpack.c.l.s4 1983009808
        %v5483 = vunpack.c.0.s8 %v5482
        %v5484 = vlaneseq
        %v5485 = vshrl.u32 %v5484, 7
        %v5486 = vsub.s32 %v5483, %v5485
        %v5487 = vrot.slane %v5479, %v5486
        %v5489 = vunpack.c.l.s4 1983009808
        %v5490 = vunpack.c.0.s8 %v5489
        %v5491 = vlaneseq
        %v5492 = vshrl.u32 %v5491, 7
        %v5493 = vsub.s32 %v5490, %v5492
        %v5494 = vrot.slane %v5480, %v5493
        %v5495 = vcombine.low %v5471, %v5487
        %v5496 = vcombine.high %v5471, %v5487
        %v5498 = vunpack.c.l.s4 1934713408
        %v5499 = vunpack.c.0.s8 %v5498
        %v5500 = vlaneseq
        %v5501 = vshrl.u32 %v5500, 7
        %v5502 = vsub.s32 %v5499, %v5501
        %v5503 = vrot.slane %v5495, %v5502
        %v5505 = vunpack.c.l.s4 1934713408
        %v5506 = vunpack.c.0.s8 %v5505
        %v5507 = vlaneseq
        %v5508 = vshrl.u32 %v5507, 7
        %v5509 = vsub.s32 %v5506, %v5508
        %v5510 = vrot.slane %v5496, %v5509
        %v5511 = vcombine.low %v5478, %v5494
        %v5512 = vcombine.high %v5478, %v5494
        %v5514 = vunpack.c.l.s4 1934713408
        %v5515 = vunpack.c.0.s8 %v5514
        %v5516 = vlaneseq
        %v5517 = vshrl.u32 %v5516, 7
        %v5518 = vsub.s32 %v5515, %v5517
        %v5519 = vrot.slane %v5511, %v5518
        %v5521 = vunpack.c.l.s4 1934713408
        %v5522 = vunpack.c.0.s8 %v5521
        %v5523 = vlaneseq
        %v5524 = vshrl.u32 %v5523, 7
        %v5525 = vsub.s32 %v5522, %v5524
        %v5526 = vrot.slane %v5512, %v5525
        %v5527 = vcombine.high %v5503, 0.0
        %v5528 = vcombine.high %v5510, 0.0
        %v5529 = vcombine.high %v5519, 0.0
        %v5530 = vcombine.high %v5526, 0.0
        %v5531 = vcombine.low %v5283, %v5301
        %v5532 = vcombine.high %v5283, %v5301
        %v5534 = vunpack.c.l.s4 1983009808
        %v5535 = vunpack.c.0.s8 %v5534
        %v5536 = vlaneseq
        %v5537 = vshrl.u32 %v5536, 7
        %v5538 = vsub.s32 %v5535, %v5537
        %v5539 = vrot.slane %v5531, %v5538
        %v5541 = vunpack.c.l.s4 1983009808
        %v5542 = vunpack.c.0.s8 %v5541
        %v5543 = vlaneseq
        %v5544 = vshrl.u32 %v5543, 7
        %v5545 = vsub.s32 %v5542, %v5544
        %v5546 = vrot.slane %v5532, %v5545
        %v5547 = vcombine.low %v5292, %v5310
        %v5548 = vcombine.high %v5292, %v5310
        %v5550 = vunpack.c.l.s4 1983009808
        %v5551 = vunpack.c.0.s8 %v5550
        %v5552 = vlaneseq
        %v5553 = vshrl.u32 %v5552, 7
        %v5554 = vsub.s32 %v5551, %v5553
        %v5555 = vrot.slane %v5547, %v5554
        %v5557 = vunpack.c.l.s4 1983009808
        %v5558 = vunpack.c.0.s8 %v5557
        %v5559 = vlaneseq
        %v5560 = vshrl.u32 %v5559, 7
        %v5561 = vsub.s32 %v5558, %v5560
        %v5562 = vrot.slane %v5548, %v5561
        %v5563 = vcombine.low %v5539, %v5555
        %v5564 = vcombine.high %v5539, %v5555
        %v5566 = vunpack.c.l.s4 1934713408
        %v5567 = vunpack.c.0.s8 %v5566
        %v5568 = vlaneseq
        %v5569 = vshrl.u32 %v5568, 7
        %v5570 = vsub.s32 %v5567, %v5569
        %v5571 = vrot.slane %v5563, %v5570
        %v5573 = vunpack.c.l.s4 1934713408
        %v5574 = vunpack.c.0.s8 %v5573
        %v5575 = vlaneseq
        %v5576 = vshrl.u32 %v5575, 7
        %v5577 = vsub.s32 %v5574, %v5576
        %v5578 = vrot.slane %v5564, %v5577
        %v5579 = vcombine.low %v5546, %v5562
        %v5580 = vcombine.high %v5546, %v5562
        %v5582 = vunpack.c.l.s4 1934713408
        %v5583 = vunpack.c.0.s8 %v5582
        %v5584 = vlaneseq
        %v5585 = vshrl.u32 %v5584, 7
        %v5586 = vsub.s32 %v5583, %v5585
        %v5587 = vrot.slane %v5579, %v5586
        %v5589 = vunpack.c.l.s4 1934713408
        %v5590 = vunpack.c.0.s8 %v5589
        %v5591 = vlaneseq
        %v5592 = vshrl.u32 %v5591, 7
        %v5593 = vsub.s32 %v5590, %v5592
        %v5594 = vrot.slane %v5580, %v5593
        %v5595 = vcombine.high %v5571, 0.0
        %v5596 = vcombine.high %v5578, 0.0
        %v5597 = vcombine.high %v5587, 0.0
        %v5598 = vcombine.high %v5594, 0.0
        %5600 = vrot.lane.b32.xlu0 %v5391, 32
        %v5601 = vpop.permute.xlu0 %5600
        %5604 = vrot.lane.b32.xlu0 %v5374, 64
        %v5605 = vpop.permute.xlu0 %5604
        %5608 = vrot.lane.b32.xlu0 %v5392, 96
        %v5609 = vpop.permute.xlu0 %5608
        %5612 = vrot.lane.b32.xlu0 %v5393, 32
        %v5613 = vpop.permute.xlu0 %5612
        %5616 = vrot.lane.b32.xlu0 %v5390, 64
        %v5617 = vpop.permute.xlu0 %5616
        %5620 = vrot.lane.b32.xlu0 %v5394, 96
        %v5621 = vpop.permute.xlu0 %5620
        %5624 = vrot.lane.b32.xlu0 %v5459, 32
        %v5625 = vpop.permute.xlu0 %5624
        %5628 = vrot.lane.b32.xlu0 %v5442, 64
        %v5629 = vpop.permute.xlu0 %5628
        %5632 = vrot.lane.b32.xlu0 %v5460, 96
        %v5633 = vpop.permute.xlu0 %5632
        %5636 = vrot.lane.b32.xlu0 %v5461, 32
        %v5637 = vpop.permute.xlu0 %5636
        %5640 = vrot.lane.b32.xlu0 %v5458, 64
        %v5641 = vpop.permute.xlu0 %5640
        %5644 = vrot.lane.b32.xlu0 %v5462, 96
        %v5645 = vpop.permute.xlu0 %5644
        %5648 = vrot.lane.b32.xlu0 %v5527, 32
        %v5649 = vpop.permute.xlu0 %5648
        %5652 = vrot.lane.b32.xlu0 %v5510, 64
        %v5653 = vpop.permute.xlu0 %5652
        %5656 = vrot.lane.b32.xlu0 %v5528, 96
        %v5657 = vpop.permute.xlu0 %5656
        %5660 = vrot.lane.b32.xlu0 %v5529, 32
        %v5661 = vpop.permute.xlu0 %5660
        %5664 = vrot.lane.b32.xlu0 %v5526, 64
        %v5665 = vpop.permute.xlu0 %5664
        %5668 = vrot.lane.b32.xlu0 %v5530, 96
        %v5669 = vpop.permute.xlu0 %5668
        %5672 = vrot.lane.b32.xlu0 %v5595, 32
        %v5673 = vpop.permute.xlu0 %5672
        %5676 = vrot.lane.b32.xlu0 %v5578, 64
        %v5677 = vpop.permute.xlu0 %5676
        %5680 = vrot.lane.b32.xlu0 %v5596, 96
        %v5681 = vpop.permute.xlu0 %5680
        %5684 = vrot.lane.b32.xlu0 %v5597, 32
        %v5685 = vpop.permute.xlu0 %5684
        %5688 = vrot.lane.b32.xlu0 %v5594, 64
        %v5689 = vpop.permute.xlu0 %5688
        %5692 = vrot.lane.b32.xlu0 %v5598, 96
        %v5693 = vpop.permute.xlu0 %5692
        %v5695 = vsel %vm1111, %v5367, %v5601
        %v5696 = vsel %vm1113, %v5695, %v5605
        %v5697 = vsel %vm1115, %v5696, %v5609
        %v5698 = vsel %vm1111, %v5383, %v5613
        %v5699 = vsel %vm1113, %v5698, %v5617
        %v5700 = vsel %vm1115, %v5699, %v5621
        %v5701 = vsel %vm1111, %v5435, %v5625
        %v5702 = vsel %vm1113, %v5701, %v5629
        %v5703 = vsel %vm1115, %v5702, %v5633
        %v5704 = vsel %vm1111, %v5451, %v5637
        %v5705 = vsel %vm1113, %v5704, %v5641
        %v5706 = vsel %vm1115, %v5705, %v5645
        %v5707 = vsel %vm1111, %v5503, %v5649
        %v5708 = vsel %vm1113, %v5707, %v5653
        %v5709 = vsel %vm1115, %v5708, %v5657
        %v5710 = vsel %vm1111, %v5519, %v5661
        %v5711 = vsel %vm1113, %v5710, %v5665
        %v5712 = vsel %vm1115, %v5711, %v5669
        %v5713 = vsel %vm1111, %v5571, %v5673
        %v5714 = vsel %vm1113, %v5713, %v5677
        %v5715 = vsel %vm1115, %v5714, %v5681
        %v5716 = vsel %vm1111, %v5587, %v5685
        %v5717 = vsel %vm1113, %v5716, %v5689
        %v5718 = vsel %vm1115, %v5717, %v5693
        %s5719 = scalar_lea.vmem %s3, 48
        %v5720 = vld [vmem:[%s5719] sm:$0xff]
        %v5722 = vsel %vm1597, %v5720, 0
        %v5725 = vsel %vm1601, %v5697, 0
        %v5728 = vsel %vm1601, %v5700, 0
        %v5731 = vsel %vm1601, %v5703, 0
        %v5734 = vsel %vm1601, %v5706, 0
        %v5737 = vsel %vm1601, %v5709, 0
        %v5740 = vsel %vm1601, %v5712, 0
        %v5743 = vsel %vm1601, %v5715, 0
        %v5746 = vsel %vm1601, %v5718, 0
        %5748 = vmatprep.subr.mxu0 %v5728
        %5749 = vmatpush1.msra.mxu0 %v5725
        %5750 = vmatprep.subr.mxu0 0.0
        %5751 = vmatpush1.msra.mxu0 0.0
        %5752 = vmatprep.subr.mxu0 0.0
        %5753 = vmatpush1.msra.mxu0 0.0
        %5754 = vmatprep.subr.mxu0 0.0
        %5755 = vmatpush1.msra.mxu0 0.0
        %5756 = vmatprep.subr.mxu0 0.0
        %5757 = vmatpush1.msra.mxu0 0.0
        %5758 = vmatprep.subr.mxu0 0.0
        %5759 = vmatpush1.msra.mxu0 0.0
        %5760 = vmatprep.subr.mxu0 0.0
        %5761 = vmatpush1.msra.mxu0 0.0
        %5762 = vmatprep.subr.mxu0 0.0
        %5763 = vmatpush1.msra.mxu0 0.0
        %5764 = vmatprep.subr.mxu0 0.0
        %5765 = vmatpush1.msra.mxu0 0.0
        %5766 = vmatprep.subr.mxu0 0.0
        %5767 = vmatpush1.msra.mxu0 0.0
        %5768 = vmatprep.subr.mxu0 0.0
        %5769 = vmatpush1.msra.mxu0 0.0
        %5770 = vmatprep.subr.mxu0 0.0
        %5771 = vmatpush1.msra.mxu0 0.0
        %5772 = vmatprep.subr.mxu0 0.0
        %5773 = vmatpush1.msra.mxu0 0.0
        %5774 = vmatprep.subr.mxu0 0.0
        %5775 = vmatpush1.msra.mxu0 0.0
        %5776 = vmatprep.subr.mxu0 0.0
        %5777 = vmatpush1.msra.mxu0 0.0
        %5778 = vmatprep.subr.mxu0 0.0
        %5779 = vmatpush1.msra.mxu0 0.0
        %5780 = vmatprep.subr.mxu0 0.0
        %5781 = vmatpush1.msra.mxu0 0.0
        %5782 = vmatprep.subr.mxu0 0.0
        %5783 = vmatpush1.msra.mxu0 0.0
        %5784 = vmatprep.subr.mxu0 0.0
        %5785 = vmatpush1.msra.mxu0 0.0
        %5786 = vmatprep.subr.mxu0 0.0
        %5787 = vmatpush1.msra.mxu0 0.0
        %5788 = vmatprep.subr.mxu0 0.0
        %5789 = vmatpush1.msra.mxu0 0.0
        %5790 = vmatprep.subr.mxu0 0.0
        %5791 = vmatpush1.msra.mxu0 0.0
        %5792 = vmatprep.subr.mxu0 0.0
        %5793 = vmatpush1.msra.mxu0 0.0
        %5794 = vmatprep.subr.mxu0 0.0
        %5795 = vmatpush1.msra.mxu0 0.0
        %5796 = vmatprep.subr.mxu0 0.0
        %5797 = vmatpush1.msra.mxu0 0.0
        %5798 = vmatprep.subr.mxu0 0.0
        %5799 = vmatpush1.msra.mxu0 0.0
        %5800 = vmatprep.subr.mxu0 0.0
        %5801 = vmatpush1.msra.mxu0 0.0
        %5802 = vmatprep.subr.mxu0 0.0
        %5803 = vmatpush1.msra.mxu0 0.0
        %5804 = vmatprep.subr.mxu0 0.0
        %5805 = vmatpush1.msra.mxu0 0.0
        %5806 = vmatprep.subr.mxu0 0.0
        %5807 = vmatpush1.msra.mxu0 0.0
        %5808 = vmatprep.subr.mxu0 0.0
        %5809 = vmatpush1.msra.mxu0 0.0
        %5810 = vmatprep.subr.mxu0 0.0
        %5811 = vmatpush1.msra.mxu0 0.0
        %5812 = vmatprep.mubr.f32.mxu0 0.0
        %5813 = vmatmul.mubr.f32.gmra.mrb[0].mxu0 %v5722
        %v5814 = vpop.f32.mrb[0].mxu0
        %v5815 = vadd.f32 0.0, %v5814
        %v5816 = vpop.f32.mrb[0].mxu0
        %v5817 = vadd.f32 0.0, %v5816
        %5818 = vdwg.mxu0
        %5819 = vmatprep.subr.mxu0 %v5734
        %5820 = vmatpush1.msra.mxu0 %v5731
        %5821 = vmatprep.subr.mxu0 0.0
        %5822 = vmatpush1.msra.mxu0 0.0
        %5823 = vmatprep.subr.mxu0 0.0
        %5824 = vmatpush1.msra.mxu0 0.0
        %5825 = vmatprep.subr.mxu0 0.0
        %5826 = vmatpush1.msra.mxu0 0.0
        %5827 = vmatprep.subr.mxu0 0.0
        %5828 = vmatpush1.msra.mxu0 0.0
        %5829 = vmatprep.subr.mxu0 0.0
        %5830 = vmatpush1.msra.mxu0 0.0
        %5831 = vmatprep.subr.mxu0 0.0
        %5832 = vmatpush1.msra.mxu0 0.0
        %5833 = vmatprep.subr.mxu0 0.0
        %5834 = vmatpush1.msra.mxu0 0.0
        %5835 = vmatprep.subr.mxu0 0.0
        %5836 = vmatpush1.msra.mxu0 0.0
        %5837 = vmatprep.subr.mxu0 0.0
        %5838 = vmatpush1.msra.mxu0 0.0
        %5839 = vmatprep.subr.mxu0 0.0
        %5840 = vmatpush1.msra.mxu0 0.0
        %5841 = vmatprep.subr.mxu0 0.0
        %5842 = vmatpush1.msra.mxu0 0.0
        %5843 = vmatprep.subr.mxu0 0.0
        %5844 = vmatpush1.msra.mxu0 0.0
        %5845 = vmatprep.subr.mxu0 0.0
        %5846 = vmatpush1.msra.mxu0 0.0
        %5847 = vmatprep.subr.mxu0 0.0
        %5848 = vmatpush1.msra.mxu0 0.0
        %5849 = vmatprep.subr.mxu0 0.0
        %5850 = vmatpush1.msra.mxu0 0.0
        %5851 = vmatprep.subr.mxu0 0.0
        %5852 = vmatpush1.msra.mxu0 0.0
        %5853 = vmatprep.subr.mxu0 0.0
        %5854 = vmatpush1.msra.mxu0 0.0
        %5855 = vmatprep.subr.mxu0 0.0
        %5856 = vmatpush1.msra.mxu0 0.0
        %5857 = vmatprep.subr.mxu0 0.0
        %5858 = vmatpush1.msra.mxu0 0.0
        %5859 = vmatprep.subr.mxu0 0.0
        %5860 = vmatpush1.msra.mxu0 0.0
        %5861 = vmatprep.subr.mxu0 0.0
        %5862 = vmatpush1.msra.mxu0 0.0
        %5863 = vmatprep.subr.mxu0 0.0
        %5864 = vmatpush1.msra.mxu0 0.0
        %5865 = vmatprep.subr.mxu0 0.0
        %5866 = vmatpush1.msra.mxu0 0.0
        %5867 = vmatprep.subr.mxu0 0.0
        %5868 = vmatpush1.msra.mxu0 0.0
        %5869 = vmatprep.subr.mxu0 0.0
        %5870 = vmatpush1.msra.mxu0 0.0
        %5871 = vmatprep.subr.mxu0 0.0
        %5872 = vmatpush1.msra.mxu0 0.0
        %5873 = vmatprep.subr.mxu0 0.0
        %5874 = vmatpush1.msra.mxu0 0.0
        %5875 = vmatprep.subr.mxu0 0.0
        %5876 = vmatpush1.msra.mxu0 0.0
        %5877 = vmatprep.subr.mxu0 0.0
        %5878 = vmatpush1.msra.mxu0 0.0
        %5879 = vmatprep.subr.mxu0 0.0
        %5880 = vmatpush1.msra.mxu0 0.0
        %5881 = vmatprep.subr.mxu0 0.0
        %5882 = vmatpush1.msra.mxu0 0.0
        %5883 = vmatprep.mubr.f32.mxu0 0.0
        %5884 = vmatmul.mubr.f32.gmra.mrb[0].mxu0 %v5722
        %v5885 = vpop.f32.mrb[0].mxu0
        %v5886 = vadd.f32 0.0, %v5885
        %v5887 = vpop.f32.mrb[0].mxu0
        %v5888 = vadd.f32 0.0, %v5887
        %5889 = vdwg.mxu0
        %5890 = vmatprep.subr.mxu0 %v5740
        %5891 = vmatpush1.msra.mxu0 %v5737
        %5892 = vmatprep.subr.mxu0 0.0
        %5893 = vmatpush1.msra.mxu0 0.0
        %5894 = vmatprep.subr.mxu0 0.0
        %5895 = vmatpush1.msra.mxu0 0.0
        %5896 = vmatprep.subr.mxu0 0.0
        %5897 = vmatpush1.msra.mxu0 0.0
        %5898 = vmatprep.subr.mxu0 0.0
        %5899 = vmatpush1.msra.mxu0 0.0
        %5900 = vmatprep.subr.mxu0 0.0
        %5901 = vmatpush1.msra.mxu0 0.0
        %5902 = vmatprep.subr.mxu0 0.0
        %5903 = vmatpush1.msra.mxu0 0.0
        %5904 = vmatprep.subr.mxu0 0.0
        %5905 = vmatpush1.msra.mxu0 0.0
        %5906 = vmatprep.subr.mxu0 0.0
        %5907 = vmatpush1.msra.mxu0 0.0
        %5908 = vmatprep.subr.mxu0 0.0
        %5909 = vmatpush1.msra.mxu0 0.0
        %5910 = vmatprep.subr.mxu0 0.0
        %5911 = vmatpush1.msra.mxu0 0.0
        %5912 = vmatprep.subr.mxu0 0.0
        %5913 = vmatpush1.msra.mxu0 0.0
        %5914 = vmatprep.subr.mxu0 0.0
        %5915 = vmatpush1.msra.mxu0 0.0
        %5916 = vmatprep.subr.mxu0 0.0
        %5917 = vmatpush1.msra.mxu0 0.0
        %5918 = vmatprep.subr.mxu0 0.0
        %5919 = vmatpush1.msra.mxu0 0.0
        %5920 = vmatprep.subr.mxu0 0.0
        %5921 = vmatpush1.msra.mxu0 0.0
        %5922 = vmatprep.subr.mxu0 0.0
        %5923 = vmatpush1.msra.mxu0 0.0
        %5924 = vmatprep.subr.mxu0 0.0
        %5925 = vmatpush1.msra.mxu0 0.0
        %5926 = vmatprep.subr.mxu0 0.0
        %5927 = vmatpush1.msra.mxu0 0.0
        %5928 = vmatprep.subr.mxu0 0.0
        %5929 = vmatpush1.msra.mxu0 0.0
        %5930 = vmatprep.subr.mxu0 0.0
        %5931 = vmatpush1.msra.mxu0 0.0
        %5932 = vmatprep.subr.mxu0 0.0
        %5933 = vmatpush1.msra.mxu0 0.0
        %5934 = vmatprep.subr.mxu0 0.0
        %5935 = vmatpush1.msra.mxu0 0.0
        %5936 = vmatprep.subr.mxu0 0.0
        %5937 = vmatpush1.msra.mxu0 0.0
        %5938 = vmatprep.subr.mxu0 0.0
        %5939 = vmatpush1.msra.mxu0 0.0
        %5940 = vmatprep.subr.mxu0 0.0
        %5941 = vmatpush1.msra.mxu0 0.0
        %5942 = vmatprep.subr.mxu0 0.0
        %5943 = vmatpush1.msra.mxu0 0.0
        %5944 = vmatprep.subr.mxu0 0.0
        %5945 = vmatpush1.msra.mxu0 0.0
        %5946 = vmatprep.subr.mxu0 0.0
        %5947 = vmatpush1.msra.mxu0 0.0
        %5948 = vmatprep.subr.mxu0 0.0
        %5949 = vmatpush1.msra.mxu0 0.0
        %5950 = vmatprep.subr.mxu0 0.0
        %5951 = vmatpush1.msra.mxu0 0.0
        %5952 = vmatprep.subr.mxu0 0.0
        %5953 = vmatpush1.msra.mxu0 0.0
        %5954 = vmatprep.mubr.f32.mxu0 0.0
        %5955 = vmatmul.mubr.f32.gmra.mrb[0].mxu0 %v5722
        %v5956 = vpop.f32.mrb[0].mxu0
        %v5957 = vadd.f32 0.0, %v5956
        %v5958 = vpop.f32.mrb[0].mxu0
        %v5959 = vadd.f32 0.0, %v5958
        %5960 = vdwg.mxu0
        %5961 = vmatprep.subr.mxu0 %v5746
        %5962 = vmatpush1.msra.mxu0 %v5743
        %5963 = vmatprep.subr.mxu0 0.0
        %5964 = vmatpush1.msra.mxu0 0.0
        %5965 = vmatprep.subr.mxu0 0.0
        %5966 = vmatpush1.msra.mxu0 0.0
        %5967 = vmatprep.subr.mxu0 0.0
        %5968 = vmatpush1.msra.mxu0 0.0
        %5969 = vmatprep.subr.mxu0 0.0
        %5970 = vmatpush1.msra.mxu0 0.0
        %5971 = vmatprep.subr.mxu0 0.0
        %5972 = vmatpush1.msra.mxu0 0.0
        %5973 = vmatprep.subr.mxu0 0.0
        %5974 = vmatpush1.msra.mxu0 0.0
        %5975 = vmatprep.subr.mxu0 0.0
        %5976 = vmatpush1.msra.mxu0 0.0
        %5977 = vmatprep.subr.mxu0 0.0
        %5978 = vmatpush1.msra.mxu0 0.0
        %5979 = vmatprep.subr.mxu0 0.0
        %5980 = vmatpush1.msra.mxu0 0.0
        %5981 = vmatprep.subr.mxu0 0.0
        %5982 = vmatpush1.msra.mxu0 0.0
        %5983 = vmatprep.subr.mxu0 0.0
        %5984 = vmatpush1.msra.mxu0 0.0
        %5985 = vmatprep.subr.mxu0 0.0
        %5986 = vmatpush1.msra.mxu0 0.0
        %5987 = vmatprep.subr.mxu0 0.0
        %5988 = vmatpush1.msra.mxu0 0.0
        %5989 = vmatprep.subr.mxu0 0.0
        %5990 = vmatpush1.msra.mxu0 0.0
        %5991 = vmatprep.subr.mxu0 0.0
        %5992 = vmatpush1.msra.mxu0 0.0
        %5993 = vmatprep.subr.mxu0 0.0
        %5994 = vmatpush1.msra.mxu0 0.0
        %5995 = vmatprep.subr.mxu0 0.0
        %5996 = vmatpush1.msra.mxu0 0.0
        %5997 = vmatprep.subr.mxu0 0.0
        %5998 = vmatpush1.msra.mxu0 0.0
        %5999 = vmatprep.subr.mxu0 0.0
        %6000 = vmatpush1.msra.mxu0 0.0
        %6001 = vmatprep.subr.mxu0 0.0
        %6002 = vmatpush1.msra.mxu0 0.0
        %6003 = vmatprep.subr.mxu0 0.0
        %6004 = vmatpush1.msra.mxu0 0.0
        %6005 = vmatprep.subr.mxu0 0.0
        %6006 = vmatpush1.msra.mxu0 0.0
        %6007 = vmatprep.subr.mxu0 0.0
        %6008 = vmatpush1.msra.mxu0 0.0
        %6009 = vmatprep.subr.mxu0 0.0
        %6010 = vmatpush1.msra.mxu0 0.0
        %6011 = vmatprep.subr.mxu0 0.0
        %6012 = vmatpush1.msra.mxu0 0.0
        %6013 = vmatprep.subr.mxu0 0.0
        %6014 = vmatpush1.msra.mxu0 0.0
        %6015 = vmatprep.subr.mxu0 0.0
        %6016 = vmatpush1.msra.mxu0 0.0
        %6017 = vmatprep.subr.mxu0 0.0
        %6018 = vmatpush1.msra.mxu0 0.0
        %6019 = vmatprep.subr.mxu0 0.0
        %6020 = vmatpush1.msra.mxu0 0.0
        %6021 = vmatprep.subr.mxu0 0.0
        %6022 = vmatpush1.msra.mxu0 0.0
        %6023 = vmatprep.subr.mxu0 0.0
        %6024 = vmatpush1.msra.mxu0 0.0
        %6025 = vmatprep.mubr.f32.mxu0 0.0
        %6026 = vmatmul.mubr.f32.gmra.mrb[0].mxu0 %v5722
        %v6027 = vpop.f32.mrb[0].mxu0
        %v6028 = vadd.f32 0.0, %v6027
        %v6029 = vpop.f32.mrb[0].mxu0
        %v6030 = vadd.f32 0.0, %v6029
        %6031 = vdwg.mxu0
        %v6032 = vadd.f32 %v5266, %v5815
        %v6033 = vadd.f32 %v5267, %v5817
        %v6034 = vadd.f32 %v5268, %v5886
        %v6035 = vadd.f32 %v5269, %v5888
        %v6036 = vadd.f32 %v5270, %v5957
        %v6037 = vadd.f32 %v5271, %v5959
        %v6038 = vadd.f32 %v5272, %v6028
        %v6039 = vadd.f32 %v5273, %v6030
        %6040 = vrot.lane.b32.xlu0 %v5277, 127
        %v6041 = vpop.permute.xlu0 %6040
        %6042 = vrot.lane.b32.xlu0 %v5279, 127
        %v6043 = vpop.permute.xlu0 %6042
        %6044 = vrot.lane.b32.xlu0 %v5281, 127
        %v6045 = vpop.permute.xlu0 %6044
        %6046 = vrot.lane.b32.xlu0 %v5283, 127
        %v6047 = vpop.permute.xlu0 %6046
        %6048 = vrot.lane.b32.xlu0 %v5286, 127
        %v6049 = vpop.permute.xlu0 %6048
        %6050 = vrot.lane.b32.xlu0 %v5288, 127
        %v6051 = vpop.permute.xlu0 %6050
        %6052 = vrot.lane.b32.xlu0 %v5290, 127
        %v6053 = vpop.permute.xlu0 %6052
        %6054 = vrot.lane.b32.xlu0 %v5292, 127
        %v6055 = vpop.permute.xlu0 %6054
        %6056 = vrot.lane.b32.xlu0 %v5295, 127
        %v6057 = vpop.permute.xlu0 %6056
        %6058 = vrot.lane.b32.xlu0 %v5297, 127
        %v6059 = vpop.permute.xlu0 %6058
        %6060 = vrot.lane.b32.xlu0 %v5299, 127
        %v6061 = vpop.permute.xlu0 %6060
        %6062 = vrot.lane.b32.xlu0 %v5301, 127
        %v6063 = vpop.permute.xlu0 %6062
        %6064 = vrot.lane.b32.xlu0 %v5304, 127
        %v6065 = vpop.permute.xlu0 %6064
        %6066 = vrot.lane.b32.xlu0 %v5306, 127
        %v6067 = vpop.permute.xlu0 %6066
        %6068 = vrot.lane.b32.xlu0 %v5308, 127
        %v6069 = vpop.permute.xlu0 %6068
        %6070 = vrot.lane.b32.xlu0 %v5310, 127
        %v6071 = vpop.permute.xlu0 %6070
        %v6088 = vcombine.low %v6041, %v6057
        %v6089 = vcombine.high %v6041, %v6057
        %v6091 = vunpack.c.l.s4 1983009808
        %v6092 = vunpack.c.0.s8 %v6091
        %v6093 = vlaneseq
        %v6094 = vshrl.u32 %v6093, 7
        %v6095 = vsub.s32 %v6092, %v6094
        %v6096 = vrot.slane %v6088, %v6095
        %v6098 = vunpack.c.l.s4 1983009808
        %v6099 = vunpack.c.0.s8 %v6098
        %v6100 = vlaneseq
        %v6101 = vshrl.u32 %v6100, 7
        %v6102 = vsub.s32 %v6099, %v6101
        %v6103 = vrot.slane %v6089, %v6102
        %v6104 = vcombine.low %v6049, %v6065
        %v6105 = vcombine.high %v6049, %v6065
        %v6107 = vunpack.c.l.s4 1983009808
        %v6108 = vunpack.c.0.s8 %v6107
        %v6109 = vlaneseq
        %v6110 = vshrl.u32 %v6109, 7
        %v6111 = vsub.s32 %v6108, %v6110
        %v6112 = vrot.slane %v6104, %v6111
        %v6114 = vunpack.c.l.s4 1983009808
        %v6115 = vunpack.c.0.s8 %v6114
        %v6116 = vlaneseq
        %v6117 = vshrl.u32 %v6116, 7
        %v6118 = vsub.s32 %v6115, %v6117
        %v6119 = vrot.slane %v6105, %v6118
        %v6120 = vcombine.low %v6096, %v6112
        %v6121 = vcombine.high %v6096, %v6112
        %v6123 = vunpack.c.l.s4 1934713408
        %v6124 = vunpack.c.0.s8 %v6123
        %v6125 = vlaneseq
        %v6126 = vshrl.u32 %v6125, 7
        %v6127 = vsub.s32 %v6124, %v6126
        %v6128 = vrot.slane %v6120, %v6127
        %v6130 = vunpack.c.l.s4 1934713408
        %v6131 = vunpack.c.0.s8 %v6130
        %v6132 = vlaneseq
        %v6133 = vshrl.u32 %v6132, 7
        %v6134 = vsub.s32 %v6131, %v6133
        %v6135 = vrot.slane %v6121, %v6134
        %v6136 = vcombine.low %v6103, %v6119
        %v6137 = vcombine.high %v6103, %v6119
        %v6139 = vunpack.c.l.s4 1934713408
        %v6140 = vunpack.c.0.s8 %v6139
        %v6141 = vlaneseq
        %v6142 = vshrl.u32 %v6141, 7
        %v6143 = vsub.s32 %v6140, %v6142
        %v6144 = vrot.slane %v6136, %v6143
        %v6146 = vunpack.c.l.s4 1934713408
        %v6147 = vunpack.c.0.s8 %v6146
        %v6148 = vlaneseq
        %v6149 = vshrl.u32 %v6148, 7
        %v6150 = vsub.s32 %v6147, %v6149
        %v6151 = vrot.slane %v6137, %v6150
        %v6152 = vcombine.high %v6128, 0.0
        %v6153 = vcombine.high %v6135, 0.0
        %v6154 = vcombine.high %v6144, 0.0
        %v6155 = vcombine.high %v6151, 0.0
        %v6156 = vcombine.low %v6043, %v6059
        %v6157 = vcombine.high %v6043, %v6059
        %v6159 = vunpack.c.l.s4 1983009808
        %v6160 = vunpack.c.0.s8 %v6159
        %v6161 = vlaneseq
        %v6162 = vshrl.u32 %v6161, 7
        %v6163 = vsub.s32 %v6160, %v6162
        %v6164 = vrot.slane %v6156, %v6163
        %v6166 = vunpack.c.l.s4 1983009808
        %v6167 = vunpack.c.0.s8 %v6166
        %v6168 = vlaneseq
        %v6169 = vshrl.u32 %v6168, 7
        %v6170 = vsub.s32 %v6167, %v6169
        %v6171 = vrot.slane %v6157, %v6170
        %v6172 = vcombine.low %v6051, %v6067
        %v6173 = vcombine.high %v6051, %v6067
        %v6175 = vunpack.c.l.s4 1983009808
        %v6176 = vunpack.c.0.s8 %v6175
        %v6177 = vlaneseq
        %v6178 = vshrl.u32 %v6177, 7
        %v6179 = vsub.s32 %v6176, %v6178
        %v6180 = vrot.slane %v6172, %v6179
        %v6182 = vunpack.c.l.s4 1983009808
        %v6183 = vunpack.c.0.s8 %v6182
        %v6184 = vlaneseq
        %v6185 = vshrl.u32 %v6184, 7
        %v6186 = vsub.s32 %v6183, %v6185
        %v6187 = vrot.slane %v6173, %v6186
        %v6188 = vcombine.low %v6164, %v6180
        %v6189 = vcombine.high %v6164, %v6180
        %v6191 = vunpack.c.l.s4 1934713408
        %v6192 = vunpack.c.0.s8 %v6191
        %v6193 = vlaneseq
        %v6194 = vshrl.u32 %v6193, 7
        %v6195 = vsub.s32 %v6192, %v6194
        %v6196 = vrot.slane %v6188, %v6195
        %v6198 = vunpack.c.l.s4 1934713408
        %v6199 = vunpack.c.0.s8 %v6198
        %v6200 = vlaneseq
        %v6201 = vshrl.u32 %v6200, 7
        %v6202 = vsub.s32 %v6199, %v6201
        %v6203 = vrot.slane %v6189, %v6202
        %v6204 = vcombine.low %v6171, %v6187
        %v6205 = vcombine.high %v6171, %v6187
        %v6207 = vunpack.c.l.s4 1934713408
        %v6208 = vunpack.c.0.s8 %v6207
        %v6209 = vlaneseq
        %v6210 = vshrl.u32 %v6209, 7
        %v6211 = vsub.s32 %v6208, %v6210
        %v6212 = vrot.slane %v6204, %v6211
        %v6214 = vunpack.c.l.s4 1934713408
        %v6215 = vunpack.c.0.s8 %v6214
        %v6216 = vlaneseq
        %v6217 = vshrl.u32 %v6216, 7
        %v6218 = vsub.s32 %v6215, %v6217
        %v6219 = vrot.slane %v6205, %v6218
        %v6220 = vcombine.high %v6196, 0.0
        %v6221 = vcombine.high %v6203, 0.0
        %v6222 = vcombine.high %v6212, 0.0
        %v6223 = vcombine.high %v6219, 0.0
        %v6224 = vcombine.low %v6045, %v6061
        %v6225 = vcombine.high %v6045, %v6061
        %v6227 = vunpack.c.l.s4 1983009808
        %v6228 = vunpack.c.0.s8 %v6227
        %v6229 = vlaneseq
        %v6230 = vshrl.u32 %v6229, 7
        %v6231 = vsub.s32 %v6228, %v6230
        %v6232 = vrot.slane %v6224, %v6231
        %v6234 = vunpack.c.l.s4 1983009808
        %v6235 = vunpack.c.0.s8 %v6234
        %v6236 = vlaneseq
        %v6237 = vshrl.u32 %v6236, 7
        %v6238 = vsub.s32 %v6235, %v6237
        %v6239 = vrot.slane %v6225, %v6238
        %v6240 = vcombine.low %v6053, %v6069
        %v6241 = vcombine.high %v6053, %v6069
        %v6243 = vunpack.c.l.s4 1983009808
        %v6244 = vunpack.c.0.s8 %v6243
        %v6245 = vlaneseq
        %v6246 = vshrl.u32 %v6245, 7
        %v6247 = vsub.s32 %v6244, %v6246
        %v6248 = vrot.slane %v6240, %v6247
        %v6250 = vunpack.c.l.s4 1983009808
        %v6251 = vunpack.c.0.s8 %v6250
        %v6252 = vlaneseq
        %v6253 = vshrl.u32 %v6252, 7
        %v6254 = vsub.s32 %v6251, %v6253
        %v6255 = vrot.slane %v6241, %v6254
        %v6256 = vcombine.low %v6232, %v6248
        %v6257 = vcombine.high %v6232, %v6248
        %v6259 = vunpack.c.l.s4 1934713408
        %v6260 = vunpack.c.0.s8 %v6259
        %v6261 = vlaneseq
        %v6262 = vshrl.u32 %v6261, 7
        %v6263 = vsub.s32 %v6260, %v6262
        %v6264 = vrot.slane %v6256, %v6263
        %v6266 = vunpack.c.l.s4 1934713408
        %v6267 = vunpack.c.0.s8 %v6266
        %v6268 = vlaneseq
        %v6269 = vshrl.u32 %v6268, 7
        %v6270 = vsub.s32 %v6267, %v6269
        %v6271 = vrot.slane %v6257, %v6270
        %v6272 = vcombine.low %v6239, %v6255
        %v6273 = vcombine.high %v6239, %v6255
        %v6275 = vunpack.c.l.s4 1934713408
        %v6276 = vunpack.c.0.s8 %v6275
        %v6277 = vlaneseq
        %v6278 = vshrl.u32 %v6277, 7
        %v6279 = vsub.s32 %v6276, %v6278
        %v6280 = vrot.slane %v6272, %v6279
        %v6282 = vunpack.c.l.s4 1934713408
        %v6283 = vunpack.c.0.s8 %v6282
        %v6284 = vlaneseq
        %v6285 = vshrl.u32 %v6284, 7
        %v6286 = vsub.s32 %v6283, %v6285
        %v6287 = vrot.slane %v6273, %v6286
        %v6288 = vcombine.high %v6264, 0.0
        %v6289 = vcombine.high %v6271, 0.0
        %v6290 = vcombine.high %v6280, 0.0
        %v6291 = vcombine.high %v6287, 0.0
        %v6292 = vcombine.low %v6047, %v6063
        %v6293 = vcombine.high %v6047, %v6063
        %v6295 = vunpack.c.l.s4 1983009808
        %v6296 = vunpack.c.0.s8 %v6295
        %v6297 = vlaneseq
        %v6298 = vshrl.u32 %v6297, 7
        %v6299 = vsub.s32 %v6296, %v6298
        %v6300 = vrot.slane %v6292, %v6299
        %v6302 = vunpack.c.l.s4 1983009808
        %v6303 = vunpack.c.0.s8 %v6302
        %v6304 = vlaneseq
        %v6305 = vshrl.u32 %v6304, 7
        %v6306 = vsub.s32 %v6303, %v6305
        %v6307 = vrot.slane %v6293, %v6306
        %v6308 = vcombine.low %v6055, %v6071
        %v6309 = vcombine.high %v6055, %v6071
        %v6311 = vunpack.c.l.s4 1983009808
        %v6312 = vunpack.c.0.s8 %v6311
        %v6313 = vlaneseq
        %v6314 = vshrl.u32 %v6313, 7
        %v6315 = vsub.s32 %v6312, %v6314
        %v6316 = vrot.slane %v6308, %v6315
        %v6318 = vunpack.c.l.s4 1983009808
        %v6319 = vunpack.c.0.s8 %v6318
        %v6320 = vlaneseq
        %v6321 = vshrl.u32 %v6320, 7
        %v6322 = vsub.s32 %v6319, %v6321
        %v6323 = vrot.slane %v6309, %v6322
        %v6324 = vcombine.low %v6300, %v6316
        %v6325 = vcombine.high %v6300, %v6316
        %v6327 = vunpack.c.l.s4 1934713408
        %v6328 = vunpack.c.0.s8 %v6327
        %v6329 = vlaneseq
        %v6330 = vshrl.u32 %v6329, 7
        %v6331 = vsub.s32 %v6328, %v6330
        %v6332 = vrot.slane %v6324, %v6331
        %v6334 = vunpack.c.l.s4 1934713408
        %v6335 = vunpack.c.0.s8 %v6334
        %v6336 = vlaneseq
        %v6337 = vshrl.u32 %v6336, 7
        %v6338 = vsub.s32 %v6335, %v6337
        %v6339 = vrot.slane %v6325, %v6338
        %v6340 = vcombine.low %v6307, %v6323
        %v6341 = vcombine.high %v6307, %v6323
        %v6343 = vunpack.c.l.s4 1934713408
        %v6344 = vunpack.c.0.s8 %v6343
        %v6345 = vlaneseq
        %v6346 = vshrl.u32 %v6345, 7
        %v6347 = vsub.s32 %v6344, %v6346
        %v6348 = vrot.slane %v6340, %v6347
        %v6350 = vunpack.c.l.s4 1934713408
        %v6351 = vunpack.c.0.s8 %v6350
        %v6352 = vlaneseq
        %v6353 = vshrl.u32 %v6352, 7
        %v6354 = vsub.s32 %v6351, %v6353
        %v6355 = vrot.slane %v6341, %v6354
        %v6356 = vcombine.high %v6332, 0.0
        %v6357 = vcombine.high %v6339, 0.0
        %v6358 = vcombine.high %v6348, 0.0
        %v6359 = vcombine.high %v6355, 0.0
        %6361 = vrot.lane.b32.xlu0 %v6152, 32
        %v6362 = vpop.permute.xlu0 %6361
        %6365 = vrot.lane.b32.xlu0 %v6135, 64
        %v6366 = vpop.permute.xlu0 %6365
        %6369 = vrot.lane.b32.xlu0 %v6153, 96
        %v6370 = vpop.permute.xlu0 %6369
        %6373 = vrot.lane.b32.xlu0 %v6154, 32
        %v6374 = vpop.permute.xlu0 %6373
        %6377 = vrot.lane.b32.xlu0 %v6151, 64
        %v6378 = vpop.permute.xlu0 %6377
        %6381 = vrot.lane.b32.xlu0 %v6155, 96
        %v6382 = vpop.permute.xlu0 %6381
        %6385 = vrot.lane.b32.xlu0 %v6220, 32
        %v6386 = vpop.permute.xlu0 %6385
        %6389 = vrot.lane.b32.xlu0 %v6203, 64
        %v6390 = vpop.permute.xlu0 %6389
        %6393 = vrot.lane.b32.xlu0 %v6221, 96
        %v6394 = vpop.permute.xlu0 %6393
        %6397 = vrot.lane.b32.xlu0 %v6222, 32
        %v6398 = vpop.permute.xlu0 %6397
        %6401 = vrot.lane.b32.xlu0 %v6219, 64
        %v6402 = vpop.permute.xlu0 %6401
        %6405 = vrot.lane.b32.xlu0 %v6223, 96
        %v6406 = vpop.permute.xlu0 %6405
        %6409 = vrot.lane.b32.xlu0 %v6288, 32
        %v6410 = vpop.permute.xlu0 %6409
        %6413 = vrot.lane.b32.xlu0 %v6271, 64
        %v6414 = vpop.permute.xlu0 %6413
        %6417 = vrot.lane.b32.xlu0 %v6289, 96
        %v6418 = vpop.permute.xlu0 %6417
        %6421 = vrot.lane.b32.xlu0 %v6290, 32
        %v6422 = vpop.permute.xlu0 %6421
        %6425 = vrot.lane.b32.xlu0 %v6287, 64
        %v6426 = vpop.permute.xlu0 %6425
        %6429 = vrot.lane.b32.xlu0 %v6291, 96
        %v6430 = vpop.permute.xlu0 %6429
        %6433 = vrot.lane.b32.xlu0 %v6356, 32
        %v6434 = vpop.permute.xlu0 %6433
        %6437 = vrot.lane.b32.xlu0 %v6339, 64
        %v6438 = vpop.permute.xlu0 %6437
        %6441 = vrot.lane.b32.xlu0 %v6357, 96
        %v6442 = vpop.permute.xlu0 %6441
        %6445 = vrot.lane.b32.xlu0 %v6358, 32
        %v6446 = vpop.permute.xlu0 %6445
        %6449 = vrot.lane.b32.xlu0 %v6355, 64
        %v6450 = vpop.permute.xlu0 %6449
        %6453 = vrot.lane.b32.xlu0 %v6359, 96
        %v6454 = vpop.permute.xlu0 %6453
        %v6456 = vsel %vm1111, %v6128, %v6362
        %v6457 = vsel %vm1113, %v6456, %v6366
        %v6458 = vsel %vm1115, %v6457, %v6370
        %v6459 = vsel %vm1111, %v6144, %v6374
        %v6460 = vsel %vm1113, %v6459, %v6378
        %v6461 = vsel %vm1115, %v6460, %v6382
        %v6462 = vsel %vm1111, %v6196, %v6386
        %v6463 = vsel %vm1113, %v6462, %v6390
        %v6464 = vsel %vm1115, %v6463, %v6394
        %v6465 = vsel %vm1111, %v6212, %v6398
        %v6466 = vsel %vm1113, %v6465, %v6402
        %v6467 = vsel %vm1115, %v6466, %v6406
        %v6468 = vsel %vm1111, %v6264, %v6410
        %v6469 = vsel %vm1113, %v6468, %v6414
        %v6470 = vsel %vm1115, %v6469, %v6418
        %v6471 = vsel %vm1111, %v6280, %v6422
        %v6472 = vsel %vm1113, %v6471, %v6426
        %v6473 = vsel %vm1115, %v6472, %v6430
        %v6474 = vsel %vm1111, %v6332, %v6434
        %v6475 = vsel %vm1113, %v6474, %v6438
        %v6476 = vsel %vm1115, %v6475, %v6442
        %v6477 = vsel %vm1111, %v6348, %v6446
        %v6478 = vsel %vm1113, %v6477, %v6450
        %v6479 = vsel %vm1115, %v6478, %v6454
        %s6480 = scalar_lea.vmem %s3, 56
        %v6481 = vld [vmem:[%s6480] sm:$0xff]
        %v6483 = vsel %vm1597, %v6481, 0
        %v6486 = vsel %vm1601, %v6458, 0
        %v6489 = vsel %vm1601, %v6461, 0
        %v6492 = vsel %vm1601, %v6464, 0
        %v6495 = vsel %vm1601, %v6467, 0
        %v6498 = vsel %vm1601, %v6470, 0
        %v6501 = vsel %vm1601, %v6473, 0
        %v6504 = vsel %vm1601, %v6476, 0
        %v6507 = vsel %vm1601, %v6479, 0
        %6509 = vmatprep.subr.mxu0 %v6489
        %6510 = vmatpush1.msra.mxu0 %v6486
        %6511 = vmatprep.subr.mxu0 0.0
        %6512 = vmatpush1.msra.mxu0 0.0
        %6513 = vmatprep.subr.mxu0 0.0
        %6514 = vmatpush1.msra.mxu0 0.0
        %6515 = vmatprep.subr.mxu0 0.0
        %6516 = vmatpush1.msra.mxu0 0.0
        %6517 = vmatprep.subr.mxu0 0.0
        %6518 = vmatpush1.msra.mxu0 0.0
        %6519 = vmatprep.subr.mxu0 0.0
        %6520 = vmatpush1.msra.mxu0 0.0
        %6521 = vmatprep.subr.mxu0 0.0
        %6522 = vmatpush1.msra.mxu0 0.0
        %6523 = vmatprep.subr.mxu0 0.0
        %6524 = vmatpush1.msra.mxu0 0.0
        %6525 = vmatprep.subr.mxu0 0.0
        %6526 = vmatpush1.msra.mxu0 0.0
        %6527 = vmatprep.subr.mxu0 0.0
        %6528 = vmatpush1.msra.mxu0 0.0
        %6529 = vmatprep.subr.mxu0 0.0
        %6530 = vmatpush1.msra.mxu0 0.0
        %6531 = vmatprep.subr.mxu0 0.0
        %6532 = vmatpush1.msra.mxu0 0.0
        %6533 = vmatprep.subr.mxu0 0.0
        %6534 = vmatpush1.msra.mxu0 0.0
        %6535 = vmatprep.subr.mxu0 0.0
        %6536 = vmatpush1.msra.mxu0 0.0
        %6537 = vmatprep.subr.mxu0 0.0
        %6538 = vmatpush1.msra.mxu0 0.0
        %6539 = vmatprep.subr.mxu0 0.0
        %6540 = vmatpush1.msra.mxu0 0.0
        %6541 = vmatprep.subr.mxu0 0.0
        %6542 = vmatpush1.msra.mxu0 0.0
        %6543 = vmatprep.subr.mxu0 0.0
        %6544 = vmatpush1.msra.mxu0 0.0
        %6545 = vmatprep.subr.mxu0 0.0
        %6546 = vmatpush1.msra.mxu0 0.0
        %6547 = vmatprep.subr.mxu0 0.0
        %6548 = vmatpush1.msra.mxu0 0.0
        %6549 = vmatprep.subr.mxu0 0.0
        %6550 = vmatpush1.msra.mxu0 0.0
        %6551 = vmatprep.subr.mxu0 0.0
        %6552 = vmatpush1.msra.mxu0 0.0
        %6553 = vmatprep.subr.mxu0 0.0
        %6554 = vmatpush1.msra.mxu0 0.0
        %6555 = vmatprep.subr.mxu0 0.0
        %6556 = vmatpush1.msra.mxu0 0.0
        %6557 = vmatprep.subr.mxu0 0.0
        %6558 = vmatpush1.msra.mxu0 0.0
        %6559 = vmatprep.subr.mxu0 0.0
        %6560 = vmatpush1.msra.mxu0 0.0
        %6561 = vmatprep.subr.mxu0 0.0
        %6562 = vmatpush1.msra.mxu0 0.0
        %6563 = vmatprep.subr.mxu0 0.0
        %6564 = vmatpush1.msra.mxu0 0.0
        %6565 = vmatprep.subr.mxu0 0.0
        %6566 = vmatpush1.msra.mxu0 0.0
        %6567 = vmatprep.subr.mxu0 0.0
        %6568 = vmatpush1.msra.mxu0 0.0
        %6569 = vmatprep.subr.mxu0 0.0
        %6570 = vmatpush1.msra.mxu0 0.0
        %6571 = vmatprep.subr.mxu0 0.0
        %6572 = vmatpush1.msra.mxu0 0.0
        %6573 = vmatprep.mubr.f32.mxu0 0.0
        %6574 = vmatmul.mubr.f32.gmra.mrb[0].mxu0 %v6483
        %v6575 = vpop.f32.mrb[0].mxu0
        %v6576 = vadd.f32 0.0, %v6575
        %v6577 = vpop.f32.mrb[0].mxu0
        %v6578 = vadd.f32 0.0, %v6577
        %6579 = vdwg.mxu0
        %6580 = vmatprep.subr.mxu0 %v6495
        %6581 = vmatpush1.msra.mxu0 %v6492
        %6582 = vmatprep.subr.mxu0 0.0
        %6583 = vmatpush1.msra.mxu0 0.0
        %6584 = vmatprep.subr.mxu0 0.0
        %6585 = vmatpush1.msra.mxu0 0.0
        %6586 = vmatprep.subr.mxu0 0.0
        %6587 = vmatpush1.msra.mxu0 0.0
        %6588 = vmatprep.subr.mxu0 0.0
        %6589 = vmatpush1.msra.mxu0 0.0
        %6590 = vmatprep.subr.mxu0 0.0
        %6591 = vmatpush1.msra.mxu0 0.0
        %6592 = vmatprep.subr.mxu0 0.0
        %6593 = vmatpush1.msra.mxu0 0.0
        %6594 = vmatprep.subr.mxu0 0.0
        %6595 = vmatpush1.msra.mxu0 0.0
        %6596 = vmatprep.subr.mxu0 0.0
        %6597 = vmatpush1.msra.mxu0 0.0
        %6598 = vmatprep.subr.mxu0 0.0
        %6599 = vmatpush1.msra.mxu0 0.0
        %6600 = vmatprep.subr.mxu0 0.0
        %6601 = vmatpush1.msra.mxu0 0.0
        %6602 = vmatprep.subr.mxu0 0.0
        %6603 = vmatpush1.msra.mxu0 0.0
        %6604 = vmatprep.subr.mxu0 0.0
        %6605 = vmatpush1.msra.mxu0 0.0
        %6606 = vmatprep.subr.mxu0 0.0
        %6607 = vmatpush1.msra.mxu0 0.0
        %6608 = vmatprep.subr.mxu0 0.0
        %6609 = vmatpush1.msra.mxu0 0.0
        %6610 = vmatprep.subr.mxu0 0.0
        %6611 = vmatpush1.msra.mxu0 0.0
        %6612 = vmatprep.subr.mxu0 0.0
        %6613 = vmatpush1.msra.mxu0 0.0
        %6614 = vmatprep.subr.mxu0 0.0
        %6615 = vmatpush1.msra.mxu0 0.0
        %6616 = vmatprep.subr.mxu0 0.0
        %6617 = vmatpush1.msra.mxu0 0.0
        %6618 = vmatprep.subr.mxu0 0.0
        %6619 = vmatpush1.msra.mxu0 0.0
        %6620 = vmatprep.subr.mxu0 0.0
        %6621 = vmatpush1.msra.mxu0 0.0
        %6622 = vmatprep.subr.mxu0 0.0
        %6623 = vmatpush1.msra.mxu0 0.0
        %6624 = vmatprep.subr.mxu0 0.0
        %6625 = vmatpush1.msra.mxu0 0.0
        %6626 = vmatprep.subr.mxu0 0.0
        %6627 = vmatpush1.msra.mxu0 0.0
        %6628 = vmatprep.subr.mxu0 0.0
        %6629 = vmatpush1.msra.mxu0 0.0
        %6630 = vmatprep.subr.mxu0 0.0
        %6631 = vmatpush1.msra.mxu0 0.0
        %6632 = vmatprep.subr.mxu0 0.0
        %6633 = vmatpush1.msra.mxu0 0.0
        %6634 = vmatprep.subr.mxu0 0.0
        %6635 = vmatpush1.msra.mxu0 0.0
        %6636 = vmatprep.subr.mxu0 0.0
        %6637 = vmatpush1.msra.mxu0 0.0
        %6638 = vmatprep.subr.mxu0 0.0
        %6639 = vmatpush1.msra.mxu0 0.0
        %6640 = vmatprep.subr.mxu0 0.0
        %6641 = vmatpush1.msra.mxu0 0.0
        %6642 = vmatprep.subr.mxu0 0.0
        %6643 = vmatpush1.msra.mxu0 0.0
        %6644 = vmatprep.mubr.f32.mxu0 0.0
        %6645 = vmatmul.mubr.f32.gmra.mrb[0].mxu0 %v6483
        %v6646 = vpop.f32.mrb[0].mxu0
        %v6647 = vadd.f32 0.0, %v6646
        %v6648 = vpop.f32.mrb[0].mxu0
        %v6649 = vadd.f32 0.0, %v6648
        %6650 = vdwg.mxu0
        %6651 = vmatprep.subr.mxu0 %v6501
        %6652 = vmatpush1.msra.mxu0 %v6498
        %6653 = vmatprep.subr.mxu0 0.0
        %6654 = vmatpush1.msra.mxu0 0.0
        %6655 = vmatprep.subr.mxu0 0.0
        %6656 = vmatpush1.msra.mxu0 0.0
        %6657 = vmatprep.subr.mxu0 0.0
        %6658 = vmatpush1.msra.mxu0 0.0
        %6659 = vmatprep.subr.mxu0 0.0
        %6660 = vmatpush1.msra.mxu0 0.0
        %6661 = vmatprep.subr.mxu0 0.0
        %6662 = vmatpush1.msra.mxu0 0.0
        %6663 = vmatprep.subr.mxu0 0.0
        %6664 = vmatpush1.msra.mxu0 0.0
        %6665 = vmatprep.subr.mxu0 0.0
        %6666 = vmatpush1.msra.mxu0 0.0
        %6667 = vmatprep.subr.mxu0 0.0
        %6668 = vmatpush1.msra.mxu0 0.0
        %6669 = vmatprep.subr.mxu0 0.0
        %6670 = vmatpush1.msra.mxu0 0.0
        %6671 = vmatprep.subr.mxu0 0.0
        %6672 = vmatpush1.msra.mxu0 0.0
        %6673 = vmatprep.subr.mxu0 0.0
        %6674 = vmatpush1.msra.mxu0 0.0
        %6675 = vmatprep.subr.mxu0 0.0
        %6676 = vmatpush1.msra.mxu0 0.0
        %6677 = vmatprep.subr.mxu0 0.0
        %6678 = vmatpush1.msra.mxu0 0.0
        %6679 = vmatprep.subr.mxu0 0.0
        %6680 = vmatpush1.msra.mxu0 0.0
        %6681 = vmatprep.subr.mxu0 0.0
        %6682 = vmatpush1.msra.mxu0 0.0
        %6683 = vmatprep.subr.mxu0 0.0
        %6684 = vmatpush1.msra.mxu0 0.0
        %6685 = vmatprep.subr.mxu0 0.0
        %6686 = vmatpush1.msra.mxu0 0.0
        %6687 = vmatprep.subr.mxu0 0.0
        %6688 = vmatpush1.msra.mxu0 0.0
        %6689 = vmatprep.subr.mxu0 0.0
        %6690 = vmatpush1.msra.mxu0 0.0
        %6691 = vmatprep.subr.mxu0 0.0
        %6692 = vmatpush1.msra.mxu0 0.0
        %6693 = vmatprep.subr.mxu0 0.0
        %6694 = vmatpush1.msra.mxu0 0.0
        %6695 = vmatprep.subr.mxu0 0.0
        %6696 = vmatpush1.msra.mxu0 0.0
        %6697 = vmatprep.subr.mxu0 0.0
        %6698 = vmatpush1.msra.mxu0 0.0
        %6699 = vmatprep.subr.mxu0 0.0
        %6700 = vmatpush1.msra.mxu0 0.0
        %6701 = vmatprep.subr.mxu0 0.0
        %6702 = vmatpush1.msra.mxu0 0.0
        %6703 = vmatprep.subr.mxu0 0.0
        %6704 = vmatpush1.msra.mxu0 0.0
        %6705 = vmatprep.subr.mxu0 0.0
        %6706 = vmatpush1.msra.mxu0 0.0
        %6707 = vmatprep.subr.mxu0 0.0
        %6708 = vmatpush1.msra.mxu0 0.0
        %6709 = vmatprep.subr.mxu0 0.0
        %6710 = vmatpush1.msra.mxu0 0.0
        %6711 = vmatprep.subr.mxu0 0.0
        %6712 = vmatpush1.msra.mxu0 0.0
        %6713 = vmatprep.subr.mxu0 0.0
        %6714 = vmatpush1.msra.mxu0 0.0
        %6715 = vmatprep.mubr.f32.mxu0 0.0
        %6716 = vmatmul.mubr.f32.gmra.mrb[0].mxu0 %v6483
        %v6717 = vpop.f32.mrb[0].mxu0
        %v6718 = vadd.f32 0.0, %v6717
        %v6719 = vpop.f32.mrb[0].mxu0
        %v6720 = vadd.f32 0.0, %v6719
        %6721 = vdwg.mxu0
        %6722 = vmatprep.subr.mxu0 %v6507
        %6723 = vmatpush1.msra.mxu0 %v6504
        %6724 = vmatprep.subr.mxu0 0.0
        %6725 = vmatpush1.msra.mxu0 0.0
        %6726 = vmatprep.subr.mxu0 0.0
        %6727 = vmatpush1.msra.mxu0 0.0
        %6728 = vmatprep.subr.mxu0 0.0
        %6729 = vmatpush1.msra.mxu0 0.0
        %6730 = vmatprep.subr.mxu0 0.0
        %6731 = vmatpush1.msra.mxu0 0.0
        %6732 = vmatprep.subr.mxu0 0.0
        %6733 = vmatpush1.msra.mxu0 0.0
        %6734 = vmatprep.subr.mxu0 0.0
        %6735 = vmatpush1.msra.mxu0 0.0
        %6736 = vmatprep.subr.mxu0 0.0
        %6737 = vmatpush1.msra.mxu0 0.0
        %6738 = vmatprep.subr.mxu0 0.0
        %6739 = vmatpush1.msra.mxu0 0.0
        %6740 = vmatprep.subr.mxu0 0.0
        %6741 = vmatpush1.msra.mxu0 0.0
        %6742 = vmatprep.subr.mxu0 0.0
        %6743 = vmatpush1.msra.mxu0 0.0
        %6744 = vmatprep.subr.mxu0 0.0
        %6745 = vmatpush1.msra.mxu0 0.0
        %6746 = vmatprep.subr.mxu0 0.0
        %6747 = vmatpush1.msra.mxu0 0.0
        %6748 = vmatprep.subr.mxu0 0.0
        %6749 = vmatpush1.msra.mxu0 0.0
        %6750 = vmatprep.subr.mxu0 0.0
        %6751 = vmatpush1.msra.mxu0 0.0
        %6752 = vmatprep.subr.mxu0 0.0
        %6753 = vmatpush1.msra.mxu0 0.0
        %6754 = vmatprep.subr.mxu0 0.0
        %6755 = vmatpush1.msra.mxu0 0.0
        %6756 = vmatprep.subr.mxu0 0.0
        %6757 = vmatpush1.msra.mxu0 0.0
        %6758 = vmatprep.subr.mxu0 0.0
        %6759 = vmatpush1.msra.mxu0 0.0
        %6760 = vmatprep.subr.mxu0 0.0
        %6761 = vmatpush1.msra.mxu0 0.0
        %6762 = vmatprep.subr.mxu0 0.0
        %6763 = vmatpush1.msra.mxu0 0.0
        %6764 = vmatprep.subr.mxu0 0.0
        %6765 = vmatpush1.msra.mxu0 0.0
        %6766 = vmatprep.subr.mxu0 0.0
        %6767 = vmatpush1.msra.mxu0 0.0
        %6768 = vmatprep.subr.mxu0 0.0
        %6769 = vmatpush1.msra.mxu0 0.0
        %6770 = vmatprep.subr.mxu0 0.0
        %6771 = vmatpush1.msra.mxu0 0.0
        %6772 = vmatprep.subr.mxu0 0.0
        %6773 = vmatpush1.msra.mxu0 0.0
        %6774 = vmatprep.subr.mxu0 0.0
        %6775 = vmatpush1.msra.mxu0 0.0
        %6776 = vmatprep.subr.mxu0 0.0
        %6777 = vmatpush1.msra.mxu0 0.0
        %6778 = vmatprep.subr.mxu0 0.0
        %6779 = vmatpush1.msra.mxu0 0.0
        %6780 = vmatprep.subr.mxu0 0.0
        %6781 = vmatpush1.msra.mxu0 0.0
        %6782 = vmatprep.subr.mxu0 0.0
        %6783 = vmatpush1.msra.mxu0 0.0
        %6784 = vmatprep.subr.mxu0 0.0
        %6785 = vmatpush1.msra.mxu0 0.0
        %6786 = vmatprep.mubr.f32.mxu0 0.0
        %6787 = vmatmul.mubr.f32.gmra.mrb[0].mxu0 %v6483
        %v6788 = vpop.f32.mrb[0].mxu0
        %v6789 = vadd.f32 0.0, %v6788
        %v6790 = vpop.f32.mrb[0].mxu0
        %v6791 = vadd.f32 0.0, %v6790
        %6792 = vdwg.mxu0
        %v6793 = vadd.f32 %v6032, %v6576
        %v6794 = vadd.f32 %v6033, %v6578
        %v6795 = vadd.f32 %v6034, %v6647
        %v6796 = vadd.f32 %v6035, %v6649
        %v6797 = vadd.f32 %v6036, %v6718
        %v6798 = vadd.f32 %v6037, %v6720
        %v6799 = vadd.f32 %v6038, %v6789
        %v6800 = vadd.f32 %v6039, %v6791
        %6801 = vrot.lane.b32.xlu0 %v5277, 126
        %v6802 = vpop.permute.xlu0 %6801
        %6803 = vrot.lane.b32.xlu0 %v5279, 126
        %v6804 = vpop.permute.xlu0 %6803
        %6805 = vrot.lane.b32.xlu0 %v5281, 126
        %v6806 = vpop.permute.xlu0 %6805
        %6807 = vrot.lane.b32.xlu0 %v5283, 126
        %v6808 = vpop.permute.xlu0 %6807
        %6809 = vrot.lane.b32.xlu0 %v5286, 126
        %v6810 = vpop.permute.xlu0 %6809
        %6811 = vrot.lane.b32.xlu0 %v5288, 126
        %v6812 = vpop.permute.xlu0 %6811
        %6813 = vrot.lane.b32.xlu0 %v5290, 126
        %v6814 = vpop.permute.xlu0 %6813
        %6815 = vrot.lane.b32.xlu0 %v5292, 126
        %v6816 = vpop.permute.xlu0 %6815
        %6817 = vrot.lane.b32.xlu0 %v5295, 126
        %v6818 = vpop.permute.xlu0 %6817
        %6819 = vrot.lane.b32.xlu0 %v5297, 126
        %v6820 = vpop.permute.xlu0 %6819
        %6821 = vrot.lane.b32.xlu0 %v5299, 126
        %v6822 = vpop.permute.xlu0 %6821
        %6823 = vrot.lane.b32.xlu0 %v5301, 126
        %v6824 = vpop.permute.xlu0 %6823
        %6825 = vrot.lane.b32.xlu0 %v5304, 126
        %v6826 = vpop.permute.xlu0 %6825
        %6827 = vrot.lane.b32.xlu0 %v5306, 126
        %v6828 = vpop.permute.xlu0 %6827
        %6829 = vrot.lane.b32.xlu0 %v5308, 126
        %v6830 = vpop.permute.xlu0 %6829
        %6831 = vrot.lane.b32.xlu0 %v5310, 126
        %v6832 = vpop.permute.xlu0 %6831
        %v6849 = vcombine.low %v6802, %v6818
        %v6850 = vcombine.high %v6802, %v6818
        %v6852 = vunpack.c.l.s4 1983009808
        %v6853 = vunpack.c.0.s8 %v6852
        %v6854 = vlaneseq
        %v6855 = vshrl.u32 %v6854, 7
        %v6856 = vsub.s32 %v6853, %v6855
        %v6857 = vrot.slane %v6849, %v6856
        %v6859 = vunpack.c.l.s4 1983009808
        %v6860 = vunpack.c.0.s8 %v6859
        %v6861 = vlaneseq
        %v6862 = vshrl.u32 %v6861, 7
        %v6863 = vsub.s32 %v6860, %v6862
        %v6864 = vrot.slane %v6850, %v6863
        %v6865 = vcombine.low %v6810, %v6826
        %v6866 = vcombine.high %v6810, %v6826
        %v6868 = vunpack.c.l.s4 1983009808
        %v6869 = vunpack.c.0.s8 %v6868
        %v6870 = vlaneseq
        %v6871 = vshrl.u32 %v6870, 7
        %v6872 = vsub.s32 %v6869, %v6871
        %v6873 = vrot.slane %v6865, %v6872
        %v6875 = vunpack.c.l.s4 1983009808
        %v6876 = vunpack.c.0.s8 %v6875
        %v6877 = vlaneseq
        %v6878 = vshrl.u32 %v6877, 7
        %v6879 = vsub.s32 %v6876, %v6878
        %v6880 = vrot.slane %v6866, %v6879
        %v6881 = vcombine.low %v6857, %v6873
        %v6882 = vcombine.high %v6857, %v6873
        %v6884 = vunpack.c.l.s4 1934713408
        %v6885 = vunpack.c.0.s8 %v6884
        %v6886 = vlaneseq
        %v6887 = vshrl.u32 %v6886, 7
        %v6888 = vsub.s32 %v6885, %v6887
        %v6889 = vrot.slane %v6881, %v6888
        %v6891 = vunpack.c.l.s4 1934713408
        %v6892 = vunpack.c.0.s8 %v6891
        %v6893 = vlaneseq
        %v6894 = vshrl.u32 %v6893, 7
        %v6895 = vsub.s32 %v6892, %v6894
        %v6896 = vrot.slane %v6882, %v6895
        %v6897 = vcombine.low %v6864, %v6880
        %v6898 = vcombine.high %v6864, %v6880
        %v6900 = vunpack.c.l.s4 1934713408
        %v6901 = vunpack.c.0.s8 %v6900
        %v6902 = vlaneseq
        %v6903 = vshrl.u32 %v6902, 7
        %v6904 = vsub.s32 %v6901, %v6903
        %v6905 = vrot.slane %v6897, %v6904
        %v6907 = vunpack.c.l.s4 1934713408
        %v6908 = vunpack.c.0.s8 %v6907
        %v6909 = vlaneseq
        %v6910 = vshrl.u32 %v6909, 7
        %v6911 = vsub.s32 %v6908, %v6910
        %v6912 = vrot.slane %v6898, %v6911
        %v6913 = vcombine.high %v6889, 0.0
        %v6914 = vcombine.high %v6896, 0.0
        %v6915 = vcombine.high %v6905, 0.0
        %v6916 = vcombine.high %v6912, 0.0
        %v6917 = vcombine.low %v6804, %v6820
        %v6918 = vcombine.high %v6804, %v6820
        %v6920 = vunpack.c.l.s4 1983009808
        %v6921 = vunpack.c.0.s8 %v6920
        %v6922 = vlaneseq
        %v6923 = vshrl.u32 %v6922, 7
        %v6924 = vsub.s32 %v6921, %v6923
        %v6925 = vrot.slane %v6917, %v6924
        %v6927 = vunpack.c.l.s4 1983009808
        %v6928 = vunpack.c.0.s8 %v6927
        %v6929 = vlaneseq
        %v6930 = vshrl.u32 %v6929, 7
        %v6931 = vsub.s32 %v6928, %v6930
        %v6932 = vrot.slane %v6918, %v6931
        %v6933 = vcombine.low %v6812, %v6828
        %v6934 = vcombine.high %v6812, %v6828
        %v6936 = vunpack.c.l.s4 1983009808
        %v6937 = vunpack.c.0.s8 %v6936
        %v6938 = vlaneseq
        %v6939 = vshrl.u32 %v6938, 7
        %v6940 = vsub.s32 %v6937, %v6939
        %v6941 = vrot.slane %v6933, %v6940
        %v6943 = vunpack.c.l.s4 1983009808
        %v6944 = vunpack.c.0.s8 %v6943
        %v6945 = vlaneseq
        %v6946 = vshrl.u32 %v6945, 7
        %v6947 = vsub.s32 %v6944, %v6946
        %v6948 = vrot.slane %v6934, %v6947
        %v6949 = vcombine.low %v6925, %v6941
        %v6950 = vcombine.high %v6925, %v6941
        %v6952 = vunpack.c.l.s4 1934713408
        %v6953 = vunpack.c.0.s8 %v6952
        %v6954 = vlaneseq
        %v6955 = vshrl.u32 %v6954, 7
        %v6956 = vsub.s32 %v6953, %v6955
        %v6957 = vrot.slane %v6949, %v6956
        %v6959 = vunpack.c.l.s4 1934713408
        %v6960 = vunpack.c.0.s8 %v6959
        %v6961 = vlaneseq
        %v6962 = vshrl.u32 %v6961, 7
        %v6963 = vsub.s32 %v6960, %v6962
        %v6964 = vrot.slane %v6950, %v6963
        %v6965 = vcombine.low %v6932, %v6948
        %v6966 = vcombine.high %v6932, %v6948
        %v6968 = vunpack.c.l.s4 1934713408
        %v6969 = vunpack.c.0.s8 %v6968
        %v6970 = vlaneseq
        %v6971 = vshrl.u32 %v6970, 7
        %v6972 = vsub.s32 %v6969, %v6971
        %v6973 = vrot.slane %v6965, %v6972
        %v6975 = vunpack.c.l.s4 1934713408
        %v6976 = vunpack.c.0.s8 %v6975
        %v6977 = vlaneseq
        %v6978 = vshrl.u32 %v6977, 7
        %v6979 = vsub.s32 %v6976, %v6978
        %v6980 = vrot.slane %v6966, %v6979
        %v6981 = vcombine.high %v6957, 0.0
        %v6982 = vcombine.high %v6964, 0.0
        %v6983 = vcombine.high %v6973, 0.0
        %v6984 = vcombine.high %v6980, 0.0
        %v6985 = vcombine.low %v6806, %v6822
        %v6986 = vcombine.high %v6806, %v6822
        %v6988 = vunpack.c.l.s4 1983009808
        %v6989 = vunpack.c.0.s8 %v6988
        %v6990 = vlaneseq
        %v6991 = vshrl.u32 %v6990, 7
        %v6992 = vsub.s32 %v6989, %v6991
        %v6993 = vrot.slane %v6985, %v6992
        %v6995 = vunpack.c.l.s4 1983009808
        %v6996 = vunpack.c.0.s8 %v6995
        %v6997 = vlaneseq
        %v6998 = vshrl.u32 %v6997, 7
        %v6999 = vsub.s32 %v6996, %v6998
        %v7000 = vrot.slane %v6986, %v6999
        %v7001 = vcombine.low %v6814, %v6830
        %v7002 = vcombine.high %v6814, %v6830
        %v7004 = vunpack.c.l.s4 1983009808
        %v7005 = vunpack.c.0.s8 %v7004
        %v7006 = vlaneseq
        %v7007 = vshrl.u32 %v7006, 7
        %v7008 = vsub.s32 %v7005, %v7007
        %v7009 = vrot.slane %v7001, %v7008
        %v7011 = vunpack.c.l.s4 1983009808
        %v7012 = vunpack.c.0.s8 %v7011
        %v7013 = vlaneseq
        %v7014 = vshrl.u32 %v7013, 7
        %v7015 = vsub.s32 %v7012, %v7014
        %v7016 = vrot.slane %v7002, %v7015
        %v7017 = vcombine.low %v6993, %v7009
        %v7018 = vcombine.high %v6993, %v7009
        %v7020 = vunpack.c.l.s4 1934713408
        %v7021 = vunpack.c.0.s8 %v7020
        %v7022 = vlaneseq
        %v7023 = vshrl.u32 %v7022, 7
        %v7024 = vsub.s32 %v7021, %v7023
        %v7025 = vrot.slane %v7017, %v7024
        %v7027 = vunpack.c.l.s4 1934713408
        %v7028 = vunpack.c.0.s8 %v7027
        %v7029 = vlaneseq
        %v7030 = vshrl.u32 %v7029, 7
        %v7031 = vsub.s32 %v7028, %v7030
        %v7032 = vrot.slane %v7018, %v7031
        %v7033 = vcombine.low %v7000, %v7016
        %v7034 = vcombine.high %v7000, %v7016
        %v7036 = vunpack.c.l.s4 1934713408
        %v7037 = vunpack.c.0.s8 %v7036
        %v7038 = vlaneseq
        %v7039 = vshrl.u32 %v7038, 7
        %v7040 = vsub.s32 %v7037, %v7039
        %v7041 = vrot.slane %v7033, %v7040
        %v7043 = vunpack.c.l.s4 1934713408
        %v7044 = vunpack.c.0.s8 %v7043
        %v7045 = vlaneseq
        %v7046 = vshrl.u32 %v7045, 7
        %v7047 = vsub.s32 %v7044, %v7046
        %v7048 = vrot.slane %v7034, %v7047
        %v7049 = vcombine.high %v7025, 0.0
        %v7050 = vcombine.high %v7032, 0.0
        %v7051 = vcombine.high %v7041, 0.0
        %v7052 = vcombine.high %v7048, 0.0
        %v7053 = vcombine.low %v6808, %v6824
        %v7054 = vcombine.high %v6808, %v6824
        %v7056 = vunpack.c.l.s4 1983009808
        %v7057 = vunpack.c.0.s8 %v7056
        %v7058 = vlaneseq
        %v7059 = vshrl.u32 %v7058, 7
        %v7060 = vsub.s32 %v7057, %v7059
        %v7061 = vrot.slane %v7053, %v7060
        %v7063 = vunpack.c.l.s4 1983009808
        %v7064 = vunpack.c.0.s8 %v7063
        %v7065 = vlaneseq
        %v7066 = vshrl.u32 %v7065, 7
        %v7067 = vsub.s32 %v7064, %v7066
        %v7068 = vrot.slane %v7054, %v7067
        %v7069 = vcombine.low %v6816, %v6832
        %v7070 = vcombine.high %v6816, %v6832
        %v7072 = vunpack.c.l.s4 1983009808
        %v7073 = vunpack.c.0.s8 %v7072
        %v7074 = vlaneseq
        %v7075 = vshrl.u32 %v7074, 7
        %v7076 = vsub.s32 %v7073, %v7075
        %v7077 = vrot.slane %v7069, %v7076
        %v7079 = vunpack.c.l.s4 1983009808
        %v7080 = vunpack.c.0.s8 %v7079
        %v7081 = vlaneseq
        %v7082 = vshrl.u32 %v7081, 7
        %v7083 = vsub.s32 %v7080, %v7082
        %v7084 = vrot.slane %v7070, %v7083
        %v7085 = vcombine.low %v7061, %v7077
        %v7086 = vcombine.high %v7061, %v7077
        %v7088 = vunpack.c.l.s4 1934713408
        %v7089 = vunpack.c.0.s8 %v7088
        %v7090 = vlaneseq
        %v7091 = vshrl.u32 %v7090, 7
        %v7092 = vsub.s32 %v7089, %v7091
        %v7093 = vrot.slane %v7085, %v7092
        %v7095 = vunpack.c.l.s4 1934713408
        %v7096 = vunpack.c.0.s8 %v7095
        %v7097 = vlaneseq
        %v7098 = vshrl.u32 %v7097, 7
        %v7099 = vsub.s32 %v7096, %v7098
        %v7100 = vrot.slane %v7086, %v7099
        %v7101 = vcombine.low %v7068, %v7084
        %v7102 = vcombine.high %v7068, %v7084
        %v7104 = vunpack.c.l.s4 1934713408
        %v7105 = vunpack.c.0.s8 %v7104
        %v7106 = vlaneseq
        %v7107 = vshrl.u32 %v7106, 7
        %v7108 = vsub.s32 %v7105, %v7107
        %v7109 = vrot.slane %v7101, %v7108
        %v7111 = vunpack.c.l.s4 1934713408
        %v7112 = vunpack.c.0.s8 %v7111
        %v7113 = vlaneseq
        %v7114 = vshrl.u32 %v7113, 7
        %v7115 = vsub.s32 %v7112, %v7114
        %v7116 = vrot.slane %v7102, %v7115
        %v7117 = vcombine.high %v7093, 0.0
        %v7118 = vcombine.high %v7100, 0.0
        %v7119 = vcombine.high %v7109, 0.0
        %v7120 = vcombine.high %v7116, 0.0
        %7122 = vrot.lane.b32.xlu0 %v6913, 32
        %v7123 = vpop.permute.xlu0 %7122
        %7126 = vrot.lane.b32.xlu0 %v6896, 64
        %v7127 = vpop.permute.xlu0 %7126
        %7130 = vrot.lane.b32.xlu0 %v6914, 96
        %v7131 = vpop.permute.xlu0 %7130
        %7134 = vrot.lane.b32.xlu0 %v6915, 32
        %v7135 = vpop.permute.xlu0 %7134
        %7138 = vrot.lane.b32.xlu0 %v6912, 64
        %v7139 = vpop.permute.xlu0 %7138
        %7142 = vrot.lane.b32.xlu0 %v6916, 96
        %v7143 = vpop.permute.xlu0 %7142
        %7146 = vrot.lane.b32.xlu0 %v6981, 32
        %v7147 = vpop.permute.xlu0 %7146
        %7150 = vrot.lane.b32.xlu0 %v6964, 64
        %v7151 = vpop.permute.xlu0 %7150
        %7154 = vrot.lane.b32.xlu0 %v6982, 96
        %v7155 = vpop.permute.xlu0 %7154
        %7158 = vrot.lane.b32.xlu0 %v6983, 32
        %v7159 = vpop.permute.xlu0 %7158
        %7162 = vrot.lane.b32.xlu0 %v6980, 64
        %v7163 = vpop.permute.xlu0 %7162
        %7166 = vrot.lane.b32.xlu0 %v6984, 96
        %v7167 = vpop.permute.xlu0 %7166
        %7170 = vrot.lane.b32.xlu0 %v7049, 32
        %v7171 = vpop.permute.xlu0 %7170
        %7174 = vrot.lane.b32.xlu0 %v7032, 64
        %v7175 = vpop.permute.xlu0 %7174
        %7178 = vrot.lane.b32.xlu0 %v7050, 96
        %v7179 = vpop.permute.xlu0 %7178
        %7182 = vrot.lane.b32.xlu0 %v7051, 32
        %v7183 = vpop.permute.xlu0 %7182
        %7186 = vrot.lane.b32.xlu0 %v7048, 64
        %v7187 = vpop.permute.xlu0 %7186
        %7190 = vrot.lane.b32.xlu0 %v7052, 96
        %v7191 = vpop.permute.xlu0 %7190
        %7194 = vrot.lane.b32.xlu0 %v7117, 32
        %v7195 = vpop.permute.xlu0 %7194
        %7198 = vrot.lane.b32.xlu0 %v7100, 64
        %v7199 = vpop.permute.xlu0 %7198
        %7202 = vrot.lane.b32.xlu0 %v7118, 96
        %v7203 = vpop.permute.xlu0 %7202
        %7206 = vrot.lane.b32.xlu0 %v7119, 32
        %v7207 = vpop.permute.xlu0 %7206
        %7210 = vrot.lane.b32.xlu0 %v7116, 64
        %v7211 = vpop.permute.xlu0 %7210
        %7214 = vrot.lane.b32.xlu0 %v7120, 96
        %v7215 = vpop.permute.xlu0 %7214
        %v7217 = vsel %vm1111, %v6889, %v7123
        %v7218 = vsel %vm1113, %v7217, %v7127
        %v7219 = vsel %vm1115, %v7218, %v7131
        %v7220 = vsel %vm1111, %v6905, %v7135
        %v7221 = vsel %vm1113, %v7220, %v7139
        %v7222 = vsel %vm1115, %v7221, %v7143
        %v7223 = vsel %vm1111, %v6957, %v7147
        %v7224 = vsel %vm1113, %v7223, %v7151
        %v7225 = vsel %vm1115, %v7224, %v7155
        %v7226 = vsel %vm1111, %v6973, %v7159
        %v7227 = vsel %vm1113, %v7226, %v7163
        %v7228 = vsel %vm1115, %v7227, %v7167
        %v7229 = vsel %vm1111, %v7025, %v7171
        %v7230 = vsel %vm1113, %v7229, %v7175
        %v7231 = vsel %vm1115, %v7230, %v7179
        %v7232 = vsel %vm1111, %v7041, %v7183
        %v7233 = vsel %vm1113, %v7232, %v7187
        %v7234 = vsel %vm1115, %v7233, %v7191
        %v7235 = vsel %vm1111, %v7093, %v7195
        %v7236 = vsel %vm1113, %v7235, %v7199
        %v7237 = vsel %vm1115, %v7236, %v7203
        %v7238 = vsel %vm1111, %v7109, %v7207
        %v7239 = vsel %vm1113, %v7238, %v7211
        %v7240 = vsel %vm1115, %v7239, %v7215
        %s7241 = scalar_lea.vmem %s3, 64
        %v7242 = vld [vmem:[%s7241] sm:$0xff]
        %v7244 = vsel %vm1597, %v7242, 0
        %v7247 = vsel %vm1601, %v7219, 0
        %v7250 = vsel %vm1601, %v7222, 0
        %v7253 = vsel %vm1601, %v7225, 0
        %v7256 = vsel %vm1601, %v7228, 0
        %v7259 = vsel %vm1601, %v7231, 0
        %v7262 = vsel %vm1601, %v7234, 0
        %v7265 = vsel %vm1601, %v7237, 0
        %v7268 = vsel %vm1601, %v7240, 0
        %7270 = vmatprep.subr.mxu0 %v7250
        %7271 = vmatpush1.msra.mxu0 %v7247
        %7272 = vmatprep.subr.mxu0 0.0
        %7273 = vmatpush1.msra.mxu0 0.0
        %7274 = vmatprep.subr.mxu0 0.0
        %7275 = vmatpush1.msra.mxu0 0.0
        %7276 = vmatprep.subr.mxu0 0.0
        %7277 = vmatpush1.msra.mxu0 0.0
        %7278 = vmatprep.subr.mxu0 0.0
        %7279 = vmatpush1.msra.mxu0 0.0
        %7280 = vmatprep.subr.mxu0 0.0
        %7281 = vmatpush1.msra.mxu0 0.0
        %7282 = vmatprep.subr.mxu0 0.0
        %7283 = vmatpush1.msra.mxu0 0.0
        %7284 = vmatprep.subr.mxu0 0.0
        %7285 = vmatpush1.msra.mxu0 0.0
        %7286 = vmatprep.subr.mxu0 0.0
        %7287 = vmatpush1.msra.mxu0 0.0
        %7288 = vmatprep.subr.mxu0 0.0
        %7289 = vmatpush1.msra.mxu0 0.0
        %7290 = vmatprep.subr.mxu0 0.0
        %7291 = vmatpush1.msra.mxu0 0.0
        %7292 = vmatprep.subr.mxu0 0.0
        %7293 = vmatpush1.msra.mxu0 0.0
        %7294 = vmatprep.subr.mxu0 0.0
        %7295 = vmatpush1.msra.mxu0 0.0
        %7296 = vmatprep.subr.mxu0 0.0
        %7297 = vmatpush1.msra.mxu0 0.0
        %7298 = vmatprep.subr.mxu0 0.0
        %7299 = vmatpush1.msra.mxu0 0.0
        %7300 = vmatprep.subr.mxu0 0.0
        %7301 = vmatpush1.msra.mxu0 0.0
        %7302 = vmatprep.subr.mxu0 0.0
        %7303 = vmatpush1.msra.mxu0 0.0
        %7304 = vmatprep.subr.mxu0 0.0
        %7305 = vmatpush1.msra.mxu0 0.0
        %7306 = vmatprep.subr.mxu0 0.0
        %7307 = vmatpush1.msra.mxu0 0.0
        %7308 = vmatprep.subr.mxu0 0.0
        %7309 = vmatpush1.msra.mxu0 0.0
        %7310 = vmatprep.subr.mxu0 0.0
        %7311 = vmatpush1.msra.mxu0 0.0
        %7312 = vmatprep.subr.mxu0 0.0
        %7313 = vmatpush1.msra.mxu0 0.0
        %7314 = vmatprep.subr.mxu0 0.0
        %7315 = vmatpush1.msra.mxu0 0.0
        %7316 = vmatprep.subr.mxu0 0.0
        %7317 = vmatpush1.msra.mxu0 0.0
        %7318 = vmatprep.subr.mxu0 0.0
        %7319 = vmatpush1.msra.mxu0 0.0
        %7320 = vmatprep.subr.mxu0 0.0
        %7321 = vmatpush1.msra.mxu0 0.0
        %7322 = vmatprep.subr.mxu0 0.0
        %7323 = vmatpush1.msra.mxu0 0.0
        %7324 = vmatprep.subr.mxu0 0.0
        %7325 = vmatpush1.msra.mxu0 0.0
        %7326 = vmatprep.subr.mxu0 0.0
        %7327 = vmatpush1.msra.mxu0 0.0
        %7328 = vmatprep.subr.mxu0 0.0
        %7329 = vmatpush1.msra.mxu0 0.0
        %7330 = vmatprep.subr.mxu0 0.0
        %7331 = vmatpush1.msra.mxu0 0.0
        %7332 = vmatprep.subr.mxu0 0.0
        %7333 = vmatpush1.msra.mxu0 0.0
        %7334 = vmatprep.mubr.f32.mxu0 0.0
        %7335 = vmatmul.mubr.f32.gmra.mrb[0].mxu0 %v7244
        %v7336 = vpop.f32.mrb[0].mxu0
        %v7337 = vadd.f32 0.0, %v7336
        %v7338 = vpop.f32.mrb[0].mxu0
        %v7339 = vadd.f32 0.0, %v7338
        %7340 = vdwg.mxu0
        %7341 = vmatprep.subr.mxu0 %v7256
        %7342 = vmatpush1.msra.mxu0 %v7253
        %7343 = vmatprep.subr.mxu0 0.0
        %7344 = vmatpush1.msra.mxu0 0.0
        %7345 = vmatprep.subr.mxu0 0.0
        %7346 = vmatpush1.msra.mxu0 0.0
        %7347 = vmatprep.subr.mxu0 0.0
        %7348 = vmatpush1.msra.mxu0 0.0
        %7349 = vmatprep.subr.mxu0 0.0
        %7350 = vmatpush1.msra.mxu0 0.0
        %7351 = vmatprep.subr.mxu0 0.0
        %7352 = vmatpush1.msra.mxu0 0.0
        %7353 = vmatprep.subr.mxu0 0.0
        %7354 = vmatpush1.msra.mxu0 0.0
        %7355 = vmatprep.subr.mxu0 0.0
        %7356 = vmatpush1.msra.mxu0 0.0
        %7357 = vmatprep.subr.mxu0 0.0
        %7358 = vmatpush1.msra.mxu0 0.0
        %7359 = vmatprep.subr.mxu0 0.0
        %7360 = vmatpush1.msra.mxu0 0.0
        %7361 = vmatprep.subr.mxu0 0.0
        %7362 = vmatpush1.msra.mxu0 0.0
        %7363 = vmatprep.subr.mxu0 0.0
        %7364 = vmatpush1.msra.mxu0 0.0
        %7365 = vmatprep.subr.mxu0 0.0
        %7366 = vmatpush1.msra.mxu0 0.0
        %7367 = vmatprep.subr.mxu0 0.0
        %7368 = vmatpush1.msra.mxu0 0.0
        %7369 = vmatprep.subr.mxu0 0.0
        %7370 = vmatpush1.msra.mxu0 0.0
        %7371 = vmatprep.subr.mxu0 0.0
        %7372 = vmatpush1.msra.mxu0 0.0
        %7373 = vmatprep.subr.mxu0 0.0
        %7374 = vmatpush1.msra.mxu0 0.0
        %7375 = vmatprep.subr.mxu0 0.0
        %7376 = vmatpush1.msra.mxu0 0.0
        %7377 = vmatprep.subr.mxu0 0.0
        %7378 = vmatpush1.msra.mxu0 0.0
        %7379 = vmatprep.subr.mxu0 0.0
        %7380 = vmatpush1.msra.mxu0 0.0
        %7381 = vmatprep.subr.mxu0 0.0
        %7382 = vmatpush1.msra.mxu0 0.0
        %7383 = vmatprep.subr.mxu0 0.0
        %7384 = vmatpush1.msra.mxu0 0.0
        %7385 = vmatprep.subr.mxu0 0.0
        %7386 = vmatpush1.msra.mxu0 0.0
        %7387 = vmatprep.subr.mxu0 0.0
        %7388 = vmatpush1.msra.mxu0 0.0
        %7389 = vmatprep.subr.mxu0 0.0
        %7390 = vmatpush1.msra.mxu0 0.0
        %7391 = vmatprep.subr.mxu0 0.0
        %7392 = vmatpush1.msra.mxu0 0.0
        %7393 = vmatprep.subr.mxu0 0.0
        %7394 = vmatpush1.msra.mxu0 0.0
        %7395 = vmatprep.subr.mxu0 0.0
        %7396 = vmatpush1.msra.mxu0 0.0
        %7397 = vmatprep.subr.mxu0 0.0
        %7398 = vmatpush1.msra.mxu0 0.0
        %7399 = vmatprep.subr.mxu0 0.0
        %7400 = vmatpush1.msra.mxu0 0.0
        %7401 = vmatprep.subr.mxu0 0.0
        %7402 = vmatpush1.msra.mxu0 0.0
        %7403 = vmatprep.subr.mxu0 0.0
        %7404 = vmatpush1.msra.mxu0 0.0
        %7405 = vmatprep.mubr.f32.mxu0 0.0
        %7406 = vmatmul.mubr.f32.gmra.mrb[0].mxu0 %v7244
        %v7407 = vpop.f32.mrb[0].mxu0
        %v7408 = vadd.f32 0.0, %v7407
        %v7409 = vpop.f32.mrb[0].mxu0
        %v7410 = vadd.f32 0.0, %v7409
        %7411 = vdwg.mxu0
        %7412 = vmatprep.subr.mxu0 %v7262
        %7413 = vmatpush1.msra.mxu0 %v7259
        %7414 = vmatprep.subr.mxu0 0.0
        %7415 = vmatpush1.msra.mxu0 0.0
        %7416 = vmatprep.subr.mxu0 0.0
        %7417 = vmatpush1.msra.mxu0 0.0
        %7418 = vmatprep.subr.mxu0 0.0
        %7419 = vmatpush1.msra.mxu0 0.0
        %7420 = vmatprep.subr.mxu0 0.0
        %7421 = vmatpush1.msra.mxu0 0.0
        %7422 = vmatprep.subr.mxu0 0.0
        %7423 = vmatpush1.msra.mxu0 0.0
        %7424 = vmatprep.subr.mxu0 0.0
        %7425 = vmatpush1.msra.mxu0 0.0
        %7426 = vmatprep.subr.mxu0 0.0
        %7427 = vmatpush1.msra.mxu0 0.0
        %7428 = vmatprep.subr.mxu0 0.0
        %7429 = vmatpush1.msra.mxu0 0.0
        %7430 = vmatprep.subr.mxu0 0.0
        %7431 = vmatpush1.msra.mxu0 0.0
        %7432 = vmatprep.subr.mxu0 0.0
        %7433 = vmatpush1.msra.mxu0 0.0
        %7434 = vmatprep.subr.mxu0 0.0
        %7435 = vmatpush1.msra.mxu0 0.0
        %7436 = vmatprep.subr.mxu0 0.0
        %7437 = vmatpush1.msra.mxu0 0.0
        %7438 = vmatprep.subr.mxu0 0.0
        %7439 = vmatpush1.msra.mxu0 0.0
        %7440 = vmatprep.subr.mxu0 0.0
        %7441 = vmatpush1.msra.mxu0 0.0
        %7442 = vmatprep.subr.mxu0 0.0
        %7443 = vmatpush1.msra.mxu0 0.0
        %7444 = vmatprep.subr.mxu0 0.0
        %7445 = vmatpush1.msra.mxu0 0.0
        %7446 = vmatprep.subr.mxu0 0.0
        %7447 = vmatpush1.msra.mxu0 0.0
        %7448 = vmatprep.subr.mxu0 0.0
        %7449 = vmatpush1.msra.mxu0 0.0
        %7450 = vmatprep.subr.mxu0 0.0
        %7451 = vmatpush1.msra.mxu0 0.0
        %7452 = vmatprep.subr.mxu0 0.0
        %7453 = vmatpush1.msra.mxu0 0.0
        %7454 = vmatprep.subr.mxu0 0.0
        %7455 = vmatpush1.msra.mxu0 0.0
        %7456 = vmatprep.subr.mxu0 0.0
        %7457 = vmatpush1.msra.mxu0 0.0
        %7458 = vmatprep.subr.mxu0 0.0
        %7459 = vmatpush1.msra.mxu0 0.0
        %7460 = vmatprep.subr.mxu0 0.0
        %7461 = vmatpush1.msra.mxu0 0.0
        %7462 = vmatprep.subr.mxu0 0.0
        %7463 = vmatpush1.msra.mxu0 0.0
        %7464 = vmatprep.subr.mxu0 0.0
        %7465 = vmatpush1.msra.mxu0 0.0
        %7466 = vmatprep.subr.mxu0 0.0
        %7467 = vmatpush1.msra.mxu0 0.0
        %7468 = vmatprep.subr.mxu0 0.0
        %7469 = vmatpush1.msra.mxu0 0.0
        %7470 = vmatprep.subr.mxu0 0.0
        %7471 = vmatpush1.msra.mxu0 0.0
        %7472 = vmatprep.subr.mxu0 0.0
        %7473 = vmatpush1.msra.mxu0 0.0
        %7474 = vmatprep.subr.mxu0 0.0
        %7475 = vmatpush1.msra.mxu0 0.0
        %7476 = vmatprep.mubr.f32.mxu0 0.0
        %7477 = vmatmul.mubr.f32.gmra.mrb[0].mxu0 %v7244
        %v7478 = vpop.f32.mrb[0].mxu0
        %v7479 = vadd.f32 0.0, %v7478
        %v7480 = vpop.f32.mrb[0].mxu0
        %v7481 = vadd.f32 0.0, %v7480
        %7482 = vdwg.mxu0
        %7483 = vmatprep.subr.mxu0 %v7268
        %7484 = vmatpush1.msra.mxu0 %v7265
        %7485 = vmatprep.subr.mxu0 0.0
        %7486 = vmatpush1.msra.mxu0 0.0
        %7487 = vmatprep.subr.mxu0 0.0
        %7488 = vmatpush1.msra.mxu0 0.0
        %7489 = vmatprep.subr.mxu0 0.0
        %7490 = vmatpush1.msra.mxu0 0.0
        %7491 = vmatprep.subr.mxu0 0.0
        %7492 = vmatpush1.msra.mxu0 0.0
        %7493 = vmatprep.subr.mxu0 0.0
        %7494 = vmatpush1.msra.mxu0 0.0
        %7495 = vmatprep.subr.mxu0 0.0
        %7496 = vmatpush1.msra.mxu0 0.0
        %7497 = vmatprep.subr.mxu0 0.0
        %7498 = vmatpush1.msra.mxu0 0.0
        %7499 = vmatprep.subr.mxu0 0.0
        %7500 = vmatpush1.msra.mxu0 0.0
        %7501 = vmatprep.subr.mxu0 0.0
        %7502 = vmatpush1.msra.mxu0 0.0
        %7503 = vmatprep.subr.mxu0 0.0
        %7504 = vmatpush1.msra.mxu0 0.0
        %7505 = vmatprep.subr.mxu0 0.0
        %7506 = vmatpush1.msra.mxu0 0.0
        %7507 = vmatprep.subr.mxu0 0.0
        %7508 = vmatpush1.msra.mxu0 0.0
        %7509 = vmatprep.subr.mxu0 0.0
        %7510 = vmatpush1.msra.mxu0 0.0
        %7511 = vmatprep.subr.mxu0 0.0
        %7512 = vmatpush1.msra.mxu0 0.0
        %7513 = vmatprep.subr.mxu0 0.0
        %7514 = vmatpush1.msra.mxu0 0.0
        %7515 = vmatprep.subr.mxu0 0.0
        %7516 = vmatpush1.msra.mxu0 0.0
        %7517 = vmatprep.subr.mxu0 0.0
        %7518 = vmatpush1.msra.mxu0 0.0
        %7519 = vmatprep.subr.mxu0 0.0
        %7520 = vmatpush1.msra.mxu0 0.0
        %7521 = vmatprep.subr.mxu0 0.0
        %7522 = vmatpush1.msra.mxu0 0.0
        %7523 = vmatprep.subr.mxu0 0.0
        %7524 = vmatpush1.msra.mxu0 0.0
        %7525 = vmatprep.subr.mxu0 0.0
        %7526 = vmatpush1.msra.mxu0 0.0
        %7527 = vmatprep.subr.mxu0 0.0
        %7528 = vmatpush1.msra.mxu0 0.0
        %7529 = vmatprep.subr.mxu0 0.0
        %7530 = vmatpush1.msra.mxu0 0.0
        %7531 = vmatprep.subr.mxu0 0.0
        %7532 = vmatpush1.msra.mxu0 0.0
        %7533 = vmatprep.subr.mxu0 0.0
        %7534 = vmatpush1.msra.mxu0 0.0
        %7535 = vmatprep.subr.mxu0 0.0
        %7536 = vmatpush1.msra.mxu0 0.0
        %7537 = vmatprep.subr.mxu0 0.0
        %7538 = vmatpush1.msra.mxu0 0.0
        %7539 = vmatprep.subr.mxu0 0.0
        %7540 = vmatpush1.msra.mxu0 0.0
        %7541 = vmatprep.subr.mxu0 0.0
        %7542 = vmatpush1.msra.mxu0 0.0
        %7543 = vmatprep.subr.mxu0 0.0
        %7544 = vmatpush1.msra.mxu0 0.0
        %7545 = vmatprep.subr.mxu0 0.0
        %7546 = vmatpush1.msra.mxu0 0.0
        %7547 = vmatprep.mubr.f32.mxu0 0.0
        %7548 = vmatmul.mubr.f32.gmra.mrb[0].mxu0 %v7244
        %v7549 = vpop.f32.mrb[0].mxu0
        %v7550 = vadd.f32 0.0, %v7549
        %v7551 = vpop.f32.mrb[0].mxu0
        %v7552 = vadd.f32 0.0, %v7551
        %7553 = vdwg.mxu0
        %v7554 = vadd.f32 %v6793, %v7337
        %v7555 = vadd.f32 %v6794, %v7339
        %v7556 = vadd.f32 %v6795, %v7408
        %v7557 = vadd.f32 %v6796, %v7410
        %v7558 = vadd.f32 %v6797, %v7479
        %v7559 = vadd.f32 %v6798, %v7481
        %v7560 = vadd.f32 %v6799, %v7550
        %v7561 = vadd.f32 %v6800, %v7552
        %v7562 = vld [vmem:[%s4] sm:$0xff]
        %7564 = vset.pattern.permute.xlu0 0
        %7565 = vperm.xlu0 %7564, %v7562
        %v7566 = vpop.permute.xlu0 %7565
        %v7568 = vadd.f32 %v7554, %v7566
        %v7569 = vadd.f32 %v7555, %v7566
        %v7570 = vadd.f32 %v7556, %v7566
        %v7571 = vadd.f32 %v7557, %v7566
        %v7572 = vadd.f32 %v7558, %v7566
        %v7573 = vadd.f32 %v7559, %v7566
        %v7574 = vadd.f32 %v7560, %v7566
        %v7575 = vadd.f32 %v7561, %v7566
        %v7576 = vmax.f32 %v7568, 0.0
        %v7577 = vmax.f32 %v7569, 0.0
        %v7578 = vmax.f32 %v7570, 0.0
        %v7579 = vmax.f32 %v7571, 0.0
        %v7580 = vmax.f32 %v7572, 0.0
        %v7581 = vmax.f32 %v7573, 0.0
        %v7582 = vmax.f32 %v7574, 0.0
        %v7583 = vmax.f32 %v7575, 0.0
        %7584 = vst [vmem:[%s217] sm:$0xff] %v7576
        %7585 = vst [vmem:[%s217 + $0x8] sm:$0xff] %v7577
        %7586 = vst [vmem:[%s217 + $0x10] sm:$0xff] %v7578
        %7587 = vst [vmem:[%s217 + $0x18] sm:$0xff] %v7579
        %7588 = vst [vmem:[%s217 + $0x20] sm:$0xff] %v7580
        %7589 = vst [vmem:[%s217 + $0x28] sm:$0xff] %v7581
        %7590 = vst [vmem:[%s217 + $0x30] sm:$0xff] %v7582
        %7591 = vst [vmem:[%s217 + $0x38] sm:$0xff] %v7583
        %s7592 = sand.u32 %s137, 1
        %s7593 = scalar_lea.sflag [#allocation3], %s7592
        %s7594 = sand.u32 %s137, 1
        %s7595 = smul.addr %s7594, 64
        %s7596 = scalar_lea.vmem [#allocation2], %s7595
        // Predicated region
        $region41: #{tpu_custom_call.1} parent=39 // pred_check
          %p7597 = pneg %p147
        $region42: #{tpu_custom_call.1} parent=39 // pred_check_branch
          %7599 = sbr.rel (%p7597) target = $region44
        $region43: #{tpu_custom_call.1} parent=39 // pred_region
          %s7601 = ssub.s32 1024, 1024
          %7602 = vsyncadd %s7593, %s7601
          %s7603 = smul.addr %s19, 8
          %s7604 = smul.addr %s7603, 128
          %s7605 = scalar_lea.hbm %s5, %s7604
          %s7607 = sshll.u32 %s7596, 4
          %s7608 = int_to_ptr.vmem [resolvable:$true] %s7607
          %7610 = dma.vmem_to_hbm [thread:$0]  %s7608, 1024, %s7605, %s7593
        $region44: #{tpu_custom_call.1} parent=39 // pred_fallthru
          _
      $region40: #{tpu_custom_call.1} parent=5 // pred_fallthru
        _
      %p7611 = scmp.le.s32.totalorder 2, %s14
      // Predicated region
      $region45: #{tpu_custom_call.1} parent=5 // pred_check
        %p7612 = pneg %p7611
      $region46: #{tpu_custom_call.1} parent=5 // pred_check_branch
        %7614 = sbr.rel (%p7612) target = $region48
      $region47: #{tpu_custom_call.1} parent=5 // pred_region
        %s7615 = ssub.s32 %s14, 2
        // Predicated region
        $region49: #{tpu_custom_call.1} parent=47 // pred_check
          %p7616 = pneg %p153
        $region50: #{tpu_custom_call.1} parent=47 // pred_check_branch
          %7618 = sbr.rel (%p7616) target = $region52
        $region51: #{tpu_custom_call.1} parent=47 // pred_region
          %s7619 = sand.u32 %s138, 1
          %s7620 = scalar_lea.sflag [#allocation3], %s7619
          %s7621 = sand.u32 %s138, 1
          %s7622 = smul.addr %s7621, 64
          %s7623 = scalar_lea.vmem [#allocation2], %s7622
          %7624 = dma.done %s7620, 1024
        $region52: #{tpu_custom_call.1} parent=47 // pred_fallthru
          _
      $region48: #{tpu_custom_call.1} parent=5 // pred_fallthru
        _
    $region6: #{tpu_custom_call.1} parent=1 // loop_footer
      %s18 = sadd.s32 1, %s14
    $region7: #{tpu_custom_call.1} parent=1 // loop_footer_branch
      %13 = sbr.rel target = $region3
    $region8: #{tpu_custom_call.1} parent=1 // loop_exit
      _
    %7625 = vsyncpa [#allocation3], 1
    %s7626 = scalar_lea.sflag [#allocation3], 1
    %7627 = vsyncpa %s7626, 1

</llo_original>
